<compile_context>
chip_gen: v7x
topology: tpu7x:2x2x1
jax: 0.10.0
libtpu: 0.0.40
codegen_flags: <defaults>
</compile_context>

<pallas_src>
import functools

import numpy as np
import jax
import jax.numpy as jnp
from jax.experimental import pallas as pl
from jax.experimental.pallas import tpu as pltpu

# ----------------------------- configuration (small shapes) -----------------------------
ORG_SIGNAL_LENGTH = 64
ORG_CHANNEL = 4
PATCH_SIZE = 16
IN_CHANS = 1
EMBED_DIM = 32
DEPTH = 2
NUM_HEADS = 4
MLP_RATIO = 4
DEC_EMBED_DIM = 16
DEC_DEPTH = 1
BATCH = 2
MASK_RATIO = 0.5

SIGNAL_LENGTH = ORG_SIGNAL_LENGTH * ORG_CHANNEL            # 256
assert SIGNAL_LENGTH % PATCH_SIZE == 0
NUM_PATCHES = SIGNAL_LENGTH // PATCH_SIZE                  # 16

BANDS = ("delta", "theta", "alpha", "beta", "gamma", "upper")
NB = len(BANDS)


# ---------------------------------- BlockSpec helpers ------------------------------------
def _band_spec(shape):
    """Block = one band's full slab; grid index i selects the band."""
    ndim = len(shape)
    zeros = (0,) * (ndim - 1)
    return pl.BlockSpec((1,) + tuple(shape[1:]), lambda i: (i,) + zeros)


def _full_spec(shape):
    zeros = (0,) * len(shape)
    return pl.BlockSpec(tuple(shape), lambda i: zeros)


# ---------------------------------- Pallas kernels ---------------------------------------
def _patch_embed_kernel(x_ref, w_ref, pos_ref, o_ref):
    # Conv1d(1, E, k=P, stride=P, bias=False) on non-overlapping patches == (B*Np, P) @ (P, E)
    o_ref[0] = (jnp.dot(x_ref[0], w_ref[0], preferred_element_type=jnp.float32)
                + pos_ref[0]).astype(o_ref.dtype)


def _band_transformer_kernel(x_ref,
                             ln1_g_ref, ln1_b_ref,
                             q_w_ref, q_b_ref, k_w_ref, k_b_ref, v_w_ref, v_b_ref,
                             proj_w_ref, proj_b_ref,
                             ln2_g_ref, ln2_b_ref,
                             fc1_w_ref, fc1_b_ref, fc2_w_ref, fc2_b_ref,
                             fin_g_ref, fin_b_ref,
                             head_w_ref, head_b_ref,
                             o_ref,
                             *, B, S, E, H, depth):
    """Full transformer (all `depth` layers) + final LN + head linear for one band.

    x_ref block: (1, B*S, E).  All weights for the band stay VMEM-resident for the whole
    kernel.  Heads are selected with lane masks and batches with a block-diagonal score
    mask so no unaligned stores / concatenations are needed.
    """
    Dh = E // H
    scale = 1.0 / float(np.sqrt(Dh))
    M = B * S

    x = x_ref[0]                                            # (M, E) f32

    # ---- loop-invariant masks (hoisted) ----
    lane = jax.lax.broadcasted_iota(jnp.int32, (1, E), 1)
    head_masks = [((lane >= h * Dh) & (lane < (h + 1) * Dh)).astype(jnp.float32)
                  for h in range(H)]
    row = jax.lax.broadcasted_iota(jnp.int32, (M, M), 0)
    col = jax.lax.broadcasted_iota(jnp.int32, (M, M), 1)
    same_batch = None
    for b in range(B):
        rb = (row >= b * S) & (row < (b + 1) * S)
        cb = (col >= b * S) & (col < (b + 1) * S)
        blk = rb & cb
        same_batch = blk if same_batch is None else (same_batch | blk)

    def ln(z, g, beta):
        mu = jnp.mean(z, axis=-1, keepdims=True)
        zc = z - mu
        var = jnp.mean(zc * zc, axis=-1, keepdims=True)
        return zc * jax.lax.rsqrt(var + 1e-5) * g + beta

    ln1_g = ln1_g_ref[0]; ln1_b = ln1_b_ref[0]
    ln2_g = ln2_g_ref[0]; ln2_b = ln2_b_ref[0]
    q_w = q_w_ref[0]; q_b = q_b_ref[0]
    k_w = k_w_ref[0]; k_b = k_b_ref[0]
    v_w = v_w_ref[0]; v_b = v_b_ref[0]
    proj_w = proj_w_ref[0]; proj_b = proj_b_ref[0]
    fc1_w = fc1_w_ref[0]; fc1_b = fc1_b_ref[0]
    fc2_w = fc2_w_ref[0]; fc2_b = fc2_b_ref[0]

    for l in range(depth):
        # -------- multi-head self attention (pre-LN) --------
        h_in = ln(x, ln1_g[l:l + 1], ln1_b[l:l + 1])
        q = jnp.dot(h_in, q_w[l], preferred_element_type=jnp.float32) + q_b[l:l + 1]
        k = jnp.dot(h_in, k_w[l], preferred_element_type=jnp.float32) + k_b[l:l + 1]
        v = jnp.dot(h_in, v_w[l], preferred_element_type=jnp.float32) + v_b[l:l + 1]

        att = jnp.zeros((M, E), jnp.float32)
        for h in range(H):
            mh = head_masks[h]
            # scores for head h: contract over the last dim (no explicit transpose)
            s = jax.lax.dot_general(q * mh, k * mh, (((1,), (1,)), ((), ())),
                                    preferred_element_type=jnp.float32) * scale
            s = jnp.where(same_batch, s, -1e30)              # block-diagonal over batches
            s = s - jnp.max(s, axis=-1, keepdims=True)
            p = jnp.exp(s)
            denom = jnp.sum(p, axis=-1, keepdims=True)
            p = p * pl.reciprocal(denom, approx=True)        # EUP divide
            # (S,S)@(S,E) with V masked to head lanes -> contribution only in head columns
            att = att + jnp.dot(p, v * mh, preferred_element_type=jnp.float32)

        att = jnp.dot(att, proj_w[l], preferred_element_type=jnp.float32) + proj_b[l:l + 1]
        x = x + att

        # -------- MLP (pre-LN) --------
        h_in = ln(x, ln2_g[l:l + 1], ln2_b[l:l + 1])
        h_mid = jnp.dot(h_in, fc1_w[l], preferred_element_type=jnp.float32) + fc1_b[l:l + 1]
        # NOTE: PyTorch nn.GELU defaults to exact erf; tanh approximation used here.
        h_mid = jax.nn.gelu(h_mid, approximate=True)
        h_mid = jnp.dot(h_mid, fc2_w[l], preferred_element_type=jnp.float32) + fc2_b[l:l + 1]
        x = x + h_mid

    x = ln(x, fin_g_ref[0], fin_b_ref[0])
    y = jnp.dot(x, head_w_ref[0], preferred_element_type=jnp.float32) + head_b_ref[0]
    o_ref[0] = y.astype(o_ref.dtype)


def _combine_loss_kernel(preds_ref, tgt_ref, mask_ref, comb_ref, loss_ref):
    nb = preds_ref.shape[0]
    xc = preds_ref[0]
    for i in range(1, nb):
        xc = xc + preds_ref[i]
    comb_ref[...] = xc
    d = xc - tgt_ref[...]
    per = jnp.mean(d * d, axis=-1, keepdims=True)            # (M, 1)
    m = mask_ref[...]                                        # (M, 1)
    loss_ref[0, 0] = jnp.sum(per * m) / jnp.sum(m)           # mask_ratio > 0 in this config


# ---------------------------------- kernel wrappers --------------------------------------
def patch_embed_all(x_flat, patch_w, pos_tiled):
    nb, m, _ = x_flat.shape
    e = patch_w.shape[-1]
    return pl.pallas_call(
        _patch_embed_kernel,
        out_shape=jax.ShapeDtypeStruct((nb, m, e), jnp.float32),
        grid=(nb,),
        in_specs=[_band_spec(x_flat.shape), _band_spec(patch_w.shape), _band_spec(pos_tiled.shape)],
        out_specs=_band_spec((nb, m, e)),
        compiler_params=pltpu.CompilerParams(dimension_semantics=("parallel",)),
    )(x_flat, patch_w, pos_tiled)


def band_transformer(x, tparams, head_w, head_b, *, num_heads, depth, batch):
    nb, m, e = x.shape
    s = m // batch
    n_out = head_w.shape[-1]
    # Split the fused QKV parameters into q/k/v (XLA-side slicing of the weights, free),
    # so the kernel only emits plain matmuls (no in-kernel lane slicing).
    qkv_w, qkv_b = tparams["qkv_w"], tparams["qkv_b"]
    q_w, k_w, v_w = qkv_w[..., :e], qkv_w[..., e:2 * e], qkv_w[..., 2 * e:]
    q_b, k_b, v_b = qkv_b[..., :e], qkv_b[..., e:2 * e], qkv_b[..., 2 * e:]
    operands = [x,
                tparams["ln1_g"], tparams["ln1_b"],
                q_w, q_b, k_w, k_b, v_w, v_b,
                tparams["proj_w"], tparams["proj_b"],
                tparams["ln2_g"], tparams["ln2_b"],
                tparams["fc1_w"], tparams["fc1_b"], tparams["fc2_w"], tparams["fc2_b"],
                tparams["final_g"], tparams["final_b"],
                head_w, head_b]
    kern = functools.partial(_band_transformer_kernel,
                             B=batch, S=s, E=e, H=num_heads, depth=depth)
    return pl.pallas_call(
        kern,
        out_shape=jax.ShapeDtypeStruct((nb, m, n_out), jnp.float32),
        grid=(nb,),
        in_specs=[_band_spec(op.shape) for op in operands],
        out_specs=_band_spec((nb, m, n_out)),
        compiler_params=pltpu.CompilerParams(dimension_semantics=("parallel",)),
    )(*operands)


def combine_and_loss(preds, target, mask2d):
    nb, m, p = preds.shape
    return pl.pallas_call(
        _combine_loss_kernel,
        out_shape=(jax.ShapeDtypeStruct((m, p), jnp.float32),
                   jax.ShapeDtypeStruct((1, 1), jnp.float32)),
        grid=(1,),
        in_specs=[_full_spec(preds.shape), _full_spec(target.shape), _full_spec(mask2d.shape)],
        out_specs=(_full_spec((m, p)),
                   pl.BlockSpec(memory_space=pltpu.MemorySpace.SMEM)),
        compiler_params=pltpu.CompilerParams(dimension_semantics=("arbitrary",)),
    )(preds, target, mask2d)


# ---------------------------------- parameter init ---------------------------------------
def get_1d_sincos_pos_embed(embed_dim, length, cls_token=False):
    pos = np.arange(length, dtype=np.float64)
    omega = np.arange(embed_dim // 2, dtype=np.float64) / (embed_dim / 2.0)
    omega = 1.0 / (10000.0 ** omega)
    out = np.einsum("m,d->md", pos, omega)
    emb = np.concatenate([np.sin(out), np.cos(out)], axis=1)
    if cls_token:
        emb = np.concatenate([np.zeros((1, embed_dim)), emb], axis=0)
    return emb.astype(np.float32)


def _init_linear_stacked(key, shape_w, fan_in, shape_b):
    kw, kb = jax.random.split(key)
    lim = 1.0 / np.sqrt(fan_in)
    w = jax.random.uniform(kw, shape_w, jnp.float32, -lim, lim)
    b = jax.random.uniform(kb, shape_b, jnp.float32, -lim, lim)
    return w, b


def init_transformer_stacked(key, nb, depth, dim, mlp_ratio):
    hidden = dim * mlp_ratio
    ks = jax.random.split(key, 4)
    qkv_w, qkv_b = _init_linear_stacked(ks[0], (nb, depth, dim, 3 * dim), dim, (nb, depth, 3 * dim))
    proj_w, proj_b = _init_linear_stacked(ks[1], (nb, depth, dim, dim), dim, (nb, depth, dim))
    fc1_w, fc1_b = _init_linear_stacked(ks[2], (nb, depth, dim, hidden), dim, (nb, depth, hidden))
    fc2_w, fc2_b = _init_linear_stacked(ks[3], (nb, depth, hidden, dim), hidden, (nb, depth, dim))
    return dict(
        ln1_g=jnp.ones((nb, depth, dim), jnp.float32), ln1_b=jnp.zeros((nb, depth, dim), jnp.float32),
        ln2_g=jnp.ones((nb, depth, dim), jnp.float32), ln2_b=jnp.zeros((nb, depth, dim), jnp.float32),
        qkv_w=qkv_w, qkv_b=qkv_b, proj_w=proj_w, proj_b=proj_b,
        fc1_w=fc1_w, fc1_b=fc1_b, fc2_w=fc2_w, fc2_b=fc2_b,
        final_g=jnp.ones((nb, 1, dim), jnp.float32), final_b=jnp.zeros((nb, 1, dim), jnp.float32),
    )


def init_params(key):
    k_patch, k_enc, k_de, k_dec, k_pred = jax.random.split(key, 5)
    pe = jnp.asarray(get_1d_sincos_pos_embed(EMBED_DIM, NUM_PATCHES, cls_token=True))  # (Np+1, E)
    dec_w, dec_b = _init_linear_stacked(k_de, (NB, EMBED_DIM, DEC_EMBED_DIM), EMBED_DIM,
                                        (NB, 1, DEC_EMBED_DIM))
    pred_w, pred_b = _init_linear_stacked(k_pred, (NB, DEC_EMBED_DIM, PATCH_SIZE), DEC_EMBED_DIM,
                                          (NB, 1, PATCH_SIZE))
    return dict(
        # Conv1d(1, E, P, stride=P, bias=False) weight pre-transposed as (P, E), stacked by band.
        patch_w=jax.random.normal(k_patch, (NB, PATCH_SIZE, EMBED_DIM), jnp.float32) * 0.02,
        cls_token=jnp.zeros((NB, 1, EMBED_DIM), jnp.float32),
        pos_embed=jnp.tile(pe[None], (NB, 1, 1)),
        encoder=init_transformer_stacked(k_enc, NB, DEPTH, EMBED_DIM, MLP_RATIO),
        dec_embed_w=dec_w, dec_embed_b=dec_b,
        mask_token=jnp.zeros((NB, 1, DEC_EMBED_DIM), jnp.float32),
        decoder=init_transformer_stacked(k_dec, NB, DEC_DEPTH, DEC_EMBED_DIM, MLP_RATIO),
        pred_w=pred_w, pred_b=pred_b,
    )


# ---------------------------------- model forward ----------------------------------------
def random_masking(x, mask_ratio, key):
    """x: (NB, N, L, D) band-stacked embeddings; same noise/indices for all bands."""
    _, n, l, _ = x.shape
    len_keep = int(l * (1 - mask_ratio))
    noise = jax.random.uniform(key, (n, l))
    ids_shuffle = jnp.argsort(noise, axis=1)
    ids_restore = jnp.argsort(ids_shuffle, axis=1)
    ids_keep = ids_shuffle[:, :len_keep]
    x_masked = jnp.take_along_axis(x, ids_keep[None, :, :, None], axis=2)
    mask = jnp.ones((n, l), jnp.float32).at[:, :len_keep].set(0.0)
    mask = jnp.take_along_axis(mask, ids_restore, axis=1)
    return x_masked, mask, ids_restore


def wavelet_transformer_forward(params, data, bands_x, mask_key, mask_ratio):
    B = data.shape[0]
    E, De, P, Np = EMBED_DIM, DEC_EMBED_DIM, PATCH_SIZE, NUM_PATCHES

    # ---- data_rebuild 'b c h w -> b h (c w)' + non-overlapping patching (pure layout) ----
    xb = jnp.stack(bands_x, axis=0)                                   # (NB, B, C, 1, W)
    xb = jnp.transpose(xb, (0, 1, 3, 2, 4)).reshape(NB, B, 1, -1)
    xb = xb.reshape(NB, B * Np, P)

    # ---- fused patch embed (Conv1d-as-matmul) + pos-embed add, all 6 bands in one call ----
    pos_tiled = jnp.tile(params["pos_embed"][:, 1:, :], (1, B, 1))    # (NB, B*Np, E)
    emb = patch_embed_all(xb, params["patch_w"], pos_tiled).reshape(NB, B, Np, E)

    # ---- random masking (index generation / gathers stay in JAX) ----
    masked, mask, ids_restore = random_masking(emb, mask_ratio, mask_key)
    s_enc = masked.shape[2] + 1

    # ---- prepend cls token; fused per-band encoder (+ decoder_embed) ----
    cls = params["cls_token"] + params["pos_embed"][:, :1, :]          # (NB, 1, E)
    cls = jnp.broadcast_to(cls[:, None, :, :], (NB, B, 1, E))
    x_enc = jnp.concatenate([cls, masked], axis=2).reshape(NB, B * s_enc, E)
    y_enc = band_transformer(x_enc, params["encoder"],
                             params["dec_embed_w"], params["dec_embed_b"],
                             num_heads=NUM_HEADS, depth=DEPTH, batch=B)
    y_enc = y_enc.reshape(NB, B, s_enc, De)

    # ---- un-shuffle with mask tokens (gather stays in JAX) ----
    n_mask = Np + 1 - s_enc
    mask_tok = jnp.broadcast_to(params["mask_token"][:, None, :, :], (NB, B, n_mask, De))
    x_ = jnp.concatenate([y_enc[:, :, 1:, :], mask_tok], axis=2)
    x_ = jnp.take_along_axis(x_, ids_restore[None, :, :, None], axis=2)
    x_dec = jnp.concatenate([y_enc[:, :, :1, :], x_], axis=2)          # (NB, B, Np+1, De)
    s_dec = Np + 1
    x_dec = x_dec.reshape(NB, B * s_dec, De)

    # ---- fused per-band decoder + pred head (reference never adds decoder_pos_embed) ----
    preds = band_transformer(x_dec, params["decoder"],
                             params["pred_w"], params["pred_b"],
                             num_heads=NUM_HEADS, depth=DEC_DEPTH, batch=B)
    preds = preds.reshape(NB, B, s_dec, P)[:, :, 1:, :].reshape(NB, B * Np, P)  # drop cls

    # ---- combine 6 bands + masked MSE loss in a single epilogue kernel ----
    target = data.reshape(B * Np, P)
    x_combine, loss = combine_and_loss(preds, target, mask.reshape(B * Np, 1))
    return loss[0, 0], x_combine.reshape(B, Np, P), mask


# -------------------------------------- main ----------------------------------------------
if __name__ == "__main__":
    root = jax.random.PRNGKey(0)
    root, k_params = jax.random.split(root)
    params = init_params(k_params)

    root, k_data, k_mask, *k_bands = jax.random.split(root, 3 + NB)
    data = jax.random.normal(k_data, (BATCH, SIGNAL_LENGTH), jnp.float32)
    bands_x = [jax.random.normal(kb, (BATCH, ORG_CHANNEL, 1, ORG_SIGNAL_LENGTH), jnp.float32)
               for kb in k_bands]

    fwd = jax.jit(wavelet_transformer_forward, static_argnames=("mask_ratio",))
    loss, x_combine, mask = fwd(params, data, bands_x, k_mask, mask_ratio=MASK_RATIO)
    jax.block_until_ready((loss, x_combine, mask))

    assert x_combine.shape == (BATCH, NUM_PATCHES, PATCH_SIZE)
    assert mask.shape == (BATCH, NUM_PATCHES)
    assert bool(jnp.isfinite(loss))
    print("KERNEL_OK")
</pallas_src>

<mosaic_0001>
module attributes {stable_mosaic.version = 11 : i64} {
  func.func @_patch_embed_kernel(%arg0: i32, %arg1: memref<1x32x16xf32, #tpu.memory_space<vmem>>, %arg2: memref<1x16x32xf32, #tpu.memory_space<vmem>>, %arg3: memref<1x32x32xf32, #tpu.memory_space<vmem>>, %arg4: memref<1x32x32xf32, #tpu.memory_space<vmem>>) attributes {dimension_semantics = [#tpu.dimension_semantics<parallel>], iteration_bounds = array<i64: 6>, scalar_prefetch = 0 : i64, scratch_operands = 0 : i64, tpu.core_type = #tpu.core_type<tc>, window_params = [{transform_indices = @transform_0, window_bounds = array<i64: 1, 32, 16>}, {transform_indices = @transform_1, window_bounds = array<i64: 1, 16, 32>}, {transform_indices = @transform_2, window_bounds = array<i64: 1, 32, 32>}, {transform_indices = @transform_3, window_bounds = array<i64: 1, 32, 32>}]} {
    %c0 = arith.constant 0 : index
    %c0_0 = arith.constant 0 : index
    %c0_1 = arith.constant 0 : index
    %0 = vector.load %arg1[%c0, %c0_0, %c0_1] : memref<1x32x16xf32, #tpu.memory_space<vmem>>, vector<1x32x16xf32>
    %1 = vector.shape_cast %0 : vector<1x32x16xf32> to vector<32x16xf32>
    %c0_2 = arith.constant 0 : index
    %c0_3 = arith.constant 0 : index
    %c0_4 = arith.constant 0 : index
    %2 = vector.load %arg2[%c0_2, %c0_3, %c0_4] : memref<1x16x32xf32, #tpu.memory_space<vmem>>, vector<1x16x32xf32>
    %3 = vector.shape_cast %2 : vector<1x16x32xf32> to vector<16x32xf32>
    %cst = arith.constant dense<0.000000e+00> : vector<32x32xf32>
    %4 = tpu.matmul %1, %3, %cst {dimension_numbers = #tpu.dot_dimension_numbers<[1], [0], [0], [1], [0, 0, 1, 1], [], []>} : vector<32x16xf32>, vector<16x32xf32>, vector<32x32xf32> -> vector<32x32xf32>
    %c0_5 = arith.constant 0 : index
    %c0_6 = arith.constant 0 : index
    %c0_7 = arith.constant 0 : index
    %5 = vector.load %arg3[%c0_5, %c0_6, %c0_7] : memref<1x32x32xf32, #tpu.memory_space<vmem>>, vector<1x32x32xf32>
    %6 = vector.shape_cast %5 : vector<1x32x32xf32> to vector<32x32xf32>
    %7 = arith.addf %4, %6 : vector<32x32xf32>
    %c0_8 = arith.constant 0 : index
    %c0_9 = arith.constant 0 : index
    %c0_10 = arith.constant 0 : index
    %8 = vector.load %arg4[%c0_8, %c0_9, %c0_10] : memref<1x32x32xf32, #tpu.memory_space<vmem>>, vector<1x32x32xf32>
    %9 = vector.shape_cast %8 : vector<1x32x32xf32> to vector<32x32xf32>
    %10 = vector.shape_cast %7 : vector<32x32xf32> to vector<1x32x32xf32>
    tpu.vector_store %arg4[%c0_8, %c0_9, %c0_10], %10 {strides = array<i32>} : memref<1x32x32xf32, #tpu.memory_space<vmem>>, vector<1x32x32xf32>,
    return
  }
  func.func @transform_0(%arg0: i32) -> (i32, i32, i32) {
    %c0_i32 = arith.constant 0 : i32
    %c0_i32_0 = arith.constant 0 : i32
    %c0_i32_1 = arith.constant 0 : i32
    return %arg0, %c0_i32, %c0_i32_0 : i32, i32, i32
  }
  func.func @transform_1(%arg0: i32) -> (i32, i32, i32) {
    %c0_i32 = arith.constant 0 : i32
    %c0_i32_0 = arith.constant 0 : i32
    %c0_i32_1 = arith.constant 0 : i32
    return %arg0, %c0_i32, %c0_i32_0 : i32, i32, i32
  }
  func.func @transform_2(%arg0: i32) -> (i32, i32, i32) {
    %c0_i32 = arith.constant 0 : i32
    %c0_i32_0 = arith.constant 0 : i32
    %c0_i32_1 = arith.constant 0 : i32
    return %arg0, %c0_i32, %c0_i32_0 : i32, i32, i32
  }
  func.func @transform_3(%arg0: i32) -> (i32, i32, i32) {
    %c0_i32 = arith.constant 0 : i32
    %c0_i32_0 = arith.constant 0 : i32
    %c0_i32_1 = arith.constant 0 : i32
    return %arg0, %c0_i32, %c0_i32_0 : i32, i32, i32
  }
}

module attributes {stable_mosaic.version = 11 : i64} {
  func.func @_band_transformer_kernel(%arg0: i32, %arg1: memref<1x18x32xf32, #tpu.memory_space<vmem>>, %arg2: memref<1x2x32xf32, #tpu.memory_space<vmem>>, %arg3: memref<1x2x32xf32, #tpu.memory_space<vmem>>, %arg4: memref<1x2x32x32xf32, #tpu.memory_space<vmem>>, %arg5: memref<1x2x32xf32, #tpu.memory_space<vmem>>, %arg6: memref<1x2x32x32xf32, #tpu.memory_space<vmem>>, %arg7: memref<1x2x32xf32, #tpu.memory_space<vmem>>, %arg8: memref<1x2x32x32xf32, #tpu.memory_space<vmem>>, %arg9: memref<1x2x32xf32, #tpu.memory_space<vmem>>, %arg10: memref<1x2x32x32xf32, #tpu.memory_space<vmem>>, %arg11: memref<1x2x32xf32, #tpu.memory_space<vmem>>, %arg12: memref<1x2x32xf32, #tpu.memory_space<vmem>>, %arg13: memref<1x2x32xf32, #tpu.memory_space<vmem>>, %arg14: memref<1x2x32x128xf32, #tpu.memory_space<vmem>>, %arg15: memref<1x2x128xf32, #tpu.memory_space<vmem>>, %arg16: memref<1x2x128x32xf32, #tpu.memory_space<vmem>>, %arg17: memref<1x2x32xf32, #tpu.memory_space<vmem>>, %arg18: memref<1x1x32xf32, #tpu.memory_space<vmem>>, %arg19: memref<1x1x32xf32, #tpu.memory_space<vmem>>, %arg20: memref<1x32x16xf32, #tpu.memory_space<vmem>>, %arg21: memref<1x1x16xf32, #tpu.memory_space<vmem>>, %arg22: memref<1x18x16xf32, #tpu.memory_space<vmem>>) attributes {dimension_semantics = [#tpu.dimension_semantics<parallel>], iteration_bounds = array<i64: 6>, scalar_prefetch = 0 : i64, scratch_operands = 0 : i64, tpu.core_type = #tpu.core_type<tc>, window_params = [{transform_indices = @transform_0, window_bounds = array<i64: 1, 18, 32>}, {transform_indices = @transform_1, window_bounds = array<i64: 1, 2, 32>}, {transform_indices = @transform_2, window_bounds = array<i64: 1, 2, 32>}, {transform_indices = @transform_3, window_bounds = array<i64: 1, 2, 32, 32>}, {transform_indices = @transform_4, window_bounds = array<i64: 1, 2, 32>}, {transform_indices = @transform_5, window_bounds = array<i64: 1, 2, 32, 32>}, {transform_indices = @transform_6, window_bounds = array<i64: 1, 2, 32>}, {transform_indices = @transform_7, window_bounds = array<i64: 1, 2, 32, 32>}, {transform_indices = @transform_8, window_bounds = array<i64: 1, 2, 32>}, {transform_indices = @transform_9, window_bounds = array<i64: 1, 2, 32, 32>}, {transform_indices = @transform_10, window_bounds = array<i64: 1, 2, 32>}, {transform_indices = @transform_11, window_bounds = array<i64: 1, 2, 32>}, {transform_indices = @transform_12, window_bounds = array<i64: 1, 2, 32>}, {transform_indices = @transform_13, window_bounds = array<i64: 1, 2, 32, 128>}, {transform_indices = @transform_14, window_bounds = array<i64: 1, 2, 128>}, {transform_indices = @transform_15, window_bounds = array<i64: 1, 2, 128, 32>}, {transform_indices = @transform_16, window_bounds = array<i64: 1, 2, 32>}, {transform_indices = @transform_17, window_bounds = array<i64: 1, 1, 32>}, {transform_indices = @transform_18, window_bounds = array<i64: 1, 1, 32>}, {transform_indices = @transform_19, window_bounds = array<i64: 1, 32, 16>}, {transform_indices = @transform_20, window_bounds = array<i64: 1, 1, 16>}, {transform_indices = @transform_21, window_bounds = array<i64: 1, 18, 16>}]} {
    %c0 = arith.constant 0 : index
    %c0_0 = arith.constant 0 : index
    %c0_1 = arith.constant 0 : index
    %0 = vector.load %arg1[%c0, %c0_0, %c0_1] : memref<1x18x32xf32, #tpu.memory_space<vmem>>, vector<1x18x32xf32>
    %1 = vector.shape_cast %0 : vector<1x18x32xf32> to vector<18x32xf32>
    %2 = tpu.iota {dimensions = array<i32: 1>} : vector<1x32xi32>
    %c0_i32 = arith.constant 0 : i32
    %3 = vector.broadcast %c0_i32 : i32 to vector<1x32xi32>
    %4 = arith.cmpi sge, %2, %3 : vector<1x32xi32>
    %c8_i32 = arith.constant 8 : i32
    %5 = vector.broadcast %c8_i32 : i32 to vector<1x32xi32>
    %6 = arith.cmpi slt, %2, %5 : vector<1x32xi32>
    %7 = arith.andi %4, %6 : vector<1x32xi1>
    %8 = arith.extui %7 : vector<1x32xi1> to vector<1x32xi32>
    %9 = arith.sitofp %8 : vector<1x32xi32> to vector<1x32xf32>
    %c8_i32_2 = arith.constant 8 : i32
    %10 = vector.broadcast %c8_i32_2 : i32 to vector<1x32xi32>
    %11 = arith.cmpi sge, %2, %10 : vector<1x32xi32>
    %c16_i32 = arith.constant 16 : i32
    %12 = vector.broadcast %c16_i32 : i32 to vector<1x32xi32>
    %13 = arith.cmpi slt, %2, %12 : vector<1x32xi32>
    %14 = arith.andi %11, %13 : vector<1x32xi1>
    %15 = arith.extui %14 : vector<1x32xi1> to vector<1x32xi32>
    %16 = arith.sitofp %15 : vector<1x32xi32> to vector<1x32xf32>
    %c16_i32_3 = arith.constant 16 : i32
    %17 = vector.broadcast %c16_i32_3 : i32 to vector<1x32xi32>
    %18 = arith.cmpi sge, %2, %17 : vector<1x32xi32>
    %c24_i32 = arith.constant 24 : i32
    %19 = vector.broadcast %c24_i32 : i32 to vector<1x32xi32>
    %20 = arith.cmpi slt, %2, %19 : vector<1x32xi32>
    %21 = arith.andi %18, %20 : vector<1x32xi1>
    %22 = arith.extui %21 : vector<1x32xi1> to vector<1x32xi32>
    %23 = arith.sitofp %22 : vector<1x32xi32> to vector<1x32xf32>
    %c24_i32_4 = arith.constant 24 : i32
    %24 = vector.broadcast %c24_i32_4 : i32 to vector<1x32xi32>
    %25 = arith.cmpi sge, %2, %24 : vector<1x32xi32>
    %c32_i32 = arith.constant 32 : i32
    %26 = vector.broadcast %c32_i32 : i32 to vector<1x32xi32>
    %27 = arith.cmpi slt, %2, %26 : vector<1x32xi32>
    %28 = arith.andi %25, %27 : vector<1x32xi1>
    %29 = arith.extui %28 : vector<1x32xi1> to vector<1x32xi32>
    %30 = arith.sitofp %29 : vector<1x32xi32> to vector<1x32xf32>
    %31 = tpu.iota {dimensions = array<i32: 0>} : vector<18x18xi32>
    %32 = tpu.iota {dimensions = array<i32: 1>} : vector<18x18xi32>
    %c0_i32_5 = arith.constant 0 : i32
    %33 = vector.broadcast %c0_i32_5 : i32 to vector<18x18xi32>
    %34 = arith.cmpi sge, %31, %33 : vector<18x18xi32>
    %c9_i32 = arith.constant 9 : i32
    %35 = vector.broadcast %c9_i32 : i32 to vector<18x18xi32>
    %36 = arith.cmpi slt, %31, %35 : vector<18x18xi32>
    %37 = arith.andi %34, %36 : vector<18x18xi1>
    %c0_i32_6 = arith.constant 0 : i32
    %38 = vector.broadcast %c0_i32_6 : i32 to vector<18x18xi32>
    %39 = arith.cmpi sge, %32, %38 : vector<18x18xi32>
    %c9_i32_7 = arith.constant 9 : i32
    %40 = vector.broadcast %c9_i32_7 : i32 to vector<18x18xi32>
    %41 = arith.cmpi slt, %32, %40 : vector<18x18xi32>
    %42 = arith.andi %39, %41 : vector<18x18xi1>
    %43 = arith.andi %37, %42 : vector<18x18xi1>
    %c9_i32_8 = arith.constant 9 : i32
    %44 = vector.broadcast %c9_i32_8 : i32 to vector<18x18xi32>
    %45 = arith.cmpi sge, %31, %44 : vector<18x18xi32>
    %c18_i32 = arith.constant 18 : i32
    %46 = vector.broadcast %c18_i32 : i32 to vector<18x18xi32>
    %47 = arith.cmpi slt, %31, %46 : vector<18x18xi32>
    %48 = arith.andi %45, %47 : vector<18x18xi1>
    %c9_i32_9 = arith.constant 9 : i32
    %49 = vector.broadcast %c9_i32_9 : i32 to vector<18x18xi32>
    %50 = arith.cmpi sge, %32, %49 : vector<18x18xi32>
    %c18_i32_10 = arith.constant 18 : i32
    %51 = vector.broadcast %c18_i32_10 : i32 to vector<18x18xi32>
    %52 = arith.cmpi slt, %32, %51 : vector<18x18xi32>
    %53 = arith.andi %50, %52 : vector<18x18xi1>
    %54 = arith.andi %48, %53 : vector<18x18xi1>
    %55 = arith.ori %43, %54 : vector<18x18xi1>
    %c0_11 = arith.constant 0 : index
    %c0_12 = arith.constant 0 : index
    %c0_13 = arith.constant 0 : index
    %56 = vector.load %arg2[%c0_11, %c0_12, %c0_13] : memref<1x2x32xf32, #tpu.memory_space<vmem>>, vector<1x2x32xf32>
    %57 = vector.shape_cast %56 : vector<1x2x32xf32> to vector<2x32xf32>
    %c0_14 = arith.constant 0 : index
    %c0_15 = arith.constant 0 : index
    %c0_16 = arith.constant 0 : index
    %58 = vector.load %arg3[%c0_14, %c0_15, %c0_16] : memref<1x2x32xf32, #tpu.memory_space<vmem>>, vector<1x2x32xf32>
    %59 = vector.shape_cast %58 : vector<1x2x32xf32> to vector<2x32xf32>
    %c0_17 = arith.constant 0 : index
    %c0_18 = arith.constant 0 : index
    %c0_19 = arith.constant 0 : index
    %60 = vector.load %arg12[%c0_17, %c0_18, %c0_19] : memref<1x2x32xf32, #tpu.memory_space<vmem>>, vector<1x2x32xf32>
    %61 = vector.shape_cast %60 : vector<1x2x32xf32> to vector<2x32xf32>
    %c0_20 = arith.constant 0 : index
    %c0_21 = arith.constant 0 : index
    %c0_22 = arith.constant 0 : index
    %62 = vector.load %arg13[%c0_20, %c0_21, %c0_22] : memref<1x2x32xf32, #tpu.memory_space<vmem>>, vector<1x2x32xf32>
    %63 = vector.shape_cast %62 : vector<1x2x32xf32> to vector<2x32xf32>
    %c0_23 = arith.constant 0 : index
    %c0_24 = arith.constant 0 : index
    %c0_25 = arith.constant 0 : index
    %c0_26 = arith.constant 0 : index
    %64 = vector.load %arg4[%c0_23, %c0_24, %c0_25, %c0_26] : memref<1x2x32x32xf32, #tpu.memory_space<vmem>>, vector<1x2x32x32xf32>
    %65 = vector.shape_cast %64 : vector<1x2x32x32xf32> to vector<2x32x32xf32>
    %c0_27 = arith.constant 0 : index
    %c0_28 = arith.constant 0 : index
    %c0_29 = arith.constant 0 : index
    %66 = vector.load %arg5[%c0_27, %c0_28, %c0_29] : memref<1x2x32xf32, #tpu.memory_space<vmem>>, vector<1x2x32xf32>
    %67 = vector.shape_cast %66 : vector<1x2x32xf32> to vector<2x32xf32>
    %c0_30 = arith.constant 0 : index
    %c0_31 = arith.constant 0 : index
    %c0_32 = arith.constant 0 : index
    %c0_33 = arith.constant 0 : index
    %68 = vector.load %arg6[%c0_30, %c0_31, %c0_32, %c0_33] : memref<1x2x32x32xf32, #tpu.memory_space<vmem>>, vector<1x2x32x32xf32>
    %69 = vector.shape_cast %68 : vector<1x2x32x32xf32> to vector<2x32x32xf32>
    %c0_34 = arith.constant 0 : index
    %c0_35 = arith.constant 0 : index
    %c0_36 = arith.constant 0 : index
    %70 = vector.load %arg7[%c0_34, %c0_35, %c0_36] : memref<1x2x32xf32, #tpu.memory_space<vmem>>, vector<1x2x32xf32>
    %71 = vector.shape_cast %70 : vector<1x2x32xf32> to vector<2x32xf32>
    %c0_37 = arith.constant 0 : index
    %c0_38 = arith.constant 0 : index
    %c0_39 = arith.constant 0 : index
    %c0_40 = arith.constant 0 : index
    %72 = vector.load %arg8[%c0_37, %c0_38, %c0_39, %c0_40] : memref<1x2x32x32xf32, #tpu.memory_space<vmem>>, vector<1x2x32x32xf32>
    %73 = vector.shape_cast %72 : vector<1x2x32x32xf32> to vector<2x32x32xf32>
    %c0_41 = arith.constant 0 : index
    %c0_42 = arith.constant 0 : index
    %c0_43 = arith.constant 0 : index
    %74 = vector.load %arg9[%c0_41, %c0_42, %c0_43] : memref<1x2x32xf32, #tpu.memory_space<vmem>>, vector<1x2x32xf32>
    %75 = vector.shape_cast %74 : vector<1x2x32xf32> to vector<2x32xf32>
    %c0_44 = arith.constant 0 : index
    %c0_45 = arith.constant 0 : index
    %c0_46 = arith.constant 0 : index
    %c0_47 = arith.constant 0 : index
    %76 = vector.load %arg10[%c0_44, %c0_45, %c0_46, %c0_47] : memref<1x2x32x32xf32, #tpu.memory_space<vmem>>, vector<1x2x32x32xf32>
    %77 = vector.shape_cast %76 : vector<1x2x32x32xf32> to vector<2x32x32xf32>
    %c0_48 = arith.constant 0 : index
    %c0_49 = arith.constant 0 : index
    %c0_50 = arith.constant 0 : index
    %78 = vector.load %arg11[%c0_48, %c0_49, %c0_50] : memref<1x2x32xf32, #tpu.memory_space<vmem>>, vector<1x2x32xf32>
    %79 = vector.shape_cast %78 : vector<1x2x32xf32> to vector<2x32xf32>
    %c0_51 = arith.constant 0 : index
    %c0_52 = arith.constant 0 : index
    %c0_53 = arith.constant 0 : index
    %c0_54 = arith.constant 0 : index
    %80 = vector.load %arg14[%c0_51, %c0_52, %c0_53, %c0_54] : memref<1x2x32x128xf32, #tpu.memory_space<vmem>>, vector<1x2x32x128xf32>
    %81 = vector.shape_cast %80 : vector<1x2x32x128xf32> to vector<2x32x128xf32>
    %c0_55 = arith.constant 0 : index
    %c0_56 = arith.constant 0 : index
    %c0_57 = arith.constant 0 : index
    %82 = vector.load %arg15[%c0_55, %c0_56, %c0_57] : memref<1x2x128xf32, #tpu.memory_space<vmem>>, vector<1x2x128xf32>
    %83 = vector.shape_cast %82 : vector<1x2x128xf32> to vector<2x128xf32>
    %c0_58 = arith.constant 0 : index
    %c0_59 = arith.constant 0 : index
    %c0_60 = arith.constant 0 : index
    %c0_61 = arith.constant 0 : index
    %84 = vector.load %arg16[%c0_58, %c0_59, %c0_60, %c0_61] : memref<1x2x128x32xf32, #tpu.memory_space<vmem>>, vector<1x2x128x32xf32>
    %85 = vector.shape_cast %84 : vector<1x2x128x32xf32> to vector<2x128x32xf32>
    %c0_62 = arith.constant 0 : index
    %c0_63 = arith.constant 0 : index
    %c0_64 = arith.constant 0 : index
    %86 = vector.load %arg17[%c0_62, %c0_63, %c0_64] : memref<1x2x32xf32, #tpu.memory_space<vmem>>, vector<1x2x32xf32>
    %87 = vector.shape_cast %86 : vector<1x2x32xf32> to vector<2x32xf32>
    %88 = vector.extract_strided_slice %57 {offsets = [0, 0], sizes = [1, 32], strides = [1, 1]} : vector<2x32xf32> to vector<1x32xf32>
    %89 = vector.extract_strided_slice %59 {offsets = [0, 0], sizes = [1, 32], strides = [1, 1]} : vector<2x32xf32> to vector<1x32xf32>
    %cst = arith.constant dense<0.000000e+00> : vector<18xf32>
    %90 = vector.multi_reduction <add>, %1, %cst [1] : vector<18x32xf32> to vector<18xf32>
    %91 = vector.shape_cast %90 : vector<18xf32> to vector<18x1xf32>
    %cst_65 = arith.constant 3.200000e+01 : f32
    %92 = vector.broadcast %cst_65 : f32 to vector<18x1xf32>
    %93 = arith.divf %91, %92 : vector<18x1xf32>
    %94 = vector.broadcast %93 : vector<18x1xf32> to vector<18x32xf32>
    %95 = arith.subf %1, %94 : vector<18x32xf32>
    %96 = arith.mulf %95, %95 : vector<18x32xf32>
    %cst_66 = arith.constant dense<0.000000e+00> : vector<18xf32>
    %97 = vector.multi_reduction <add>, %96, %cst_66 [1] : vector<18x32xf32> to vector<18xf32>
    %98 = vector.shape_cast %97 : vector<18xf32> to vector<18x1xf32>
    %cst_67 = arith.constant 3.200000e+01 : f32
    %99 = vector.broadcast %cst_67 : f32 to vector<18x1xf32>
    %100 = arith.divf %98, %99 : vector<18x1xf32>
    %cst_68 = arith.constant 9.99999974E-6 : f32
    %101 = vector.broadcast %cst_68 : f32 to vector<18x1xf32>
    %102 = arith.addf %100, %101 : vector<18x1xf32>
    %103 = math.rsqrt %102 : vector<18x1xf32>
    %104 = vector.broadcast %103 : vector<18x1xf32> to vector<18x32xf32>
    %105 = arith.mulf %95, %104 : vector<18x32xf32>
    %106 = vector.broadcast %88 : vector<1x32xf32> to vector<18x32xf32>
    %107 = arith.mulf %105, %106 : vector<18x32xf32>
    %108 = vector.broadcast %89 : vector<1x32xf32> to vector<18x32xf32>
    %109 = arith.addf %107, %108 : vector<18x32xf32>
    %110 = vector.extract_strided_slice %65 {offsets = [0, 0, 0], sizes = [1, 32, 32], strides = [1, 1, 1]} : vector<2x32x32xf32> to vector<1x32x32xf32>
    %111 = vector.shape_cast %110 : vector<1x32x32xf32> to vector<32x32xf32>
    %cst_69 = arith.constant dense<0.000000e+00> : vector<18x32xf32>
    %112 = tpu.matmul %109, %111, %cst_69 {dimension_numbers = #tpu.dot_dimension_numbers<[1], [0], [0], [1], [0, 0, 1, 1], [], []>} : vector<18x32xf32>, vector<32x32xf32>, vector<18x32xf32> -> vector<18x32xf32>
    %113 = vector.extract_strided_slice %67 {offsets = [0, 0], sizes = [1, 32], strides = [1, 1]} : vector<2x32xf32> to vector<1x32xf32>
    %114 = vector.broadcast %113 : vector<1x32xf32> to vector<18x32xf32>
    %115 = arith.addf %112, %114 : vector<18x32xf32>
    %116 = vector.extract_strided_slice %69 {offsets = [0, 0, 0], sizes = [1, 32, 32], strides = [1, 1, 1]} : vector<2x32x32xf32> to vector<1x32x32xf32>
    %117 = vector.shape_cast %116 : vector<1x32x32xf32> to vector<32x32xf32>
    %cst_70 = arith.constant dense<0.000000e+00> : vector<18x32xf32>
    %118 = tpu.matmul %109, %117, %cst_70 {dimension_numbers = #tpu.dot_dimension_numbers<[1], [0], [0], [1], [0, 0, 1, 1], [], []>} : vector<18x32xf32>, vector<32x32xf32>, vector<18x32xf32> -> vector<18x32xf32>
    %119 = vector.extract_strided_slice %71 {offsets = [0, 0], sizes = [1, 32], strides = [1, 1]} : vector<2x32xf32> to vector<1x32xf32>
    %120 = vector.broadcast %119 : vector<1x32xf32> to vector<18x32xf32>
    %121 = arith.addf %118, %120 : vector<18x32xf32>
    %122 = vector.extract_strided_slice %73 {offsets = [0, 0, 0], sizes = [1, 32, 32], strides = [1, 1, 1]} : vector<2x32x32xf32> to vector<1x32x32xf32>
    %123 = vector.shape_cast %122 : vector<1x32x32xf32> to vector<32x32xf32>
    %cst_71 = arith.constant dense<0.000000e+00> : vector<18x32xf32>
    %124 = tpu.matmul %109, %123, %cst_71 {dimension_numbers = #tpu.dot_dimension_numbers<[1], [0], [0], [1], [0, 0, 1, 1], [], []>} : vector<18x32xf32>, vector<32x32xf32>, vector<18x32xf32> -> vector<18x32xf32>
    %125 = vector.extract_strided_slice %75 {offsets = [0, 0], sizes = [1, 32], strides = [1, 1]} : vector<2x32xf32> to vector<1x32xf32>
    %126 = vector.broadcast %125 : vector<1x32xf32> to vector<18x32xf32>
    %127 = arith.addf %124, %126 : vector<18x32xf32>
    %cst_72 = arith.constant 0.000000e+00 : f32
    %128 = vector.broadcast %cst_72 : f32 to vector<18x32xf32>
    %129 = vector.broadcast %9 : vector<1x32xf32> to vector<18x32xf32>
    %130 = arith.mulf %115, %129 : vector<18x32xf32>
    %131 = vector.broadcast %9 : vector<1x32xf32> to vector<18x32xf32>
    %132 = arith.mulf %121, %131 : vector<18x32xf32>
    %cst_73 = arith.constant dense<0.000000e+00> : vector<18x18xf32>
    %133 = tpu.matmul %130, %132, %cst_73 {dimension_numbers = #tpu.dot_dimension_numbers<[1], [1], [0], [0], [0, 0, 1, 0], [], []>} : vector<18x32xf32>, vector<18x32xf32>, vector<18x18xf32> -> vector<18x18xf32>
    %cst_74 = arith.constant 0.353553385 : f32
    %134 = vector.broadcast %cst_74 : f32 to vector<18x18xf32>
    %135 = arith.mulf %133, %134 : vector<18x18xf32>
    %cst_75 = arith.constant -1.000000e+30 : f32
    %136 = vector.broadcast %cst_75 : f32 to vector<18x18xf32>
    %137 = arith.select %55, %135, %136 : vector<18x18xi1>, vector<18x18xf32>
    %cst_76 = arith.constant dense<0xFF800000> : vector<18xf32>
    %138 = vector.multi_reduction <maximumf>, %137, %cst_76 [1] : vector<18x18xf32> to vector<18xf32>
    %139 = vector.shape_cast %138 : vector<18xf32> to vector<18x1xf32>
    %140 = vector.broadcast %139 : vector<18x1xf32> to vector<18x18xf32>
    %141 = arith.subf %137, %140 : vector<18x18xf32>
    %142 = math.exp %141 : vector<18x18xf32>
    %cst_77 = arith.constant dense<0.000000e+00> : vector<18xf32>
    %143 = vector.multi_reduction <add>, %142, %cst_77 [1] : vector<18x18xf32> to vector<18xf32>
    %144 = vector.shape_cast %143 : vector<18xf32> to vector<18x1xf32>
    %145 = tpu.reciprocal %144 {approx = true} : vector<18x1xf32> -> vector<18x1xf32>
    %146 = vector.broadcast %145 : vector<18x1xf32> to vector<18x18xf32>
    %147 = arith.mulf %142, %146 : vector<18x18xf32>
    %148 = vector.broadcast %9 : vector<1x32xf32> to vector<18x32xf32>
    %149 = arith.mulf %127, %148 : vector<18x32xf32>
    %cst_78 = arith.constant dense<0.000000e+00> : vector<18x32xf32>
    %150 = tpu.matmul %147, %149, %cst_78 {dimension_numbers = #tpu.dot_dimension_numbers<[1], [0], [0], [1], [0, 0, 1, 1], [], []>} : vector<18x18xf32>, vector<18x32xf32>, vector<18x32xf32> -> vector<18x32xf32>
    %151 = arith.addf %128, %150 : vector<18x32xf32>
    %152 = vector.broadcast %16 : vector<1x32xf32> to vector<18x32xf32>
    %153 = arith.mulf %115, %152 : vector<18x32xf32>
    %154 = vector.broadcast %16 : vector<1x32xf32> to vector<18x32xf32>
    %155 = arith.mulf %121, %154 : vector<18x32xf32>
    %cst_79 = arith.constant dense<0.000000e+00> : vector<18x18xf32>
    %156 = tpu.matmul %153, %155, %cst_79 {dimension_numbers = #tpu.dot_dimension_numbers<[1], [1], [0], [0], [0, 0, 1, 0], [], []>} : vector<18x32xf32>, vector<18x32xf32>, vector<18x18xf32> -> vector<18x18xf32>
    %cst_80 = arith.constant 0.353553385 : f32
    %157 = vector.broadcast %cst_80 : f32 to vector<18x18xf32>
    %158 = arith.mulf %156, %157 : vector<18x18xf32>
    %cst_81 = arith.constant -1.000000e+30 : f32
    %159 = vector.broadcast %cst_81 : f32 to vector<18x18xf32>
    %160 = arith.select %55, %158, %159 : vector<18x18xi1>, vector<18x18xf32>
    %cst_82 = arith.constant dense<0xFF800000> : vector<18xf32>
    %161 = vector.multi_reduction <maximumf>, %160, %cst_82 [1] : vector<18x18xf32> to vector<18xf32>
    %162 = vector.shape_cast %161 : vector<18xf32> to vector<18x1xf32>
    %163 = vector.broadcast %162 : vector<18x1xf32> to vector<18x18xf32>
    %164 = arith.subf %160, %163 : vector<18x18xf32>
    %165 = math.exp %164 : vector<18x18xf32>
    %cst_83 = arith.constant dense<0.000000e+00> : vector<18xf32>
    %166 = vector.multi_reduction <add>, %165, %cst_83 [1] : vector<18x18xf32> to vector<18xf32>
    %167 = vector.shape_cast %166 : vector<18xf32> to vector<18x1xf32>
    %168 = tpu.reciprocal %167 {approx = true} : vector<18x1xf32> -> vector<18x1xf32>
    %169 = vector.broadcast %168 : vector<18x1xf32> to vector<18x18xf32>
    %170 = arith.mulf %165, %169 : vector<18x18xf32>
    %171 = vector.broadcast %16 : vector<1x32xf32> to vector<18x32xf32>
    %172 = arith.mulf %127, %171 : vector<18x32xf32>
    %cst_84 = arith.constant dense<0.000000e+00> : vector<18x32xf32>
    %173 = tpu.matmul %170, %172, %cst_84 {dimension_numbers = #tpu.dot_dimension_numbers<[1], [0], [0], [1], [0, 0, 1, 1], [], []>} : vector<18x18xf32>, vector<18x32xf32>, vector<18x32xf32> -> vector<18x32xf32>
    %174 = arith.addf %151, %173 : vector<18x32xf32>
    %175 = vector.broadcast %23 : vector<1x32xf32> to vector<18x32xf32>
    %176 = arith.mulf %115, %175 : vector<18x32xf32>
    %177 = vector.broadcast %23 : vector<1x32xf32> to vector<18x32xf32>
    %178 = arith.mulf %121, %177 : vector<18x32xf32>
    %cst_85 = arith.constant dense<0.000000e+00> : vector<18x18xf32>
    %179 = tpu.matmul %176, %178, %cst_85 {dimension_numbers = #tpu.dot_dimension_numbers<[1], [1], [0], [0], [0, 0, 1, 0], [], []>} : vector<18x32xf32>, vector<18x32xf32>, vector<18x18xf32> -> vector<18x18xf32>
    %cst_86 = arith.constant 0.353553385 : f32
    %180 = vector.broadcast %cst_86 : f32 to vector<18x18xf32>
    %181 = arith.mulf %179, %180 : vector<18x18xf32>
    %cst_87 = arith.constant -1.000000e+30 : f32
    %182 = vector.broadcast %cst_87 : f32 to vector<18x18xf32>
    %183 = arith.select %55, %181, %182 : vector<18x18xi1>, vector<18x18xf32>
    %cst_88 = arith.constant dense<0xFF800000> : vector<18xf32>
    %184 = vector.multi_reduction <maximumf>, %183, %cst_88 [1] : vector<18x18xf32> to vector<18xf32>
    %185 = vector.shape_cast %184 : vector<18xf32> to vector<18x1xf32>
    %186 = vector.broadcast %185 : vector<18x1xf32> to vector<18x18xf32>
    %187 = arith.subf %183, %186 : vector<18x18xf32>
    %188 = math.exp %187 : vector<18x18xf32>
    %cst_89 = arith.constant dense<0.000000e+00> : vector<18xf32>
    %189 = vector.multi_reduction <add>, %188, %cst_89 [1] : vector<18x18xf32> to vector<18xf32>
    %190 = vector.shape_cast %189 : vector<18xf32> to vector<18x1xf32>
    %191 = tpu.reciprocal %190 {approx = true} : vector<18x1xf32> -> vector<18x1xf32>
    %192 = vector.broadcast %191 : vector<18x1xf32> to vector<18x18xf32>
    %193 = arith.mulf %188, %192 : vector<18x18xf32>
    %194 = vector.broadcast %23 : vector<1x32xf32> to vector<18x32xf32>
    %195 = arith.mulf %127, %194 : vector<18x32xf32>
    %cst_90 = arith.constant dense<0.000000e+00> : vector<18x32xf32>
    %196 = tpu.matmul %193, %195, %cst_90 {dimension_numbers = #tpu.dot_dimension_numbers<[1], [0], [0], [1], [0, 0, 1, 1], [], []>} : vector<18x18xf32>, vector<18x32xf32>, vector<18x32xf32> -> vector<18x32xf32>
    %197 = arith.addf %174, %196 : vector<18x32xf32>
    %198 = vector.broadcast %30 : vector<1x32xf32> to vector<18x32xf32>
    %199 = arith.mulf %115, %198 : vector<18x32xf32>
    %200 = vector.broadcast %30 : vector<1x32xf32> to vector<18x32xf32>
    %201 = arith.mulf %121, %200 : vector<18x32xf32>
    %cst_91 = arith.constant dense<0.000000e+00> : vector<18x18xf32>
    %202 = tpu.matmul %199, %201, %cst_91 {dimension_numbers = #tpu.dot_dimension_numbers<[1], [1], [0], [0], [0, 0, 1, 0], [], []>} : vector<18x32xf32>, vector<18x32xf32>, vector<18x18xf32> -> vector<18x18xf32>
    %cst_92 = arith.constant 0.353553385 : f32
    %203 = vector.broadcast %cst_92 : f32 to vector<18x18xf32>
    %204 = arith.mulf %202, %203 : vector<18x18xf32>
    %cst_93 = arith.constant -1.000000e+30 : f32
    %205 = vector.broadcast %cst_93 : f32 to vector<18x18xf32>
    %206 = arith.select %55, %204, %205 : vector<18x18xi1>, vector<18x18xf32>
    %cst_94 = arith.constant dense<0xFF800000> : vector<18xf32>
    %207 = vector.multi_reduction <maximumf>, %206, %cst_94 [1] : vector<18x18xf32> to vector<18xf32>
    %208 = vector.shape_cast %207 : vector<18xf32> to vector<18x1xf32>
    %209 = vector.broadcast %208 : vector<18x1xf32> to vector<18x18xf32>
    %210 = arith.subf %206, %209 : vector<18x18xf32>
    %211 = math.exp %210 : vector<18x18xf32>
    %cst_95 = arith.constant dense<0.000000e+00> : vector<18xf32>
    %212 = vector.multi_reduction <add>, %211, %cst_95 [1] : vector<18x18xf32> to vector<18xf32>
    %213 = vector.shape_cast %212 : vector<18xf32> to vector<18x1xf32>
    %214 = tpu.reciprocal %213 {approx = true} : vector<18x1xf32> -> vector<18x1xf32>
    %215 = vector.broadcast %214 : vector<18x1xf32> to vector<18x18xf32>
    %216 = arith.mulf %211, %215 : vector<18x18xf32>
    %217 = vector.broadcast %30 : vector<1x32xf32> to vector<18x32xf32>
    %218 = arith.mulf %127, %217 : vector<18x32xf32>
    %cst_96 = arith.constant dense<0.000000e+00> : vector<18x32xf32>
    %219 = tpu.matmul %216, %218, %cst_96 {dimension_numbers = #tpu.dot_dimension_numbers<[1], [0], [0], [1], [0, 0, 1, 1], [], []>} : vector<18x18xf32>, vector<18x32xf32>, vector<18x32xf32> -> vector<18x32xf32>
    %220 = arith.addf %197, %219 : vector<18x32xf32>
    %221 = vector.extract_strided_slice %77 {offsets = [0, 0, 0], sizes = [1, 32, 32], strides = [1, 1, 1]} : vector<2x32x32xf32> to vector<1x32x32xf32>
    %222 = vector.shape_cast %221 : vector<1x32x32xf32> to vector<32x32xf32>
    %cst_97 = arith.constant dense<0.000000e+00> : vector<18x32xf32>
    %223 = tpu.matmul %220, %222, %cst_97 {dimension_numbers = #tpu.dot_dimension_numbers<[1], [0], [0], [1], [0, 0, 1, 1], [], []>} : vector<18x32xf32>, vector<32x32xf32>, vector<18x32xf32> -> vector<18x32xf32>
    %224 = vector.extract_strided_slice %79 {offsets = [0, 0], sizes = [1, 32], strides = [1, 1]} : vector<2x32xf32> to vector<1x32xf32>
    %225 = vector.broadcast %224 : vector<1x32xf32> to vector<18x32xf32>
    %226 = arith.addf %223, %225 : vector<18x32xf32>
    %227 = arith.addf %1, %226 : vector<18x32xf32>
    %228 = vector.extract_strided_slice %61 {offsets = [0, 0], sizes = [1, 32], strides = [1, 1]} : vector<2x32xf32> to vector<1x32xf32>
    %229 = vector.extract_strided_slice %63 {offsets = [0, 0], sizes = [1, 32], strides = [1, 1]} : vector<2x32xf32> to vector<1x32xf32>
    %cst_98 = arith.constant dense<0.000000e+00> : vector<18xf32>
    %230 = vector.multi_reduction <add>, %227, %cst_98 [1] : vector<18x32xf32> to vector<18xf32>
    %231 = vector.shape_cast %230 : vector<18xf32> to vector<18x1xf32>
    %cst_99 = arith.constant 3.200000e+01 : f32
    %232 = vector.broadcast %cst_99 : f32 to vector<18x1xf32>
    %233 = arith.divf %231, %232 : vector<18x1xf32>
    %234 = vector.broadcast %233 : vector<18x1xf32> to vector<18x32xf32>
    %235 = arith.subf %227, %234 : vector<18x32xf32>
    %236 = arith.mulf %235, %235 : vector<18x32xf32>
    %cst_100 = arith.constant dense<0.000000e+00> : vector<18xf32>
    %237 = vector.multi_reduction <add>, %236, %cst_100 [1] : vector<18x32xf32> to vector<18xf32>
    %238 = vector.shape_cast %237 : vector<18xf32> to vector<18x1xf32>
    %cst_101 = arith.constant 3.200000e+01 : f32
    %239 = vector.broadcast %cst_101 : f32 to vector<18x1xf32>
    %240 = arith.divf %238, %239 : vector<18x1xf32>
    %cst_102 = arith.constant 9.99999974E-6 : f32
    %241 = vector.broadcast %cst_102 : f32 to vector<18x1xf32>
    %242 = arith.addf %240, %241 : vector<18x1xf32>
    %243 = math.rsqrt %242 : vector<18x1xf32>
    %244 = vector.broadcast %243 : vector<18x1xf32> to vector<18x32xf32>
    %245 = arith.mulf %235, %244 : vector<18x32xf32>
    %246 = vector.broadcast %228 : vector<1x32xf32> to vector<18x32xf32>
    %247 = arith.mulf %245, %246 : vector<18x32xf32>
    %248 = vector.broadcast %229 : vector<1x32xf32> to vector<18x32xf32>
    %249 = arith.addf %247, %248 : vector<18x32xf32>
    %250 = vector.extract_strided_slice %81 {offsets = [0, 0, 0], sizes = [1, 32, 128], strides = [1, 1, 1]} : vector<2x32x128xf32> to vector<1x32x128xf32>
    %251 = vector.shape_cast %250 : vector<1x32x128xf32> to vector<32x128xf32>
    %cst_103 = arith.constant dense<0.000000e+00> : vector<18x128xf32>
    %252 = tpu.matmul %249, %251, %cst_103 {dimension_numbers = #tpu.dot_dimension_numbers<[1], [0], [0], [1], [0, 0, 1, 1], [], []>} : vector<18x32xf32>, vector<32x128xf32>, vector<18x128xf32> -> vector<18x128xf32>
    %253 = vector.extract_strided_slice %83 {offsets = [0, 0], sizes = [1, 128], strides = [1, 1]} : vector<2x128xf32> to vector<1x128xf32>
    %254 = vector.broadcast %253 : vector<1x128xf32> to vector<18x128xf32>
    %255 = arith.addf %252, %254 : vector<18x128xf32>
    %256 = arith.mulf %255, %255 : vector<18x128xf32>
    %257 = arith.mulf %255, %256 : vector<18x128xf32>
    %cst_104 = arith.constant 4.471500e-02 : f32
    %258 = vector.broadcast %cst_104 : f32 to vector<18x128xf32>
    %259 = arith.mulf %258, %257 : vector<18x128xf32>
    %260 = arith.addf %255, %259 : vector<18x128xf32>
    %cst_105 = arith.constant 0.797884583 : f32
    %261 = vector.broadcast %cst_105 : f32 to vector<18x128xf32>
    %262 = arith.mulf %261, %260 : vector<18x128xf32>
    %263 = math.tanh %262 : vector<18x128xf32>
    %cst_106 = arith.constant 1.000000e+00 : f32
    %264 = vector.broadcast %cst_106 : f32 to vector<18x128xf32>
    %265 = arith.addf %264, %263 : vector<18x128xf32>
    %cst_107 = arith.constant 5.000000e-01 : f32
    %266 = vector.broadcast %cst_107 : f32 to vector<18x128xf32>
    %267 = arith.mulf %266, %265 : vector<18x128xf32>
    %268 = arith.mulf %255, %267 : vector<18x128xf32>
    %269 = vector.extract_strided_slice %85 {offsets = [0, 0, 0], sizes = [1, 128, 32], strides = [1, 1, 1]} : vector<2x128x32xf32> to vector<1x128x32xf32>
    %270 = vector.shape_cast %269 : vector<1x128x32xf32> to vector<128x32xf32>
    %cst_108 = arith.constant dense<0.000000e+00> : vector<18x32xf32>
    %271 = tpu.matmul %268, %270, %cst_108 {dimension_numbers = #tpu.dot_dimension_numbers<[1], [0], [0], [1], [0, 0, 1, 1], [], []>} : vector<18x128xf32>, vector<128x32xf32>, vector<18x32xf32> -> vector<18x32xf32>
    %272 = vector.extract_strided_slice %87 {offsets = [0, 0], sizes = [1, 32], strides = [1, 1]} : vector<2x32xf32> to vector<1x32xf32>
    %273 = vector.broadcast %272 : vector<1x32xf32> to vector<18x32xf32>
    %274 = arith.addf %271, %273 : vector<18x32xf32>
    %275 = arith.addf %227, %274 : vector<18x32xf32>
    %276 = vector.extract_strided_slice %57 {offsets = [1, 0], sizes = [1, 32], strides = [1, 1]} : vector<2x32xf32> to vector<1x32xf32>
    %277 = vector.extract_strided_slice %59 {offsets = [1, 0], sizes = [1, 32], strides = [1, 1]} : vector<2x32xf32> to vector<1x32xf32>
    %cst_109 = arith.constant dense<0.000000e+00> : vector<18xf32>
    %278 = vector.multi_reduction <add>, %275, %cst_109 [1] : vector<18x32xf32> to vector<18xf32>
    %279 = vector.shape_cast %278 : vector<18xf32> to vector<18x1xf32>
    %cst_110 = arith.constant 3.200000e+01 : f32
    %280 = vector.broadcast %cst_110 : f32 to vector<18x1xf32>
    %281 = arith.divf %279, %280 : vector<18x1xf32>
    %282 = vector.broadcast %281 : vector<18x1xf32> to vector<18x32xf32>
    %283 = arith.subf %275, %282 : vector<18x32xf32>
    %284 = arith.mulf %283, %283 : vector<18x32xf32>
    %cst_111 = arith.constant dense<0.000000e+00> : vector<18xf32>
    %285 = vector.multi_reduction <add>, %284, %cst_111 [1] : vector<18x32xf32> to vector<18xf32>
    %286 = vector.shape_cast %285 : vector<18xf32> to vector<18x1xf32>
    %cst_112 = arith.constant 3.200000e+01 : f32
    %287 = vector.broadcast %cst_112 : f32 to vector<18x1xf32>
    %288 = arith.divf %286, %287 : vector<18x1xf32>
    %cst_113 = arith.constant 9.99999974E-6 : f32
    %289 = vector.broadcast %cst_113 : f32 to vector<18x1xf32>
    %290 = arith.addf %288, %289 : vector<18x1xf32>
    %291 = math.rsqrt %290 : vector<18x1xf32>
    %292 = vector.broadcast %291 : vector<18x1xf32> to vector<18x32xf32>
    %293 = arith.mulf %283, %292 : vector<18x32xf32>
    %294 = vector.broadcast %276 : vector<1x32xf32> to vector<18x32xf32>
    %295 = arith.mulf %293, %294 : vector<18x32xf32>
    %296 = vector.broadcast %277 : vector<1x32xf32> to vector<18x32xf32>
    %297 = arith.addf %295, %296 : vector<18x32xf32>
    %298 = vector.extract_strided_slice %65 {offsets = [1, 0, 0], sizes = [1, 32, 32], strides = [1, 1, 1]} : vector<2x32x32xf32> to vector<1x32x32xf32>
    %299 = vector.shape_cast %298 : vector<1x32x32xf32> to vector<32x32xf32>
    %cst_114 = arith.constant dense<0.000000e+00> : vector<18x32xf32>
    %300 = tpu.matmul %297, %299, %cst_114 {dimension_numbers = #tpu.dot_dimension_numbers<[1], [0], [0], [1], [0, 0, 1, 1], [], []>} : vector<18x32xf32>, vector<32x32xf32>, vector<18x32xf32> -> vector<18x32xf32>
    %301 = vector.extract_strided_slice %67 {offsets = [1, 0], sizes = [1, 32], strides = [1, 1]} : vector<2x32xf32> to vector<1x32xf32>
    %302 = vector.broadcast %301 : vector<1x32xf32> to vector<18x32xf32>
    %303 = arith.addf %300, %302 : vector<18x32xf32>
    %304 = vector.extract_strided_slice %69 {offsets = [1, 0, 0], sizes = [1, 32, 32], strides = [1, 1, 1]} : vector<2x32x32xf32> to vector<1x32x32xf32>
    %305 = vector.shape_cast %304 : vector<1x32x32xf32> to vector<32x32xf32>
    %cst_115 = arith.constant dense<0.000000e+00> : vector<18x32xf32>
    %306 = tpu.matmul %297, %305, %cst_115 {dimension_numbers = #tpu.dot_dimension_numbers<[1], [0], [0], [1], [0, 0, 1, 1], [], []>} : vector<18x32xf32>, vector<32x32xf32>, vector<18x32xf32> -> vector<18x32xf32>
    %307 = vector.extract_strided_slice %71 {offsets = [1, 0], sizes = [1, 32], strides = [1, 1]} : vector<2x32xf32> to vector<1x32xf32>
    %308 = vector.broadcast %307 : vector<1x32xf32> to vector<18x32xf32>
    %309 = arith.addf %306, %308 : vector<18x32xf32>
    %310 = vector.extract_strided_slice %73 {offsets = [1, 0, 0], sizes = [1, 32, 32], strides = [1, 1, 1]} : vector<2x32x32xf32> to vector<1x32x32xf32>
    %311 = vector.shape_cast %310 : vector<1x32x32xf32> to vector<32x32xf32>
    %cst_116 = arith.constant dense<0.000000e+00> : vector<18x32xf32>
    %312 = tpu.matmul %297, %311, %cst_116 {dimension_numbers = #tpu.dot_dimension_numbers<[1], [0], [0], [1], [0, 0, 1, 1], [], []>} : vector<18x32xf32>, vector<32x32xf32>, vector<18x32xf32> -> vector<18x32xf32>
    %313 = vector.extract_strided_slice %75 {offsets = [1, 0], sizes = [1, 32], strides = [1, 1]} : vector<2x32xf32> to vector<1x32xf32>
    %314 = vector.broadcast %313 : vector<1x32xf32> to vector<18x32xf32>
    %315 = arith.addf %312, %314 : vector<18x32xf32>
    %cst_117 = arith.constant 0.000000e+00 : f32
    %316 = vector.broadcast %cst_117 : f32 to vector<18x32xf32>
    %317 = vector.broadcast %9 : vector<1x32xf32> to vector<18x32xf32>
    %318 = arith.mulf %303, %317 : vector<18x32xf32>
    %319 = vector.broadcast %9 : vector<1x32xf32> to vector<18x32xf32>
    %320 = arith.mulf %309, %319 : vector<18x32xf32>
    %cst_118 = arith.constant dense<0.000000e+00> : vector<18x18xf32>
    %321 = tpu.matmul %318, %320, %cst_118 {dimension_numbers = #tpu.dot_dimension_numbers<[1], [1], [0], [0], [0, 0, 1, 0], [], []>} : vector<18x32xf32>, vector<18x32xf32>, vector<18x18xf32> -> vector<18x18xf32>
    %cst_119 = arith.constant 0.353553385 : f32
    %322 = vector.broadcast %cst_119 : f32 to vector<18x18xf32>
    %323 = arith.mulf %321, %322 : vector<18x18xf32>
    %cst_120 = arith.constant -1.000000e+30 : f32
    %324 = vector.broadcast %cst_120 : f32 to vector<18x18xf32>
    %325 = arith.select %55, %323, %324 : vector<18x18xi1>, vector<18x18xf32>
    %cst_121 = arith.constant dense<0xFF800000> : vector<18xf32>
    %326 = vector.multi_reduction <maximumf>, %325, %cst_121 [1] : vector<18x18xf32> to vector<18xf32>
    %327 = vector.shape_cast %326 : vector<18xf32> to vector<18x1xf32>
    %328 = vector.broadcast %327 : vector<18x1xf32> to vector<18x18xf32>
    %329 = arith.subf %325, %328 : vector<18x18xf32>
    %330 = math.exp %329 : vector<18x18xf32>
    %cst_122 = arith.constant dense<0.000000e+00> : vector<18xf32>
    %331 = vector.multi_reduction <add>, %330, %cst_122 [1] : vector<18x18xf32> to vector<18xf32>
    %332 = vector.shape_cast %331 : vector<18xf32> to vector<18x1xf32>
    %333 = tpu.reciprocal %332 {approx = true} : vector<18x1xf32> -> vector<18x1xf32>
    %334 = vector.broadcast %333 : vector<18x1xf32> to vector<18x18xf32>
    %335 = arith.mulf %330, %334 : vector<18x18xf32>
    %336 = vector.broadcast %9 : vector<1x32xf32> to vector<18x32xf32>
    %337 = arith.mulf %315, %336 : vector<18x32xf32>
    %cst_123 = arith.constant dense<0.000000e+00> : vector<18x32xf32>
    %338 = tpu.matmul %335, %337, %cst_123 {dimension_numbers = #tpu.dot_dimension_numbers<[1], [0], [0], [1], [0, 0, 1, 1], [], []>} : vector<18x18xf32>, vector<18x32xf32>, vector<18x32xf32> -> vector<18x32xf32>
    %339 = arith.addf %316, %338 : vector<18x32xf32>
    %340 = vector.broadcast %16 : vector<1x32xf32> to vector<18x32xf32>
    %341 = arith.mulf %303, %340 : vector<18x32xf32>
    %342 = vector.broadcast %16 : vector<1x32xf32> to vector<18x32xf32>
    %343 = arith.mulf %309, %342 : vector<18x32xf32>
    %cst_124 = arith.constant dense<0.000000e+00> : vector<18x18xf32>
    %344 = tpu.matmul %341, %343, %cst_124 {dimension_numbers = #tpu.dot_dimension_numbers<[1], [1], [0], [0], [0, 0, 1, 0], [], []>} : vector<18x32xf32>, vector<18x32xf32>, vector<18x18xf32> -> vector<18x18xf32>
    %cst_125 = arith.constant 0.353553385 : f32
    %345 = vector.broadcast %cst_125 : f32 to vector<18x18xf32>
    %346 = arith.mulf %344, %345 : vector<18x18xf32>
    %cst_126 = arith.constant -1.000000e+30 : f32
    %347 = vector.broadcast %cst_126 : f32 to vector<18x18xf32>
    %348 = arith.select %55, %346, %347 : vector<18x18xi1>, vector<18x18xf32>
    %cst_127 = arith.constant dense<0xFF800000> : vector<18xf32>
    %349 = vector.multi_reduction <maximumf>, %348, %cst_127 [1] : vector<18x18xf32> to vector<18xf32>
    %350 = vector.shape_cast %349 : vector<18xf32> to vector<18x1xf32>
    %351 = vector.broadcast %350 : vector<18x1xf32> to vector<18x18xf32>
    %352 = arith.subf %348, %351 : vector<18x18xf32>
    %353 = math.exp %352 : vector<18x18xf32>
    %cst_128 = arith.constant dense<0.000000e+00> : vector<18xf32>
    %354 = vector.multi_reduction <add>, %353, %cst_128 [1] : vector<18x18xf32> to vector<18xf32>
    %355 = vector.shape_cast %354 : vector<18xf32> to vector<18x1xf32>
    %356 = tpu.reciprocal %355 {approx = true} : vector<18x1xf32> -> vector<18x1xf32>
    %357 = vector.broadcast %356 : vector<18x1xf32> to vector<18x18xf32>
    %358 = arith.mulf %353, %357 : vector<18x18xf32>
    %359 = vector.broadcast %16 : vector<1x32xf32> to vector<18x32xf32>
    %360 = arith.mulf %315, %359 : vector<18x32xf32>
    %cst_129 = arith.constant dense<0.000000e+00> : vector<18x32xf32>
    %361 = tpu.matmul %358, %360, %cst_129 {dimension_numbers = #tpu.dot_dimension_numbers<[1], [0], [0], [1], [0, 0, 1, 1], [], []>} : vector<18x18xf32>, vector<18x32xf32>, vector<18x32xf32> -> vector<18x32xf32>
    %362 = arith.addf %339, %361 : vector<18x32xf32>
    %363 = vector.broadcast %23 : vector<1x32xf32> to vector<18x32xf32>
    %364 = arith.mulf %303, %363 : vector<18x32xf32>
    %365 = vector.broadcast %23 : vector<1x32xf32> to vector<18x32xf32>
    %366 = arith.mulf %309, %365 : vector<18x32xf32>
    %cst_130 = arith.constant dense<0.000000e+00> : vector<18x18xf32>
    %367 = tpu.matmul %364, %366, %cst_130 {dimension_numbers = #tpu.dot_dimension_numbers<[1], [1], [0], [0], [0, 0, 1, 0], [], []>} : vector<18x32xf32>, vector<18x32xf32>, vector<18x18xf32> -> vector<18x18xf32>
    %cst_131 = arith.constant 0.353553385 : f32
    %368 = vector.broadcast %cst_131 : f32 to vector<18x18xf32>
    %369 = arith.mulf %367, %368 : vector<18x18xf32>
    %cst_132 = arith.constant -1.000000e+30 : f32
    %370 = vector.broadcast %cst_132 : f32 to vector<18x18xf32>
    %371 = arith.select %55, %369, %370 : vector<18x18xi1>, vector<18x18xf32>
    %cst_133 = arith.constant dense<0xFF800000> : vector<18xf32>
    %372 = vector.multi_reduction <maximumf>, %371, %cst_133 [1] : vector<18x18xf32> to vector<18xf32>
    %373 = vector.shape_cast %372 : vector<18xf32> to vector<18x1xf32>
    %374 = vector.broadcast %373 : vector<18x1xf32> to vector<18x18xf32>
    %375 = arith.subf %371, %374 : vector<18x18xf32>
    %376 = math.exp %375 : vector<18x18xf32>
    %cst_134 = arith.constant dense<0.000000e+00> : vector<18xf32>
    %377 = vector.multi_reduction <add>, %376, %cst_134 [1] : vector<18x18xf32> to vector<18xf32>
    %378 = vector.shape_cast %377 : vector<18xf32> to vector<18x1xf32>
    %379 = tpu.reciprocal %378 {approx = true} : vector<18x1xf32> -> vector<18x1xf32>
    %380 = vector.broadcast %379 : vector<18x1xf32> to vector<18x18xf32>
    %381 = arith.mulf %376, %380 : vector<18x18xf32>
    %382 = vector.broadcast %23 : vector<1x32xf32> to vector<18x32xf32>
    %383 = arith.mulf %315, %382 : vector<18x32xf32>
    %cst_135 = arith.constant dense<0.000000e+00> : vector<18x32xf32>
    %384 = tpu.matmul %381, %383, %cst_135 {dimension_numbers = #tpu.dot_dimension_numbers<[1], [0], [0], [1], [0, 0, 1, 1], [], []>} : vector<18x18xf32>, vector<18x32xf32>, vector<18x32xf32> -> vector<18x32xf32>
    %385 = arith.addf %362, %384 : vector<18x32xf32>
    %386 = vector.broadcast %30 : vector<1x32xf32> to vector<18x32xf32>
    %387 = arith.mulf %303, %386 : vector<18x32xf32>
    %388 = vector.broadcast %30 : vector<1x32xf32> to vector<18x32xf32>
    %389 = arith.mulf %309, %388 : vector<18x32xf32>
    %cst_136 = arith.constant dense<0.000000e+00> : vector<18x18xf32>
    %390 = tpu.matmul %387, %389, %cst_136 {dimension_numbers = #tpu.dot_dimension_numbers<[1], [1], [0], [0], [0, 0, 1, 0], [], []>} : vector<18x32xf32>, vector<18x32xf32>, vector<18x18xf32> -> vector<18x18xf32>
    %cst_137 = arith.constant 0.353553385 : f32
    %391 = vector.broadcast %cst_137 : f32 to vector<18x18xf32>
    %392 = arith.mulf %390, %391 : vector<18x18xf32>
    %cst_138 = arith.constant -1.000000e+30 : f32
    %393 = vector.broadcast %cst_138 : f32 to vector<18x18xf32>
    %394 = arith.select %55, %392, %393 : vector<18x18xi1>, vector<18x18xf32>
    %cst_139 = arith.constant dense<0xFF800000> : vector<18xf32>
    %395 = vector.multi_reduction <maximumf>, %394, %cst_139 [1] : vector<18x18xf32> to vector<18xf32>
    %396 = vector.shape_cast %395 : vector<18xf32> to vector<18x1xf32>
    %397 = vector.broadcast %396 : vector<18x1xf32> to vector<18x18xf32>
    %398 = arith.subf %394, %397 : vector<18x18xf32>
    %399 = math.exp %398 : vector<18x18xf32>
    %cst_140 = arith.constant dense<0.000000e+00> : vector<18xf32>
    %400 = vector.multi_reduction <add>, %399, %cst_140 [1] : vector<18x18xf32> to vector<18xf32>
    %401 = vector.shape_cast %400 : vector<18xf32> to vector<18x1xf32>
    %402 = tpu.reciprocal %401 {approx = true} : vector<18x1xf32> -> vector<18x1xf32>
    %403 = vector.broadcast %402 : vector<18x1xf32> to vector<18x18xf32>
    %404 = arith.mulf %399, %403 : vector<18x18xf32>
    %405 = vector.broadcast %30 : vector<1x32xf32> to vector<18x32xf32>
    %406 = arith.mulf %315, %405 : vector<18x32xf32>
    %cst_141 = arith.constant dense<0.000000e+00> : vector<18x32xf32>
    %407 = tpu.matmul %404, %406, %cst_141 {dimension_numbers = #tpu.dot_dimension_numbers<[1], [0], [0], [1], [0, 0, 1, 1], [], []>} : vector<18x18xf32>, vector<18x32xf32>, vector<18x32xf32> -> vector<18x32xf32>
    %408 = arith.addf %385, %407 : vector<18x32xf32>
    %409 = vector.extract_strided_slice %77 {offsets = [1, 0, 0], sizes = [1, 32, 32], strides = [1, 1, 1]} : vector<2x32x32xf32> to vector<1x32x32xf32>
    %410 = vector.shape_cast %409 : vector<1x32x32xf32> to vector<32x32xf32>
    %cst_142 = arith.constant dense<0.000000e+00> : vector<18x32xf32>
    %411 = tpu.matmul %408, %410, %cst_142 {dimension_numbers = #tpu.dot_dimension_numbers<[1], [0], [0], [1], [0, 0, 1, 1], [], []>} : vector<18x32xf32>, vector<32x32xf32>, vector<18x32xf32> -> vector<18x32xf32>
    %412 = vector.extract_strided_slice %79 {offsets = [1, 0], sizes = [1, 32], strides = [1, 1]} : vector<2x32xf32> to vector<1x32xf32>
    %413 = vector.broadcast %412 : vector<1x32xf32> to vector<18x32xf32>
    %414 = arith.addf %411, %413 : vector<18x32xf32>
    %415 = arith.addf %275, %414 : vector<18x32xf32>
    %416 = vector.extract_strided_slice %61 {offsets = [1, 0], sizes = [1, 32], strides = [1, 1]} : vector<2x32xf32> to vector<1x32xf32>
    %417 = vector.extract_strided_slice %63 {offsets = [1, 0], sizes = [1, 32], strides = [1, 1]} : vector<2x32xf32> to vector<1x32xf32>
    %cst_143 = arith.constant dense<0.000000e+00> : vector<18xf32>
    %418 = vector.multi_reduction <add>, %415, %cst_143 [1] : vector<18x32xf32> to vector<18xf32>
    %419 = vector.shape_cast %418 : vector<18xf32> to vector<18x1xf32>
    %cst_144 = arith.constant 3.200000e+01 : f32
    %420 = vector.broadcast %cst_144 : f32 to vector<18x1xf32>
    %421 = arith.divf %419, %420 : vector<18x1xf32>
    %422 = vector.broadcast %421 : vector<18x1xf32> to vector<18x32xf32>
    %423 = arith.subf %415, %422 : vector<18x32xf32>
    %424 = arith.mulf %423, %423 : vector<18x32xf32>
    %cst_145 = arith.constant dense<0.000000e+00> : vector<18xf32>
    %425 = vector.multi_reduction <add>, %424, %cst_145 [1] : vector<18x32xf32> to vector<18xf32>
    %426 = vector.shape_cast %425 : vector<18xf32> to vector<18x1xf32>
    %cst_146 = arith.constant 3.200000e+01 : f32
    %427 = vector.broadcast %cst_146 : f32 to vector<18x1xf32>
    %428 = arith.divf %426, %427 : vector<18x1xf32>
    %cst_147 = arith.constant 9.99999974E-6 : f32
    %429 = vector.broadcast %cst_147 : f32 to vector<18x1xf32>
    %430 = arith.addf %428, %429 : vector<18x1xf32>
    %431 = math.rsqrt %430 : vector<18x1xf32>
    %432 = vector.broadcast %431 : vector<18x1xf32> to vector<18x32xf32>
    %433 = arith.mulf %423, %432 : vector<18x32xf32>
    %434 = vector.broadcast %416 : vector<1x32xf32> to vector<18x32xf32>
    %435 = arith.mulf %433, %434 : vector<18x32xf32>
    %436 = vector.broadcast %417 : vector<1x32xf32> to vector<18x32xf32>
    %437 = arith.addf %435, %436 : vector<18x32xf32>
    %438 = vector.extract_strided_slice %81 {offsets = [1, 0, 0], sizes = [1, 32, 128], strides = [1, 1, 1]} : vector<2x32x128xf32> to vector<1x32x128xf32>
    %439 = vector.shape_cast %438 : vector<1x32x128xf32> to vector<32x128xf32>
    %cst_148 = arith.constant dense<0.000000e+00> : vector<18x128xf32>
    %440 = tpu.matmul %437, %439, %cst_148 {dimension_numbers = #tpu.dot_dimension_numbers<[1], [0], [0], [1], [0, 0, 1, 1], [], []>} : vector<18x32xf32>, vector<32x128xf32>, vector<18x128xf32> -> vector<18x128xf32>
    %441 = vector.extract_strided_slice %83 {offsets = [1, 0], sizes = [1, 128], strides = [1, 1]} : vector<2x128xf32> to vector<1x128xf32>
    %442 = vector.broadcast %441 : vector<1x128xf32> to vector<18x128xf32>
    %443 = arith.addf %440, %442 : vector<18x128xf32>
    %444 = arith.mulf %443, %443 : vector<18x128xf32>
    %445 = arith.mulf %443, %444 : vector<18x128xf32>
    %cst_149 = arith.constant 4.471500e-02 : f32
    %446 = vector.broadcast %cst_149 : f32 to vector<18x128xf32>
    %447 = arith.mulf %446, %445 : vector<18x128xf32>
    %448 = arith.addf %443, %447 : vector<18x128xf32>
    %cst_150 = arith.constant 0.797884583 : f32
    %449 = vector.broadcast %cst_150 : f32 to vector<18x128xf32>
    %450 = arith.mulf %449, %448 : vector<18x128xf32>
    %451 = math.tanh %450 : vector<18x128xf32>
    %cst_151 = arith.constant 1.000000e+00 : f32
    %452 = vector.broadcast %cst_151 : f32 to vector<18x128xf32>
    %453 = arith.addf %452, %451 : vector<18x128xf32>
    %cst_152 = arith.constant 5.000000e-01 : f32
    %454 = vector.broadcast %cst_152 : f32 to vector<18x128xf32>
    %455 = arith.mulf %454, %453 : vector<18x128xf32>
    %456 = arith.mulf %443, %455 : vector<18x128xf32>
    %457 = vector.extract_strided_slice %85 {offsets = [1, 0, 0], sizes = [1, 128, 32], strides = [1, 1, 1]} : vector<2x128x32xf32> to vector<1x128x32xf32>
    %458 = vector.shape_cast %457 : vector<1x128x32xf32> to vector<128x32xf32>
    %cst_153 = arith.constant dense<0.000000e+00> : vector<18x32xf32>
    %459 = tpu.matmul %456, %458, %cst_153 {dimension_numbers = #tpu.dot_dimension_numbers<[1], [0], [0], [1], [0, 0, 1, 1], [], []>} : vector<18x128xf32>, vector<128x32xf32>, vector<18x32xf32> -> vector<18x32xf32>
    %460 = vector.extract_strided_slice %87 {offsets = [1, 0], sizes = [1, 32], strides = [1, 1]} : vector<2x32xf32> to vector<1x32xf32>
    %461 = vector.broadcast %460 : vector<1x32xf32> to vector<18x32xf32>
    %462 = arith.addf %459, %461 : vector<18x32xf32>
    %463 = arith.addf %415, %462 : vector<18x32xf32>
    %c0_154 = arith.constant 0 : index
    %c0_155 = arith.constant 0 : index
    %c0_156 = arith.constant 0 : index
    %464 = vector.load %arg18[%c0_154, %c0_155, %c0_156] : memref<1x1x32xf32, #tpu.memory_space<vmem>>, vector<1x1x32xf32>
    %465 = vector.shape_cast %464 : vector<1x1x32xf32> to vector<1x32xf32>
    %c0_157 = arith.constant 0 : index
    %c0_158 = arith.constant 0 : index
    %c0_159 = arith.constant 0 : index
    %466 = vector.load %arg19[%c0_157, %c0_158, %c0_159] : memref<1x1x32xf32, #tpu.memory_space<vmem>>, vector<1x1x32xf32>
    %467 = vector.shape_cast %466 : vector<1x1x32xf32> to vector<1x32xf32>
    %cst_160 = arith.constant dense<0.000000e+00> : vector<18xf32>
    %468 = vector.multi_reduction <add>, %463, %cst_160 [1] : vector<18x32xf32> to vector<18xf32>
    %469 = vector.shape_cast %468 : vector<18xf32> to vector<18x1xf32>
    %cst_161 = arith.constant 3.200000e+01 : f32
    %470 = vector.broadcast %cst_161 : f32 to vector<18x1xf32>
    %471 = arith.divf %469, %470 : vector<18x1xf32>
    %472 = vector.broadcast %471 : vector<18x1xf32> to vector<18x32xf32>
    %473 = arith.subf %463, %472 : vector<18x32xf32>
    %474 = arith.mulf %473, %473 : vector<18x32xf32>
    %cst_162 = arith.constant dense<0.000000e+00> : vector<18xf32>
    %475 = vector.multi_reduction <add>, %474, %cst_162 [1] : vector<18x32xf32> to vector<18xf32>
    %476 = vector.shape_cast %475 : vector<18xf32> to vector<18x1xf32>
    %cst_163 = arith.constant 3.200000e+01 : f32
    %477 = vector.broadcast %cst_163 : f32 to vector<18x1xf32>
    %478 = arith.divf %476, %477 : vector<18x1xf32>
    %cst_164 = arith.constant 9.99999974E-6 : f32
    %479 = vector.broadcast %cst_164 : f32 to vector<18x1xf32>
    %480 = arith.addf %478, %479 : vector<18x1xf32>
    %481 = math.rsqrt %480 : vector<18x1xf32>
    %482 = vector.broadcast %481 : vector<18x1xf32> to vector<18x32xf32>
    %483 = arith.mulf %473, %482 : vector<18x32xf32>
    %484 = vector.broadcast %465 : vector<1x32xf32> to vector<18x32xf32>
    %485 = arith.mulf %483, %484 : vector<18x32xf32>
    %486 = vector.broadcast %467 : vector<1x32xf32> to vector<18x32xf32>
    %487 = arith.addf %485, %486 : vector<18x32xf32>
    %c0_165 = arith.constant 0 : index
    %c0_166 = arith.constant 0 : index
    %c0_167 = arith.constant 0 : index
    %488 = vector.load %arg20[%c0_165, %c0_166, %c0_167] : memref<1x32x16xf32, #tpu.memory_space<vmem>>, vector<1x32x16xf32>
    %489 = vector.shape_cast %488 : vector<1x32x16xf32> to vector<32x16xf32>
    %cst_168 = arith.constant dense<0.000000e+00> : vector<18x16xf32>
    %490 = tpu.matmul %487, %489, %cst_168 {dimension_numbers = #tpu.dot_dimension_numbers<[1], [0], [0], [1], [0, 0, 1, 1], [], []>} : vector<18x32xf32>, vector<32x16xf32>, vector<18x16xf32> -> vector<18x16xf32>
    %c0_169 = arith.constant 0 : index
    %c0_170 = arith.constant 0 : index
    %c0_171 = arith.constant 0 : index
    %491 = vector.load %arg21[%c0_169, %c0_170, %c0_171] : memref<1x1x16xf32, #tpu.memory_space<vmem>>, vector<1x1x16xf32>
    %492 = vector.shape_cast %491 : vector<1x1x16xf32> to vector<1x16xf32>
    %493 = vector.broadcast %492 : vector<1x16xf32> to vector<18x16xf32>
    %494 = arith.addf %490, %493 : vector<18x16xf32>
    %c0_172 = arith.constant 0 : index
    %c0_173 = arith.constant 0 : index
    %c0_174 = arith.constant 0 : index
    %495 = vector.load %arg22[%c0_172, %c0_173, %c0_174] : memref<1x18x16xf32, #tpu.memory_space<vmem>>, vector<1x18x16xf32>
    %496 = vector.shape_cast %495 : vector<1x18x16xf32> to vector<18x16xf32>
    %497 = vector.shape_cast %494 : vector<18x16xf32> to vector<1x18x16xf32>
    tpu.vector_store %arg22[%c0_172, %c0_173, %c0_174], %497 {strides = array<i32>} : memref<1x18x16xf32, #tpu.memory_space<vmem>>, vector<1x18x16xf32>,
    return
  }
  func.func @transform_0(%arg0: i32) -> (i32, i32, i32) {
    %c0_i32 = arith.constant 0 : i32
    %c0_i32_0 = arith.constant 0 : i32
    %c0_i32_1 = arith.constant 0 : i32
    return %arg0, %c0_i32, %c0_i32_0 : i32, i32, i32
  }
  func.func @transform_1(%arg0: i32) -> (i32, i32, i32) {
    %c0_i32 = arith.constant 0 : i32
    %c0_i32_0 = arith.constant 0 : i32
    %c0_i32_1 = arith.constant 0 : i32
    return %arg0, %c0_i32, %c0_i32_0 : i32, i32, i32
  }
  func.func @transform_2(%arg0: i32) -> (i32, i32, i32) {
    %c0_i32 = arith.constant 0 : i32
    %c0_i32_0 = arith.constant 0 : i32
    %c0_i32_1 = arith.constant 0 : i32
    return %arg0, %c0_i32, %c0_i32_0 : i32, i32, i32
  }
  func.func @transform_3(%arg0: i32) -> (i32, i32, i32, i32) {
    %c0_i32 = arith.constant 0 : i32
    %c0_i32_0 = arith.constant 0 : i32
    %c0_i32_1 = arith.constant 0 : i32
    %c0_i32_2 = arith.constant 0 : i32
    return %arg0, %c0_i32, %c0_i32_0, %c0_i32_1 : i32, i32, i32, i32
  }
  func.func @transform_4(%arg0: i32) -> (i32, i32, i32) {
    %c0_i32 = arith.constant 0 : i32
    %c0_i32_0 = arith.constant 0 : i32
    %c0_i32_1 = arith.constant 0 : i32
    return %arg0, %c0_i32, %c0_i32_0 : i32, i32, i32
  }
  func.func @transform_5(%arg0: i32) -> (i32, i32, i32, i32) {
    %c0_i32 = arith.constant 0 : i32
    %c0_i32_0 = arith.constant 0 : i32
    %c0_i32_1 = arith.constant 0 : i32
    %c0_i32_2 = arith.constant 0 : i32
    return %arg0, %c0_i32, %c0_i32_0, %c0_i32_1 : i32, i32, i32, i32
  }
  func.func @transform_6(%arg0: i32) -> (i32, i32, i32) {
    %c0_i32 = arith.constant 0 : i32
    %c0_i32_0 = arith.constant 0 : i32
    %c0_i32_1 = arith.constant 0 : i32
    return %arg0, %c0_i32, %c0_i32_0 : i32, i32, i32
  }
  func.func @transform_7(%arg0: i32) -> (i32, i32, i32, i32) {
    %c0_i32 = arith.constant 0 : i32
    %c0_i32_0 = arith.constant 0 : i32
    %c0_i32_1 = arith.constant 0 : i32
    %c0_i32_2 = arith.constant 0 : i32
    return %arg0, %c0_i32, %c0_i32_0, %c0_i32_1 : i32, i32, i32, i32
  }
  func.func @transform_8(%arg0: i32) -> (i32, i32, i32) {
    %c0_i32 = arith.constant 0 : i32
    %c0_i32_0 = arith.constant 0 : i32
    %c0_i32_1 = arith.constant 0 : i32
    return %arg0, %c0_i32, %c0_i32_0 : i32, i32, i32
  }
  func.func @transform_9(%arg0: i32) -> (i32, i32, i32, i32) {
    %c0_i32 = arith.constant 0 : i32
    %c0_i32_0 = arith.constant 0 : i32
    %c0_i32_1 = arith.constant 0 : i32
    %c0_i32_2 = arith.constant 0 : i32
    return %arg0, %c0_i32, %c0_i32_0, %c0_i32_1 : i32, i32, i32, i32
  }
  func.func @transform_10(%arg0: i32) -> (i32, i32, i32) {
    %c0_i32 = arith.constant 0 : i32
    %c0_i32_0 = arith.constant 0 : i32
    %c0_i32_1 = arith.constant 0 : i32
    return %arg0, %c0_i32, %c0_i32_0 : i32, i32, i32
  }
  func.func @transform_11(%arg0: i32) -> (i32, i32, i32) {
    %c0_i32 = arith.constant 0 : i32
    %c0_i32_0 = arith.constant 0 : i32
    %c0_i32_1 = arith.constant 0 : i32
    return %arg0, %c0_i32, %c0_i32_0 : i32, i32, i32
  }
  func.func @transform_12(%arg0: i32) -> (i32, i32, i32) {
    %c0_i32 = arith.constant 0 : i32
    %c0_i32_0 = arith.constant 0 : i32
    %c0_i32_1 = arith.constant 0 : i32
    return %arg0, %c0_i32, %c0_i32_0 : i32, i32, i32
  }
  func.func @transform_13(%arg0: i32) -> (i32, i32, i32, i32) {
    %c0_i32 = arith.constant 0 : i32
    %c0_i32_0 = arith.constant 0 : i32
    %c0_i32_1 = arith.constant 0 : i32
    %c0_i32_2 = arith.constant 0 : i32
    return %arg0, %c0_i32, %c0_i32_0, %c0_i32_1 : i32, i32, i32, i32
  }
  func.func @transform_14(%arg0: i32) -> (i32, i32, i32) {
    %c0_i32 = arith.constant 0 : i32
    %c0_i32_0 = arith.constant 0 : i32
    %c0_i32_1 = arith.constant 0 : i32
    return %arg0, %c0_i32, %c0_i32_0 : i32, i32, i32
  }
  func.func @transform_15(%arg0: i32) -> (i32, i32, i32, i32) {
    %c0_i32 = arith.constant 0 : i32
    %c0_i32_0 = arith.constant 0 : i32
    %c0_i32_1 = arith.constant 0 : i32
    %c0_i32_2 = arith.constant 0 : i32
    return %arg0, %c0_i32, %c0_i32_0, %c0_i32_1 : i32, i32, i32, i32
  }
  func.func @transform_16(%arg0: i32) -> (i32, i32, i32) {
    %c0_i32 = arith.constant 0 : i32
    %c0_i32_0 = arith.constant 0 : i32
    %c0_i32_1 = arith.constant 0 : i32
    return %arg0, %c0_i32, %c0_i32_0 : i32, i32, i32
  }
  func.func @transform_17(%arg0: i32) -> (i32, i32, i32) {
    %c0_i32 = arith.constant 0 : i32
    %c0_i32_0 = arith.constant 0 : i32
    %c0_i32_1 = arith.constant 0 : i32
    return %arg0, %c0_i32, %c0_i32_0 : i32, i32, i32
  }
  func.func @transform_18(%arg0: i32) -> (i32, i32, i32) {
    %c0_i32 = arith.constant 0 : i32
    %c0_i32_0 = arith.constant 0 : i32
    %c0_i32_1 = arith.constant 0 : i32
    return %arg0, %c0_i32, %c0_i32_0 : i32, i32, i32
  }
  func.func @transform_19(%arg0: i32) -> (i32, i32, i32) {
    %c0_i32 = arith.constant 0 : i32
    %c0_i32_0 = arith.constant 0 : i32
    %c0_i32_1 = arith.constant 0 : i32
    return %arg0, %c0_i32, %c0_i32_0 : i32, i32, i32
  }
  func.func @transform_20(%arg0: i32) -> (i32, i32, i32) {
    %c0_i32 = arith.constant 0 : i32
    %c0_i32_0 = arith.constant 0 : i32
    %c0_i32_1 = arith.constant 0 : i32
    return %arg0, %c0_i32, %c0_i32_0 : i32, i32, i32
  }
  func.func @transform_21(%arg0: i32) -> (i32, i32, i32) {
    %c0_i32 = arith.constant 0 : i32
    %c0_i32_0 = arith.constant 0 : i32
    %c0_i32_1 = arith.constant 0 : i32
    return %arg0, %c0_i32, %c0_i32_0 : i32, i32, i32
  }
}

module attributes {stable_mosaic.version = 11 : i64} {
  func.func @_band_transformer_kernel(%arg0: i32, %arg1: memref<1x34x16xf32, #tpu.memory_space<vmem>>, %arg2: memref<1x1x16xf32, #tpu.memory_space<vmem>>, %arg3: memref<1x1x16xf32, #tpu.memory_space<vmem>>, %arg4: memref<1x1x16x16xf32, #tpu.memory_space<vmem>>, %arg5: memref<1x1x16xf32, #tpu.memory_space<vmem>>, %arg6: memref<1x1x16x16xf32, #tpu.memory_space<vmem>>, %arg7: memref<1x1x16xf32, #tpu.memory_space<vmem>>, %arg8: memref<1x1x16x16xf32, #tpu.memory_space<vmem>>, %arg9: memref<1x1x16xf32, #tpu.memory_space<vmem>>, %arg10: memref<1x1x16x16xf32, #tpu.memory_space<vmem>>, %arg11: memref<1x1x16xf32, #tpu.memory_space<vmem>>, %arg12: memref<1x1x16xf32, #tpu.memory_space<vmem>>, %arg13: memref<1x1x16xf32, #tpu.memory_space<vmem>>, %arg14: memref<1x1x16x64xf32, #tpu.memory_space<vmem>>, %arg15: memref<1x1x64xf32, #tpu.memory_space<vmem>>, %arg16: memref<1x1x64x16xf32, #tpu.memory_space<vmem>>, %arg17: memref<1x1x16xf32, #tpu.memory_space<vmem>>, %arg18: memref<1x1x16xf32, #tpu.memory_space<vmem>>, %arg19: memref<1x1x16xf32, #tpu.memory_space<vmem>>, %arg20: memref<1x16x16xf32, #tpu.memory_space<vmem>>, %arg21: memref<1x1x16xf32, #tpu.memory_space<vmem>>, %arg22: memref<1x34x16xf32, #tpu.memory_space<vmem>>) attributes {dimension_semantics = [#tpu.dimension_semantics<parallel>], iteration_bounds = array<i64: 6>, scalar_prefetch = 0 : i64, scratch_operands = 0 : i64, tpu.core_type = #tpu.core_type<tc>, window_params = [{transform_indices = @transform_0, window_bounds = array<i64: 1, 34, 16>}, {transform_indices = @transform_1, window_bounds = array<i64: 1, 1, 16>}, {transform_indices = @transform_2, window_bounds = array<i64: 1, 1, 16>}, {transform_indices = @transform_3, window_bounds = array<i64: 1, 1, 16, 16>}, {transform_indices = @transform_4, window_bounds = array<i64: 1, 1, 16>}, {transform_indices = @transform_5, window_bounds = array<i64: 1, 1, 16, 16>}, {transform_indices = @transform_6, window_bounds = array<i64: 1, 1, 16>}, {transform_indices = @transform_7, window_bounds = array<i64: 1, 1, 16, 16>}, {transform_indices = @transform_8, window_bounds = array<i64: 1, 1, 16>}, {transform_indices = @transform_9, window_bounds = array<i64: 1, 1, 16, 16>}, {transform_indices = @transform_10, window_bounds = array<i64: 1, 1, 16>}, {transform_indices = @transform_11, window_bounds = array<i64: 1, 1, 16>}, {transform_indices = @transform_12, window_bounds = array<i64: 1, 1, 16>}, {transform_indices = @transform_13, window_bounds = array<i64: 1, 1, 16, 64>}, {transform_indices = @transform_14, window_bounds = array<i64: 1, 1, 64>}, {transform_indices = @transform_15, window_bounds = array<i64: 1, 1, 64, 16>}, {transform_indices = @transform_16, window_bounds = array<i64: 1, 1, 16>}, {transform_indices = @transform_17, window_bounds = array<i64: 1, 1, 16>}, {transform_indices = @transform_18, window_bounds = array<i64: 1, 1, 16>}, {transform_indices = @transform_19, window_bounds = array<i64: 1, 16, 16>}, {transform_indices = @transform_20, window_bounds = array<i64: 1, 1, 16>}, {transform_indices = @transform_21, window_bounds = array<i64: 1, 34, 16>}]} {
    %c0 = arith.constant 0 : index
    %c0_0 = arith.constant 0 : index
    %c0_1 = arith.constant 0 : index
    %0 = vector.load %arg1[%c0, %c0_0, %c0_1] : memref<1x34x16xf32, #tpu.memory_space<vmem>>, vector<1x34x16xf32>
    %1 = vector.shape_cast %0 : vector<1x34x16xf32> to vector<34x16xf32>
    %2 = tpu.iota {dimensions = array<i32: 1>} : vector<1x16xi32>
    %c0_i32 = arith.constant 0 : i32
    %3 = vector.broadcast %c0_i32 : i32 to vector<1x16xi32>
    %4 = arith.cmpi sge, %2, %3 : vector<1x16xi32>
    %c4_i32 = arith.constant 4 : i32
    %5 = vector.broadcast %c4_i32 : i32 to vector<1x16xi32>
    %6 = arith.cmpi slt, %2, %5 : vector<1x16xi32>
    %7 = arith.andi %4, %6 : vector<1x16xi1>
    %8 = arith.extui %7 : vector<1x16xi1> to vector<1x16xi32>
    %9 = arith.sitofp %8 : vector<1x16xi32> to vector<1x16xf32>
    %c4_i32_2 = arith.constant 4 : i32
    %10 = vector.broadcast %c4_i32_2 : i32 to vector<1x16xi32>
    %11 = arith.cmpi sge, %2, %10 : vector<1x16xi32>
    %c8_i32 = arith.constant 8 : i32
    %12 = vector.broadcast %c8_i32 : i32 to vector<1x16xi32>
    %13 = arith.cmpi slt, %2, %12 : vector<1x16xi32>
    %14 = arith.andi %11, %13 : vector<1x16xi1>
    %15 = arith.extui %14 : vector<1x16xi1> to vector<1x16xi32>
    %16 = arith.sitofp %15 : vector<1x16xi32> to vector<1x16xf32>
    %c8_i32_3 = arith.constant 8 : i32
    %17 = vector.broadcast %c8_i32_3 : i32 to vector<1x16xi32>
    %18 = arith.cmpi sge, %2, %17 : vector<1x16xi32>
    %c12_i32 = arith.constant 12 : i32
    %19 = vector.broadcast %c12_i32 : i32 to vector<1x16xi32>
    %20 = arith.cmpi slt, %2, %19 : vector<1x16xi32>
    %21 = arith.andi %18, %20 : vector<1x16xi1>
    %22 = arith.extui %21 : vector<1x16xi1> to vector<1x16xi32>
    %23 = arith.sitofp %22 : vector<1x16xi32> to vector<1x16xf32>
    %c12_i32_4 = arith.constant 12 : i32
    %24 = vector.broadcast %c12_i32_4 : i32 to vector<1x16xi32>
    %25 = arith.cmpi sge, %2, %24 : vector<1x16xi32>
    %c16_i32 = arith.constant 16 : i32
    %26 = vector.broadcast %c16_i32 : i32 to vector<1x16xi32>
    %27 = arith.cmpi slt, %2, %26 : vector<1x16xi32>
    %28 = arith.andi %25, %27 : vector<1x16xi1>
    %29 = arith.extui %28 : vector<1x16xi1> to vector<1x16xi32>
    %30 = arith.sitofp %29 : vector<1x16xi32> to vector<1x16xf32>
    %31 = tpu.iota {dimensions = array<i32: 0>} : vector<34x34xi32>
    %32 = tpu.iota {dimensions = array<i32: 1>} : vector<34x34xi32>
    %c0_i32_5 = arith.constant 0 : i32
    %33 = vector.broadcast %c0_i32_5 : i32 to vector<34x34xi32>
    %34 = arith.cmpi sge, %31, %33 : vector<34x34xi32>
    %c17_i32 = arith.constant 17 : i32
    %35 = vector.broadcast %c17_i32 : i32 to vector<34x34xi32>
    %36 = arith.cmpi slt, %31, %35 : vector<34x34xi32>
    %37 = arith.andi %34, %36 : vector<34x34xi1>
    %c0_i32_6 = arith.constant 0 : i32
    %38 = vector.broadcast %c0_i32_6 : i32 to vector<34x34xi32>
    %39 = arith.cmpi sge, %32, %38 : vector<34x34xi32>
    %c17_i32_7 = arith.constant 17 : i32
    %40 = vector.broadcast %c17_i32_7 : i32 to vector<34x34xi32>
    %41 = arith.cmpi slt, %32, %40 : vector<34x34xi32>
    %42 = arith.andi %39, %41 : vector<34x34xi1>
    %43 = arith.andi %37, %42 : vector<34x34xi1>
    %c17_i32_8 = arith.constant 17 : i32
    %44 = vector.broadcast %c17_i32_8 : i32 to vector<34x34xi32>
    %45 = arith.cmpi sge, %31, %44 : vector<34x34xi32>
    %c34_i32 = arith.constant 34 : i32
    %46 = vector.broadcast %c34_i32 : i32 to vector<34x34xi32>
    %47 = arith.cmpi slt, %31, %46 : vector<34x34xi32>
    %48 = arith.andi %45, %47 : vector<34x34xi1>
    %c17_i32_9 = arith.constant 17 : i32
    %49 = vector.broadcast %c17_i32_9 : i32 to vector<34x34xi32>
    %50 = arith.cmpi sge, %32, %49 : vector<34x34xi32>
    %c34_i32_10 = arith.constant 34 : i32
    %51 = vector.broadcast %c34_i32_10 : i32 to vector<34x34xi32>
    %52 = arith.cmpi slt, %32, %51 : vector<34x34xi32>
    %53 = arith.andi %50, %52 : vector<34x34xi1>
    %54 = arith.andi %48, %53 : vector<34x34xi1>
    %55 = arith.ori %43, %54 : vector<34x34xi1>
    %c0_11 = arith.constant 0 : index
    %c0_12 = arith.constant 0 : index
    %c0_13 = arith.constant 0 : index
    %56 = vector.load %arg2[%c0_11, %c0_12, %c0_13] : memref<1x1x16xf32, #tpu.memory_space<vmem>>, vector<1x1x16xf32>
    %57 = vector.shape_cast %56 : vector<1x1x16xf32> to vector<1x16xf32>
    %c0_14 = arith.constant 0 : index
    %c0_15 = arith.constant 0 : index
    %c0_16 = arith.constant 0 : index
    %58 = vector.load %arg3[%c0_14, %c0_15, %c0_16] : memref<1x1x16xf32, #tpu.memory_space<vmem>>, vector<1x1x16xf32>
    %59 = vector.shape_cast %58 : vector<1x1x16xf32> to vector<1x16xf32>
    %c0_17 = arith.constant 0 : index
    %c0_18 = arith.constant 0 : index
    %c0_19 = arith.constant 0 : index
    %60 = vector.load %arg12[%c0_17, %c0_18, %c0_19] : memref<1x1x16xf32, #tpu.memory_space<vmem>>, vector<1x1x16xf32>
    %61 = vector.shape_cast %60 : vector<1x1x16xf32> to vector<1x16xf32>
    %c0_20 = arith.constant 0 : index
    %c0_21 = arith.constant 0 : index
    %c0_22 = arith.constant 0 : index
    %62 = vector.load %arg13[%c0_20, %c0_21, %c0_22] : memref<1x1x16xf32, #tpu.memory_space<vmem>>, vector<1x1x16xf32>
    %63 = vector.shape_cast %62 : vector<1x1x16xf32> to vector<1x16xf32>
    %c0_23 = arith.constant 0 : index
    %c0_24 = arith.constant 0 : index
    %c0_25 = arith.constant 0 : index
    %c0_26 = arith.constant 0 : index
    %64 = vector.load %arg4[%c0_23, %c0_24, %c0_25, %c0_26] : memref<1x1x16x16xf32, #tpu.memory_space<vmem>>, vector<1x1x16x16xf32>
    %65 = vector.shape_cast %64 : vector<1x1x16x16xf32> to vector<1x16x16xf32>
    %c0_27 = arith.constant 0 : index
    %c0_28 = arith.constant 0 : index
    %c0_29 = arith.constant 0 : index
    %66 = vector.load %arg5[%c0_27, %c0_28, %c0_29] : memref<1x1x16xf32, #tpu.memory_space<vmem>>, vector<1x1x16xf32>
    %67 = vector.shape_cast %66 : vector<1x1x16xf32> to vector<1x16xf32>
    %c0_30 = arith.constant 0 : index
    %c0_31 = arith.constant 0 : index
    %c0_32 = arith.constant 0 : index
    %c0_33 = arith.constant 0 : index
    %68 = vector.load %arg6[%c0_30, %c0_31, %c0_32, %c0_33] : memref<1x1x16x16xf32, #tpu.memory_space<vmem>>, vector<1x1x16x16xf32>
    %69 = vector.shape_cast %68 : vector<1x1x16x16xf32> to vector<1x16x16xf32>
    %c0_34 = arith.constant 0 : index
    %c0_35 = arith.constant 0 : index
    %c0_36 = arith.constant 0 : index
    %70 = vector.load %arg7[%c0_34, %c0_35, %c0_36] : memref<1x1x16xf32, #tpu.memory_space<vmem>>, vector<1x1x16xf32>
    %71 = vector.shape_cast %70 : vector<1x1x16xf32> to vector<1x16xf32>
    %c0_37 = arith.constant 0 : index
    %c0_38 = arith.constant 0 : index
    %c0_39 = arith.constant 0 : index
    %c0_40 = arith.constant 0 : index
    %72 = vector.load %arg8[%c0_37, %c0_38, %c0_39, %c0_40] : memref<1x1x16x16xf32, #tpu.memory_space<vmem>>, vector<1x1x16x16xf32>
    %73 = vector.shape_cast %72 : vector<1x1x16x16xf32> to vector<1x16x16xf32>
    %c0_41 = arith.constant 0 : index
    %c0_42 = arith.constant 0 : index
    %c0_43 = arith.constant 0 : index
    %74 = vector.load %arg9[%c0_41, %c0_42, %c0_43] : memref<1x1x16xf32, #tpu.memory_space<vmem>>, vector<1x1x16xf32>
    %75 = vector.shape_cast %74 : vector<1x1x16xf32> to vector<1x16xf32>
    %c0_44 = arith.constant 0 : index
    %c0_45 = arith.constant 0 : index
    %c0_46 = arith.constant 0 : index
    %c0_47 = arith.constant 0 : index
    %76 = vector.load %arg10[%c0_44, %c0_45, %c0_46, %c0_47] : memref<1x1x16x16xf32, #tpu.memory_space<vmem>>, vector<1x1x16x16xf32>
    %77 = vector.shape_cast %76 : vector<1x1x16x16xf32> to vector<1x16x16xf32>
    %c0_48 = arith.constant 0 : index
    %c0_49 = arith.constant 0 : index
    %c0_50 = arith.constant 0 : index
    %78 = vector.load %arg11[%c0_48, %c0_49, %c0_50] : memref<1x1x16xf32, #tpu.memory_space<vmem>>, vector<1x1x16xf32>
    %79 = vector.shape_cast %78 : vector<1x1x16xf32> to vector<1x16xf32>
    %c0_51 = arith.constant 0 : index
    %c0_52 = arith.constant 0 : index
    %c0_53 = arith.constant 0 : index
    %c0_54 = arith.constant 0 : index
    %80 = vector.load %arg14[%c0_51, %c0_52, %c0_53, %c0_54] : memref<1x1x16x64xf32, #tpu.memory_space<vmem>>, vector<1x1x16x64xf32>
    %81 = vector.shape_cast %80 : vector<1x1x16x64xf32> to vector<1x16x64xf32>
    %c0_55 = arith.constant 0 : index
    %c0_56 = arith.constant 0 : index
    %c0_57 = arith.constant 0 : index
    %82 = vector.load %arg15[%c0_55, %c0_56, %c0_57] : memref<1x1x64xf32, #tpu.memory_space<vmem>>, vector<1x1x64xf32>
    %83 = vector.shape_cast %82 : vector<1x1x64xf32> to vector<1x64xf32>
    %c0_58 = arith.constant 0 : index
    %c0_59 = arith.constant 0 : index
    %c0_60 = arith.constant 0 : index
    %c0_61 = arith.constant 0 : index
    %84 = vector.load %arg16[%c0_58, %c0_59, %c0_60, %c0_61] : memref<1x1x64x16xf32, #tpu.memory_space<vmem>>, vector<1x1x64x16xf32>
    %85 = vector.shape_cast %84 : vector<1x1x64x16xf32> to vector<1x64x16xf32>
    %c0_62 = arith.constant 0 : index
    %c0_63 = arith.constant 0 : index
    %c0_64 = arith.constant 0 : index
    %86 = vector.load %arg17[%c0_62, %c0_63, %c0_64] : memref<1x1x16xf32, #tpu.memory_space<vmem>>, vector<1x1x16xf32>
    %87 = vector.shape_cast %86 : vector<1x1x16xf32> to vector<1x16xf32>
    %cst = arith.constant dense<0.000000e+00> : vector<34xf32>
    %88 = vector.multi_reduction <add>, %1, %cst [1] : vector<34x16xf32> to vector<34xf32>
    %89 = vector.shape_cast %88 : vector<34xf32> to vector<34x1xf32>
    %cst_65 = arith.constant 1.600000e+01 : f32
    %90 = vector.broadcast %cst_65 : f32 to vector<34x1xf32>
    %91 = arith.divf %89, %90 : vector<34x1xf32>
    %92 = vector.broadcast %91 : vector<34x1xf32> to vector<34x16xf32>
    %93 = arith.subf %1, %92 : vector<34x16xf32>
    %94 = arith.mulf %93, %93 : vector<34x16xf32>
    %cst_66 = arith.constant dense<0.000000e+00> : vector<34xf32>
    %95 = vector.multi_reduction <add>, %94, %cst_66 [1] : vector<34x16xf32> to vector<34xf32>
    %96 = vector.shape_cast %95 : vector<34xf32> to vector<34x1xf32>
    %cst_67 = arith.constant 1.600000e+01 : f32
    %97 = vector.broadcast %cst_67 : f32 to vector<34x1xf32>
    %98 = arith.divf %96, %97 : vector<34x1xf32>
    %cst_68 = arith.constant 9.99999974E-6 : f32
    %99 = vector.broadcast %cst_68 : f32 to vector<34x1xf32>
    %100 = arith.addf %98, %99 : vector<34x1xf32>
    %101 = math.rsqrt %100 : vector<34x1xf32>
    %102 = vector.broadcast %101 : vector<34x1xf32> to vector<34x16xf32>
    %103 = arith.mulf %93, %102 : vector<34x16xf32>
    %104 = vector.broadcast %57 : vector<1x16xf32> to vector<34x16xf32>
    %105 = arith.mulf %103, %104 : vector<34x16xf32>
    %106 = vector.broadcast %59 : vector<1x16xf32> to vector<34x16xf32>
    %107 = arith.addf %105, %106 : vector<34x16xf32>
    %108 = vector.shape_cast %65 : vector<1x16x16xf32> to vector<16x16xf32>
    %cst_69 = arith.constant dense<0.000000e+00> : vector<34x16xf32>
    %109 = tpu.matmul %107, %108, %cst_69 {dimension_numbers = #tpu.dot_dimension_numbers<[1], [0], [0], [1], [0, 0, 1, 1], [], []>} : vector<34x16xf32>, vector<16x16xf32>, vector<34x16xf32> -> vector<34x16xf32>
    %110 = vector.broadcast %67 : vector<1x16xf32> to vector<34x16xf32>
    %111 = arith.addf %109, %110 : vector<34x16xf32>
    %112 = vector.shape_cast %69 : vector<1x16x16xf32> to vector<16x16xf32>
    %cst_70 = arith.constant dense<0.000000e+00> : vector<34x16xf32>
    %113 = tpu.matmul %107, %112, %cst_70 {dimension_numbers = #tpu.dot_dimension_numbers<[1], [0], [0], [1], [0, 0, 1, 1], [], []>} : vector<34x16xf32>, vector<16x16xf32>, vector<34x16xf32> -> vector<34x16xf32>
    %114 = vector.broadcast %71 : vector<1x16xf32> to vector<34x16xf32>
    %115 = arith.addf %113, %114 : vector<34x16xf32>
    %116 = vector.shape_cast %73 : vector<1x16x16xf32> to vector<16x16xf32>
    %cst_71 = arith.constant dense<0.000000e+00> : vector<34x16xf32>
    %117 = tpu.matmul %107, %116, %cst_71 {dimension_numbers = #tpu.dot_dimension_numbers<[1], [0], [0], [1], [0, 0, 1, 1], [], []>} : vector<34x16xf32>, vector<16x16xf32>, vector<34x16xf32> -> vector<34x16xf32>
    %118 = vector.broadcast %75 : vector<1x16xf32> to vector<34x16xf32>
    %119 = arith.addf %117, %118 : vector<34x16xf32>
    %cst_72 = arith.constant 0.000000e+00 : f32
    %120 = vector.broadcast %cst_72 : f32 to vector<34x16xf32>
    %121 = vector.broadcast %9 : vector<1x16xf32> to vector<34x16xf32>
    %122 = arith.mulf %111, %121 : vector<34x16xf32>
    %123 = vector.broadcast %9 : vector<1x16xf32> to vector<34x16xf32>
    %124 = arith.mulf %115, %123 : vector<34x16xf32>
    %cst_73 = arith.constant dense<0.000000e+00> : vector<34x34xf32>
    %125 = tpu.matmul %122, %124, %cst_73 {dimension_numbers = #tpu.dot_dimension_numbers<[1], [1], [0], [0], [0, 0, 1, 0], [], []>} : vector<34x16xf32>, vector<34x16xf32>, vector<34x34xf32> -> vector<34x34xf32>
    %cst_74 = arith.constant 5.000000e-01 : f32
    %126 = vector.broadcast %cst_74 : f32 to vector<34x34xf32>
    %127 = arith.mulf %125, %126 : vector<34x34xf32>
    %cst_75 = arith.constant -1.000000e+30 : f32
    %128 = vector.broadcast %cst_75 : f32 to vector<34x34xf32>
    %129 = arith.select %55, %127, %128 : vector<34x34xi1>, vector<34x34xf32>
    %cst_76 = arith.constant dense<0xFF800000> : vector<34xf32>
    %130 = vector.multi_reduction <maximumf>, %129, %cst_76 [1] : vector<34x34xf32> to vector<34xf32>
    %131 = vector.shape_cast %130 : vector<34xf32> to vector<34x1xf32>
    %132 = vector.broadcast %131 : vector<34x1xf32> to vector<34x34xf32>
    %133 = arith.subf %129, %132 : vector<34x34xf32>
    %134 = math.exp %133 : vector<34x34xf32>
    %cst_77 = arith.constant dense<0.000000e+00> : vector<34xf32>
    %135 = vector.multi_reduction <add>, %134, %cst_77 [1] : vector<34x34xf32> to vector<34xf32>
    %136 = vector.shape_cast %135 : vector<34xf32> to vector<34x1xf32>
    %137 = tpu.reciprocal %136 {approx = true} : vector<34x1xf32> -> vector<34x1xf32>
    %138 = vector.broadcast %137 : vector<34x1xf32> to vector<34x34xf32>
    %139 = arith.mulf %134, %138 : vector<34x34xf32>
    %140 = vector.broadcast %9 : vector<1x16xf32> to vector<34x16xf32>
    %141 = arith.mulf %119, %140 : vector<34x16xf32>
    %cst_78 = arith.constant dense<0.000000e+00> : vector<34x16xf32>
    %142 = tpu.matmul %139, %141, %cst_78 {dimension_numbers = #tpu.dot_dimension_numbers<[1], [0], [0], [1], [0, 0, 1, 1], [], []>} : vector<34x34xf32>, vector<34x16xf32>, vector<34x16xf32> -> vector<34x16xf32>
    %143 = arith.addf %120, %142 : vector<34x16xf32>
    %144 = vector.broadcast %16 : vector<1x16xf32> to vector<34x16xf32>
    %145 = arith.mulf %111, %144 : vector<34x16xf32>
    %146 = vector.broadcast %16 : vector<1x16xf32> to vector<34x16xf32>
    %147 = arith.mulf %115, %146 : vector<34x16xf32>
    %cst_79 = arith.constant dense<0.000000e+00> : vector<34x34xf32>
    %148 = tpu.matmul %145, %147, %cst_79 {dimension_numbers = #tpu.dot_dimension_numbers<[1], [1], [0], [0], [0, 0, 1, 0], [], []>} : vector<34x16xf32>, vector<34x16xf32>, vector<34x34xf32> -> vector<34x34xf32>
    %cst_80 = arith.constant 5.000000e-01 : f32
    %149 = vector.broadcast %cst_80 : f32 to vector<34x34xf32>
    %150 = arith.mulf %148, %149 : vector<34x34xf32>
    %cst_81 = arith.constant -1.000000e+30 : f32
    %151 = vector.broadcast %cst_81 : f32 to vector<34x34xf32>
    %152 = arith.select %55, %150, %151 : vector<34x34xi1>, vector<34x34xf32>
    %cst_82 = arith.constant dense<0xFF800000> : vector<34xf32>
    %153 = vector.multi_reduction <maximumf>, %152, %cst_82 [1] : vector<34x34xf32> to vector<34xf32>
    %154 = vector.shape_cast %153 : vector<34xf32> to vector<34x1xf32>
    %155 = vector.broadcast %154 : vector<34x1xf32> to vector<34x34xf32>
    %156 = arith.subf %152, %155 : vector<34x34xf32>
    %157 = math.exp %156 : vector<34x34xf32>
    %cst_83 = arith.constant dense<0.000000e+00> : vector<34xf32>
    %158 = vector.multi_reduction <add>, %157, %cst_83 [1] : vector<34x34xf32> to vector<34xf32>
    %159 = vector.shape_cast %158 : vector<34xf32> to vector<34x1xf32>
    %160 = tpu.reciprocal %159 {approx = true} : vector<34x1xf32> -> vector<34x1xf32>
    %161 = vector.broadcast %160 : vector<34x1xf32> to vector<34x34xf32>
    %162 = arith.mulf %157, %161 : vector<34x34xf32>
    %163 = vector.broadcast %16 : vector<1x16xf32> to vector<34x16xf32>
    %164 = arith.mulf %119, %163 : vector<34x16xf32>
    %cst_84 = arith.constant dense<0.000000e+00> : vector<34x16xf32>
    %165 = tpu.matmul %162, %164, %cst_84 {dimension_numbers = #tpu.dot_dimension_numbers<[1], [0], [0], [1], [0, 0, 1, 1], [], []>} : vector<34x34xf32>, vector<34x16xf32>, vector<34x16xf32> -> vector<34x16xf32>
    %166 = arith.addf %143, %165 : vector<34x16xf32>
    %167 = vector.broadcast %23 : vector<1x16xf32> to vector<34x16xf32>
    %168 = arith.mulf %111, %167 : vector<34x16xf32>
    %169 = vector.broadcast %23 : vector<1x16xf32> to vector<34x16xf32>
    %170 = arith.mulf %115, %169 : vector<34x16xf32>
    %cst_85 = arith.constant dense<0.000000e+00> : vector<34x34xf32>
    %171 = tpu.matmul %168, %170, %cst_85 {dimension_numbers = #tpu.dot_dimension_numbers<[1], [1], [0], [0], [0, 0, 1, 0], [], []>} : vector<34x16xf32>, vector<34x16xf32>, vector<34x34xf32> -> vector<34x34xf32>
    %cst_86 = arith.constant 5.000000e-01 : f32
    %172 = vector.broadcast %cst_86 : f32 to vector<34x34xf32>
    %173 = arith.mulf %171, %172 : vector<34x34xf32>
    %cst_87 = arith.constant -1.000000e+30 : f32
    %174 = vector.broadcast %cst_87 : f32 to vector<34x34xf32>
    %175 = arith.select %55, %173, %174 : vector<34x34xi1>, vector<34x34xf32>
    %cst_88 = arith.constant dense<0xFF800000> : vector<34xf32>
    %176 = vector.multi_reduction <maximumf>, %175, %cst_88 [1] : vector<34x34xf32> to vector<34xf32>
    %177 = vector.shape_cast %176 : vector<34xf32> to vector<34x1xf32>
    %178 = vector.broadcast %177 : vector<34x1xf32> to vector<34x34xf32>
    %179 = arith.subf %175, %178 : vector<34x34xf32>
    %180 = math.exp %179 : vector<34x34xf32>
    %cst_89 = arith.constant dense<0.000000e+00> : vector<34xf32>
    %181 = vector.multi_reduction <add>, %180, %cst_89 [1] : vector<34x34xf32> to vector<34xf32>
    %182 = vector.shape_cast %181 : vector<34xf32> to vector<34x1xf32>
    %183 = tpu.reciprocal %182 {approx = true} : vector<34x1xf32> -> vector<34x1xf32>
    %184 = vector.broadcast %183 : vector<34x1xf32> to vector<34x34xf32>
    %185 = arith.mulf %180, %184 : vector<34x34xf32>
    %186 = vector.broadcast %23 : vector<1x16xf32> to vector<34x16xf32>
    %187 = arith.mulf %119, %186 : vector<34x16xf32>
    %cst_90 = arith.constant dense<0.000000e+00> : vector<34x16xf32>
    %188 = tpu.matmul %185, %187, %cst_90 {dimension_numbers = #tpu.dot_dimension_numbers<[1], [0], [0], [1], [0, 0, 1, 1], [], []>} : vector<34x34xf32>, vector<34x16xf32>, vector<34x16xf32> -> vector<34x16xf32>
    %189 = arith.addf %166, %188 : vector<34x16xf32>
    %190 = vector.broadcast %30 : vector<1x16xf32> to vector<34x16xf32>
    %191 = arith.mulf %111, %190 : vector<34x16xf32>
    %192 = vector.broadcast %30 : vector<1x16xf32> to vector<34x16xf32>
    %193 = arith.mulf %115, %192 : vector<34x16xf32>
    %cst_91 = arith.constant dense<0.000000e+00> : vector<34x34xf32>
    %194 = tpu.matmul %191, %193, %cst_91 {dimension_numbers = #tpu.dot_dimension_numbers<[1], [1], [0], [0], [0, 0, 1, 0], [], []>} : vector<34x16xf32>, vector<34x16xf32>, vector<34x34xf32> -> vector<34x34xf32>
    %cst_92 = arith.constant 5.000000e-01 : f32
    %195 = vector.broadcast %cst_92 : f32 to vector<34x34xf32>
    %196 = arith.mulf %194, %195 : vector<34x34xf32>
    %cst_93 = arith.constant -1.000000e+30 : f32
    %197 = vector.broadcast %cst_93 : f32 to vector<34x34xf32>
    %198 = arith.select %55, %196, %197 : vector<34x34xi1>, vector<34x34xf32>
    %cst_94 = arith.constant dense<0xFF800000> : vector<34xf32>
    %199 = vector.multi_reduction <maximumf>, %198, %cst_94 [1] : vector<34x34xf32> to vector<34xf32>
    %200 = vector.shape_cast %199 : vector<34xf32> to vector<34x1xf32>
    %201 = vector.broadcast %200 : vector<34x1xf32> to vector<34x34xf32>
    %202 = arith.subf %198, %201 : vector<34x34xf32>
    %203 = math.exp %202 : vector<34x34xf32>
    %cst_95 = arith.constant dense<0.000000e+00> : vector<34xf32>
    %204 = vector.multi_reduction <add>, %203, %cst_95 [1] : vector<34x34xf32> to vector<34xf32>
    %205 = vector.shape_cast %204 : vector<34xf32> to vector<34x1xf32>
    %206 = tpu.reciprocal %205 {approx = true} : vector<34x1xf32> -> vector<34x1xf32>
    %207 = vector.broadcast %206 : vector<34x1xf32> to vector<34x34xf32>
    %208 = arith.mulf %203, %207 : vector<34x34xf32>
    %209 = vector.broadcast %30 : vector<1x16xf32> to vector<34x16xf32>
    %210 = arith.mulf %119, %209 : vector<34x16xf32>
    %cst_96 = arith.constant dense<0.000000e+00> : vector<34x16xf32>
    %211 = tpu.matmul %208, %210, %cst_96 {dimension_numbers = #tpu.dot_dimension_numbers<[1], [0], [0], [1], [0, 0, 1, 1], [], []>} : vector<34x34xf32>, vector<34x16xf32>, vector<34x16xf32> -> vector<34x16xf32>
    %212 = arith.addf %189, %211 : vector<34x16xf32>
    %213 = vector.shape_cast %77 : vector<1x16x16xf32> to vector<16x16xf32>
    %cst_97 = arith.constant dense<0.000000e+00> : vector<34x16xf32>
    %214 = tpu.matmul %212, %213, %cst_97 {dimension_numbers = #tpu.dot_dimension_numbers<[1], [0], [0], [1], [0, 0, 1, 1], [], []>} : vector<34x16xf32>, vector<16x16xf32>, vector<34x16xf32> -> vector<34x16xf32>
    %215 = vector.broadcast %79 : vector<1x16xf32> to vector<34x16xf32>
    %216 = arith.addf %214, %215 : vector<34x16xf32>
    %217 = arith.addf %1, %216 : vector<34x16xf32>
    %cst_98 = arith.constant dense<0.000000e+00> : vector<34xf32>
    %218 = vector.multi_reduction <add>, %217, %cst_98 [1] : vector<34x16xf32> to vector<34xf32>
    %219 = vector.shape_cast %218 : vector<34xf32> to vector<34x1xf32>
    %cst_99 = arith.constant 1.600000e+01 : f32
    %220 = vector.broadcast %cst_99 : f32 to vector<34x1xf32>
    %221 = arith.divf %219, %220 : vector<34x1xf32>
    %222 = vector.broadcast %221 : vector<34x1xf32> to vector<34x16xf32>
    %223 = arith.subf %217, %222 : vector<34x16xf32>
    %224 = arith.mulf %223, %223 : vector<34x16xf32>
    %cst_100 = arith.constant dense<0.000000e+00> : vector<34xf32>
    %225 = vector.multi_reduction <add>, %224, %cst_100 [1] : vector<34x16xf32> to vector<34xf32>
    %226 = vector.shape_cast %225 : vector<34xf32> to vector<34x1xf32>
    %cst_101 = arith.constant 1.600000e+01 : f32
    %227 = vector.broadcast %cst_101 : f32 to vector<34x1xf32>
    %228 = arith.divf %226, %227 : vector<34x1xf32>
    %cst_102 = arith.constant 9.99999974E-6 : f32
    %229 = vector.broadcast %cst_102 : f32 to vector<34x1xf32>
    %230 = arith.addf %228, %229 : vector<34x1xf32>
    %231 = math.rsqrt %230 : vector<34x1xf32>
    %232 = vector.broadcast %231 : vector<34x1xf32> to vector<34x16xf32>
    %233 = arith.mulf %223, %232 : vector<34x16xf32>
    %234 = vector.broadcast %61 : vector<1x16xf32> to vector<34x16xf32>
    %235 = arith.mulf %233, %234 : vector<34x16xf32>
    %236 = vector.broadcast %63 : vector<1x16xf32> to vector<34x16xf32>
    %237 = arith.addf %235, %236 : vector<34x16xf32>
    %238 = vector.shape_cast %81 : vector<1x16x64xf32> to vector<16x64xf32>
    %cst_103 = arith.constant dense<0.000000e+00> : vector<34x64xf32>
    %239 = tpu.matmul %237, %238, %cst_103 {dimension_numbers = #tpu.dot_dimension_numbers<[1], [0], [0], [1], [0, 0, 1, 1], [], []>} : vector<34x16xf32>, vector<16x64xf32>, vector<34x64xf32> -> vector<34x64xf32>
    %240 = vector.broadcast %83 : vector<1x64xf32> to vector<34x64xf32>
    %241 = arith.addf %239, %240 : vector<34x64xf32>
    %242 = arith.mulf %241, %241 : vector<34x64xf32>
    %243 = arith.mulf %241, %242 : vector<34x64xf32>
    %cst_104 = arith.constant 4.471500e-02 : f32
    %244 = vector.broadcast %cst_104 : f32 to vector<34x64xf32>
    %245 = arith.mulf %244, %243 : vector<34x64xf32>
    %246 = arith.addf %241, %245 : vector<34x64xf32>
    %cst_105 = arith.constant 0.797884583 : f32
    %247 = vector.broadcast %cst_105 : f32 to vector<34x64xf32>
    %248 = arith.mulf %247, %246 : vector<34x64xf32>
    %249 = math.tanh %248 : vector<34x64xf32>
    %cst_106 = arith.constant 1.000000e+00 : f32
    %250 = vector.broadcast %cst_106 : f32 to vector<34x64xf32>
    %251 = arith.addf %250, %249 : vector<34x64xf32>
    %cst_107 = arith.constant 5.000000e-01 : f32
    %252 = vector.broadcast %cst_107 : f32 to vector<34x64xf32>
    %253 = arith.mulf %252, %251 : vector<34x64xf32>
    %254 = arith.mulf %241, %253 : vector<34x64xf32>
    %255 = vector.shape_cast %85 : vector<1x64x16xf32> to vector<64x16xf32>
    %cst_108 = arith.constant dense<0.000000e+00> : vector<34x16xf32>
    %256 = tpu.matmul %254, %255, %cst_108 {dimension_numbers = #tpu.dot_dimension_numbers<[1], [0], [0], [1], [0, 0, 1, 1], [], []>} : vector<34x64xf32>, vector<64x16xf32>, vector<34x16xf32> -> vector<34x16xf32>
    %257 = vector.broadcast %87 : vector<1x16xf32> to vector<34x16xf32>
    %258 = arith.addf %256, %257 : vector<34x16xf32>
    %259 = arith.addf %217, %258 : vector<34x16xf32>
    %c0_109 = arith.constant 0 : index
    %c0_110 = arith.constant 0 : index
    %c0_111 = arith.constant 0 : index
    %260 = vector.load %arg18[%c0_109, %c0_110, %c0_111] : memref<1x1x16xf32, #tpu.memory_space<vmem>>, vector<1x1x16xf32>
    %261 = vector.shape_cast %260 : vector<1x1x16xf32> to vector<1x16xf32>
    %c0_112 = arith.constant 0 : index
    %c0_113 = arith.constant 0 : index
    %c0_114 = arith.constant 0 : index
    %262 = vector.load %arg19[%c0_112, %c0_113, %c0_114] : memref<1x1x16xf32, #tpu.memory_space<vmem>>, vector<1x1x16xf32>
    %263 = vector.shape_cast %262 : vector<1x1x16xf32> to vector<1x16xf32>
    %cst_115 = arith.constant dense<0.000000e+00> : vector<34xf32>
    %264 = vector.multi_reduction <add>, %259, %cst_115 [1] : vector<34x16xf32> to vector<34xf32>
    %265 = vector.shape_cast %264 : vector<34xf32> to vector<34x1xf32>
    %cst_116 = arith.constant 1.600000e+01 : f32
    %266 = vector.broadcast %cst_116 : f32 to vector<34x1xf32>
    %267 = arith.divf %265, %266 : vector<34x1xf32>
    %268 = vector.broadcast %267 : vector<34x1xf32> to vector<34x16xf32>
    %269 = arith.subf %259, %268 : vector<34x16xf32>
    %270 = arith.mulf %269, %269 : vector<34x16xf32>
    %cst_117 = arith.constant dense<0.000000e+00> : vector<34xf32>
    %271 = vector.multi_reduction <add>, %270, %cst_117 [1] : vector<34x16xf32> to vector<34xf32>
    %272 = vector.shape_cast %271 : vector<34xf32> to vector<34x1xf32>
    %cst_118 = arith.constant 1.600000e+01 : f32
    %273 = vector.broadcast %cst_118 : f32 to vector<34x1xf32>
    %274 = arith.divf %272, %273 : vector<34x1xf32>
    %cst_119 = arith.constant 9.99999974E-6 : f32
    %275 = vector.broadcast %cst_119 : f32 to vector<34x1xf32>
    %276 = arith.addf %274, %275 : vector<34x1xf32>
    %277 = math.rsqrt %276 : vector<34x1xf32>
    %278 = vector.broadcast %277 : vector<34x1xf32> to vector<34x16xf32>
    %279 = arith.mulf %269, %278 : vector<34x16xf32>
    %280 = vector.broadcast %261 : vector<1x16xf32> to vector<34x16xf32>
    %281 = arith.mulf %279, %280 : vector<34x16xf32>
    %282 = vector.broadcast %263 : vector<1x16xf32> to vector<34x16xf32>
    %283 = arith.addf %281, %282 : vector<34x16xf32>
    %c0_120 = arith.constant 0 : index
    %c0_121 = arith.constant 0 : index
    %c0_122 = arith.constant 0 : index
    %284 = vector.load %arg20[%c0_120, %c0_121, %c0_122] : memref<1x16x16xf32, #tpu.memory_space<vmem>>, vector<1x16x16xf32>
    %285 = vector.shape_cast %284 : vector<1x16x16xf32> to vector<16x16xf32>
    %cst_123 = arith.constant dense<0.000000e+00> : vector<34x16xf32>
    %286 = tpu.matmul %283, %285, %cst_123 {dimension_numbers = #tpu.dot_dimension_numbers<[1], [0], [0], [1], [0, 0, 1, 1], [], []>} : vector<34x16xf32>, vector<16x16xf32>, vector<34x16xf32> -> vector<34x16xf32>
    %c0_124 = arith.constant 0 : index
    %c0_125 = arith.constant 0 : index
    %c0_126 = arith.constant 0 : index
    %287 = vector.load %arg21[%c0_124, %c0_125, %c0_126] : memref<1x1x16xf32, #tpu.memory_space<vmem>>, vector<1x1x16xf32>
    %288 = vector.shape_cast %287 : vector<1x1x16xf32> to vector<1x16xf32>
    %289 = vector.broadcast %288 : vector<1x16xf32> to vector<34x16xf32>
    %290 = arith.addf %286, %289 : vector<34x16xf32>
    %c0_127 = arith.constant 0 : index
    %c0_128 = arith.constant 0 : index
    %c0_129 = arith.constant 0 : index
    %291 = vector.load %arg22[%c0_127, %c0_128, %c0_129] : memref<1x34x16xf32, #tpu.memory_space<vmem>>, vector<1x34x16xf32>
    %292 = vector.shape_cast %291 : vector<1x34x16xf32> to vector<34x16xf32>
    %293 = vector.shape_cast %290 : vector<34x16xf32> to vector<1x34x16xf32>
    tpu.vector_store %arg22[%c0_127, %c0_128, %c0_129], %293 {strides = array<i32>} : memref<1x34x16xf32, #tpu.memory_space<vmem>>, vector<1x34x16xf32>,
    return
  }
  func.func @transform_0(%arg0: i32) -> (i32, i32, i32) {
    %c0_i32 = arith.constant 0 : i32
    %c0_i32_0 = arith.constant 0 : i32
    %c0_i32_1 = arith.constant 0 : i32
    return %arg0, %c0_i32, %c0_i32_0 : i32, i32, i32
  }
  func.func @transform_1(%arg0: i32) -> (i32, i32, i32) {
    %c0_i32 = arith.constant 0 : i32
    %c0_i32_0 = arith.constant 0 : i32
    %c0_i32_1 = arith.constant 0 : i32
    return %arg0, %c0_i32, %c0_i32_0 : i32, i32, i32
  }
  func.func @transform_2(%arg0: i32) -> (i32, i32, i32) {
    %c0_i32 = arith.constant 0 : i32
    %c0_i32_0 = arith.constant 0 : i32
    %c0_i32_1 = arith.constant 0 : i32
    return %arg0, %c0_i32, %c0_i32_0 : i32, i32, i32
  }
  func.func @transform_3(%arg0: i32) -> (i32, i32, i32, i32) {
    %c0_i32 = arith.constant 0 : i32
    %c0_i32_0 = arith.constant 0 : i32
    %c0_i32_1 = arith.constant 0 : i32
    %c0_i32_2 = arith.constant 0 : i32
    return %arg0, %c0_i32, %c0_i32_0, %c0_i32_1 : i32, i32, i32, i32
  }
  func.func @transform_4(%arg0: i32) -> (i32, i32, i32) {
    %c0_i32 = arith.constant 0 : i32
    %c0_i32_0 = arith.constant 0 : i32
    %c0_i32_1 = arith.constant 0 : i32
    return %arg0, %c0_i32, %c0_i32_0 : i32, i32, i32
  }
  func.func @transform_5(%arg0: i32) -> (i32, i32, i32, i32) {
    %c0_i32 = arith.constant 0 : i32
    %c0_i32_0 = arith.constant 0 : i32
    %c0_i32_1 = arith.constant 0 : i32
    %c0_i32_2 = arith.constant 0 : i32
    return %arg0, %c0_i32, %c0_i32_0, %c0_i32_1 : i32, i32, i32, i32
  }
  func.func @transform_6(%arg0: i32) -> (i32, i32, i32) {
    %c0_i32 = arith.constant 0 : i32
    %c0_i32_0 = arith.constant 0 : i32
    %c0_i32_1 = arith.constant 0 : i32
    return %arg0, %c0_i32, %c0_i32_0 : i32, i32, i32
  }
  func.func @transform_7(%arg0: i32) -> (i32, i32, i32, i32) {
    %c0_i32 = arith.constant 0 : i32
    %c0_i32_0 = arith.constant 0 : i32
    %c0_i32_1 = arith.constant 0 : i32
    %c0_i32_2 = arith.constant 0 : i32
    return %arg0, %c0_i32, %c0_i32_0, %c0_i32_1 : i32, i32, i32, i32
  }
  func.func @transform_8(%arg0: i32) -> (i32, i32, i32) {
    %c0_i32 = arith.constant 0 : i32
    %c0_i32_0 = arith.constant 0 : i32
    %c0_i32_1 = arith.constant 0 : i32
    return %arg0, %c0_i32, %c0_i32_0 : i32, i32, i32
  }
  func.func @transform_9(%arg0: i32) -> (i32, i32, i32, i32) {
    %c0_i32 = arith.constant 0 : i32
    %c0_i32_0 = arith.constant 0 : i32
    %c0_i32_1 = arith.constant 0 : i32
    %c0_i32_2 = arith.constant 0 : i32
    return %arg0, %c0_i32, %c0_i32_0, %c0_i32_1 : i32, i32, i32, i32
  }
  func.func @transform_10(%arg0: i32) -> (i32, i32, i32) {
    %c0_i32 = arith.constant 0 : i32
    %c0_i32_0 = arith.constant 0 : i32
    %c0_i32_1 = arith.constant 0 : i32
    return %arg0, %c0_i32, %c0_i32_0 : i32, i32, i32
  }
  func.func @transform_11(%arg0: i32) -> (i32, i32, i32) {
    %c0_i32 = arith.constant 0 : i32
    %c0_i32_0 = arith.constant 0 : i32
    %c0_i32_1 = arith.constant 0 : i32
    return %arg0, %c0_i32, %c0_i32_0 : i32, i32, i32
  }
  func.func @transform_12(%arg0: i32) -> (i32, i32, i32) {
    %c0_i32 = arith.constant 0 : i32
    %c0_i32_0 = arith.constant 0 : i32
    %c0_i32_1 = arith.constant 0 : i32
    return %arg0, %c0_i32, %c0_i32_0 : i32, i32, i32
  }
  func.func @transform_13(%arg0: i32) -> (i32, i32, i32, i32) {
    %c0_i32 = arith.constant 0 : i32
    %c0_i32_0 = arith.constant 0 : i32
    %c0_i32_1 = arith.constant 0 : i32
    %c0_i32_2 = arith.constant 0 : i32
    return %arg0, %c0_i32, %c0_i32_0, %c0_i32_1 : i32, i32, i32, i32
  }
  func.func @transform_14(%arg0: i32) -> (i32, i32, i32) {
    %c0_i32 = arith.constant 0 : i32
    %c0_i32_0 = arith.constant 0 : i32
    %c0_i32_1 = arith.constant 0 : i32
    return %arg0, %c0_i32, %c0_i32_0 : i32, i32, i32
  }
  func.func @transform_15(%arg0: i32) -> (i32, i32, i32, i32) {
    %c0_i32 = arith.constant 0 : i32
    %c0_i32_0 = arith.constant 0 : i32
    %c0_i32_1 = arith.constant 0 : i32
    %c0_i32_2 = arith.constant 0 : i32
    return %arg0, %c0_i32, %c0_i32_0, %c0_i32_1 : i32, i32, i32, i32
  }
  func.func @transform_16(%arg0: i32) -> (i32, i32, i32) {
    %c0_i32 = arith.constant 0 : i32
    %c0_i32_0 = arith.constant 0 : i32
    %c0_i32_1 = arith.constant 0 : i32
    return %arg0, %c0_i32, %c0_i32_0 : i32, i32, i32
  }
  func.func @transform_17(%arg0: i32) -> (i32, i32, i32) {
    %c0_i32 = arith.constant 0 : i32
    %c0_i32_0 = arith.constant 0 : i32
    %c0_i32_1 = arith.constant 0 : i32
    return %arg0, %c0_i32, %c0_i32_0 : i32, i32, i32
  }
  func.func @transform_18(%arg0: i32) -> (i32, i32, i32) {
    %c0_i32 = arith.constant 0 : i32
    %c0_i32_0 = arith.constant 0 : i32
    %c0_i32_1 = arith.constant 0 : i32
    return %arg0, %c0_i32, %c0_i32_0 : i32, i32, i32
  }
  func.func @transform_19(%arg0: i32) -> (i32, i32, i32) {
    %c0_i32 = arith.constant 0 : i32
    %c0_i32_0 = arith.constant 0 : i32
    %c0_i32_1 = arith.constant 0 : i32
    return %arg0, %c0_i32, %c0_i32_0 : i32, i32, i32
  }
  func.func @transform_20(%arg0: i32) -> (i32, i32, i32) {
    %c0_i32 = arith.constant 0 : i32
    %c0_i32_0 = arith.constant 0 : i32
    %c0_i32_1 = arith.constant 0 : i32
    return %arg0, %c0_i32, %c0_i32_0 : i32, i32, i32
  }
  func.func @transform_21(%arg0: i32) -> (i32, i32, i32) {
    %c0_i32 = arith.constant 0 : i32
    %c0_i32_0 = arith.constant 0 : i32
    %c0_i32_1 = arith.constant 0 : i32
    return %arg0, %c0_i32, %c0_i32_0 : i32, i32, i32
  }
}

module attributes {stable_mosaic.version = 11 : i64} {
  func.func @_combine_loss_kernel(%arg0: i32, %arg1: memref<6x32x16xf32, #tpu.memory_space<vmem>>, %arg2: memref<32x16xf32, #tpu.memory_space<vmem>>, %arg3: memref<32x1xf32, #tpu.memory_space<vmem>>, %arg4: memref<32x16xf32, #tpu.memory_space<vmem>>, %arg5: memref<1x1xf32, #tpu.memory_space<smem>>) attributes {dimension_semantics = [#tpu.dimension_semantics<arbitrary>], iteration_bounds = array<i64: 1>, scalar_prefetch = 0 : i64, scratch_operands = 0 : i64, tpu.core_type = #tpu.core_type<tc>, window_params = [{pipeline_mode = #tpu.pipeline_mode<synchronous>, transform_indices = @transform_0, window_bounds = array<i64: 6, 32, 16>}, {pipeline_mode = #tpu.pipeline_mode<synchronous>, transform_indices = @transform_1, window_bounds = array<i64: 32, 16>}, {pipeline_mode = #tpu.pipeline_mode<synchronous>, transform_indices = @transform_2, window_bounds = array<i64: 32, 1>}, {pipeline_mode = #tpu.pipeline_mode<synchronous>, transform_indices = @transform_3, window_bounds = array<i64: 32, 16>}, {transform_indices = @transform_4, window_bounds = array<i64: 1, 1>}]} {
    %c0 = arith.constant 0 : index
    %c0_0 = arith.constant 0 : index
    %c0_1 = arith.constant 0 : index
    %0 = vector.load %arg1[%c0, %c0_0, %c0_1] : memref<6x32x16xf32, #tpu.memory_space<vmem>>, vector<1x32x16xf32>
    %1 = vector.shape_cast %0 : vector<1x32x16xf32> to vector<32x16xf32>
    %c1 = arith.constant 1 : index
    %c0_2 = arith.constant 0 : index
    %c0_3 = arith.constant 0 : index
    %2 = vector.load %arg1[%c1, %c0_2, %c0_3] : memref<6x32x16xf32, #tpu.memory_space<vmem>>, vector<1x32x16xf32>
    %3 = vector.shape_cast %2 : vector<1x32x16xf32> to vector<32x16xf32>
    %4 = arith.addf %1, %3 : vector<32x16xf32>
    %c2 = arith.constant 2 : index
    %c0_4 = arith.constant 0 : index
    %c0_5 = arith.constant 0 : index
    %5 = vector.load %arg1[%c2, %c0_4, %c0_5] : memref<6x32x16xf32, #tpu.memory_space<vmem>>, vector<1x32x16xf32>
    %6 = vector.shape_cast %5 : vector<1x32x16xf32> to vector<32x16xf32>
    %7 = arith.addf %4, %6 : vector<32x16xf32>
    %c3 = arith.constant 3 : index
    %c0_6 = arith.constant 0 : index
    %c0_7 = arith.constant 0 : index
    %8 = vector.load %arg1[%c3, %c0_6, %c0_7] : memref<6x32x16xf32, #tpu.memory_space<vmem>>, vector<1x32x16xf32>
    %9 = vector.shape_cast %8 : vector<1x32x16xf32> to vector<32x16xf32>
    %10 = arith.addf %7, %9 : vector<32x16xf32>
    %c4 = arith.constant 4 : index
    %c0_8 = arith.constant 0 : index
    %c0_9 = arith.constant 0 : index
    %11 = vector.load %arg1[%c4, %c0_8, %c0_9] : memref<6x32x16xf32, #tpu.memory_space<vmem>>, vector<1x32x16xf32>
    %12 = vector.shape_cast %11 : vector<1x32x16xf32> to vector<32x16xf32>
    %13 = arith.addf %10, %12 : vector<32x16xf32>
    %c5 = arith.constant 5 : index
    %c0_10 = arith.constant 0 : index
    %c0_11 = arith.constant 0 : index
    %14 = vector.load %arg1[%c5, %c0_10, %c0_11] : memref<6x32x16xf32, #tpu.memory_space<vmem>>, vector<1x32x16xf32>
    %15 = vector.shape_cast %14 : vector<1x32x16xf32> to vector<32x16xf32>
    %16 = arith.addf %13, %15 : vector<32x16xf32>
    %c0_12 = arith.constant 0 : index
    %c0_13 = arith.constant 0 : index
    %17 = vector.load %arg4[%c0_12, %c0_13] : memref<32x16xf32, #tpu.memory_space<vmem>>, vector<32x16xf32>
    tpu.vector_store %arg4[%c0_12, %c0_13], %16 {strides = array<i32>} : memref<32x16xf32, #tpu.memory_space<vmem>>, vector<32x16xf32>,
    %c0_14 = arith.constant 0 : index
    %c0_15 = arith.constant 0 : index
    %18 = vector.load %arg2[%c0_14, %c0_15] : memref<32x16xf32, #tpu.memory_space<vmem>>, vector<32x16xf32>
    %19 = arith.subf %16, %18 : vector<32x16xf32>
    %20 = arith.mulf %19, %19 : vector<32x16xf32>
    %cst = arith.constant dense<0.000000e+00> : vector<32xf32>
    %21 = vector.multi_reduction <add>, %20, %cst [1] : vector<32x16xf32> to vector<32xf32>
    %22 = vector.shape_cast %21 : vector<32xf32> to vector<32x1xf32>
    %cst_16 = arith.constant 1.600000e+01 : f32
    %23 = vector.broadcast %cst_16 : f32 to vector<32x1xf32>
    %24 = arith.divf %22, %23 : vector<32x1xf32>
    %c0_17 = arith.constant 0 : index
    %c0_18 = arith.constant 0 : index
    %25 = vector.load %arg3[%c0_17, %c0_18] : memref<32x1xf32, #tpu.memory_space<vmem>>, vector<32x1xf32>
    %26 = arith.mulf %24, %25 : vector<32x1xf32>
    %27 = vector.shape_cast %26 : vector<32x1xf32> to vector<1x32x1xf32>
    %cst_19 = arith.constant dense<0.000000e+00> : vector<1xf32>
    %28 = vector.multi_reduction <add>, %27, %cst_19 [1, 2] : vector<1x32x1xf32> to vector<1xf32>
    %29 = vector.shape_cast %28 : vector<1xf32> to vector<1x1x1xf32>
    %30 = vector.extract %29[0, 0, 0] : f32 from vector<1x1x1xf32>
    %31 = vector.shape_cast %25 : vector<32x1xf32> to vector<1x32x1xf32>
    %cst_20 = arith.constant dense<0.000000e+00> : vector<1xf32>
    %32 = vector.multi_reduction <add>, %31, %cst_20 [1, 2] : vector<1x32x1xf32> to vector<1xf32>
    %33 = vector.shape_cast %32 : vector<1xf32> to vector<1x1x1xf32>
    %34 = vector.extract %33[0, 0, 0] : f32 from vector<1x1x1xf32>
    %35 = arith.divf %30, %34 : f32
    %c0_21 = arith.constant 0 : index
    %c0_22 = arith.constant 0 : index
    %36 = memref.load %arg5[%c0_21, %c0_22] : memref<1x1xf32, #tpu.memory_space<smem>>
    memref.store %35, %arg5[%c0_21, %c0_22] : memref<1x1xf32, #tpu.memory_space<smem>>
    return
  }
  func.func @transform_0(%arg0: i32) -> (i32, i32, i32) {
    %c0_i32 = arith.constant 0 : i32
    %c0_i32_0 = arith.constant 0 : i32
    %c0_i32_1 = arith.constant 0 : i32
    %c0_i32_2 = arith.constant 0 : i32
    return %c0_i32, %c0_i32_0, %c0_i32_1 : i32, i32, i32
  }
  func.func @transform_1(%arg0: i32) -> (i32, i32) {
    %c0_i32 = arith.constant 0 : i32
    %c0_i32_0 = arith.constant 0 : i32
    %c0_i32_1 = arith.constant 0 : i32
    return %c0_i32, %c0_i32_0 : i32, i32
  }
  func.func @transform_2(%arg0: i32) -> (i32, i32) {
    %c0_i32 = arith.constant 0 : i32
    %c0_i32_0 = arith.constant 0 : i32
    %c0_i32_1 = arith.constant 0 : i32
    return %c0_i32, %c0_i32_0 : i32, i32
  }
  func.func @transform_3(%arg0: i32) -> (i32, i32) {
    %c0_i32 = arith.constant 0 : i32
    %c0_i32_0 = arith.constant 0 : i32
    %c0_i32_1 = arith.constant 0 : i32
    return %c0_i32, %c0_i32_0 : i32, i32
  }
  func.func @transform_4(%arg0: i32) -> (i32, i32) {
    %c0_i32 = arith.constant 0 : i32
    %c0_i32_0 = arith.constant 0 : i32
    %c0_i32_1 = arith.constant 0 : i32
    return %c0_i32, %c0_i32_0 : i32, i32
  }
}

</mosaic_0001>

<llo_original>
// kernel: wavelet_transformer_forward.4
$region0: #{wavelet_transformer_forward.4}
  #allocation0 [shape = 'u32[]', space=smem, size = 0x4, offset = 0x4, fixed_abs, tag = 'smem constant byte address 0x4 - core index']
  #allocation1 [shape = 'u32[144,128]{1,0:T(1,128)}', space=vmem, size = 0x12000, scoped, tag = 'internal scratch']
  %s0 = inlined_call_operand.vmem [shape: f32[6,32,16], index: 0, kind: input, shape index: {}]
  %s1 = inlined_call_operand.vmem [shape: f32[6,16,32], index: 1, kind: input, shape index: {}]
  %s2 = inlined_call_operand.vmem [shape: f32[6,32,32], index: 2, kind: input, shape index: {}]
  %s3 = inlined_call_operand.vmem [shape: f32[6,32,32], index: 3, kind: output, shape index: {}]
  %s4 = sld [smem:[#allocation0]]
  $region45: #{wavelet_transformer_forward.4} parent=0
    _
  %s6 = ssub.s32 1, %s4
  %s7 = scalar_select 0, %s6, %s4
  loop: start=0, step=1, limit=8
  $region2: #{wavelet_transformer_forward.4} parent=0 // loop_pre_header
    _
  $region3: #{wavelet_transformer_forward.4} parent=0 // loop_header
    %s9 = sphi 0, %s13
    %p10 = scmp.ge.s32.totalorder %s9, 8
    %s19 = sphi 0, %s21
    %s22 = sphi 0, %s19
    %s23 = sphi 0, %s22
    %s39 = sphi 0, %s23
    %s45 = sphi 0, %s47
    %s48 = sphi 0, %s45
    %s49 = sphi 0, %s48
    %s65 = sphi 0, %s49
    %s71 = sphi 0, %s73
    %s74 = sphi 0, %s71
    %s75 = sphi 0, %s74
    %s91 = sphi 0, %s75
    %s97 = sphi 0, %s99
    %s100 = sphi 0, %s97
    %s101 = sphi 0, %s100
    %s117 = sphi 0, %s101
  $region4: #{wavelet_transformer_forward.4} parent=0 // loop_header_branch
    %12 = sbr.rel (%p10) target = $region8
  $region5: #{wavelet_transformer_forward.4} parent=0 // loop_body
    %s14 = ssub.s32 %s9, 1
    %s15 = ssub.s32 %s9, 2
    %s16 = sadd.s32 %s9, 1
    %s17 = ssub.s32 %s9, %s16
    %p18 = scmp.eq.s32.totalorder %s17, 0
    %s20 = sadd.s32 %s19, 1
    %s21 = scalar_select %p18, %s19, %s20
    %p24 = pneg %p18
    %p25 = scmp.eq.s32.totalorder %s9, 5
    %p26 = por %p24, %p25
    %p27 = scmp.ne.s32.totalorder %s19, %s22
    %p28 = scmp.eq.s32.totalorder %s9, 0
    %p29 = por %p27, %p28
    %p30 = scmp.ne.s32.totalorder %s19, %s22
    %p31 = scmp.eq.s32.totalorder %s14, 5
    %p32 = por %p30, %p31
    %p33 = scmp.ne.s32.totalorder %s22, %s23
    %p34 = scmp.eq.s32.totalorder %s14, 0
    %p35 = por %p33, %p34
    %p36 = scmp.ne.s32.totalorder %s22, %s23
    %p37 = scmp.eq.s32.totalorder %s15, 5
    %p38 = por %p36, %p37
    %p40 = scmp.ne.s32.totalorder %s23, %s39
    %p41 = scmp.eq.s32.totalorder %s15, 0
    %p42 = por %p40, %p41
    %s43 = ssub.s32 %s9, %s16
    %p44 = scmp.eq.s32.totalorder %s43, 0
    %s46 = sadd.s32 %s45, 1
    %s47 = scalar_select %p44, %s45, %s46
    %p50 = pneg %p44
    %p51 = scmp.eq.s32.totalorder %s9, 5
    %p52 = por %p50, %p51
    %p53 = scmp.ne.s32.totalorder %s45, %s48
    %p54 = scmp.eq.s32.totalorder %s9, 0
    %p55 = por %p53, %p54
    %p56 = scmp.ne.s32.totalorder %s45, %s48
    %p57 = scmp.eq.s32.totalorder %s14, 5
    %p58 = por %p56, %p57
    %p59 = scmp.ne.s32.totalorder %s48, %s49
    %p60 = scmp.eq.s32.totalorder %s14, 0
    %p61 = por %p59, %p60
    %p62 = scmp.ne.s32.totalorder %s48, %s49
    %p63 = scmp.eq.s32.totalorder %s15, 5
    %p64 = por %p62, %p63
    %p66 = scmp.ne.s32.totalorder %s49, %s65
    %p67 = scmp.eq.s32.totalorder %s15, 0
    %p68 = por %p66, %p67
    %s69 = ssub.s32 %s9, %s16
    %p70 = scmp.eq.s32.totalorder %s69, 0
    %s72 = sadd.s32 %s71, 1
    %s73 = scalar_select %p70, %s71, %s72
    %p76 = pneg %p70
    %p77 = scmp.eq.s32.totalorder %s9, 5
    %p78 = por %p76, %p77
    %p79 = scmp.ne.s32.totalorder %s71, %s74
    %p80 = scmp.eq.s32.totalorder %s9, 0
    %p81 = por %p79, %p80
    %p82 = scmp.ne.s32.totalorder %s71, %s74
    %p83 = scmp.eq.s32.totalorder %s14, 5
    %p84 = por %p82, %p83
    %p85 = scmp.ne.s32.totalorder %s74, %s75
    %p86 = scmp.eq.s32.totalorder %s14, 0
    %p87 = por %p85, %p86
    %p88 = scmp.ne.s32.totalorder %s74, %s75
    %p89 = scmp.eq.s32.totalorder %s15, 5
    %p90 = por %p88, %p89
    %p92 = scmp.ne.s32.totalorder %s75, %s91
    %p93 = scmp.eq.s32.totalorder %s15, 0
    %p94 = por %p92, %p93
    %s95 = ssub.s32 %s9, %s16
    %p96 = scmp.eq.s32.totalorder %s95, 0
    %s98 = sadd.s32 %s97, 1
    %s99 = scalar_select %p96, %s97, %s98
    %p102 = pneg %p96
    %p103 = scmp.eq.s32.totalorder %s9, 5
    %p104 = por %p102, %p103
    %p105 = scmp.ne.s32.totalorder %s97, %s100
    %p106 = scmp.eq.s32.totalorder %s9, 0
    %p107 = por %p105, %p106
    %p108 = scmp.ne.s32.totalorder %s97, %s100
    %p109 = scmp.eq.s32.totalorder %s14, 5
    %p110 = por %p108, %p109
    %p111 = scmp.ne.s32.totalorder %s100, %s101
    %p112 = scmp.eq.s32.totalorder %s14, 0
    %p113 = por %p111, %p112
    %p114 = scmp.ne.s32.totalorder %s100, %s101
    %p115 = scmp.eq.s32.totalorder %s15, 5
    %p116 = por %p114, %p115
    %p118 = scmp.ne.s32.totalorder %s101, %s117
    %p119 = scmp.eq.s32.totalorder %s15, 0
    %p120 = por %p118, %p119
    %p121 = scmp.le.s32.totalorder 1, %s9
    %p122 = scmp.lt.s32.totalorder %s9, 7
    %p123 = pnand %p121, %p122
    %p124 = pneg %p123
    // Predicated region
    $region9: #{wavelet_transformer_forward.4} parent=5 // pred_check
      _
    $region10: #{wavelet_transformer_forward.4} parent=5 // pred_check_branch
      %126 = sbr.rel (%p123) target = $region12
    $region11: #{wavelet_transformer_forward.4} parent=5 // pred_region
      %s127 = ssub.s32 %s9, 1
    $region12: #{wavelet_transformer_forward.4} parent=5 // pred_fallthru
      _
    %p128 = scmp.lt.s32.totalorder %s9, 6
    // Predicated region
    $region13: #{wavelet_transformer_forward.4} parent=5 // pred_check
      %p129 = pneg %p128
    $region14: #{wavelet_transformer_forward.4} parent=5 // pred_check_branch
      %131 = sbr.rel (%p129) target = $region16
    $region15: #{wavelet_transformer_forward.4} parent=5 // pred_region
      // Predicated region
      $region17: #{wavelet_transformer_forward.4} parent=15 // pred_check
        %p132 = pneg %p29
      $region18: #{wavelet_transformer_forward.4} parent=15 // pred_check_branch
        %134 = sbr.rel (%p132) target = $region20
      $region19: #{wavelet_transformer_forward.4} parent=15 // pred_region
        %p135 = scmp.lt.s32.totalorder %s9, 5
        %s136 = scalar_select %p135, %s9, 5
        %s137 = smul.addr %s136, 4
        %s138 = smul.addr %s137, 8
        %s139 = scalar_lea.vmem %s0, %s138
      $region20: #{wavelet_transformer_forward.4} parent=15 // pred_fallthru
        _
      // Predicated region
      $region21: #{wavelet_transformer_forward.4} parent=15 // pred_check
        %p140 = pneg %p55
      $region22: #{wavelet_transformer_forward.4} parent=15 // pred_check_branch
        %142 = sbr.rel (%p140) target = $region24
      $region23: #{wavelet_transformer_forward.4} parent=15 // pred_region
        %p143 = scmp.lt.s32.totalorder %s9, 5
        %s144 = scalar_select %p143, %s9, 5
        %s145 = smul.addr %s144, 2
        %s146 = smul.addr %s145, 8
        %s147 = scalar_lea.vmem %s1, %s146
      $region24: #{wavelet_transformer_forward.4} parent=15 // pred_fallthru
        _
      // Predicated region
      $region25: #{wavelet_transformer_forward.4} parent=15 // pred_check
        %p148 = pneg %p81
      $region26: #{wavelet_transformer_forward.4} parent=15 // pred_check_branch
        %150 = sbr.rel (%p148) target = $region28
      $region27: #{wavelet_transformer_forward.4} parent=15 // pred_region
        %p151 = scmp.lt.s32.totalorder %s9, 5
        %s152 = scalar_select %p151, %s9, 5
        %s153 = smul.addr %s152, 4
        %s154 = smul.addr %s153, 8
        %s155 = scalar_lea.vmem %s2, %s154
      $region28: #{wavelet_transformer_forward.4} parent=15 // pred_fallthru
        _
    $region16: #{wavelet_transformer_forward.4} parent=5 // pred_fallthru
      _
    %p156 = scmp.le.s32.totalorder 1, %s9
    %p157 = scmp.lt.s32.totalorder %s9, 7
    %p158 = pnand %p156, %p157
    %p159 = pneg %p158
    // Predicated region
    $region29: #{wavelet_transformer_forward.4} parent=5 // pred_check
      _
    $region30: #{wavelet_transformer_forward.4} parent=5 // pred_check_branch
      %161 = sbr.rel (%p158) target = $region32
    $region31: #{wavelet_transformer_forward.4} parent=5 // pred_region
      %s162 = ssub.s32 %s9, 1
      %p163 = scmp.lt.s32.totalorder %s14, 5
      %s164 = scalar_select %p163, %s14, 5
      %s165 = smul.addr %s164, 4
      %s166 = smul.addr %s165, 8
      %s167 = scalar_lea.vmem %s0, %s166
      %p168 = pneg %p35
      %p169 = pneg %p32
      %p170 = scmp.lt.s32.totalorder %s14, 5
      %s171 = scalar_select %p170, %s14, 5
      %s172 = smul.addr %s171, 2
      %s173 = smul.addr %s172, 8
      %s174 = scalar_lea.vmem %s1, %s173
      %p175 = pneg %p61
      %p176 = pneg %p58
      %p177 = scmp.lt.s32.totalorder %s14, 5
      %s178 = scalar_select %p177, %s14, 5
      %s179 = smul.addr %s178, 4
      %s180 = smul.addr %s179, 8
      %s181 = scalar_lea.vmem %s2, %s180
      %p182 = pneg %p87
      %p183 = pneg %p84
      %p184 = pneg %p113
      %p185 = pneg %p110
      %p186 = scmp.lt.s32.totalorder %s14, 5
      %s187 = scalar_select %p186, %s14, 5
      %s188 = smul.addr %s187, 4
      %s189 = smul.addr %s188, 8
      %s190 = scalar_lea.vmem %s3, %s189
      %p191 = scmp.lt.s32.totalorder %s14, 5
      %s192 = scalar_select %p191, %s14, 5
      %s193 = smul.addr %s192, 4
      %s194 = smul.addr %s193, 8
      %s195 = scalar_lea.vmem %s0, %s194
      %p196 = scmp.lt.s32.totalorder %s14, 5
      %s197 = scalar_select %p196, %s14, 5
      %s198 = smul.addr %s197, 2
      %s199 = smul.addr %s198, 8
      %s200 = scalar_lea.vmem %s1, %s199
      %p201 = scmp.lt.s32.totalorder %s14, 5
      %s202 = scalar_select %p201, %s14, 5
      %s203 = smul.addr %s202, 4
      %s204 = smul.addr %s203, 8
      %s205 = scalar_lea.vmem %s2, %s204
      %p206 = scmp.lt.s32.totalorder %s14, 5
      %s207 = scalar_select %p206, %s14, 5
      %s208 = smul.addr %s207, 4
      %s209 = smul.addr %s208, 8
      %s210 = scalar_lea.vmem %s3, %s209
      %v211 = vld [vmem:[%s195] sm:$0xff]
      %v212 = vld [vmem:[%s195 + $0x8] sm:$0xff]
      %v213 = vld [vmem:[%s195 + $0x10] sm:$0xff]
      %v214 = vld [vmem:[%s195 + $0x18] sm:$0xff]
      %v215 = vld [vmem:[%s200] sm:$0xff]
      %v216 = vld [vmem:[%s200 + $0x8] sm:$0xff]
      %v217 = vld [vmem:[%s205] sm:$0xff]
      %v218 = vld [vmem:[%s205 + $0x8] sm:$0xff]
      %v219 = vld [vmem:[%s205 + $0x10] sm:$0xff]
      %v220 = vld [vmem:[%s205 + $0x18] sm:$0xff]
      %vm221 = vcmask 130048
      %v223 = vsel %vm221, %v211, 0
      %v226 = vsel %vm221, %v212, 0
      %v229 = vsel %vm221, %v213, 0
      %v232 = vsel %vm221, %v214, 0
      %234 = vmatprep.subr.mxu0 0.0
      %235 = vmatpush1.msra.mxu0 %v215
      %236 = vmatprep.subr.mxu0 0.0
      %237 = vmatpush1.msra.mxu0 %v216
      %238 = vmatprep.subr.mxu0 0.0
      %239 = vmatpush1.msra.mxu0 0.0
      %240 = vmatprep.subr.mxu0 0.0
      %241 = vmatpush1.msra.mxu0 0.0
      %242 = vmatprep.subr.mxu0 0.0
      %243 = vmatpush1.msra.mxu0 0.0
      %244 = vmatprep.subr.mxu0 0.0
      %245 = vmatpush1.msra.mxu0 0.0
      %246 = vmatprep.subr.mxu0 0.0
      %247 = vmatpush1.msra.mxu0 0.0
      %248 = vmatprep.subr.mxu0 0.0
      %249 = vmatpush1.msra.mxu0 0.0
      %250 = vmatprep.subr.mxu0 0.0
      %251 = vmatpush1.msra.mxu0 0.0
      %252 = vmatprep.subr.mxu0 0.0
      %253 = vmatpush1.msra.mxu0 0.0
      %254 = vmatprep.subr.mxu0 0.0
      %255 = vmatpush1.msra.mxu0 0.0
      %256 = vmatprep.subr.mxu0 0.0
      %257 = vmatpush1.msra.mxu0 0.0
      %258 = vmatprep.subr.mxu0 0.0
      %259 = vmatpush1.msra.mxu0 0.0
      %260 = vmatprep.subr.mxu0 0.0
      %261 = vmatpush1.msra.mxu0 0.0
      %262 = vmatprep.subr.mxu0 0.0
      %263 = vmatpush1.msra.mxu0 0.0
      %264 = vmatprep.subr.mxu0 0.0
      %265 = vmatpush1.msra.mxu0 0.0
      %266 = vmatprep.subr.mxu0 0.0
      %267 = vmatpush1.msra.mxu0 0.0
      %268 = vmatprep.subr.mxu0 0.0
      %269 = vmatpush1.msra.mxu0 0.0
      %270 = vmatprep.subr.mxu0 0.0
      %271 = vmatpush1.msra.mxu0 0.0
      %272 = vmatprep.subr.mxu0 0.0
      %273 = vmatpush1.msra.mxu0 0.0
      %274 = vmatprep.subr.mxu0 0.0
      %275 = vmatpush1.msra.mxu0 0.0
      %276 = vmatprep.subr.mxu0 0.0
      %277 = vmatpush1.msra.mxu0 0.0
      %278 = vmatprep.subr.mxu0 0.0
      %279 = vmatpush1.msra.mxu0 0.0
      %280 = vmatprep.subr.mxu0 0.0
      %281 = vmatpush1.msra.mxu0 0.0
      %282 = vmatprep.subr.mxu0 0.0
      %283 = vmatpush1.msra.mxu0 0.0
      %284 = vmatprep.subr.mxu0 0.0
      %285 = vmatpush1.msra.mxu0 0.0
      %286 = vmatprep.subr.mxu0 0.0
      %287 = vmatpush1.msra.mxu0 0.0
      %288 = vmatprep.subr.mxu0 0.0
      %289 = vmatpush1.msra.mxu0 0.0
      %290 = vmatprep.subr.mxu0 0.0
      %291 = vmatpush1.msra.mxu0 0.0
      %292 = vmatprep.subr.mxu0 0.0
      %293 = vmatpush1.msra.mxu0 0.0
      %294 = vmatprep.subr.mxu0 0.0
      %295 = vmatpush1.msra.mxu0 0.0
      %296 = vmatprep.subr.mxu0 0.0
      %297 = vmatpush1.msra.mxu0 0.0
      %298 = vmatprep.mubr.f32.mxu0 0.0
      %299 = vmatmul.mubr.f32.gmra.mrb[0].mxu0 %v223
      %v300 = vpop.f32.mrb[0].mxu0
      %v301 = vadd.f32 %v217, %v300
      %v302 = vpop.f32.mrb[0].mxu0
      %303 = vmatprep.mubr.f32.mxu0 0.0
      %304 = vmatmul.mubr.f32.gmra.mrb[0].mxu0 %v226
      %v305 = vpop.f32.mrb[0].mxu0
      %v306 = vadd.f32 %v218, %v305
      %v307 = vpop.f32.mrb[0].mxu0
      %308 = vmatprep.mubr.f32.mxu0 0.0
      %309 = vmatmul.mubr.f32.gmra.mrb[0].mxu0 %v229
      %v310 = vpop.f32.mrb[0].mxu0
      %v311 = vadd.f32 %v219, %v310
      %v312 = vpop.f32.mrb[0].mxu0
      %313 = vmatprep.mubr.f32.mxu0 0.0
      %314 = vmatmul.mubr.f32.gmra.mrb[0].mxu0 %v232
      %v315 = vpop.f32.mrb[0].mxu0
      %v316 = vadd.f32 %v220, %v315
      %v317 = vpop.f32.mrb[0].mxu0
      %318 = vdwg.mxu0
      %vm319 = vcmask 261120
      %320 = vst.msk [vmem:[%s210] sm:$0xff] %vm319, %v301
      %321 = vst.msk [vmem:[%s210 + $0x8] sm:$0xff] %vm319, %v306
      %322 = vst.msk [vmem:[%s210 + $0x10] sm:$0xff] %vm319, %v311
      %323 = vst.msk [vmem:[%s210 + $0x18] sm:$0xff] %vm319, %v316
      %p324 = scmp.lt.s32.totalorder %s14, 5
      %s325 = scalar_select %p324, %s14, 5
      %s326 = smul.addr %s325, 4
      %s327 = smul.addr %s326, 8
      %s328 = scalar_lea.vmem %s3, %s327
      // Predicated region
      $region33: #{wavelet_transformer_forward.4} parent=31 // pred_check
        %p329 = pneg %p110
      $region34: #{wavelet_transformer_forward.4} parent=31 // pred_check_branch
        %331 = sbr.rel (%p329) target = $region36
      $region35: #{wavelet_transformer_forward.4} parent=31 // pred_region
        _
      $region36: #{wavelet_transformer_forward.4} parent=31 // pred_fallthru
        _
    $region32: #{wavelet_transformer_forward.4} parent=5 // pred_fallthru
      _
    %p332 = scmp.le.s32.totalorder 2, %s9
    // Predicated region
    $region37: #{wavelet_transformer_forward.4} parent=5 // pred_check
      %p333 = pneg %p332
    $region38: #{wavelet_transformer_forward.4} parent=5 // pred_check_branch
      %335 = sbr.rel (%p333) target = $region40
    $region39: #{wavelet_transformer_forward.4} parent=5 // pred_region
      %s336 = ssub.s32 %s9, 2
      // Predicated region
      $region41: #{wavelet_transformer_forward.4} parent=39 // pred_check
        %p337 = pneg %p116
      $region42: #{wavelet_transformer_forward.4} parent=39 // pred_check_branch
        %339 = sbr.rel (%p337) target = $region44
      $region43: #{wavelet_transformer_forward.4} parent=39 // pred_region
        %p340 = scmp.lt.s32.totalorder %s15, 5
        %s341 = scalar_select %p340, %s15, 5
        %s342 = smul.addr %s341, 4
        %s343 = smul.addr %s342, 8
        %s344 = scalar_lea.vmem %s3, %s343
      $region44: #{wavelet_transformer_forward.4} parent=39 // pred_fallthru
        _
    $region40: #{wavelet_transformer_forward.4} parent=5 // pred_fallthru
      _
  $region6: #{wavelet_transformer_forward.4} parent=0 // loop_footer
    %s13 = sadd.s32 1, %s9
  $region7: #{wavelet_transformer_forward.4} parent=0 // loop_footer_branch
    %8 = sbr.rel target = $region3
  $region8: #{wavelet_transformer_forward.4} parent=0 // loop_exit
    _

// kernel: wavelet_transformer_forward.5
$region0: #{wavelet_transformer_forward.5}
  #allocation0 [shape = 'u32[]', space=smem, size = 0x4, offset = 0x4, fixed_abs, tag = 'smem constant byte address 0x4 - core index']
  #allocation1 [shape = 'u32[144,128]{1,0:T(1,128)}', space=vmem, size = 0x12000, scoped, tag = 'internal scratch']
  %s0 = inlined_call_operand.vmem [shape: f32[6,18,32], index: 0, kind: input, shape index: {}]
  %s1 = inlined_call_operand.vmem [shape: f32[6,2,32], index: 1, kind: input, shape index: {}]
  %s2 = inlined_call_operand.vmem [shape: f32[6,2,32], index: 2, kind: input, shape index: {}]
  %s3 = inlined_call_operand.vmem [shape: f32[6,2,32,32], index: 3, kind: input, shape index: {}]
  %s4 = inlined_call_operand.vmem [shape: f32[6,2,32], index: 4, kind: input, shape index: {}]
  %s5 = inlined_call_operand.vmem [shape: f32[6,2,32,32], index: 5, kind: input, shape index: {}]
  %s6 = inlined_call_operand.vmem [shape: f32[6,2,32], index: 6, kind: input, shape index: {}]
  %s7 = inlined_call_operand.vmem [shape: f32[6,2,32,32], index: 7, kind: input, shape index: {}]
  %s8 = inlined_call_operand.vmem [shape: f32[6,2,32], index: 8, kind: input, shape index: {}]
  %s9 = inlined_call_operand.vmem [shape: f32[6,2,32,32], index: 9, kind: input, shape index: {}]
  %s10 = inlined_call_operand.vmem [shape: f32[6,2,32], index: 10, kind: input, shape index: {}]
  %s11 = inlined_call_operand.vmem [shape: f32[6,2,32], index: 11, kind: input, shape index: {}]
  %s12 = inlined_call_operand.vmem [shape: f32[6,2,32], index: 12, kind: input, shape index: {}]
  %s13 = inlined_call_operand.vmem [shape: f32[6,2,32,128], index: 13, kind: input, shape index: {}]
  %s14 = inlined_call_operand.vmem [shape: f32[6,2,128], index: 14, kind: input, shape index: {}]
  %s15 = inlined_call_operand.vmem [shape: f32[6,2,128,32], index: 15, kind: input, shape index: {}]
  %s16 = inlined_call_operand.vmem [shape: f32[6,2,32], index: 16, kind: input, shape index: {}]
  %s17 = inlined_call_operand.vmem [shape: f32[6,1,32], index: 17, kind: input, shape index: {}]
  %s18 = inlined_call_operand.vmem [shape: f32[6,1,32], index: 18, kind: input, shape index: {}]
  %s19 = inlined_call_operand.vmem [shape: f32[6,32,16], index: 19, kind: input, shape index: {}]
  %s20 = inlined_call_operand.vmem [shape: f32[6,1,16], index: 20, kind: input, shape index: {}]
  %s21 = inlined_call_operand.vmem [shape: f32[6,18,16], index: 21, kind: output, shape index: {}]
  %s22 = sld [smem:[#allocation0]]
  $region117: #{wavelet_transformer_forward.5} parent=0
    _
  %s24 = ssub.s32 1, %s22
  %s25 = scalar_select 0, %s24, %s22
  loop: start=0, step=1, limit=8
  $region2: #{wavelet_transformer_forward.5} parent=0 // loop_pre_header
    _
  $region3: #{wavelet_transformer_forward.5} parent=0 // loop_header
    %s27 = sphi 0, %s31
    %p28 = scmp.ge.s32.totalorder %s27, 8
    %s37 = sphi 0, %s39
    %s40 = sphi 0, %s37
    %s41 = sphi 0, %s40
    %s57 = sphi 0, %s41
    %s63 = sphi 0, %s65
    %s66 = sphi 0, %s63
    %s67 = sphi 0, %s66
    %s83 = sphi 0, %s67
    %s89 = sphi 0, %s91
    %s92 = sphi 0, %s89
    %s93 = sphi 0, %s92
    %s109 = sphi 0, %s93
    %s115 = sphi 0, %s117
    %s118 = sphi 0, %s115
    %s119 = sphi 0, %s118
    %s135 = sphi 0, %s119
    %s141 = sphi 0, %s143
    %s144 = sphi 0, %s141
    %s145 = sphi 0, %s144
    %s161 = sphi 0, %s145
    %s167 = sphi 0, %s169
    %s170 = sphi 0, %s167
    %s171 = sphi 0, %s170
    %s187 = sphi 0, %s171
    %s193 = sphi 0, %s195
    %s196 = sphi 0, %s193
    %s197 = sphi 0, %s196
    %s213 = sphi 0, %s197
    %s219 = sphi 0, %s221
    %s222 = sphi 0, %s219
    %s223 = sphi 0, %s222
    %s239 = sphi 0, %s223
    %s245 = sphi 0, %s247
    %s248 = sphi 0, %s245
    %s249 = sphi 0, %s248
    %s265 = sphi 0, %s249
    %s271 = sphi 0, %s273
    %s274 = sphi 0, %s271
    %s275 = sphi 0, %s274
    %s291 = sphi 0, %s275
    %s297 = sphi 0, %s299
    %s300 = sphi 0, %s297
    %s301 = sphi 0, %s300
    %s317 = sphi 0, %s301
    %s323 = sphi 0, %s325
    %s326 = sphi 0, %s323
    %s327 = sphi 0, %s326
    %s343 = sphi 0, %s327
    %s349 = sphi 0, %s351
    %s352 = sphi 0, %s349
    %s353 = sphi 0, %s352
    %s369 = sphi 0, %s353
    %s375 = sphi 0, %s377
    %s378 = sphi 0, %s375
    %s379 = sphi 0, %s378
    %s395 = sphi 0, %s379
    %s401 = sphi 0, %s403
    %s404 = sphi 0, %s401
    %s405 = sphi 0, %s404
    %s421 = sphi 0, %s405
    %s427 = sphi 0, %s429
    %s430 = sphi 0, %s427
    %s431 = sphi 0, %s430
    %s447 = sphi 0, %s431
    %s453 = sphi 0, %s455
    %s456 = sphi 0, %s453
    %s457 = sphi 0, %s456
    %s473 = sphi 0, %s457
    %s479 = sphi 0, %s481
    %s482 = sphi 0, %s479
    %s483 = sphi 0, %s482
    %s499 = sphi 0, %s483
    %s505 = sphi 0, %s507
    %s508 = sphi 0, %s505
    %s509 = sphi 0, %s508
    %s525 = sphi 0, %s509
    %s531 = sphi 0, %s533
    %s534 = sphi 0, %s531
    %s535 = sphi 0, %s534
    %s551 = sphi 0, %s535
    %s557 = sphi 0, %s559
    %s560 = sphi 0, %s557
    %s561 = sphi 0, %s560
    %s577 = sphi 0, %s561
    %s583 = sphi 0, %s585
    %s586 = sphi 0, %s583
    %s587 = sphi 0, %s586
    %s603 = sphi 0, %s587
  $region4: #{wavelet_transformer_forward.5} parent=0 // loop_header_branch
    %30 = sbr.rel (%p28) target = $region8
  $region5: #{wavelet_transformer_forward.5} parent=0 // loop_body
    %s32 = ssub.s32 %s27, 1
    %s33 = ssub.s32 %s27, 2
    %s34 = sadd.s32 %s27, 1
    %s35 = ssub.s32 %s27, %s34
    %p36 = scmp.eq.s32.totalorder %s35, 0
    %s38 = sadd.s32 %s37, 1
    %s39 = scalar_select %p36, %s37, %s38
    %p42 = pneg %p36
    %p43 = scmp.eq.s32.totalorder %s27, 5
    %p44 = por %p42, %p43
    %p45 = scmp.ne.s32.totalorder %s37, %s40
    %p46 = scmp.eq.s32.totalorder %s27, 0
    %p47 = por %p45, %p46
    %p48 = scmp.ne.s32.totalorder %s37, %s40
    %p49 = scmp.eq.s32.totalorder %s32, 5
    %p50 = por %p48, %p49
    %p51 = scmp.ne.s32.totalorder %s40, %s41
    %p52 = scmp.eq.s32.totalorder %s32, 0
    %p53 = por %p51, %p52
    %p54 = scmp.ne.s32.totalorder %s40, %s41
    %p55 = scmp.eq.s32.totalorder %s33, 5
    %p56 = por %p54, %p55
    %p58 = scmp.ne.s32.totalorder %s41, %s57
    %p59 = scmp.eq.s32.totalorder %s33, 0
    %p60 = por %p58, %p59
    %s61 = ssub.s32 %s27, %s34
    %p62 = scmp.eq.s32.totalorder %s61, 0
    %s64 = sadd.s32 %s63, 1
    %s65 = scalar_select %p62, %s63, %s64
    %p68 = pneg %p62
    %p69 = scmp.eq.s32.totalorder %s27, 5
    %p70 = por %p68, %p69
    %p71 = scmp.ne.s32.totalorder %s63, %s66
    %p72 = scmp.eq.s32.totalorder %s27, 0
    %p73 = por %p71, %p72
    %p74 = scmp.ne.s32.totalorder %s63, %s66
    %p75 = scmp.eq.s32.totalorder %s32, 5
    %p76 = por %p74, %p75
    %p77 = scmp.ne.s32.totalorder %s66, %s67
    %p78 = scmp.eq.s32.totalorder %s32, 0
    %p79 = por %p77, %p78
    %p80 = scmp.ne.s32.totalorder %s66, %s67
    %p81 = scmp.eq.s32.totalorder %s33, 5
    %p82 = por %p80, %p81
    %p84 = scmp.ne.s32.totalorder %s67, %s83
    %p85 = scmp.eq.s32.totalorder %s33, 0
    %p86 = por %p84, %p85
    %s87 = ssub.s32 %s27, %s34
    %p88 = scmp.eq.s32.totalorder %s87, 0
    %s90 = sadd.s32 %s89, 1
    %s91 = scalar_select %p88, %s89, %s90
    %p94 = pneg %p88
    %p95 = scmp.eq.s32.totalorder %s27, 5
    %p96 = por %p94, %p95
    %p97 = scmp.ne.s32.totalorder %s89, %s92
    %p98 = scmp.eq.s32.totalorder %s27, 0
    %p99 = por %p97, %p98
    %p100 = scmp.ne.s32.totalorder %s89, %s92
    %p101 = scmp.eq.s32.totalorder %s32, 5
    %p102 = por %p100, %p101
    %p103 = scmp.ne.s32.totalorder %s92, %s93
    %p104 = scmp.eq.s32.totalorder %s32, 0
    %p105 = por %p103, %p104
    %p106 = scmp.ne.s32.totalorder %s92, %s93
    %p107 = scmp.eq.s32.totalorder %s33, 5
    %p108 = por %p106, %p107
    %p110 = scmp.ne.s32.totalorder %s93, %s109
    %p111 = scmp.eq.s32.totalorder %s33, 0
    %p112 = por %p110, %p111
    %s113 = ssub.s32 %s27, %s34
    %p114 = scmp.eq.s32.totalorder %s113, 0
    %s116 = sadd.s32 %s115, 1
    %s117 = scalar_select %p114, %s115, %s116
    %p120 = pneg %p114
    %p121 = scmp.eq.s32.totalorder %s27, 5
    %p122 = por %p120, %p121
    %p123 = scmp.ne.s32.totalorder %s115, %s118
    %p124 = scmp.eq.s32.totalorder %s27, 0
    %p125 = por %p123, %p124
    %p126 = scmp.ne.s32.totalorder %s115, %s118
    %p127 = scmp.eq.s32.totalorder %s32, 5
    %p128 = por %p126, %p127
    %p129 = scmp.ne.s32.totalorder %s118, %s119
    %p130 = scmp.eq.s32.totalorder %s32, 0
    %p131 = por %p129, %p130
    %p132 = scmp.ne.s32.totalorder %s118, %s119
    %p133 = scmp.eq.s32.totalorder %s33, 5
    %p134 = por %p132, %p133
    %p136 = scmp.ne.s32.totalorder %s119, %s135
    %p137 = scmp.eq.s32.totalorder %s33, 0
    %p138 = por %p136, %p137
    %s139 = ssub.s32 %s27, %s34
    %p140 = scmp.eq.s32.totalorder %s139, 0
    %s142 = sadd.s32 %s141, 1
    %s143 = scalar_select %p140, %s141, %s142
    %p146 = pneg %p140
    %p147 = scmp.eq.s32.totalorder %s27, 5
    %p148 = por %p146, %p147
    %p149 = scmp.ne.s32.totalorder %s141, %s144
    %p150 = scmp.eq.s32.totalorder %s27, 0
    %p151 = por %p149, %p150
    %p152 = scmp.ne.s32.totalorder %s141, %s144
    %p153 = scmp.eq.s32.totalorder %s32, 5
    %p154 = por %p152, %p153
    %p155 = scmp.ne.s32.totalorder %s144, %s145
    %p156 = scmp.eq.s32.totalorder %s32, 0
    %p157 = por %p155, %p156
    %p158 = scmp.ne.s32.totalorder %s144, %s145
    %p159 = scmp.eq.s32.totalorder %s33, 5
    %p160 = por %p158, %p159
    %p162 = scmp.ne.s32.totalorder %s145, %s161
    %p163 = scmp.eq.s32.totalorder %s33, 0
    %p164 = por %p162, %p163
    %s165 = ssub.s32 %s27, %s34
    %p166 = scmp.eq.s32.totalorder %s165, 0
    %s168 = sadd.s32 %s167, 1
    %s169 = scalar_select %p166, %s167, %s168
    %p172 = pneg %p166
    %p173 = scmp.eq.s32.totalorder %s27, 5
    %p174 = por %p172, %p173
    %p175 = scmp.ne.s32.totalorder %s167, %s170
    %p176 = scmp.eq.s32.totalorder %s27, 0
    %p177 = por %p175, %p176
    %p178 = scmp.ne.s32.totalorder %s167, %s170
    %p179 = scmp.eq.s32.totalorder %s32, 5
    %p180 = por %p178, %p179
    %p181 = scmp.ne.s32.totalorder %s170, %s171
    %p182 = scmp.eq.s32.totalorder %s32, 0
    %p183 = por %p181, %p182
    %p184 = scmp.ne.s32.totalorder %s170, %s171
    %p185 = scmp.eq.s32.totalorder %s33, 5
    %p186 = por %p184, %p185
    %p188 = scmp.ne.s32.totalorder %s171, %s187
    %p189 = scmp.eq.s32.totalorder %s33, 0
    %p190 = por %p188, %p189
    %s191 = ssub.s32 %s27, %s34
    %p192 = scmp.eq.s32.totalorder %s191, 0
    %s194 = sadd.s32 %s193, 1
    %s195 = scalar_select %p192, %s193, %s194
    %p198 = pneg %p192
    %p199 = scmp.eq.s32.totalorder %s27, 5
    %p200 = por %p198, %p199
    %p201 = scmp.ne.s32.totalorder %s193, %s196
    %p202 = scmp.eq.s32.totalorder %s27, 0
    %p203 = por %p201, %p202
    %p204 = scmp.ne.s32.totalorder %s193, %s196
    %p205 = scmp.eq.s32.totalorder %s32, 5
    %p206 = por %p204, %p205
    %p207 = scmp.ne.s32.totalorder %s196, %s197
    %p208 = scmp.eq.s32.totalorder %s32, 0
    %p209 = por %p207, %p208
    %p210 = scmp.ne.s32.totalorder %s196, %s197
    %p211 = scmp.eq.s32.totalorder %s33, 5
    %p212 = por %p210, %p211
    %p214 = scmp.ne.s32.totalorder %s197, %s213
    %p215 = scmp.eq.s32.totalorder %s33, 0
    %p216 = por %p214, %p215
    %s217 = ssub.s32 %s27, %s34
    %p218 = scmp.eq.s32.totalorder %s217, 0
    %s220 = sadd.s32 %s219, 1
    %s221 = scalar_select %p218, %s219, %s220
    %p224 = pneg %p218
    %p225 = scmp.eq.s32.totalorder %s27, 5
    %p226 = por %p224, %p225
    %p227 = scmp.ne.s32.totalorder %s219, %s222
    %p228 = scmp.eq.s32.totalorder %s27, 0
    %p229 = por %p227, %p228
    %p230 = scmp.ne.s32.totalorder %s219, %s222
    %p231 = scmp.eq.s32.totalorder %s32, 5
    %p232 = por %p230, %p231
    %p233 = scmp.ne.s32.totalorder %s222, %s223
    %p234 = scmp.eq.s32.totalorder %s32, 0
    %p235 = por %p233, %p234
    %p236 = scmp.ne.s32.totalorder %s222, %s223
    %p237 = scmp.eq.s32.totalorder %s33, 5
    %p238 = por %p236, %p237
    %p240 = scmp.ne.s32.totalorder %s223, %s239
    %p241 = scmp.eq.s32.totalorder %s33, 0
    %p242 = por %p240, %p241
    %s243 = ssub.s32 %s27, %s34
    %p244 = scmp.eq.s32.totalorder %s243, 0
    %s246 = sadd.s32 %s245, 1
    %s247 = scalar_select %p244, %s245, %s246
    %p250 = pneg %p244
    %p251 = scmp.eq.s32.totalorder %s27, 5
    %p252 = por %p250, %p251
    %p253 = scmp.ne.s32.totalorder %s245, %s248
    %p254 = scmp.eq.s32.totalorder %s27, 0
    %p255 = por %p253, %p254
    %p256 = scmp.ne.s32.totalorder %s245, %s248
    %p257 = scmp.eq.s32.totalorder %s32, 5
    %p258 = por %p256, %p257
    %p259 = scmp.ne.s32.totalorder %s248, %s249
    %p260 = scmp.eq.s32.totalorder %s32, 0
    %p261 = por %p259, %p260
    %p262 = scmp.ne.s32.totalorder %s248, %s249
    %p263 = scmp.eq.s32.totalorder %s33, 5
    %p264 = por %p262, %p263
    %p266 = scmp.ne.s32.totalorder %s249, %s265
    %p267 = scmp.eq.s32.totalorder %s33, 0
    %p268 = por %p266, %p267
    %s269 = ssub.s32 %s27, %s34
    %p270 = scmp.eq.s32.totalorder %s269, 0
    %s272 = sadd.s32 %s271, 1
    %s273 = scalar_select %p270, %s271, %s272
    %p276 = pneg %p270
    %p277 = scmp.eq.s32.totalorder %s27, 5
    %p278 = por %p276, %p277
    %p279 = scmp.ne.s32.totalorder %s271, %s274
    %p280 = scmp.eq.s32.totalorder %s27, 0
    %p281 = por %p279, %p280
    %p282 = scmp.ne.s32.totalorder %s271, %s274
    %p283 = scmp.eq.s32.totalorder %s32, 5
    %p284 = por %p282, %p283
    %p285 = scmp.ne.s32.totalorder %s274, %s275
    %p286 = scmp.eq.s32.totalorder %s32, 0
    %p287 = por %p285, %p286
    %p288 = scmp.ne.s32.totalorder %s274, %s275
    %p289 = scmp.eq.s32.totalorder %s33, 5
    %p290 = por %p288, %p289
    %p292 = scmp.ne.s32.totalorder %s275, %s291
    %p293 = scmp.eq.s32.totalorder %s33, 0
    %p294 = por %p292, %p293
    %s295 = ssub.s32 %s27, %s34
    %p296 = scmp.eq.s32.totalorder %s295, 0
    %s298 = sadd.s32 %s297, 1
    %s299 = scalar_select %p296, %s297, %s298
    %p302 = pneg %p296
    %p303 = scmp.eq.s32.totalorder %s27, 5
    %p304 = por %p302, %p303
    %p305 = scmp.ne.s32.totalorder %s297, %s300
    %p306 = scmp.eq.s32.totalorder %s27, 0
    %p307 = por %p305, %p306
    %p308 = scmp.ne.s32.totalorder %s297, %s300
    %p309 = scmp.eq.s32.totalorder %s32, 5
    %p310 = por %p308, %p309
    %p311 = scmp.ne.s32.totalorder %s300, %s301
    %p312 = scmp.eq.s32.totalorder %s32, 0
    %p313 = por %p311, %p312
    %p314 = scmp.ne.s32.totalorder %s300, %s301
    %p315 = scmp.eq.s32.totalorder %s33, 5
    %p316 = por %p314, %p315
    %p318 = scmp.ne.s32.totalorder %s301, %s317
    %p319 = scmp.eq.s32.totalorder %s33, 0
    %p320 = por %p318, %p319
    %s321 = ssub.s32 %s27, %s34
    %p322 = scmp.eq.s32.totalorder %s321, 0
    %s324 = sadd.s32 %s323, 1
    %s325 = scalar_select %p322, %s323, %s324
    %p328 = pneg %p322
    %p329 = scmp.eq.s32.totalorder %s27, 5
    %p330 = por %p328, %p329
    %p331 = scmp.ne.s32.totalorder %s323, %s326
    %p332 = scmp.eq.s32.totalorder %s27, 0
    %p333 = por %p331, %p332
    %p334 = scmp.ne.s32.totalorder %s323, %s326
    %p335 = scmp.eq.s32.totalorder %s32, 5
    %p336 = por %p334, %p335
    %p337 = scmp.ne.s32.totalorder %s326, %s327
    %p338 = scmp.eq.s32.totalorder %s32, 0
    %p339 = por %p337, %p338
    %p340 = scmp.ne.s32.totalorder %s326, %s327
    %p341 = scmp.eq.s32.totalorder %s33, 5
    %p342 = por %p340, %p341
    %p344 = scmp.ne.s32.totalorder %s327, %s343
    %p345 = scmp.eq.s32.totalorder %s33, 0
    %p346 = por %p344, %p345
    %s347 = ssub.s32 %s27, %s34
    %p348 = scmp.eq.s32.totalorder %s347, 0
    %s350 = sadd.s32 %s349, 1
    %s351 = scalar_select %p348, %s349, %s350
    %p354 = pneg %p348
    %p355 = scmp.eq.s32.totalorder %s27, 5
    %p356 = por %p354, %p355
    %p357 = scmp.ne.s32.totalorder %s349, %s352
    %p358 = scmp.eq.s32.totalorder %s27, 0
    %p359 = por %p357, %p358
    %p360 = scmp.ne.s32.totalorder %s349, %s352
    %p361 = scmp.eq.s32.totalorder %s32, 5
    %p362 = por %p360, %p361
    %p363 = scmp.ne.s32.totalorder %s352, %s353
    %p364 = scmp.eq.s32.totalorder %s32, 0
    %p365 = por %p363, %p364
    %p366 = scmp.ne.s32.totalorder %s352, %s353
    %p367 = scmp.eq.s32.totalorder %s33, 5
    %p368 = por %p366, %p367
    %p370 = scmp.ne.s32.totalorder %s353, %s369
    %p371 = scmp.eq.s32.totalorder %s33, 0
    %p372 = por %p370, %p371
    %s373 = ssub.s32 %s27, %s34
    %p374 = scmp.eq.s32.totalorder %s373, 0
    %s376 = sadd.s32 %s375, 1
    %s377 = scalar_select %p374, %s375, %s376
    %p380 = pneg %p374
    %p381 = scmp.eq.s32.totalorder %s27, 5
    %p382 = por %p380, %p381
    %p383 = scmp.ne.s32.totalorder %s375, %s378
    %p384 = scmp.eq.s32.totalorder %s27, 0
    %p385 = por %p383, %p384
    %p386 = scmp.ne.s32.totalorder %s375, %s378
    %p387 = scmp.eq.s32.totalorder %s32, 5
    %p388 = por %p386, %p387
    %p389 = scmp.ne.s32.totalorder %s378, %s379
    %p390 = scmp.eq.s32.totalorder %s32, 0
    %p391 = por %p389, %p390
    %p392 = scmp.ne.s32.totalorder %s378, %s379
    %p393 = scmp.eq.s32.totalorder %s33, 5
    %p394 = por %p392, %p393
    %p396 = scmp.ne.s32.totalorder %s379, %s395
    %p397 = scmp.eq.s32.totalorder %s33, 0
    %p398 = por %p396, %p397
    %s399 = ssub.s32 %s27, %s34
    %p400 = scmp.eq.s32.totalorder %s399, 0
    %s402 = sadd.s32 %s401, 1
    %s403 = scalar_select %p400, %s401, %s402
    %p406 = pneg %p400
    %p407 = scmp.eq.s32.totalorder %s27, 5
    %p408 = por %p406, %p407
    %p409 = scmp.ne.s32.totalorder %s401, %s404
    %p410 = scmp.eq.s32.totalorder %s27, 0
    %p411 = por %p409, %p410
    %p412 = scmp.ne.s32.totalorder %s401, %s404
    %p413 = scmp.eq.s32.totalorder %s32, 5
    %p414 = por %p412, %p413
    %p415 = scmp.ne.s32.totalorder %s404, %s405
    %p416 = scmp.eq.s32.totalorder %s32, 0
    %p417 = por %p415, %p416
    %p418 = scmp.ne.s32.totalorder %s404, %s405
    %p419 = scmp.eq.s32.totalorder %s33, 5
    %p420 = por %p418, %p419
    %p422 = scmp.ne.s32.totalorder %s405, %s421
    %p423 = scmp.eq.s32.totalorder %s33, 0
    %p424 = por %p422, %p423
    %s425 = ssub.s32 %s27, %s34
    %p426 = scmp.eq.s32.totalorder %s425, 0
    %s428 = sadd.s32 %s427, 1
    %s429 = scalar_select %p426, %s427, %s428
    %p432 = pneg %p426
    %p433 = scmp.eq.s32.totalorder %s27, 5
    %p434 = por %p432, %p433
    %p435 = scmp.ne.s32.totalorder %s427, %s430
    %p436 = scmp.eq.s32.totalorder %s27, 0
    %p437 = por %p435, %p436
    %p438 = scmp.ne.s32.totalorder %s427, %s430
    %p439 = scmp.eq.s32.totalorder %s32, 5
    %p440 = por %p438, %p439
    %p441 = scmp.ne.s32.totalorder %s430, %s431
    %p442 = scmp.eq.s32.totalorder %s32, 0
    %p443 = por %p441, %p442
    %p444 = scmp.ne.s32.totalorder %s430, %s431
    %p445 = scmp.eq.s32.totalorder %s33, 5
    %p446 = por %p444, %p445
    %p448 = scmp.ne.s32.totalorder %s431, %s447
    %p449 = scmp.eq.s32.totalorder %s33, 0
    %p450 = por %p448, %p449
    %s451 = ssub.s32 %s27, %s34
    %p452 = scmp.eq.s32.totalorder %s451, 0
    %s454 = sadd.s32 %s453, 1
    %s455 = scalar_select %p452, %s453, %s454
    %p458 = pneg %p452
    %p459 = scmp.eq.s32.totalorder %s27, 5
    %p460 = por %p458, %p459
    %p461 = scmp.ne.s32.totalorder %s453, %s456
    %p462 = scmp.eq.s32.totalorder %s27, 0
    %p463 = por %p461, %p462
    %p464 = scmp.ne.s32.totalorder %s453, %s456
    %p465 = scmp.eq.s32.totalorder %s32, 5
    %p466 = por %p464, %p465
    %p467 = scmp.ne.s32.totalorder %s456, %s457
    %p468 = scmp.eq.s32.totalorder %s32, 0
    %p469 = por %p467, %p468
    %p470 = scmp.ne.s32.totalorder %s456, %s457
    %p471 = scmp.eq.s32.totalorder %s33, 5
    %p472 = por %p470, %p471
    %p474 = scmp.ne.s32.totalorder %s457, %s473
    %p475 = scmp.eq.s32.totalorder %s33, 0
    %p476 = por %p474, %p475
    %s477 = ssub.s32 %s27, %s34
    %p478 = scmp.eq.s32.totalorder %s477, 0
    %s480 = sadd.s32 %s479, 1
    %s481 = scalar_select %p478, %s479, %s480
    %p484 = pneg %p478
    %p485 = scmp.eq.s32.totalorder %s27, 5
    %p486 = por %p484, %p485
    %p487 = scmp.ne.s32.totalorder %s479, %s482
    %p488 = scmp.eq.s32.totalorder %s27, 0
    %p489 = por %p487, %p488
    %p490 = scmp.ne.s32.totalorder %s479, %s482
    %p491 = scmp.eq.s32.totalorder %s32, 5
    %p492 = por %p490, %p491
    %p493 = scmp.ne.s32.totalorder %s482, %s483
    %p494 = scmp.eq.s32.totalorder %s32, 0
    %p495 = por %p493, %p494
    %p496 = scmp.ne.s32.totalorder %s482, %s483
    %p497 = scmp.eq.s32.totalorder %s33, 5
    %p498 = por %p496, %p497
    %p500 = scmp.ne.s32.totalorder %s483, %s499
    %p501 = scmp.eq.s32.totalorder %s33, 0
    %p502 = por %p500, %p501
    %s503 = ssub.s32 %s27, %s34
    %p504 = scmp.eq.s32.totalorder %s503, 0
    %s506 = sadd.s32 %s505, 1
    %s507 = scalar_select %p504, %s505, %s506
    %p510 = pneg %p504
    %p511 = scmp.eq.s32.totalorder %s27, 5
    %p512 = por %p510, %p511
    %p513 = scmp.ne.s32.totalorder %s505, %s508
    %p514 = scmp.eq.s32.totalorder %s27, 0
    %p515 = por %p513, %p514
    %p516 = scmp.ne.s32.totalorder %s505, %s508
    %p517 = scmp.eq.s32.totalorder %s32, 5
    %p518 = por %p516, %p517
    %p519 = scmp.ne.s32.totalorder %s508, %s509
    %p520 = scmp.eq.s32.totalorder %s32, 0
    %p521 = por %p519, %p520
    %p522 = scmp.ne.s32.totalorder %s508, %s509
    %p523 = scmp.eq.s32.totalorder %s33, 5
    %p524 = por %p522, %p523
    %p526 = scmp.ne.s32.totalorder %s509, %s525
    %p527 = scmp.eq.s32.totalorder %s33, 0
    %p528 = por %p526, %p527
    %s529 = ssub.s32 %s27, %s34
    %p530 = scmp.eq.s32.totalorder %s529, 0
    %s532 = sadd.s32 %s531, 1
    %s533 = scalar_select %p530, %s531, %s532
    %p536 = pneg %p530
    %p537 = scmp.eq.s32.totalorder %s27, 5
    %p538 = por %p536, %p537
    %p539 = scmp.ne.s32.totalorder %s531, %s534
    %p540 = scmp.eq.s32.totalorder %s27, 0
    %p541 = por %p539, %p540
    %p542 = scmp.ne.s32.totalorder %s531, %s534
    %p543 = scmp.eq.s32.totalorder %s32, 5
    %p544 = por %p542, %p543
    %p545 = scmp.ne.s32.totalorder %s534, %s535
    %p546 = scmp.eq.s32.totalorder %s32, 0
    %p547 = por %p545, %p546
    %p548 = scmp.ne.s32.totalorder %s534, %s535
    %p549 = scmp.eq.s32.totalorder %s33, 5
    %p550 = por %p548, %p549
    %p552 = scmp.ne.s32.totalorder %s535, %s551
    %p553 = scmp.eq.s32.totalorder %s33, 0
    %p554 = por %p552, %p553
    %s555 = ssub.s32 %s27, %s34
    %p556 = scmp.eq.s32.totalorder %s555, 0
    %s558 = sadd.s32 %s557, 1
    %s559 = scalar_select %p556, %s557, %s558
    %p562 = pneg %p556
    %p563 = scmp.eq.s32.totalorder %s27, 5
    %p564 = por %p562, %p563
    %p565 = scmp.ne.s32.totalorder %s557, %s560
    %p566 = scmp.eq.s32.totalorder %s27, 0
    %p567 = por %p565, %p566
    %p568 = scmp.ne.s32.totalorder %s557, %s560
    %p569 = scmp.eq.s32.totalorder %s32, 5
    %p570 = por %p568, %p569
    %p571 = scmp.ne.s32.totalorder %s560, %s561
    %p572 = scmp.eq.s32.totalorder %s32, 0
    %p573 = por %p571, %p572
    %p574 = scmp.ne.s32.totalorder %s560, %s561
    %p575 = scmp.eq.s32.totalorder %s33, 5
    %p576 = por %p574, %p575
    %p578 = scmp.ne.s32.totalorder %s561, %s577
    %p579 = scmp.eq.s32.totalorder %s33, 0
    %p580 = por %p578, %p579
    %s581 = ssub.s32 %s27, %s34
    %p582 = scmp.eq.s32.totalorder %s581, 0
    %s584 = sadd.s32 %s583, 1
    %s585 = scalar_select %p582, %s583, %s584
    %p588 = pneg %p582
    %p589 = scmp.eq.s32.totalorder %s27, 5
    %p590 = por %p588, %p589
    %p591 = scmp.ne.s32.totalorder %s583, %s586
    %p592 = scmp.eq.s32.totalorder %s27, 0
    %p593 = por %p591, %p592
    %p594 = scmp.ne.s32.totalorder %s583, %s586
    %p595 = scmp.eq.s32.totalorder %s32, 5
    %p596 = por %p594, %p595
    %p597 = scmp.ne.s32.totalorder %s586, %s587
    %p598 = scmp.eq.s32.totalorder %s32, 0
    %p599 = por %p597, %p598
    %p600 = scmp.ne.s32.totalorder %s586, %s587
    %p601 = scmp.eq.s32.totalorder %s33, 5
    %p602 = por %p600, %p601
    %p604 = scmp.ne.s32.totalorder %s587, %s603
    %p605 = scmp.eq.s32.totalorder %s33, 0
    %p606 = por %p604, %p605
    %p607 = scmp.le.s32.totalorder 1, %s27
    %p608 = scmp.lt.s32.totalorder %s27, 7
    %p609 = pnand %p607, %p608
    %p610 = pneg %p609
    // Predicated region
    $region9: #{wavelet_transformer_forward.5} parent=5 // pred_check
      _
    $region10: #{wavelet_transformer_forward.5} parent=5 // pred_check_branch
      %612 = sbr.rel (%p609) target = $region12
    $region11: #{wavelet_transformer_forward.5} parent=5 // pred_region
      %s613 = ssub.s32 %s27, 1
    $region12: #{wavelet_transformer_forward.5} parent=5 // pred_fallthru
      _
    %p614 = scmp.lt.s32.totalorder %s27, 6
    // Predicated region
    $region13: #{wavelet_transformer_forward.5} parent=5 // pred_check
      %p615 = pneg %p614
    $region14: #{wavelet_transformer_forward.5} parent=5 // pred_check_branch
      %617 = sbr.rel (%p615) target = $region16
    $region15: #{wavelet_transformer_forward.5} parent=5 // pred_region
      // Predicated region
      $region17: #{wavelet_transformer_forward.5} parent=15 // pred_check
        %p618 = pneg %p47
      $region18: #{wavelet_transformer_forward.5} parent=15 // pred_check_branch
        %620 = sbr.rel (%p618) target = $region20
      $region19: #{wavelet_transformer_forward.5} parent=15 // pred_region
        %p621 = scmp.lt.s32.totalorder %s27, 5
        %s622 = scalar_select %p621, %s27, 5
        %s623 = smul.addr %s622, 3
        %s624 = smul.addr %s623, 8
        %s625 = scalar_lea.vmem %s0, %s624
      $region20: #{wavelet_transformer_forward.5} parent=15 // pred_fallthru
        _
      // Predicated region
      $region21: #{wavelet_transformer_forward.5} parent=15 // pred_check
        %p626 = pneg %p73
      $region22: #{wavelet_transformer_forward.5} parent=15 // pred_check_branch
        %628 = sbr.rel (%p626) target = $region24
      $region23: #{wavelet_transformer_forward.5} parent=15 // pred_region
        %p629 = scmp.lt.s32.totalorder %s27, 5
        %s630 = scalar_select %p629, %s27, 5
        %s631 = smul.addr %s630, 2
        %s632 = scalar_lea.vmem %s1, %s631
      $region24: #{wavelet_transformer_forward.5} parent=15 // pred_fallthru
        _
      // Predicated region
      $region25: #{wavelet_transformer_forward.5} parent=15 // pred_check
        %p633 = pneg %p99
      $region26: #{wavelet_transformer_forward.5} parent=15 // pred_check_branch
        %635 = sbr.rel (%p633) target = $region28
      $region27: #{wavelet_transformer_forward.5} parent=15 // pred_region
        %p636 = scmp.lt.s32.totalorder %s27, 5
        %s637 = scalar_select %p636, %s27, 5
        %s638 = smul.addr %s637, 2
        %s639 = scalar_lea.vmem %s2, %s638
      $region28: #{wavelet_transformer_forward.5} parent=15 // pred_fallthru
        _
      // Predicated region
      $region29: #{wavelet_transformer_forward.5} parent=15 // pred_check
        %p640 = pneg %p125
      $region30: #{wavelet_transformer_forward.5} parent=15 // pred_check_branch
        %642 = sbr.rel (%p640) target = $region32
      $region31: #{wavelet_transformer_forward.5} parent=15 // pred_region
        %p643 = scmp.lt.s32.totalorder %s27, 5
        %s644 = scalar_select %p643, %s27, 5
        %s645 = smul.addr %s644, 8
        %s646 = smul.addr %s645, 8
        %s647 = scalar_lea.vmem %s3, %s646
      $region32: #{wavelet_transformer_forward.5} parent=15 // pred_fallthru
        _
      // Predicated region
      $region33: #{wavelet_transformer_forward.5} parent=15 // pred_check
        %p648 = pneg %p151
      $region34: #{wavelet_transformer_forward.5} parent=15 // pred_check_branch
        %650 = sbr.rel (%p648) target = $region36
      $region35: #{wavelet_transformer_forward.5} parent=15 // pred_region
        %p651 = scmp.lt.s32.totalorder %s27, 5
        %s652 = scalar_select %p651, %s27, 5
        %s653 = smul.addr %s652, 2
        %s654 = scalar_lea.vmem %s4, %s653
      $region36: #{wavelet_transformer_forward.5} parent=15 // pred_fallthru
        _
      // Predicated region
      $region37: #{wavelet_transformer_forward.5} parent=15 // pred_check
        %p655 = pneg %p177
      $region38: #{wavelet_transformer_forward.5} parent=15 // pred_check_branch
        %657 = sbr.rel (%p655) target = $region40
      $region39: #{wavelet_transformer_forward.5} parent=15 // pred_region
        %p658 = scmp.lt.s32.totalorder %s27, 5
        %s659 = scalar_select %p658, %s27, 5
        %s660 = smul.addr %s659, 8
        %s661 = smul.addr %s660, 8
        %s662 = scalar_lea.vmem %s5, %s661
      $region40: #{wavelet_transformer_forward.5} parent=15 // pred_fallthru
        _
      // Predicated region
      $region41: #{wavelet_transformer_forward.5} parent=15 // pred_check
        %p663 = pneg %p203
      $region42: #{wavelet_transformer_forward.5} parent=15 // pred_check_branch
        %665 = sbr.rel (%p663) target = $region44
      $region43: #{wavelet_transformer_forward.5} parent=15 // pred_region
        %p666 = scmp.lt.s32.totalorder %s27, 5
        %s667 = scalar_select %p666, %s27, 5
        %s668 = smul.addr %s667, 2
        %s669 = scalar_lea.vmem %s6, %s668
      $region44: #{wavelet_transformer_forward.5} parent=15 // pred_fallthru
        _
      // Predicated region
      $region45: #{wavelet_transformer_forward.5} parent=15 // pred_check
        %p670 = pneg %p229
      $region46: #{wavelet_transformer_forward.5} parent=15 // pred_check_branch
        %672 = sbr.rel (%p670) target = $region48
      $region47: #{wavelet_transformer_forward.5} parent=15 // pred_region
        %p673 = scmp.lt.s32.totalorder %s27, 5
        %s674 = scalar_select %p673, %s27, 5
        %s675 = smul.addr %s674, 8
        %s676 = smul.addr %s675, 8
        %s677 = scalar_lea.vmem %s7, %s676
      $region48: #{wavelet_transformer_forward.5} parent=15 // pred_fallthru
        _
      // Predicated region
      $region49: #{wavelet_transformer_forward.5} parent=15 // pred_check
        %p678 = pneg %p255
      $region50: #{wavelet_transformer_forward.5} parent=15 // pred_check_branch
        %680 = sbr.rel (%p678) target = $region52
      $region51: #{wavelet_transformer_forward.5} parent=15 // pred_region
        %p681 = scmp.lt.s32.totalorder %s27, 5
        %s682 = scalar_select %p681, %s27, 5
        %s683 = smul.addr %s682, 2
        %s684 = scalar_lea.vmem %s8, %s683
      $region52: #{wavelet_transformer_forward.5} parent=15 // pred_fallthru
        _
      // Predicated region
      $region53: #{wavelet_transformer_forward.5} parent=15 // pred_check
        %p685 = pneg %p281
      $region54: #{wavelet_transformer_forward.5} parent=15 // pred_check_branch
        %687 = sbr.rel (%p685) target = $region56
      $region55: #{wavelet_transformer_forward.5} parent=15 // pred_region
        %p688 = scmp.lt.s32.totalorder %s27, 5
        %s689 = scalar_select %p688, %s27, 5
        %s690 = smul.addr %s689, 8
        %s691 = smul.addr %s690, 8
        %s692 = scalar_lea.vmem %s9, %s691
      $region56: #{wavelet_transformer_forward.5} parent=15 // pred_fallthru
        _
      // Predicated region
      $region57: #{wavelet_transformer_forward.5} parent=15 // pred_check
        %p693 = pneg %p307
      $region58: #{wavelet_transformer_forward.5} parent=15 // pred_check_branch
        %695 = sbr.rel (%p693) target = $region60
      $region59: #{wavelet_transformer_forward.5} parent=15 // pred_region
        %p696 = scmp.lt.s32.totalorder %s27, 5
        %s697 = scalar_select %p696, %s27, 5
        %s698 = smul.addr %s697, 2
        %s699 = scalar_lea.vmem %s10, %s698
      $region60: #{wavelet_transformer_forward.5} parent=15 // pred_fallthru
        _
      // Predicated region
      $region61: #{wavelet_transformer_forward.5} parent=15 // pred_check
        %p700 = pneg %p333
      $region62: #{wavelet_transformer_forward.5} parent=15 // pred_check_branch
        %702 = sbr.rel (%p700) target = $region64
      $region63: #{wavelet_transformer_forward.5} parent=15 // pred_region
        %p703 = scmp.lt.s32.totalorder %s27, 5
        %s704 = scalar_select %p703, %s27, 5
        %s705 = smul.addr %s704, 2
        %s706 = scalar_lea.vmem %s11, %s705
      $region64: #{wavelet_transformer_forward.5} parent=15 // pred_fallthru
        _
      // Predicated region
      $region65: #{wavelet_transformer_forward.5} parent=15 // pred_check
        %p707 = pneg %p359
      $region66: #{wavelet_transformer_forward.5} parent=15 // pred_check_branch
        %709 = sbr.rel (%p707) target = $region68
      $region67: #{wavelet_transformer_forward.5} parent=15 // pred_region
        %p710 = scmp.lt.s32.totalorder %s27, 5
        %s711 = scalar_select %p710, %s27, 5
        %s712 = smul.addr %s711, 2
        %s713 = scalar_lea.vmem %s12, %s712
      $region68: #{wavelet_transformer_forward.5} parent=15 // pred_fallthru
        _
      // Predicated region
      $region69: #{wavelet_transformer_forward.5} parent=15 // pred_check
        %p714 = pneg %p385
      $region70: #{wavelet_transformer_forward.5} parent=15 // pred_check_branch
        %716 = sbr.rel (%p714) target = $region72
      $region71: #{wavelet_transformer_forward.5} parent=15 // pred_region
        %p717 = scmp.lt.s32.totalorder %s27, 5
        %s718 = scalar_select %p717, %s27, 5
        %s719 = smul.addr %s718, 8
        %s720 = smul.addr %s719, 8
        %s721 = scalar_lea.vmem %s13, %s720
      $region72: #{wavelet_transformer_forward.5} parent=15 // pred_fallthru
        _
      // Predicated region
      $region73: #{wavelet_transformer_forward.5} parent=15 // pred_check
        %p722 = pneg %p411
      $region74: #{wavelet_transformer_forward.5} parent=15 // pred_check_branch
        %724 = sbr.rel (%p722) target = $region76
      $region75: #{wavelet_transformer_forward.5} parent=15 // pred_region
        %p725 = scmp.lt.s32.totalorder %s27, 5
        %s726 = scalar_select %p725, %s27, 5
        %s727 = smul.addr %s726, 2
        %s728 = scalar_lea.vmem %s14, %s727
      $region76: #{wavelet_transformer_forward.5} parent=15 // pred_fallthru
        _
      // Predicated region
      $region77: #{wavelet_transformer_forward.5} parent=15 // pred_check
        %p729 = pneg %p437
      $region78: #{wavelet_transformer_forward.5} parent=15 // pred_check_branch
        %731 = sbr.rel (%p729) target = $region80
      $region79: #{wavelet_transformer_forward.5} parent=15 // pred_region
        %p732 = scmp.lt.s32.totalorder %s27, 5
        %s733 = scalar_select %p732, %s27, 5
        %s734 = smul.addr %s733, 32
        %s735 = smul.addr %s734, 8
        %s736 = scalar_lea.vmem %s15, %s735
      $region80: #{wavelet_transformer_forward.5} parent=15 // pred_fallthru
        _
      // Predicated region
      $region81: #{wavelet_transformer_forward.5} parent=15 // pred_check
        %p737 = pneg %p463
      $region82: #{wavelet_transformer_forward.5} parent=15 // pred_check_branch
        %739 = sbr.rel (%p737) target = $region84
      $region83: #{wavelet_transformer_forward.5} parent=15 // pred_region
        %p740 = scmp.lt.s32.totalorder %s27, 5
        %s741 = scalar_select %p740, %s27, 5
        %s742 = smul.addr %s741, 2
        %s743 = scalar_lea.vmem %s16, %s742
      $region84: #{wavelet_transformer_forward.5} parent=15 // pred_fallthru
        _
      // Predicated region
      $region85: #{wavelet_transformer_forward.5} parent=15 // pred_check
        %p744 = pneg %p489
      $region86: #{wavelet_transformer_forward.5} parent=15 // pred_check_branch
        %746 = sbr.rel (%p744) target = $region88
      $region87: #{wavelet_transformer_forward.5} parent=15 // pred_region
        %p747 = scmp.lt.s32.totalorder %s27, 5
        %s748 = scalar_select %p747, %s27, 5
        %s749 = scalar_lea.vmem %s17, %s748
      $region88: #{wavelet_transformer_forward.5} parent=15 // pred_fallthru
        _
      // Predicated region
      $region89: #{wavelet_transformer_forward.5} parent=15 // pred_check
        %p750 = pneg %p515
      $region90: #{wavelet_transformer_forward.5} parent=15 // pred_check_branch
        %752 = sbr.rel (%p750) target = $region92
      $region91: #{wavelet_transformer_forward.5} parent=15 // pred_region
        %p753 = scmp.lt.s32.totalorder %s27, 5
        %s754 = scalar_select %p753, %s27, 5
        %s755 = scalar_lea.vmem %s18, %s754
      $region92: #{wavelet_transformer_forward.5} parent=15 // pred_fallthru
        _
      // Predicated region
      $region93: #{wavelet_transformer_forward.5} parent=15 // pred_check
        %p756 = pneg %p541
      $region94: #{wavelet_transformer_forward.5} parent=15 // pred_check_branch
        %758 = sbr.rel (%p756) target = $region96
      $region95: #{wavelet_transformer_forward.5} parent=15 // pred_region
        %p759 = scmp.lt.s32.totalorder %s27, 5
        %s760 = scalar_select %p759, %s27, 5
        %s761 = smul.addr %s760, 4
        %s762 = smul.addr %s761, 8
        %s763 = scalar_lea.vmem %s19, %s762
      $region96: #{wavelet_transformer_forward.5} parent=15 // pred_fallthru
        _
      // Predicated region
      $region97: #{wavelet_transformer_forward.5} parent=15 // pred_check
        %p764 = pneg %p567
      $region98: #{wavelet_transformer_forward.5} parent=15 // pred_check_branch
        %766 = sbr.rel (%p764) target = $region100
      $region99: #{wavelet_transformer_forward.5} parent=15 // pred_region
        %p767 = scmp.lt.s32.totalorder %s27, 5
        %s768 = scalar_select %p767, %s27, 5
        %s769 = scalar_lea.vmem %s20, %s768
      $region100: #{wavelet_transformer_forward.5} parent=15 // pred_fallthru
        _
    $region16: #{wavelet_transformer_forward.5} parent=5 // pred_fallthru
      _
    %p770 = scmp.le.s32.totalorder 1, %s27
    %p771 = scmp.lt.s32.totalorder %s27, 7
    %p772 = pnand %p770, %p771
    %p773 = pneg %p772
    // Predicated region
    $region101: #{wavelet_transformer_forward.5} parent=5 // pred_check
      _
    $region102: #{wavelet_transformer_forward.5} parent=5 // pred_check_branch
      %775 = sbr.rel (%p772) target = $region104
    $region103: #{wavelet_transformer_forward.5} parent=5 // pred_region
      %s776 = ssub.s32 %s27, 1
      %p777 = scmp.lt.s32.totalorder %s32, 5
      %s778 = scalar_select %p777, %s32, 5
      %s779 = smul.addr %s778, 3
      %s780 = smul.addr %s779, 8
      %s781 = scalar_lea.vmem %s0, %s780
      %p782 = pneg %p53
      %p783 = pneg %p50
      %p784 = scmp.lt.s32.totalorder %s32, 5
      %s785 = scalar_select %p784, %s32, 5
      %s786 = smul.addr %s785, 2
      %s787 = scalar_lea.vmem %s1, %s786
      %p788 = pneg %p79
      %p789 = pneg %p76
      %p790 = scmp.lt.s32.totalorder %s32, 5
      %s791 = scalar_select %p790, %s32, 5
      %s792 = smul.addr %s791, 2
      %s793 = scalar_lea.vmem %s2, %s792
      %p794 = pneg %p105
      %p795 = pneg %p102
      %p796 = scmp.lt.s32.totalorder %s32, 5
      %s797 = scalar_select %p796, %s32, 5
      %s798 = smul.addr %s797, 8
      %s799 = smul.addr %s798, 8
      %s800 = scalar_lea.vmem %s3, %s799
      %p801 = pneg %p131
      %p802 = pneg %p128
      %p803 = scmp.lt.s32.totalorder %s32, 5
      %s804 = scalar_select %p803, %s32, 5
      %s805 = smul.addr %s804, 2
      %s806 = scalar_lea.vmem %s4, %s805
      %p807 = pneg %p157
      %p808 = pneg %p154
      %p809 = scmp.lt.s32.totalorder %s32, 5
      %s810 = scalar_select %p809, %s32, 5
      %s811 = smul.addr %s810, 8
      %s812 = smul.addr %s811, 8
      %s813 = scalar_lea.vmem %s5, %s812
      %p814 = pneg %p183
      %p815 = pneg %p180
      %p816 = scmp.lt.s32.totalorder %s32, 5
      %s817 = scalar_select %p816, %s32, 5
      %s818 = smul.addr %s817, 2
      %s819 = scalar_lea.vmem %s6, %s818
      %p820 = pneg %p209
      %p821 = pneg %p206
      %p822 = scmp.lt.s32.totalorder %s32, 5
      %s823 = scalar_select %p822, %s32, 5
      %s824 = smul.addr %s823, 8
      %s825 = smul.addr %s824, 8
      %s826 = scalar_lea.vmem %s7, %s825
      %p827 = pneg %p235
      %p828 = pneg %p232
      %p829 = scmp.lt.s32.totalorder %s32, 5
      %s830 = scalar_select %p829, %s32, 5
      %s831 = smul.addr %s830, 2
      %s832 = scalar_lea.vmem %s8, %s831
      %p833 = pneg %p261
      %p834 = pneg %p258
      %p835 = scmp.lt.s32.totalorder %s32, 5
      %s836 = scalar_select %p835, %s32, 5
      %s837 = smul.addr %s836, 8
      %s838 = smul.addr %s837, 8
      %s839 = scalar_lea.vmem %s9, %s838
      %p840 = pneg %p287
      %p841 = pneg %p284
      %p842 = scmp.lt.s32.totalorder %s32, 5
      %s843 = scalar_select %p842, %s32, 5
      %s844 = smul.addr %s843, 2
      %s845 = scalar_lea.vmem %s10, %s844
      %p846 = pneg %p313
      %p847 = pneg %p310
      %p848 = scmp.lt.s32.totalorder %s32, 5
      %s849 = scalar_select %p848, %s32, 5
      %s850 = smul.addr %s849, 2
      %s851 = scalar_lea.vmem %s11, %s850
      %p852 = pneg %p339
      %p853 = pneg %p336
      %p854 = scmp.lt.s32.totalorder %s32, 5
      %s855 = scalar_select %p854, %s32, 5
      %s856 = smul.addr %s855, 2
      %s857 = scalar_lea.vmem %s12, %s856
      %p858 = pneg %p365
      %p859 = pneg %p362
      %p860 = scmp.lt.s32.totalorder %s32, 5
      %s861 = scalar_select %p860, %s32, 5
      %s862 = smul.addr %s861, 8
      %s863 = smul.addr %s862, 8
      %s864 = scalar_lea.vmem %s13, %s863
      %p865 = pneg %p391
      %p866 = pneg %p388
      %p867 = scmp.lt.s32.totalorder %s32, 5
      %s868 = scalar_select %p867, %s32, 5
      %s869 = smul.addr %s868, 2
      %s870 = scalar_lea.vmem %s14, %s869
      %p871 = pneg %p417
      %p872 = pneg %p414
      %p873 = scmp.lt.s32.totalorder %s32, 5
      %s874 = scalar_select %p873, %s32, 5
      %s875 = smul.addr %s874, 32
      %s876 = smul.addr %s875, 8
      %s877 = scalar_lea.vmem %s15, %s876
      %p878 = pneg %p443
      %p879 = pneg %p440
      %p880 = scmp.lt.s32.totalorder %s32, 5
      %s881 = scalar_select %p880, %s32, 5
      %s882 = smul.addr %s881, 2
      %s883 = scalar_lea.vmem %s16, %s882
      %p884 = pneg %p469
      %p885 = pneg %p466
      %p886 = scmp.lt.s32.totalorder %s32, 5
      %s887 = scalar_select %p886, %s32, 5
      %s888 = scalar_lea.vmem %s17, %s887
      %p889 = pneg %p495
      %p890 = pneg %p492
      %p891 = scmp.lt.s32.totalorder %s32, 5
      %s892 = scalar_select %p891, %s32, 5
      %s893 = scalar_lea.vmem %s18, %s892
      %p894 = pneg %p521
      %p895 = pneg %p518
      %p896 = scmp.lt.s32.totalorder %s32, 5
      %s897 = scalar_select %p896, %s32, 5
      %s898 = smul.addr %s897, 4
      %s899 = smul.addr %s898, 8
      %s900 = scalar_lea.vmem %s19, %s899
      %p901 = pneg %p547
      %p902 = pneg %p544
      %p903 = scmp.lt.s32.totalorder %s32, 5
      %s904 = scalar_select %p903, %s32, 5
      %s905 = scalar_lea.vmem %s20, %s904
      %p906 = pneg %p573
      %p907 = pneg %p570
      %p908 = pneg %p599
      %p909 = pneg %p596
      %p910 = scmp.lt.s32.totalorder %s32, 5
      %s911 = scalar_select %p910, %s32, 5
      %s912 = smul.addr %s911, 3
      %s913 = smul.addr %s912, 8
      %s914 = scalar_lea.vmem %s21, %s913
      %p915 = scmp.lt.s32.totalorder %s32, 5
      %s916 = scalar_select %p915, %s32, 5
      %s917 = smul.addr %s916, 3
      %s918 = smul.addr %s917, 8
      %s919 = scalar_lea.vmem %s0, %s918
      %p920 = scmp.lt.s32.totalorder %s32, 5
      %s921 = scalar_select %p920, %s32, 5
      %s922 = smul.addr %s921, 2
      %s923 = scalar_lea.vmem %s1, %s922
      %p924 = scmp.lt.s32.totalorder %s32, 5
      %s925 = scalar_select %p924, %s32, 5
      %s926 = smul.addr %s925, 2
      %s927 = scalar_lea.vmem %s2, %s926
      %p928 = scmp.lt.s32.totalorder %s32, 5
      %s929 = scalar_select %p928, %s32, 5
      %s930 = smul.addr %s929, 8
      %s931 = smul.addr %s930, 8
      %s932 = scalar_lea.vmem %s3, %s931
      %p933 = scmp.lt.s32.totalorder %s32, 5
      %s934 = scalar_select %p933, %s32, 5
      %s935 = smul.addr %s934, 2
      %s936 = scalar_lea.vmem %s4, %s935
      %p937 = scmp.lt.s32.totalorder %s32, 5
      %s938 = scalar_select %p937, %s32, 5
      %s939 = smul.addr %s938, 8
      %s940 = smul.addr %s939, 8
      %s941 = scalar_lea.vmem %s5, %s940
      %p942 = scmp.lt.s32.totalorder %s32, 5
      %s943 = scalar_select %p942, %s32, 5
      %s944 = smul.addr %s943, 2
      %s945 = scalar_lea.vmem %s6, %s944
      %p946 = scmp.lt.s32.totalorder %s32, 5
      %s947 = scalar_select %p946, %s32, 5
      %s948 = smul.addr %s947, 8
      %s949 = smul.addr %s948, 8
      %s950 = scalar_lea.vmem %s7, %s949
      %p951 = scmp.lt.s32.totalorder %s32, 5
      %s952 = scalar_select %p951, %s32, 5
      %s953 = smul.addr %s952, 2
      %s954 = scalar_lea.vmem %s8, %s953
      %p955 = scmp.lt.s32.totalorder %s32, 5
      %s956 = scalar_select %p955, %s32, 5
      %s957 = smul.addr %s956, 8
      %s958 = smul.addr %s957, 8
      %s959 = scalar_lea.vmem %s9, %s958
      %p960 = scmp.lt.s32.totalorder %s32, 5
      %s961 = scalar_select %p960, %s32, 5
      %s962 = smul.addr %s961, 2
      %s963 = scalar_lea.vmem %s10, %s962
      %p964 = scmp.lt.s32.totalorder %s32, 5
      %s965 = scalar_select %p964, %s32, 5
      %s966 = smul.addr %s965, 2
      %s967 = scalar_lea.vmem %s11, %s966
      %p968 = scmp.lt.s32.totalorder %s32, 5
      %s969 = scalar_select %p968, %s32, 5
      %s970 = smul.addr %s969, 2
      %s971 = scalar_lea.vmem %s12, %s970
      %p972 = scmp.lt.s32.totalorder %s32, 5
      %s973 = scalar_select %p972, %s32, 5
      %s974 = smul.addr %s973, 8
      %s975 = smul.addr %s974, 8
      %s976 = scalar_lea.vmem %s13, %s975
      %p977 = scmp.lt.s32.totalorder %s32, 5
      %s978 = scalar_select %p977, %s32, 5
      %s979 = smul.addr %s978, 2
      %s980 = scalar_lea.vmem %s14, %s979
      %p981 = scmp.lt.s32.totalorder %s32, 5
      %s982 = scalar_select %p981, %s32, 5
      %s983 = smul.addr %s982, 32
      %s984 = smul.addr %s983, 8
      %s985 = scalar_lea.vmem %s15, %s984
      %p986 = scmp.lt.s32.totalorder %s32, 5
      %s987 = scalar_select %p986, %s32, 5
      %s988 = smul.addr %s987, 2
      %s989 = scalar_lea.vmem %s16, %s988
      %p990 = scmp.lt.s32.totalorder %s32, 5
      %s991 = scalar_select %p990, %s32, 5
      %s992 = scalar_lea.vmem %s17, %s991
      %p993 = scmp.lt.s32.totalorder %s32, 5
      %s994 = scalar_select %p993, %s32, 5
      %s995 = scalar_lea.vmem %s18, %s994
      %p996 = scmp.lt.s32.totalorder %s32, 5
      %s997 = scalar_select %p996, %s32, 5
      %s998 = smul.addr %s997, 4
      %s999 = smul.addr %s998, 8
      %s1000 = scalar_lea.vmem %s19, %s999
      %p1001 = scmp.lt.s32.totalorder %s32, 5
      %s1002 = scalar_select %p1001, %s32, 5
      %s1003 = scalar_lea.vmem %s20, %s1002
      %p1004 = scmp.lt.s32.totalorder %s32, 5
      %s1005 = scalar_select %p1004, %s32, 5
      %s1006 = smul.addr %s1005, 3
      %s1007 = smul.addr %s1006, 8
      %s1008 = scalar_lea.vmem %s21, %s1007
      %v1009 = vld [vmem:[%s919] sm:$0xff]
      %v1010 = vld [vmem:[%s919 + $0x8] sm:$0xff]
      %v1011 = vld [vmem:[%s919 + $0x10] sm:$0x3]
      %v1012 = vlaneseq
      %v1013 = vand.u32 %v1012, 127
      %vm1014 = vcmp.ge.s32.totalorder %v1013, 0
      %vm1015 = vcmp.lt.s32.totalorder %v1013, 8
      %vm1016 = vmand %vm1014, %vm1015
      %v1017 = vsel %vm1016, 1, 0
      %v1018 = vcvt.s32.f32 %v1017
      %vm1019 = vcmp.ge.s32.totalorder %v1013, 8
      %vm1020 = vcmp.lt.s32.totalorder %v1013, 16
      %vm1021 = vmand %vm1019, %vm1020
      %v1022 = vsel %vm1021, 1, 0
      %v1023 = vcvt.s32.f32 %v1022
      %vm1024 = vcmp.ge.s32.totalorder %v1013, 16
      %vm1025 = vcmp.lt.s32.totalorder %v1013, 24
      %vm1026 = vmand %vm1024, %vm1025
      %v1027 = vsel %vm1026, 1, 0
      %v1028 = vcvt.s32.f32 %v1027
      %vm1029 = vcmp.ge.s32.totalorder %v1013, 24
      %vm1030 = vcmp.lt.s32.totalorder %v1013, 32
      %vm1031 = vmand %vm1029, %vm1030
      %v1032 = vsel %vm1031, 1, 0
      %v1033 = vcvt.s32.f32 %v1032
      %v1034 = vlaneseq
      %v1035 = vshrl.u32 %v1034, 7
      %v1036 = vadd.s32 %v1035, 8
      %v1037 = vadd.s32 %v1035, 16
      %vm1038 = vcmp.ge.s32.totalorder %v1035, 0
      %vm1039 = vcmp.ge.s32.totalorder %v1036, 0
      %vm1040 = vcmp.ge.s32.totalorder %v1037, 0
      %vm1041 = vcmp.lt.s32.totalorder %v1035, 9
      %vm1042 = vcmp.lt.s32.totalorder %v1036, 9
      %vm1043 = vcmp.lt.s32.totalorder %v1037, 9
      %vm1044 = vmand %vm1038, %vm1041
      %vm1045 = vmand %vm1039, %vm1042
      %vm1046 = vmand %vm1040, %vm1043
      %vm1047 = vcmp.lt.s32.totalorder %v1013, 9
      %vm1048 = vmand %vm1014, %vm1047
      %vm1049 = vmand %vm1044, %vm1048
      %vm1050 = vmand %vm1045, %vm1048
      %vm1051 = vmand %vm1046, %vm1048
      %vm1052 = vcmp.ge.s32.totalorder %v1035, 9
      %vm1053 = vcmp.ge.s32.totalorder %v1036, 9
      %vm1054 = vcmp.ge.s32.totalorder %v1037, 9
      %vm1055 = vcmp.lt.s32.totalorder %v1035, 18
      %vm1056 = vcmp.lt.s32.totalorder %v1036, 18
      %vm1057 = vcmp.lt.s32.totalorder %v1037, 18
      %vm1058 = vmand %vm1052, %vm1055
      %vm1059 = vmand %vm1053, %vm1056
      %vm1060 = vmand %vm1054, %vm1057
      %vm1061 = vcmp.ge.s32.totalorder %v1013, 9
      %vm1062 = vcmp.lt.s32.totalorder %v1013, 18
      %vm1063 = vmand %vm1061, %vm1062
      %vm1064 = vmand %vm1058, %vm1063
      %vm1065 = vmand %vm1059, %vm1063
      %vm1066 = vmand %vm1060, %vm1063
      %vm1067 = vmor %vm1049, %vm1064
      %vm1068 = vmor %vm1050, %vm1065
      %vm1069 = vmor %vm1051, %vm1066
      %v1070 = vld [vmem:[%s923] sm:$0x3]
      %v1071 = vld [vmem:[%s927] sm:$0x3]
      %v1072 = vld [vmem:[%s967] sm:$0x3]
      %v1073 = vld [vmem:[%s971] sm:$0x3]
      %v1074 = vld [vmem:[%s932] sm:$0xff]
      %v1075 = vld [vmem:[%s932 + $0x8] sm:$0xff]
      %v1076 = vld [vmem:[%s932 + $0x10] sm:$0xff]
      %v1077 = vld [vmem:[%s932 + $0x18] sm:$0xff]
      %v1078 = vld [vmem:[%s932 + $0x20] sm:$0xff]
      %v1079 = vld [vmem:[%s932 + $0x28] sm:$0xff]
      %v1080 = vld [vmem:[%s932 + $0x30] sm:$0xff]
      %v1081 = vld [vmem:[%s932 + $0x38] sm:$0xff]
      %v1082 = vld [vmem:[%s936] sm:$0x3]
      %v1083 = vld [vmem:[%s941] sm:$0xff]
      %v1084 = vld [vmem:[%s941 + $0x8] sm:$0xff]
      %v1085 = vld [vmem:[%s941 + $0x10] sm:$0xff]
      %v1086 = vld [vmem:[%s941 + $0x18] sm:$0xff]
      %v1087 = vld [vmem:[%s941 + $0x20] sm:$0xff]
      %v1088 = vld [vmem:[%s941 + $0x28] sm:$0xff]
      %v1089 = vld [vmem:[%s941 + $0x30] sm:$0xff]
      %v1090 = vld [vmem:[%s941 + $0x38] sm:$0xff]
      %v1091 = vld [vmem:[%s945] sm:$0x3]
      %v1092 = vld [vmem:[%s950] sm:$0xff]
      %v1093 = vld [vmem:[%s950 + $0x8] sm:$0xff]
      %v1094 = vld [vmem:[%s950 + $0x10] sm:$0xff]
      %v1095 = vld [vmem:[%s950 + $0x18] sm:$0xff]
      %v1096 = vld [vmem:[%s950 + $0x20] sm:$0xff]
      %v1097 = vld [vmem:[%s950 + $0x28] sm:$0xff]
      %v1098 = vld [vmem:[%s950 + $0x30] sm:$0xff]
      %v1099 = vld [vmem:[%s950 + $0x38] sm:$0xff]
      %v1100 = vld [vmem:[%s954] sm:$0x3]
      %v1101 = vld [vmem:[%s959] sm:$0xff]
      %v1102 = vld [vmem:[%s959 + $0x8] sm:$0xff]
      %v1103 = vld [vmem:[%s959 + $0x10] sm:$0xff]
      %v1104 = vld [vmem:[%s959 + $0x18] sm:$0xff]
      %v1105 = vld [vmem:[%s959 + $0x20] sm:$0xff]
      %v1106 = vld [vmem:[%s959 + $0x28] sm:$0xff]
      %v1107 = vld [vmem:[%s959 + $0x30] sm:$0xff]
      %v1108 = vld [vmem:[%s959 + $0x38] sm:$0xff]
      %v1109 = vld [vmem:[%s963] sm:$0x3]
      %v1110 = vld [vmem:[%s976] sm:$0xff]
      %v1111 = vld [vmem:[%s976 + $0x8] sm:$0xff]
      %v1112 = vld [vmem:[%s976 + $0x10] sm:$0xff]
      %v1113 = vld [vmem:[%s976 + $0x18] sm:$0xff]
      %v1114 = vld [vmem:[%s976 + $0x20] sm:$0xff]
      %v1115 = vld [vmem:[%s976 + $0x28] sm:$0xff]
      %v1116 = vld [vmem:[%s976 + $0x30] sm:$0xff]
      %v1117 = vld [vmem:[%s976 + $0x38] sm:$0xff]
      %v1118 = vld [vmem:[%s980] sm:$0x3]
      %v1119 = vld [vmem:[%s985] sm:$0xff]
      %v1120 = vld [vmem:[%s985 + $0x8] sm:$0xff]
      %v1121 = vld [vmem:[%s985 + $0x10] sm:$0xff]
      %v1122 = vld [vmem:[%s985 + $0x18] sm:$0xff]
      %v1123 = vld [vmem:[%s985 + $0x20] sm:$0xff]
      %v1124 = vld [vmem:[%s985 + $0x28] sm:$0xff]
      %v1125 = vld [vmem:[%s985 + $0x30] sm:$0xff]
      %v1126 = vld [vmem:[%s985 + $0x38] sm:$0xff]
      %v1127 = vld [vmem:[%s985 + $0x40] sm:$0xff]
      %v1128 = vld [vmem:[%s985 + $0x48] sm:$0xff]
      %v1129 = vld [vmem:[%s985 + $0x50] sm:$0xff]
      %v1130 = vld [vmem:[%s985 + $0x58] sm:$0xff]
      %v1131 = vld [vmem:[%s985 + $0x60] sm:$0xff]
      %v1132 = vld [vmem:[%s985 + $0x68] sm:$0xff]
      %v1133 = vld [vmem:[%s985 + $0x70] sm:$0xff]
      %v1134 = vld [vmem:[%s985 + $0x78] sm:$0xff]
      %v1135 = vld [vmem:[%s985 + $0x80] sm:$0xff]
      %v1136 = vld [vmem:[%s985 + $0x88] sm:$0xff]
      %v1137 = vld [vmem:[%s985 + $0x90] sm:$0xff]
      %v1138 = vld [vmem:[%s985 + $0x98] sm:$0xff]
      %v1139 = vld [vmem:[%s985 + $0xa0] sm:$0xff]
      %v1140 = vld [vmem:[%s985 + $0xa8] sm:$0xff]
      %v1141 = vld [vmem:[%s985 + $0xb0] sm:$0xff]
      %v1142 = vld [vmem:[%s985 + $0xb8] sm:$0xff]
      %v1143 = vld [vmem:[%s985 + $0xc0] sm:$0xff]
      %v1144 = vld [vmem:[%s985 + $0xc8] sm:$0xff]
      %v1145 = vld [vmem:[%s985 + $0xd0] sm:$0xff]
      %v1146 = vld [vmem:[%s985 + $0xd8] sm:$0xff]
      %v1147 = vld [vmem:[%s985 + $0xe0] sm:$0xff]
      %v1148 = vld [vmem:[%s985 + $0xe8] sm:$0xff]
      %v1149 = vld [vmem:[%s985 + $0xf0] sm:$0xff]
      %v1150 = vld [vmem:[%s985 + $0xf8] sm:$0xff]
      %v1151 = vld [vmem:[%s989] sm:$0x3]
      %vm1152 = vcmask 261120
      %v1153 = vsel %vm1152, %v1009, 0.0
      %1154 = vadd.xlane.f32.xlu0 %v1153
      %v1155 = vpop.xlane.xlu0 %1154
      %v1156 = vsel %vm1152, %v1010, 0.0
      %1157 = vadd.xlane.f32.xlu0 %v1156
      %v1158 = vpop.xlane.xlu0 %1157
      %vm1159 = vcmask 254976
      %v1160 = vsel %vm1159, %v1011, 0.0
      %1161 = vadd.xlane.f32.xlu0 %v1160
      %v1162 = vpop.xlane.xlu0 %1161
      %v1163 = vrcp.pop 32.0
      %v1164 = vmul.f32 %v1155, %v1163
      %v1165 = vmul.f32 %v1158, %v1163
      %v1166 = vmul.f32 %v1162, %v1163
      %v1167 = vsub.f32 %v1009, %v1164
      %v1168 = vsub.f32 %v1010, %v1165
      %v1169 = vsub.f32 %v1011, %v1166
      %v1170 = vmul.f32 %v1167, %v1167
      %v1171 = vmul.f32 %v1168, %v1168
      %v1172 = vmul.f32 %v1169, %v1169
      %v1173 = vsel %vm1152, %v1170, 0.0
      %1174 = vadd.xlane.f32.xlu0 %v1173
      %v1175 = vpop.xlane.xlu0 %1174
      %v1176 = vsel %vm1152, %v1171, 0.0
      %1177 = vadd.xlane.f32.xlu0 %v1176
      %v1178 = vpop.xlane.xlu0 %1177
      %v1179 = vsel %vm1159, %v1172, 0.0
      %1180 = vadd.xlane.f32.xlu0 %v1179
      %v1181 = vpop.xlane.xlu0 %1180
      %v1182 = vmul.f32 %v1175, %v1163
      %v1183 = vmul.f32 %v1178, %v1163
      %v1184 = vmul.f32 %v1181, %v1163
      %v1185 = vadd.f32 %v1182, 1e-05
      %v1186 = vadd.f32 %v1183, 1e-05
      %v1187 = vadd.f32 %v1184, 1e-05
      %v1188 = vrsqrt.pop %v1185
      %v1189 = vrsqrt.pop %v1186
      %v1190 = vrsqrt.pop %v1187
      %v1191 = vmul.f32 %v1167, %v1188
      %v1192 = vmul.f32 %v1168, %v1189
      %v1193 = vmul.f32 %v1169, %v1190
      %v1194 = vlaneseq
      %v1195 = vshrl.u32 %v1194, 7
      %v1196 = vsub.s32 0, %v1195
      %v1197 = vrot.slane %v1070, %v1196
      %v1198 = vmul.f32 %v1191, %v1197
      %v1199 = vmul.f32 %v1192, %v1197
      %v1200 = vmul.f32 %v1193, %v1197
      %v1201 = vlaneseq
      %v1202 = vshrl.u32 %v1201, 7
      %v1203 = vsub.s32 0, %v1202
      %v1204 = vrot.slane %v1071, %v1203
      %v1205 = vadd.f32 %v1198, %v1204
      %v1206 = vadd.f32 %v1199, %v1204
      %v1207 = vadd.f32 %v1200, %v1204
      %v1208 = vlaneseq
      %v1209 = vshrl.u32 %v1208, 7
      %v1210 = vsub.s32 0, %v1209
      %v1211 = vrot.slane %v1082, %v1210
      %v1213 = vsel %vm1152, %v1205, 0
      %v1216 = vsel %vm1152, %v1206, 0
      %v1219 = vsel %vm1152, %v1207, 0
      %1221 = vmatprep.subr.mxu0 0.0
      %1222 = vmatpush1.msra.mxu0 %v1074
      %1223 = vmatprep.subr.mxu0 0.0
      %1224 = vmatpush1.msra.mxu0 %v1075
      %1225 = vmatprep.subr.mxu0 0.0
      %1226 = vmatpush1.msra.mxu0 %v1076
      %1227 = vmatprep.subr.mxu0 0.0
      %1228 = vmatpush1.msra.mxu0 %v1077
      %1229 = vmatprep.subr.mxu0 0.0
      %1230 = vmatpush1.msra.mxu0 0.0
      %1231 = vmatprep.subr.mxu0 0.0
      %1232 = vmatpush1.msra.mxu0 0.0
      %1233 = vmatprep.subr.mxu0 0.0
      %1234 = vmatpush1.msra.mxu0 0.0
      %1235 = vmatprep.subr.mxu0 0.0
      %1236 = vmatpush1.msra.mxu0 0.0
      %1237 = vmatprep.subr.mxu0 0.0
      %1238 = vmatpush1.msra.mxu0 0.0
      %1239 = vmatprep.subr.mxu0 0.0
      %1240 = vmatpush1.msra.mxu0 0.0
      %1241 = vmatprep.subr.mxu0 0.0
      %1242 = vmatpush1.msra.mxu0 0.0
      %1243 = vmatprep.subr.mxu0 0.0
      %1244 = vmatpush1.msra.mxu0 0.0
      %1245 = vmatprep.subr.mxu0 0.0
      %1246 = vmatpush1.msra.mxu0 0.0
      %1247 = vmatprep.subr.mxu0 0.0
      %1248 = vmatpush1.msra.mxu0 0.0
      %1249 = vmatprep.subr.mxu0 0.0
      %1250 = vmatpush1.msra.mxu0 0.0
      %1251 = vmatprep.subr.mxu0 0.0
      %1252 = vmatpush1.msra.mxu0 0.0
      %1253 = vmatprep.subr.mxu0 0.0
      %1254 = vmatpush1.msra.mxu0 0.0
      %1255 = vmatprep.subr.mxu0 0.0
      %1256 = vmatpush1.msra.mxu0 0.0
      %1257 = vmatprep.subr.mxu0 0.0
      %1258 = vmatpush1.msra.mxu0 0.0
      %1259 = vmatprep.subr.mxu0 0.0
      %1260 = vmatpush1.msra.mxu0 0.0
      %1261 = vmatprep.subr.mxu0 0.0
      %1262 = vmatpush1.msra.mxu0 0.0
      %1263 = vmatprep.subr.mxu0 0.0
      %1264 = vmatpush1.msra.mxu0 0.0
      %1265 = vmatprep.subr.mxu0 0.0
      %1266 = vmatpush1.msra.mxu0 0.0
      %1267 = vmatprep.subr.mxu0 0.0
      %1268 = vmatpush1.msra.mxu0 0.0
      %1269 = vmatprep.subr.mxu0 0.0
      %1270 = vmatpush1.msra.mxu0 0.0
      %1271 = vmatprep.subr.mxu0 0.0
      %1272 = vmatpush1.msra.mxu0 0.0
      %1273 = vmatprep.subr.mxu0 0.0
      %1274 = vmatpush1.msra.mxu0 0.0
      %1275 = vmatprep.subr.mxu0 0.0
      %1276 = vmatpush1.msra.mxu0 0.0
      %1277 = vmatprep.subr.mxu0 0.0
      %1278 = vmatpush1.msra.mxu0 0.0
      %1279 = vmatprep.subr.mxu0 0.0
      %1280 = vmatpush1.msra.mxu0 0.0
      %1281 = vmatprep.subr.mxu0 0.0
      %1282 = vmatpush1.msra.mxu0 0.0
      %1283 = vmatprep.subr.mxu0 0.0
      %1284 = vmatpush1.msra.mxu0 0.0
      %1285 = vmatprep.mubr.f32.mxu0 0.0
      %1286 = vmatmul.mubr.f32.gmra.mrb[0].mxu0 %v1213
      %v1287 = vpop.f32.mrb[0].mxu0
      %v1288 = vadd.f32 %v1211, %v1287
      %v1289 = vpop.f32.mrb[0].mxu0
      %1290 = vmatprep.mubr.f32.mxu0 0.0
      %1291 = vmatmul.mubr.f32.gmra.mrb[0].mxu0 %v1216
      %v1292 = vpop.f32.mrb[0].mxu0
      %v1293 = vadd.f32 %v1211, %v1292
      %v1294 = vpop.f32.mrb[0].mxu0
      %1295 = vmatprep.mubr.f32.mxu0 0.0
      %1296 = vmatmul.mubr.f32.gmra.mrb[0].mxu0 %v1219
      %v1297 = vpop.f32.mrb[0].mxu0
      %v1298 = vadd.f32 %v1211, %v1297
      %v1299 = vpop.f32.mrb[0].mxu0
      %1300 = vdwg.mxu0
      %v1301 = vlaneseq
      %v1302 = vshrl.u32 %v1301, 7
      %v1303 = vsub.s32 0, %v1302
      %v1304 = vrot.slane %v1091, %v1303
      %1305 = vmatprep.subr.mxu0 0.0
      %1306 = vmatpush1.msra.mxu0 %v1083
      %1307 = vmatprep.subr.mxu0 0.0
      %1308 = vmatpush1.msra.mxu0 %v1084
      %1309 = vmatprep.subr.mxu0 0.0
      %1310 = vmatpush1.msra.mxu0 %v1085
      %1311 = vmatprep.subr.mxu0 0.0
      %1312 = vmatpush1.msra.mxu0 %v1086
      %1313 = vmatprep.subr.mxu0 0.0
      %1314 = vmatpush1.msra.mxu0 0.0
      %1315 = vmatprep.subr.mxu0 0.0
      %1316 = vmatpush1.msra.mxu0 0.0
      %1317 = vmatprep.subr.mxu0 0.0
      %1318 = vmatpush1.msra.mxu0 0.0
      %1319 = vmatprep.subr.mxu0 0.0
      %1320 = vmatpush1.msra.mxu0 0.0
      %1321 = vmatprep.subr.mxu0 0.0
      %1322 = vmatpush1.msra.mxu0 0.0
      %1323 = vmatprep.subr.mxu0 0.0
      %1324 = vmatpush1.msra.mxu0 0.0
      %1325 = vmatprep.subr.mxu0 0.0
      %1326 = vmatpush1.msra.mxu0 0.0
      %1327 = vmatprep.subr.mxu0 0.0
      %1328 = vmatpush1.msra.mxu0 0.0
      %1329 = vmatprep.subr.mxu0 0.0
      %1330 = vmatpush1.msra.mxu0 0.0
      %1331 = vmatprep.subr.mxu0 0.0
      %1332 = vmatpush1.msra.mxu0 0.0
      %1333 = vmatprep.subr.mxu0 0.0
      %1334 = vmatpush1.msra.mxu0 0.0
      %1335 = vmatprep.subr.mxu0 0.0
      %1336 = vmatpush1.msra.mxu0 0.0
      %1337 = vmatprep.subr.mxu0 0.0
      %1338 = vmatpush1.msra.mxu0 0.0
      %1339 = vmatprep.subr.mxu0 0.0
      %1340 = vmatpush1.msra.mxu0 0.0
      %1341 = vmatprep.subr.mxu0 0.0
      %1342 = vmatpush1.msra.mxu0 0.0
      %1343 = vmatprep.subr.mxu0 0.0
      %1344 = vmatpush1.msra.mxu0 0.0
      %1345 = vmatprep.subr.mxu0 0.0
      %1346 = vmatpush1.msra.mxu0 0.0
      %1347 = vmatprep.subr.mxu0 0.0
      %1348 = vmatpush1.msra.mxu0 0.0
      %1349 = vmatprep.subr.mxu0 0.0
      %1350 = vmatpush1.msra.mxu0 0.0
      %1351 = vmatprep.subr.mxu0 0.0
      %1352 = vmatpush1.msra.mxu0 0.0
      %1353 = vmatprep.subr.mxu0 0.0
      %1354 = vmatpush1.msra.mxu0 0.0
      %1355 = vmatprep.subr.mxu0 0.0
      %1356 = vmatpush1.msra.mxu0 0.0
      %1357 = vmatprep.subr.mxu0 0.0
      %1358 = vmatpush1.msra.mxu0 0.0
      %1359 = vmatprep.subr.mxu0 0.0
      %1360 = vmatpush1.msra.mxu0 0.0
      %1361 = vmatprep.subr.mxu0 0.0
      %1362 = vmatpush1.msra.mxu0 0.0
      %1363 = vmatprep.subr.mxu0 0.0
      %1364 = vmatpush1.msra.mxu0 0.0
      %1365 = vmatprep.subr.mxu0 0.0
      %1366 = vmatpush1.msra.mxu0 0.0
      %1367 = vmatprep.subr.mxu0 0.0
      %1368 = vmatpush1.msra.mxu0 0.0
      %1369 = vmatprep.mubr.f32.mxu0 0.0
      %1370 = vmatmul.mubr.f32.gmra.mrb[0].mxu0 %v1213
      %v1371 = vpop.f32.mrb[0].mxu0
      %v1372 = vadd.f32 %v1304, %v1371
      %v1373 = vpop.f32.mrb[0].mxu0
      %1374 = vmatprep.mubr.f32.mxu0 0.0
      %1375 = vmatmul.mubr.f32.gmra.mrb[0].mxu0 %v1216
      %v1376 = vpop.f32.mrb[0].mxu0
      %v1377 = vadd.f32 %v1304, %v1376
      %v1378 = vpop.f32.mrb[0].mxu0
      %1379 = vmatprep.mubr.f32.mxu0 0.0
      %1380 = vmatmul.mubr.f32.gmra.mrb[0].mxu0 %v1219
      %v1381 = vpop.f32.mrb[0].mxu0
      %v1382 = vadd.f32 %v1304, %v1381
      %v1383 = vpop.f32.mrb[0].mxu0
      %1384 = vdwg.mxu0
      %v1385 = vlaneseq
      %v1386 = vshrl.u32 %v1385, 7
      %v1387 = vsub.s32 0, %v1386
      %v1388 = vrot.slane %v1100, %v1387
      %1389 = vmatprep.subr.mxu0 0.0
      %1390 = vmatpush1.msra.mxu0 %v1092
      %1391 = vmatprep.subr.mxu0 0.0
      %1392 = vmatpush1.msra.mxu0 %v1093
      %1393 = vmatprep.subr.mxu0 0.0
      %1394 = vmatpush1.msra.mxu0 %v1094
      %1395 = vmatprep.subr.mxu0 0.0
      %1396 = vmatpush1.msra.mxu0 %v1095
      %1397 = vmatprep.subr.mxu0 0.0
      %1398 = vmatpush1.msra.mxu0 0.0
      %1399 = vmatprep.subr.mxu0 0.0
      %1400 = vmatpush1.msra.mxu0 0.0
      %1401 = vmatprep.subr.mxu0 0.0
      %1402 = vmatpush1.msra.mxu0 0.0
      %1403 = vmatprep.subr.mxu0 0.0
      %1404 = vmatpush1.msra.mxu0 0.0
      %1405 = vmatprep.subr.mxu0 0.0
      %1406 = vmatpush1.msra.mxu0 0.0
      %1407 = vmatprep.subr.mxu0 0.0
      %1408 = vmatpush1.msra.mxu0 0.0
      %1409 = vmatprep.subr.mxu0 0.0
      %1410 = vmatpush1.msra.mxu0 0.0
      %1411 = vmatprep.subr.mxu0 0.0
      %1412 = vmatpush1.msra.mxu0 0.0
      %1413 = vmatprep.subr.mxu0 0.0
      %1414 = vmatpush1.msra.mxu0 0.0
      %1415 = vmatprep.subr.mxu0 0.0
      %1416 = vmatpush1.msra.mxu0 0.0
      %1417 = vmatprep.subr.mxu0 0.0
      %1418 = vmatpush1.msra.mxu0 0.0
      %1419 = vmatprep.subr.mxu0 0.0
      %1420 = vmatpush1.msra.mxu0 0.0
      %1421 = vmatprep.subr.mxu0 0.0
      %1422 = vmatpush1.msra.mxu0 0.0
      %1423 = vmatprep.subr.mxu0 0.0
      %1424 = vmatpush1.msra.mxu0 0.0
      %1425 = vmatprep.subr.mxu0 0.0
      %1426 = vmatpush1.msra.mxu0 0.0
      %1427 = vmatprep.subr.mxu0 0.0
      %1428 = vmatpush1.msra.mxu0 0.0
      %1429 = vmatprep.subr.mxu0 0.0
      %1430 = vmatpush1.msra.mxu0 0.0
      %1431 = vmatprep.subr.mxu0 0.0
      %1432 = vmatpush1.msra.mxu0 0.0
      %1433 = vmatprep.subr.mxu0 0.0
      %1434 = vmatpush1.msra.mxu0 0.0
      %1435 = vmatprep.subr.mxu0 0.0
      %1436 = vmatpush1.msra.mxu0 0.0
      %1437 = vmatprep.subr.mxu0 0.0
      %1438 = vmatpush1.msra.mxu0 0.0
      %1439 = vmatprep.subr.mxu0 0.0
      %1440 = vmatpush1.msra.mxu0 0.0
      %1441 = vmatprep.subr.mxu0 0.0
      %1442 = vmatpush1.msra.mxu0 0.0
      %1443 = vmatprep.subr.mxu0 0.0
      %1444 = vmatpush1.msra.mxu0 0.0
      %1445 = vmatprep.subr.mxu0 0.0
      %1446 = vmatpush1.msra.mxu0 0.0
      %1447 = vmatprep.subr.mxu0 0.0
      %1448 = vmatpush1.msra.mxu0 0.0
      %1449 = vmatprep.subr.mxu0 0.0
      %1450 = vmatpush1.msra.mxu0 0.0
      %1451 = vmatprep.subr.mxu0 0.0
      %1452 = vmatpush1.msra.mxu0 0.0
      %1453 = vmatprep.mubr.f32.mxu0 0.0
      %1454 = vmatmul.mubr.f32.gmra.mrb[0].mxu0 %v1213
      %v1455 = vpop.f32.mrb[0].mxu0
      %v1456 = vadd.f32 %v1388, %v1455
      %v1457 = vpop.f32.mrb[0].mxu0
      %1458 = vmatprep.mubr.f32.mxu0 0.0
      %1459 = vmatmul.mubr.f32.gmra.mrb[0].mxu0 %v1216
      %v1460 = vpop.f32.mrb[0].mxu0
      %v1461 = vadd.f32 %v1388, %v1460
      %v1462 = vpop.f32.mrb[0].mxu0
      %1463 = vmatprep.mubr.f32.mxu0 0.0
      %1464 = vmatmul.mubr.f32.gmra.mrb[0].mxu0 %v1219
      %v1465 = vpop.f32.mrb[0].mxu0
      %v1466 = vadd.f32 %v1388, %v1465
      %v1467 = vpop.f32.mrb[0].mxu0
      %1468 = vdwg.mxu0
      %v1469 = vmul.f32 %v1288, %v1018
      %v1470 = vmul.f32 %v1293, %v1018
      %v1471 = vmul.f32 %v1298, %v1018
      %v1472 = vmul.f32 %v1372, %v1018
      %v1473 = vmul.f32 %v1377, %v1018
      %v1474 = vmul.f32 %v1382, %v1018
      %v1476 = vsel %vm1152, %v1469, 0
      %v1479 = vsel %vm1152, %v1470, 0
      %v1482 = vsel %vm1152, %v1471, 0
      %v1485 = vsel %vm1152, %v1472, 0
      %v1488 = vsel %vm1152, %v1473, 0
      %v1491 = vsel %vm1152, %v1474, 0
      %1493 = vmatprep.subr.mxu0 0.0
      %1494 = vmatpush1.xpose.msra.mxu0 %v1485
      %1495 = vmatprep.subr.mxu0 0.0
      %1496 = vmatpush1.xpose.msra.mxu0 %v1488
      %1497 = vmatprep.subr.mxu0 0.0
      %1498 = vmatpush1.xpose.msra.mxu0 %v1491
      %1499 = vmatprep.subr.mxu0 0.0
      %1500 = vmatpush1.xpose.msra.mxu0 0.0
      %1501 = vmatprep.subr.mxu0 0.0
      %1502 = vmatpush1.xpose.msra.mxu0 0.0
      %1503 = vmatprep.subr.mxu0 0.0
      %1504 = vmatpush1.xpose.msra.mxu0 0.0
      %1505 = vmatprep.subr.mxu0 0.0
      %1506 = vmatpush1.xpose.msra.mxu0 0.0
      %1507 = vmatprep.subr.mxu0 0.0
      %1508 = vmatpush1.xpose.msra.mxu0 0.0
      %1509 = vmatprep.subr.mxu0 0.0
      %1510 = vmatpush1.xpose.msra.mxu0 0.0
      %1511 = vmatprep.subr.mxu0 0.0
      %1512 = vmatpush1.xpose.msra.mxu0 0.0
      %1513 = vmatprep.subr.mxu0 0.0
      %1514 = vmatpush1.xpose.msra.mxu0 0.0
      %1515 = vmatprep.subr.mxu0 0.0
      %1516 = vmatpush1.xpose.msra.mxu0 0.0
      %1517 = vmatprep.subr.mxu0 0.0
      %1518 = vmatpush1.xpose.msra.mxu0 0.0
      %1519 = vmatprep.subr.mxu0 0.0
      %1520 = vmatpush1.xpose.msra.mxu0 0.0
      %1521 = vmatprep.subr.mxu0 0.0
      %1522 = vmatpush1.xpose.msra.mxu0 0.0
      %1523 = vmatprep.subr.mxu0 0.0
      %1524 = vmatpush1.xpose.msra.mxu0 0.0
      %1525 = vmatprep.subr.mxu0 0.0
      %1526 = vmatpush1.xpose.msra.mxu0 0.0
      %1527 = vmatprep.subr.mxu0 0.0
      %1528 = vmatpush1.xpose.msra.mxu0 0.0
      %1529 = vmatprep.subr.mxu0 0.0
      %1530 = vmatpush1.xpose.msra.mxu0 0.0
      %1531 = vmatprep.subr.mxu0 0.0
      %1532 = vmatpush1.xpose.msra.mxu0 0.0
      %1533 = vmatprep.subr.mxu0 0.0
      %1534 = vmatpush1.xpose.msra.mxu0 0.0
      %1535 = vmatprep.subr.mxu0 0.0
      %1536 = vmatpush1.xpose.msra.mxu0 0.0
      %1537 = vmatprep.subr.mxu0 0.0
      %1538 = vmatpush1.xpose.msra.mxu0 0.0
      %1539 = vmatprep.subr.mxu0 0.0
      %1540 = vmatpush1.xpose.msra.mxu0 0.0
      %1541 = vmatprep.subr.mxu0 0.0
      %1542 = vmatpush1.xpose.msra.mxu0 0.0
      %1543 = vmatprep.subr.mxu0 0.0
      %1544 = vmatpush1.xpose.msra.mxu0 0.0
      %1545 = vmatprep.subr.mxu0 0.0
      %1546 = vmatpush1.xpose.msra.mxu0 0.0
      %1547 = vmatprep.subr.mxu0 0.0
      %1548 = vmatpush1.xpose.msra.mxu0 0.0
      %1549 = vmatprep.subr.mxu0 0.0
      %1550 = vmatpush1.xpose.msra.mxu0 0.0
      %1551 = vmatprep.subr.mxu0 0.0
      %1552 = vmatpush1.xpose.msra.mxu0 0.0
      %1553 = vmatprep.subr.mxu0 0.0
      %1554 = vmatpush1.xpose.msra.mxu0 0.0
      %1555 = vmatprep.subr.mxu0 0.0
      %1556 = vmatpush1.xpose.msra.mxu0 0.0
      %1557 = vmatprep.mubr.f32.mxu0 0.0
      %1558 = vmatmul.mubr.f32.gmra.mrb[0].mxu0 %v1476
      %v1559 = vpop.f32.mrb[0].mxu0
      %v1560 = vadd.f32 0.0, %v1559
      %v1561 = vpop.f32.mrb[0].mxu0
      %1562 = vmatprep.mubr.f32.mxu0 0.0
      %1563 = vmatmul.mubr.f32.gmra.mrb[0].mxu0 %v1479
      %v1564 = vpop.f32.mrb[0].mxu0
      %v1565 = vadd.f32 0.0, %v1564
      %v1566 = vpop.f32.mrb[0].mxu0
      %1567 = vmatprep.mubr.f32.mxu0 0.0
      %1568 = vmatmul.mubr.f32.gmra.mrb[0].mxu0 %v1482
      %v1569 = vpop.f32.mrb[0].mxu0
      %v1570 = vadd.f32 0.0, %v1569
      %v1571 = vpop.f32.mrb[0].mxu0
      %1572 = vdwg.mxu0
      %v1573 = vmul.f32 %v1560, 0.35355338
      %v1574 = vmul.f32 %v1565, 0.35355338
      %v1575 = vmul.f32 %v1570, 0.35355338
      %v1576 = vsel %vm1067, %v1573, -1e+30
      %v1577 = vsel %vm1068, %v1574, -1e+30
      %v1578 = vsel %vm1069, %v1575, -1e+30
      %vm1579 = vcmask 146432
      %v1580 = vsel %vm1579, %v1576, -inf
      %1581 = vmax.xlane.f32.xlu0 %v1580
      %v1582 = vpop.xlane.xlu0 %1581
      %v1583 = vsel %vm1579, %v1577, -inf
      %1584 = vmax.xlane.f32.xlu0 %v1583
      %v1585 = vpop.xlane.xlu0 %1584
      %vm1586 = vcmask 140288
      %v1587 = vsel %vm1586, %v1578, -inf
      %1588 = vmax.xlane.f32.xlu0 %v1587
      %v1589 = vpop.xlane.xlu0 %1588
      %v1590 = vsub.f32 %v1576, %v1582
      %v1591 = vsub.f32 %v1577, %v1585
      %v1592 = vsub.f32 %v1578, %v1589
      %v1593 = vmul.f32 %v1590, 1.442695
      %v1594 = vpow.pop %v1593
      %v1595 = vmul.f32 %v1591, 1.442695
      %v1596 = vpow.pop %v1595
      %v1597 = vmul.f32 %v1592, 1.442695
      %v1598 = vpow.pop %v1597
      %v1599 = vsel %vm1579, %v1594, 0.0
      %1600 = vadd.xlane.f32.xlu0 %v1599
      %v1601 = vpop.xlane.xlu0 %1600
      %v1602 = vsel %vm1579, %v1596, 0.0
      %1603 = vadd.xlane.f32.xlu0 %v1602
      %v1604 = vpop.xlane.xlu0 %1603
      %v1605 = vsel %vm1586, %v1598, 0.0
      %1606 = vadd.xlane.f32.xlu0 %v1605
      %v1607 = vpop.xlane.xlu0 %1606
      %v1608 = vrcp.pop %v1601
      %v1609 = vrcp.pop %v1604
      %v1610 = vrcp.pop %v1607
      %v1611 = vmul.f32 %v1594, %v1608
      %v1612 = vmul.f32 %v1596, %v1609
      %v1613 = vmul.f32 %v1598, %v1610
      %v1614 = vmul.f32 %v1456, %v1018
      %v1615 = vmul.f32 %v1461, %v1018
      %v1616 = vmul.f32 %v1466, %v1018
      %v1617 = vmul.f32 %v1288, %v1023
      %v1618 = vmul.f32 %v1293, %v1023
      %v1619 = vmul.f32 %v1298, %v1023
      %v1620 = vmul.f32 %v1372, %v1023
      %v1621 = vmul.f32 %v1377, %v1023
      %v1622 = vmul.f32 %v1382, %v1023
      %v1624 = vsel %vm1152, %v1617, 0
      %v1627 = vsel %vm1152, %v1618, 0
      %v1630 = vsel %vm1152, %v1619, 0
      %v1633 = vsel %vm1152, %v1620, 0
      %v1636 = vsel %vm1152, %v1621, 0
      %v1639 = vsel %vm1152, %v1622, 0
      %1641 = vmatprep.subr.mxu0 0.0
      %1642 = vmatpush1.xpose.msra.mxu0 %v1633
      %1643 = vmatprep.subr.mxu0 0.0
      %1644 = vmatpush1.xpose.msra.mxu0 %v1636
      %1645 = vmatprep.subr.mxu0 0.0
      %1646 = vmatpush1.xpose.msra.mxu0 %v1639
      %1647 = vmatprep.subr.mxu0 0.0
      %1648 = vmatpush1.xpose.msra.mxu0 0.0
      %1649 = vmatprep.subr.mxu0 0.0
      %1650 = vmatpush1.xpose.msra.mxu0 0.0
      %1651 = vmatprep.subr.mxu0 0.0
      %1652 = vmatpush1.xpose.msra.mxu0 0.0
      %1653 = vmatprep.subr.mxu0 0.0
      %1654 = vmatpush1.xpose.msra.mxu0 0.0
      %1655 = vmatprep.subr.mxu0 0.0
      %1656 = vmatpush1.xpose.msra.mxu0 0.0
      %1657 = vmatprep.subr.mxu0 0.0
      %1658 = vmatpush1.xpose.msra.mxu0 0.0
      %1659 = vmatprep.subr.mxu0 0.0
      %1660 = vmatpush1.xpose.msra.mxu0 0.0
      %1661 = vmatprep.subr.mxu0 0.0
      %1662 = vmatpush1.xpose.msra.mxu0 0.0
      %1663 = vmatprep.subr.mxu0 0.0
      %1664 = vmatpush1.xpose.msra.mxu0 0.0
      %1665 = vmatprep.subr.mxu0 0.0
      %1666 = vmatpush1.xpose.msra.mxu0 0.0
      %1667 = vmatprep.subr.mxu0 0.0
      %1668 = vmatpush1.xpose.msra.mxu0 0.0
      %1669 = vmatprep.subr.mxu0 0.0
      %1670 = vmatpush1.xpose.msra.mxu0 0.0
      %1671 = vmatprep.subr.mxu0 0.0
      %1672 = vmatpush1.xpose.msra.mxu0 0.0
      %1673 = vmatprep.subr.mxu0 0.0
      %1674 = vmatpush1.xpose.msra.mxu0 0.0
      %1675 = vmatprep.subr.mxu0 0.0
      %1676 = vmatpush1.xpose.msra.mxu0 0.0
      %1677 = vmatprep.subr.mxu0 0.0
      %1678 = vmatpush1.xpose.msra.mxu0 0.0
      %1679 = vmatprep.subr.mxu0 0.0
      %1680 = vmatpush1.xpose.msra.mxu0 0.0
      %1681 = vmatprep.subr.mxu0 0.0
      %1682 = vmatpush1.xpose.msra.mxu0 0.0
      %1683 = vmatprep.subr.mxu0 0.0
      %1684 = vmatpush1.xpose.msra.mxu0 0.0
      %1685 = vmatprep.subr.mxu0 0.0
      %1686 = vmatpush1.xpose.msra.mxu0 0.0
      %1687 = vmatprep.subr.mxu0 0.0
      %1688 = vmatpush1.xpose.msra.mxu0 0.0
      %1689 = vmatprep.subr.mxu0 0.0
      %1690 = vmatpush1.xpose.msra.mxu0 0.0
      %1691 = vmatprep.subr.mxu0 0.0
      %1692 = vmatpush1.xpose.msra.mxu0 0.0
      %1693 = vmatprep.subr.mxu0 0.0
      %1694 = vmatpush1.xpose.msra.mxu0 0.0
      %1695 = vmatprep.subr.mxu0 0.0
      %1696 = vmatpush1.xpose.msra.mxu0 0.0
      %1697 = vmatprep.subr.mxu0 0.0
      %1698 = vmatpush1.xpose.msra.mxu0 0.0
      %1699 = vmatprep.subr.mxu0 0.0
      %1700 = vmatpush1.xpose.msra.mxu0 0.0
      %1701 = vmatprep.subr.mxu0 0.0
      %1702 = vmatpush1.xpose.msra.mxu0 0.0
      %1703 = vmatprep.subr.mxu0 0.0
      %1704 = vmatpush1.xpose.msra.mxu0 0.0
      %1705 = vmatprep.mubr.f32.mxu0 0.0
      %1706 = vmatmul.mubr.f32.gmra.mrb[0].mxu0 %v1624
      %v1707 = vpop.f32.mrb[0].mxu0
      %v1708 = vadd.f32 0.0, %v1707
      %v1709 = vpop.f32.mrb[0].mxu0
      %1710 = vmatprep.mubr.f32.mxu0 0.0
      %1711 = vmatmul.mubr.f32.gmra.mrb[0].mxu0 %v1627
      %v1712 = vpop.f32.mrb[0].mxu0
      %v1713 = vadd.f32 0.0, %v1712
      %v1714 = vpop.f32.mrb[0].mxu0
      %1715 = vmatprep.mubr.f32.mxu0 0.0
      %1716 = vmatmul.mubr.f32.gmra.mrb[0].mxu0 %v1630
      %v1717 = vpop.f32.mrb[0].mxu0
      %v1718 = vadd.f32 0.0, %v1717
      %v1719 = vpop.f32.mrb[0].mxu0
      %1720 = vdwg.mxu0
      %v1721 = vmul.f32 %v1708, 0.35355338
      %v1722 = vmul.f32 %v1713, 0.35355338
      %v1723 = vmul.f32 %v1718, 0.35355338
      %v1724 = vsel %vm1067, %v1721, -1e+30
      %v1725 = vsel %vm1068, %v1722, -1e+30
      %v1726 = vsel %vm1069, %v1723, -1e+30
      %v1727 = vsel %vm1579, %v1724, -inf
      %1728 = vmax.xlane.f32.xlu0 %v1727
      %v1729 = vpop.xlane.xlu0 %1728
      %v1730 = vsel %vm1579, %v1725, -inf
      %1731 = vmax.xlane.f32.xlu0 %v1730
      %v1732 = vpop.xlane.xlu0 %1731
      %v1733 = vsel %vm1586, %v1726, -inf
      %1734 = vmax.xlane.f32.xlu0 %v1733
      %v1735 = vpop.xlane.xlu0 %1734
      %v1736 = vsub.f32 %v1724, %v1729
      %v1737 = vsub.f32 %v1725, %v1732
      %v1738 = vsub.f32 %v1726, %v1735
      %v1739 = vmul.f32 %v1736, 1.442695
      %v1740 = vpow.pop %v1739
      %v1741 = vmul.f32 %v1737, 1.442695
      %v1742 = vpow.pop %v1741
      %v1743 = vmul.f32 %v1738, 1.442695
      %v1744 = vpow.pop %v1743
      %v1745 = vsel %vm1579, %v1740, 0.0
      %1746 = vadd.xlane.f32.xlu0 %v1745
      %v1747 = vpop.xlane.xlu0 %1746
      %v1748 = vsel %vm1579, %v1742, 0.0
      %1749 = vadd.xlane.f32.xlu0 %v1748
      %v1750 = vpop.xlane.xlu0 %1749
      %v1751 = vsel %vm1586, %v1744, 0.0
      %1752 = vadd.xlane.f32.xlu0 %v1751
      %v1753 = vpop.xlane.xlu0 %1752
      %v1754 = vrcp.pop %v1747
      %v1755 = vrcp.pop %v1750
      %v1756 = vrcp.pop %v1753
      %v1757 = vmul.f32 %v1740, %v1754
      %v1758 = vmul.f32 %v1742, %v1755
      %v1759 = vmul.f32 %v1744, %v1756
      %v1760 = vmul.f32 %v1456, %v1023
      %v1761 = vmul.f32 %v1461, %v1023
      %v1762 = vmul.f32 %v1466, %v1023
      %v1764 = vsel %vm1579, %v1757, 0
      %v1767 = vsel %vm1579, %v1758, 0
      %v1770 = vsel %vm1579, %v1759, 0
      %vm1772 = vcmask 1041408
      %v1774 = vsel %vm1772, %v1762, 0
      %1776 = vmatprep.subr.mxu0 0.0
      %1777 = vmatpush1.msra.mxu0 %v1760
      %1778 = vmatprep.subr.mxu0 0.0
      %1779 = vmatpush1.msra.mxu0 %v1761
      %1780 = vmatprep.subr.mxu0 0.0
      %1781 = vmatpush1.msra.mxu0 %v1774
      %1782 = vmatprep.subr.mxu0 0.0
      %1783 = vmatpush1.msra.mxu0 0.0
      %1784 = vmatprep.subr.mxu0 0.0
      %1785 = vmatpush1.msra.mxu0 0.0
      %1786 = vmatprep.subr.mxu0 0.0
      %1787 = vmatpush1.msra.mxu0 0.0
      %1788 = vmatprep.subr.mxu0 0.0
      %1789 = vmatpush1.msra.mxu0 0.0
      %1790 = vmatprep.subr.mxu0 0.0
      %1791 = vmatpush1.msra.mxu0 0.0
      %1792 = vmatprep.subr.mxu0 0.0
      %1793 = vmatpush1.msra.mxu0 0.0
      %1794 = vmatprep.subr.mxu0 0.0
      %1795 = vmatpush1.msra.mxu0 0.0
      %1796 = vmatprep.subr.mxu0 0.0
      %1797 = vmatpush1.msra.mxu0 0.0
      %1798 = vmatprep.subr.mxu0 0.0
      %1799 = vmatpush1.msra.mxu0 0.0
      %1800 = vmatprep.subr.mxu0 0.0
      %1801 = vmatpush1.msra.mxu0 0.0
      %1802 = vmatprep.subr.mxu0 0.0
      %1803 = vmatpush1.msra.mxu0 0.0
      %1804 = vmatprep.subr.mxu0 0.0
      %1805 = vmatpush1.msra.mxu0 0.0
      %1806 = vmatprep.subr.mxu0 0.0
      %1807 = vmatpush1.msra.mxu0 0.0
      %1808 = vmatprep.subr.mxu0 0.0
      %1809 = vmatpush1.msra.mxu0 0.0
      %1810 = vmatprep.subr.mxu0 0.0
      %1811 = vmatpush1.msra.mxu0 0.0
      %1812 = vmatprep.subr.mxu0 0.0
      %1813 = vmatpush1.msra.mxu0 0.0
      %1814 = vmatprep.subr.mxu0 0.0
      %1815 = vmatpush1.msra.mxu0 0.0
      %1816 = vmatprep.subr.mxu0 0.0
      %1817 = vmatpush1.msra.mxu0 0.0
      %1818 = vmatprep.subr.mxu0 0.0
      %1819 = vmatpush1.msra.mxu0 0.0
      %1820 = vmatprep.subr.mxu0 0.0
      %1821 = vmatpush1.msra.mxu0 0.0
      %1822 = vmatprep.subr.mxu0 0.0
      %1823 = vmatpush1.msra.mxu0 0.0
      %1824 = vmatprep.subr.mxu0 0.0
      %1825 = vmatpush1.msra.mxu0 0.0
      %1826 = vmatprep.subr.mxu0 0.0
      %1827 = vmatpush1.msra.mxu0 0.0
      %1828 = vmatprep.subr.mxu0 0.0
      %1829 = vmatpush1.msra.mxu0 0.0
      %1830 = vmatprep.subr.mxu0 0.0
      %1831 = vmatpush1.msra.mxu0 0.0
      %1832 = vmatprep.subr.mxu0 0.0
      %1833 = vmatpush1.msra.mxu0 0.0
      %1834 = vmatprep.subr.mxu0 0.0
      %1835 = vmatpush1.msra.mxu0 0.0
      %1836 = vmatprep.subr.mxu0 0.0
      %1837 = vmatpush1.msra.mxu0 0.0
      %1838 = vmatprep.subr.mxu0 0.0
      %1839 = vmatpush1.msra.mxu0 0.0
      %1840 = vmatprep.mubr.f32.mxu0 0.0
      %1841 = vmatmul.mubr.f32.gmra.mrb[0].mxu0 %v1764
      %v1842 = vpop.f32.mrb[0].mxu0
      %v1843 = vadd.f32 0.0, %v1842
      %v1844 = vpop.f32.mrb[0].mxu0
      %1845 = vmatprep.mubr.f32.mxu0 0.0
      %1846 = vmatmul.mubr.f32.gmra.mrb[0].mxu0 %v1767
      %v1847 = vpop.f32.mrb[0].mxu0
      %v1848 = vadd.f32 0.0, %v1847
      %v1849 = vpop.f32.mrb[0].mxu0
      %1850 = vmatprep.mubr.f32.mxu0 0.0
      %1851 = vmatmul.mubr.f32.gmra.mrb[0].mxu0 %v1770
      %v1852 = vpop.f32.mrb[0].mxu0
      %v1853 = vadd.f32 0.0, %v1852
      %v1854 = vpop.f32.mrb[0].mxu0
      %1855 = vdwg.mxu0
      %v1857 = vsel %vm1579, %v1611, 0
      %v1860 = vsel %vm1579, %v1612, 0
      %v1863 = vsel %vm1579, %v1613, 0
      %v1866 = vsel %vm1772, %v1616, 0
      %1868 = vmatprep.subr.mxu0 0.0
      %1869 = vmatpush1.msra.mxu0 %v1614
      %1870 = vmatprep.subr.mxu0 0.0
      %1871 = vmatpush1.msra.mxu0 %v1615
      %1872 = vmatprep.subr.mxu0 0.0
      %1873 = vmatpush1.msra.mxu0 %v1866
      %1874 = vmatprep.subr.mxu0 0.0
      %1875 = vmatpush1.msra.mxu0 0.0
      %1876 = vmatprep.subr.mxu0 0.0
      %1877 = vmatpush1.msra.mxu0 0.0
      %1878 = vmatprep.subr.mxu0 0.0
      %1879 = vmatpush1.msra.mxu0 0.0
      %1880 = vmatprep.subr.mxu0 0.0
      %1881 = vmatpush1.msra.mxu0 0.0
      %1882 = vmatprep.subr.mxu0 0.0
      %1883 = vmatpush1.msra.mxu0 0.0
      %1884 = vmatprep.subr.mxu0 0.0
      %1885 = vmatpush1.msra.mxu0 0.0
      %1886 = vmatprep.subr.mxu0 0.0
      %1887 = vmatpush1.msra.mxu0 0.0
      %1888 = vmatprep.subr.mxu0 0.0
      %1889 = vmatpush1.msra.mxu0 0.0
      %1890 = vmatprep.subr.mxu0 0.0
      %1891 = vmatpush1.msra.mxu0 0.0
      %1892 = vmatprep.subr.mxu0 0.0
      %1893 = vmatpush1.msra.mxu0 0.0
      %1894 = vmatprep.subr.mxu0 0.0
      %1895 = vmatpush1.msra.mxu0 0.0
      %1896 = vmatprep.subr.mxu0 0.0
      %1897 = vmatpush1.msra.mxu0 0.0
      %1898 = vmatprep.subr.mxu0 0.0
      %1899 = vmatpush1.msra.mxu0 0.0
      %1900 = vmatprep.subr.mxu0 0.0
      %1901 = vmatpush1.msra.mxu0 0.0
      %1902 = vmatprep.subr.mxu0 0.0
      %1903 = vmatpush1.msra.mxu0 0.0
      %1904 = vmatprep.subr.mxu0 0.0
      %1905 = vmatpush1.msra.mxu0 0.0
      %1906 = vmatprep.subr.mxu0 0.0
      %1907 = vmatpush1.msra.mxu0 0.0
      %1908 = vmatprep.subr.mxu0 0.0
      %1909 = vmatpush1.msra.mxu0 0.0
      %1910 = vmatprep.subr.mxu0 0.0
      %1911 = vmatpush1.msra.mxu0 0.0
      %1912 = vmatprep.subr.mxu0 0.0
      %1913 = vmatpush1.msra.mxu0 0.0
      %1914 = vmatprep.subr.mxu0 0.0
      %1915 = vmatpush1.msra.mxu0 0.0
      %1916 = vmatprep.subr.mxu0 0.0
      %1917 = vmatpush1.msra.mxu0 0.0
      %1918 = vmatprep.subr.mxu0 0.0
      %1919 = vmatpush1.msra.mxu0 0.0
      %1920 = vmatprep.subr.mxu0 0.0
      %1921 = vmatpush1.msra.mxu0 0.0
      %1922 = vmatprep.subr.mxu0 0.0
      %1923 = vmatpush1.msra.mxu0 0.0
      %1924 = vmatprep.subr.mxu0 0.0
      %1925 = vmatpush1.msra.mxu0 0.0
      %1926 = vmatprep.subr.mxu0 0.0
      %1927 = vmatpush1.msra.mxu0 0.0
      %1928 = vmatprep.subr.mxu0 0.0
      %1929 = vmatpush1.msra.mxu0 0.0
      %1930 = vmatprep.subr.mxu0 0.0
      %1931 = vmatpush1.msra.mxu0 0.0
      %1932 = vmatprep.mubr.f32.mxu0 0.0
      %1933 = vmatmul.mubr.f32.gmra.mrb[0].mxu0 %v1857
      %v1934 = vpop.f32.mrb[0].mxu0
      %v1935 = vadd.f32 %v1843, %v1934
      %v1936 = vpop.f32.mrb[0].mxu0
      %1937 = vmatprep.mubr.f32.mxu0 0.0
      %1938 = vmatmul.mubr.f32.gmra.mrb[0].mxu0 %v1860
      %v1939 = vpop.f32.mrb[0].mxu0
      %v1940 = vadd.f32 %v1848, %v1939
      %v1941 = vpop.f32.mrb[0].mxu0
      %1942 = vmatprep.mubr.f32.mxu0 0.0
      %1943 = vmatmul.mubr.f32.gmra.mrb[0].mxu0 %v1863
      %v1944 = vpop.f32.mrb[0].mxu0
      %v1945 = vadd.f32 %v1853, %v1944
      %v1946 = vpop.f32.mrb[0].mxu0
      %1947 = vdwg.mxu0
      %v1948 = vmul.f32 %v1288, %v1028
      %v1949 = vmul.f32 %v1293, %v1028
      %v1950 = vmul.f32 %v1298, %v1028
      %v1951 = vmul.f32 %v1372, %v1028
      %v1952 = vmul.f32 %v1377, %v1028
      %v1953 = vmul.f32 %v1382, %v1028
      %v1955 = vsel %vm1152, %v1948, 0
      %v1958 = vsel %vm1152, %v1949, 0
      %v1961 = vsel %vm1152, %v1950, 0
      %v1964 = vsel %vm1152, %v1951, 0
      %v1967 = vsel %vm1152, %v1952, 0
      %v1970 = vsel %vm1152, %v1953, 0
      %1972 = vmatprep.subr.mxu0 0.0
      %1973 = vmatpush1.xpose.msra.mxu0 %v1964
      %1974 = vmatprep.subr.mxu0 0.0
      %1975 = vmatpush1.xpose.msra.mxu0 %v1967
      %1976 = vmatprep.subr.mxu0 0.0
      %1977 = vmatpush1.xpose.msra.mxu0 %v1970
      %1978 = vmatprep.subr.mxu0 0.0
      %1979 = vmatpush1.xpose.msra.mxu0 0.0
      %1980 = vmatprep.subr.mxu0 0.0
      %1981 = vmatpush1.xpose.msra.mxu0 0.0
      %1982 = vmatprep.subr.mxu0 0.0
      %1983 = vmatpush1.xpose.msra.mxu0 0.0
      %1984 = vmatprep.subr.mxu0 0.0
      %1985 = vmatpush1.xpose.msra.mxu0 0.0
      %1986 = vmatprep.subr.mxu0 0.0
      %1987 = vmatpush1.xpose.msra.mxu0 0.0
      %1988 = vmatprep.subr.mxu0 0.0
      %1989 = vmatpush1.xpose.msra.mxu0 0.0
      %1990 = vmatprep.subr.mxu0 0.0
      %1991 = vmatpush1.xpose.msra.mxu0 0.0
      %1992 = vmatprep.subr.mxu0 0.0
      %1993 = vmatpush1.xpose.msra.mxu0 0.0
      %1994 = vmatprep.subr.mxu0 0.0
      %1995 = vmatpush1.xpose.msra.mxu0 0.0
      %1996 = vmatprep.subr.mxu0 0.0
      %1997 = vmatpush1.xpose.msra.mxu0 0.0
      %1998 = vmatprep.subr.mxu0 0.0
      %1999 = vmatpush1.xpose.msra.mxu0 0.0
      %2000 = vmatprep.subr.mxu0 0.0
      %2001 = vmatpush1.xpose.msra.mxu0 0.0
      %2002 = vmatprep.subr.mxu0 0.0
      %2003 = vmatpush1.xpose.msra.mxu0 0.0
      %2004 = vmatprep.subr.mxu0 0.0
      %2005 = vmatpush1.xpose.msra.mxu0 0.0
      %2006 = vmatprep.subr.mxu0 0.0
      %2007 = vmatpush1.xpose.msra.mxu0 0.0
      %2008 = vmatprep.subr.mxu0 0.0
      %2009 = vmatpush1.xpose.msra.mxu0 0.0
      %2010 = vmatprep.subr.mxu0 0.0
      %2011 = vmatpush1.xpose.msra.mxu0 0.0
      %2012 = vmatprep.subr.mxu0 0.0
      %2013 = vmatpush1.xpose.msra.mxu0 0.0
      %2014 = vmatprep.subr.mxu0 0.0
      %2015 = vmatpush1.xpose.msra.mxu0 0.0
      %2016 = vmatprep.subr.mxu0 0.0
      %2017 = vmatpush1.xpose.msra.mxu0 0.0
      %2018 = vmatprep.subr.mxu0 0.0
      %2019 = vmatpush1.xpose.msra.mxu0 0.0
      %2020 = vmatprep.subr.mxu0 0.0
      %2021 = vmatpush1.xpose.msra.mxu0 0.0
      %2022 = vmatprep.subr.mxu0 0.0
      %2023 = vmatpush1.xpose.msra.mxu0 0.0
      %2024 = vmatprep.subr.mxu0 0.0
      %2025 = vmatpush1.xpose.msra.mxu0 0.0
      %2026 = vmatprep.subr.mxu0 0.0
      %2027 = vmatpush1.xpose.msra.mxu0 0.0
      %2028 = vmatprep.subr.mxu0 0.0
      %2029 = vmatpush1.xpose.msra.mxu0 0.0
      %2030 = vmatprep.subr.mxu0 0.0
      %2031 = vmatpush1.xpose.msra.mxu0 0.0
      %2032 = vmatprep.subr.mxu0 0.0
      %2033 = vmatpush1.xpose.msra.mxu0 0.0
      %2034 = vmatprep.subr.mxu0 0.0
      %2035 = vmatpush1.xpose.msra.mxu0 0.0
      %2036 = vmatprep.mubr.f32.mxu0 0.0
      %2037 = vmatmul.mubr.f32.gmra.mrb[0].mxu0 %v1955
      %v2038 = vpop.f32.mrb[0].mxu0
      %v2039 = vadd.f32 0.0, %v2038
      %v2040 = vpop.f32.mrb[0].mxu0
      %2041 = vmatprep.mubr.f32.mxu0 0.0
      %2042 = vmatmul.mubr.f32.gmra.mrb[0].mxu0 %v1958
      %v2043 = vpop.f32.mrb[0].mxu0
      %v2044 = vadd.f32 0.0, %v2043
      %v2045 = vpop.f32.mrb[0].mxu0
      %2046 = vmatprep.mubr.f32.mxu0 0.0
      %2047 = vmatmul.mubr.f32.gmra.mrb[0].mxu0 %v1961
      %v2048 = vpop.f32.mrb[0].mxu0
      %v2049 = vadd.f32 0.0, %v2048
      %v2050 = vpop.f32.mrb[0].mxu0
      %2051 = vdwg.mxu0
      %v2052 = vmul.f32 %v2039, 0.35355338
      %v2053 = vmul.f32 %v2044, 0.35355338
      %v2054 = vmul.f32 %v2049, 0.35355338
      %v2055 = vsel %vm1067, %v2052, -1e+30
      %v2056 = vsel %vm1068, %v2053, -1e+30
      %v2057 = vsel %vm1069, %v2054, -1e+30
      %v2058 = vsel %vm1579, %v2055, -inf
      %2059 = vmax.xlane.f32.xlu0 %v2058
      %v2060 = vpop.xlane.xlu0 %2059
      %v2061 = vsel %vm1579, %v2056, -inf
      %2062 = vmax.xlane.f32.xlu0 %v2061
      %v2063 = vpop.xlane.xlu0 %2062
      %v2064 = vsel %vm1586, %v2057, -inf
      %2065 = vmax.xlane.f32.xlu0 %v2064
      %v2066 = vpop.xlane.xlu0 %2065
      %v2067 = vsub.f32 %v2055, %v2060
      %v2068 = vsub.f32 %v2056, %v2063
      %v2069 = vsub.f32 %v2057, %v2066
      %v2070 = vmul.f32 %v2067, 1.442695
      %v2071 = vpow.pop %v2070
      %v2072 = vmul.f32 %v2068, 1.442695
      %v2073 = vpow.pop %v2072
      %v2074 = vmul.f32 %v2069, 1.442695
      %v2075 = vpow.pop %v2074
      %v2076 = vsel %vm1579, %v2071, 0.0
      %2077 = vadd.xlane.f32.xlu0 %v2076
      %v2078 = vpop.xlane.xlu0 %2077
      %v2079 = vsel %vm1579, %v2073, 0.0
      %2080 = vadd.xlane.f32.xlu0 %v2079
      %v2081 = vpop.xlane.xlu0 %2080
      %v2082 = vsel %vm1586, %v2075, 0.0
      %2083 = vadd.xlane.f32.xlu0 %v2082
      %v2084 = vpop.xlane.xlu0 %2083
      %v2085 = vrcp.pop %v2078
      %v2086 = vrcp.pop %v2081
      %v2087 = vrcp.pop %v2084
      %v2088 = vmul.f32 %v2071, %v2085
      %v2089 = vmul.f32 %v2073, %v2086
      %v2090 = vmul.f32 %v2075, %v2087
      %v2091 = vmul.f32 %v1456, %v1028
      %v2092 = vmul.f32 %v1461, %v1028
      %v2093 = vmul.f32 %v1466, %v1028
      %v2095 = vsel %vm1579, %v2088, 0
      %v2098 = vsel %vm1579, %v2089, 0
      %v2101 = vsel %vm1579, %v2090, 0
      %v2104 = vsel %vm1772, %v2093, 0
      %2106 = vmatprep.subr.mxu0 0.0
      %2107 = vmatpush1.msra.mxu0 %v2091
      %2108 = vmatprep.subr.mxu0 0.0
      %2109 = vmatpush1.msra.mxu0 %v2092
      %2110 = vmatprep.subr.mxu0 0.0
      %2111 = vmatpush1.msra.mxu0 %v2104
      %2112 = vmatprep.subr.mxu0 0.0
      %2113 = vmatpush1.msra.mxu0 0.0
      %2114 = vmatprep.subr.mxu0 0.0
      %2115 = vmatpush1.msra.mxu0 0.0
      %2116 = vmatprep.subr.mxu0 0.0
      %2117 = vmatpush1.msra.mxu0 0.0
      %2118 = vmatprep.subr.mxu0 0.0
      %2119 = vmatpush1.msra.mxu0 0.0
      %2120 = vmatprep.subr.mxu0 0.0
      %2121 = vmatpush1.msra.mxu0 0.0
      %2122 = vmatprep.subr.mxu0 0.0
      %2123 = vmatpush1.msra.mxu0 0.0
      %2124 = vmatprep.subr.mxu0 0.0
      %2125 = vmatpush1.msra.mxu0 0.0
      %2126 = vmatprep.subr.mxu0 0.0
      %2127 = vmatpush1.msra.mxu0 0.0
      %2128 = vmatprep.subr.mxu0 0.0
      %2129 = vmatpush1.msra.mxu0 0.0
      %2130 = vmatprep.subr.mxu0 0.0
      %2131 = vmatpush1.msra.mxu0 0.0
      %2132 = vmatprep.subr.mxu0 0.0
      %2133 = vmatpush1.msra.mxu0 0.0
      %2134 = vmatprep.subr.mxu0 0.0
      %2135 = vmatpush1.msra.mxu0 0.0
      %2136 = vmatprep.subr.mxu0 0.0
      %2137 = vmatpush1.msra.mxu0 0.0
      %2138 = vmatprep.subr.mxu0 0.0
      %2139 = vmatpush1.msra.mxu0 0.0
      %2140 = vmatprep.subr.mxu0 0.0
      %2141 = vmatpush1.msra.mxu0 0.0
      %2142 = vmatprep.subr.mxu0 0.0
      %2143 = vmatpush1.msra.mxu0 0.0
      %2144 = vmatprep.subr.mxu0 0.0
      %2145 = vmatpush1.msra.mxu0 0.0
      %2146 = vmatprep.subr.mxu0 0.0
      %2147 = vmatpush1.msra.mxu0 0.0
      %2148 = vmatprep.subr.mxu0 0.0
      %2149 = vmatpush1.msra.mxu0 0.0
      %2150 = vmatprep.subr.mxu0 0.0
      %2151 = vmatpush1.msra.mxu0 0.0
      %2152 = vmatprep.subr.mxu0 0.0
      %2153 = vmatpush1.msra.mxu0 0.0
      %2154 = vmatprep.subr.mxu0 0.0
      %2155 = vmatpush1.msra.mxu0 0.0
      %2156 = vmatprep.subr.mxu0 0.0
      %2157 = vmatpush1.msra.mxu0 0.0
      %2158 = vmatprep.subr.mxu0 0.0
      %2159 = vmatpush1.msra.mxu0 0.0
      %2160 = vmatprep.subr.mxu0 0.0
      %2161 = vmatpush1.msra.mxu0 0.0
      %2162 = vmatprep.subr.mxu0 0.0
      %2163 = vmatpush1.msra.mxu0 0.0
      %2164 = vmatprep.subr.mxu0 0.0
      %2165 = vmatpush1.msra.mxu0 0.0
      %2166 = vmatprep.subr.mxu0 0.0
      %2167 = vmatpush1.msra.mxu0 0.0
      %2168 = vmatprep.subr.mxu0 0.0
      %2169 = vmatpush1.msra.mxu0 0.0
      %2170 = vmatprep.mubr.f32.mxu0 0.0
      %2171 = vmatmul.mubr.f32.gmra.mrb[0].mxu0 %v2095
      %v2172 = vpop.f32.mrb[0].mxu0
      %v2173 = vadd.f32 0.0, %v2172
      %v2174 = vpop.f32.mrb[0].mxu0
      %2175 = vmatprep.mubr.f32.mxu0 0.0
      %2176 = vmatmul.mubr.f32.gmra.mrb[0].mxu0 %v2098
      %v2177 = vpop.f32.mrb[0].mxu0
      %v2178 = vadd.f32 0.0, %v2177
      %v2179 = vpop.f32.mrb[0].mxu0
      %2180 = vmatprep.mubr.f32.mxu0 0.0
      %2181 = vmatmul.mubr.f32.gmra.mrb[0].mxu0 %v2101
      %v2182 = vpop.f32.mrb[0].mxu0
      %v2183 = vadd.f32 0.0, %v2182
      %v2184 = vpop.f32.mrb[0].mxu0
      %2185 = vdwg.mxu0
      %v2186 = vadd.f32 %v1935, %v2173
      %v2187 = vadd.f32 %v1940, %v2178
      %v2188 = vadd.f32 %v1945, %v2183
      %v2189 = vmul.f32 %v1288, %v1033
      %v2190 = vmul.f32 %v1293, %v1033
      %v2191 = vmul.f32 %v1298, %v1033
      %v2192 = vmul.f32 %v1372, %v1033
      %v2193 = vmul.f32 %v1377, %v1033
      %v2194 = vmul.f32 %v1382, %v1033
      %v2196 = vsel %vm1152, %v2189, 0
      %v2199 = vsel %vm1152, %v2190, 0
      %v2202 = vsel %vm1152, %v2191, 0
      %v2205 = vsel %vm1152, %v2192, 0
      %v2208 = vsel %vm1152, %v2193, 0
      %v2211 = vsel %vm1152, %v2194, 0
      %2213 = vmatprep.subr.mxu0 0.0
      %2214 = vmatpush1.xpose.msra.mxu0 %v2205
      %2215 = vmatprep.subr.mxu0 0.0
      %2216 = vmatpush1.xpose.msra.mxu0 %v2208
      %2217 = vmatprep.subr.mxu0 0.0
      %2218 = vmatpush1.xpose.msra.mxu0 %v2211
      %2219 = vmatprep.subr.mxu0 0.0
      %2220 = vmatpush1.xpose.msra.mxu0 0.0
      %2221 = vmatprep.subr.mxu0 0.0
      %2222 = vmatpush1.xpose.msra.mxu0 0.0
      %2223 = vmatprep.subr.mxu0 0.0
      %2224 = vmatpush1.xpose.msra.mxu0 0.0
      %2225 = vmatprep.subr.mxu0 0.0
      %2226 = vmatpush1.xpose.msra.mxu0 0.0
      %2227 = vmatprep.subr.mxu0 0.0
      %2228 = vmatpush1.xpose.msra.mxu0 0.0
      %2229 = vmatprep.subr.mxu0 0.0
      %2230 = vmatpush1.xpose.msra.mxu0 0.0
      %2231 = vmatprep.subr.mxu0 0.0
      %2232 = vmatpush1.xpose.msra.mxu0 0.0
      %2233 = vmatprep.subr.mxu0 0.0
      %2234 = vmatpush1.xpose.msra.mxu0 0.0
      %2235 = vmatprep.subr.mxu0 0.0
      %2236 = vmatpush1.xpose.msra.mxu0 0.0
      %2237 = vmatprep.subr.mxu0 0.0
      %2238 = vmatpush1.xpose.msra.mxu0 0.0
      %2239 = vmatprep.subr.mxu0 0.0
      %2240 = vmatpush1.xpose.msra.mxu0 0.0
      %2241 = vmatprep.subr.mxu0 0.0
      %2242 = vmatpush1.xpose.msra.mxu0 0.0
      %2243 = vmatprep.subr.mxu0 0.0
      %2244 = vmatpush1.xpose.msra.mxu0 0.0
      %2245 = vmatprep.subr.mxu0 0.0
      %2246 = vmatpush1.xpose.msra.mxu0 0.0
      %2247 = vmatprep.subr.mxu0 0.0
      %2248 = vmatpush1.xpose.msra.mxu0 0.0
      %2249 = vmatprep.subr.mxu0 0.0
      %2250 = vmatpush1.xpose.msra.mxu0 0.0
      %2251 = vmatprep.subr.mxu0 0.0
      %2252 = vmatpush1.xpose.msra.mxu0 0.0
      %2253 = vmatprep.subr.mxu0 0.0
      %2254 = vmatpush1.xpose.msra.mxu0 0.0
      %2255 = vmatprep.subr.mxu0 0.0
      %2256 = vmatpush1.xpose.msra.mxu0 0.0
      %2257 = vmatprep.subr.mxu0 0.0
      %2258 = vmatpush1.xpose.msra.mxu0 0.0
      %2259 = vmatprep.subr.mxu0 0.0
      %2260 = vmatpush1.xpose.msra.mxu0 0.0
      %2261 = vmatprep.subr.mxu0 0.0
      %2262 = vmatpush1.xpose.msra.mxu0 0.0
      %2263 = vmatprep.subr.mxu0 0.0
      %2264 = vmatpush1.xpose.msra.mxu0 0.0
      %2265 = vmatprep.subr.mxu0 0.0
      %2266 = vmatpush1.xpose.msra.mxu0 0.0
      %2267 = vmatprep.subr.mxu0 0.0
      %2268 = vmatpush1.xpose.msra.mxu0 0.0
      %2269 = vmatprep.subr.mxu0 0.0
      %2270 = vmatpush1.xpose.msra.mxu0 0.0
      %2271 = vmatprep.subr.mxu0 0.0
      %2272 = vmatpush1.xpose.msra.mxu0 0.0
      %2273 = vmatprep.subr.mxu0 0.0
      %2274 = vmatpush1.xpose.msra.mxu0 0.0
      %2275 = vmatprep.subr.mxu0 0.0
      %2276 = vmatpush1.xpose.msra.mxu0 0.0
      %2277 = vmatprep.mubr.f32.mxu0 0.0
      %2278 = vmatmul.mubr.f32.gmra.mrb[0].mxu0 %v2196
      %v2279 = vpop.f32.mrb[0].mxu0
      %v2280 = vadd.f32 0.0, %v2279
      %v2281 = vpop.f32.mrb[0].mxu0
      %2282 = vmatprep.mubr.f32.mxu0 0.0
      %2283 = vmatmul.mubr.f32.gmra.mrb[0].mxu0 %v2199
      %v2284 = vpop.f32.mrb[0].mxu0
      %v2285 = vadd.f32 0.0, %v2284
      %v2286 = vpop.f32.mrb[0].mxu0
      %2287 = vmatprep.mubr.f32.mxu0 0.0
      %2288 = vmatmul.mubr.f32.gmra.mrb[0].mxu0 %v2202
      %v2289 = vpop.f32.mrb[0].mxu0
      %v2290 = vadd.f32 0.0, %v2289
      %v2291 = vpop.f32.mrb[0].mxu0
      %2292 = vdwg.mxu0
      %v2293 = vmul.f32 %v2280, 0.35355338
      %v2294 = vmul.f32 %v2285, 0.35355338
      %v2295 = vmul.f32 %v2290, 0.35355338
      %v2296 = vsel %vm1067, %v2293, -1e+30
      %v2297 = vsel %vm1068, %v2294, -1e+30
      %v2298 = vsel %vm1069, %v2295, -1e+30
      %v2299 = vsel %vm1579, %v2296, -inf
      %2300 = vmax.xlane.f32.xlu0 %v2299
      %v2301 = vpop.xlane.xlu0 %2300
      %v2302 = vsel %vm1579, %v2297, -inf
      %2303 = vmax.xlane.f32.xlu0 %v2302
      %v2304 = vpop.xlane.xlu0 %2303
      %v2305 = vsel %vm1586, %v2298, -inf
      %2306 = vmax.xlane.f32.xlu0 %v2305
      %v2307 = vpop.xlane.xlu0 %2306
      %v2308 = vsub.f32 %v2296, %v2301
      %v2309 = vsub.f32 %v2297, %v2304
      %v2310 = vsub.f32 %v2298, %v2307
      %v2311 = vmul.f32 %v2308, 1.442695
      %v2312 = vpow.pop %v2311
      %v2313 = vmul.f32 %v2309, 1.442695
      %v2314 = vpow.pop %v2313
      %v2315 = vmul.f32 %v2310, 1.442695
      %v2316 = vpow.pop %v2315
      %v2317 = vsel %vm1579, %v2312, 0.0
      %2318 = vadd.xlane.f32.xlu0 %v2317
      %v2319 = vpop.xlane.xlu0 %2318
      %v2320 = vsel %vm1579, %v2314, 0.0
      %2321 = vadd.xlane.f32.xlu0 %v2320
      %v2322 = vpop.xlane.xlu0 %2321
      %v2323 = vsel %vm1586, %v2316, 0.0
      %2324 = vadd.xlane.f32.xlu0 %v2323
      %v2325 = vpop.xlane.xlu0 %2324
      %v2326 = vrcp.pop %v2319
      %v2327 = vrcp.pop %v2322
      %v2328 = vrcp.pop %v2325
      %v2329 = vmul.f32 %v2312, %v2326
      %v2330 = vmul.f32 %v2314, %v2327
      %v2331 = vmul.f32 %v2316, %v2328
      %v2332 = vmul.f32 %v1456, %v1033
      %v2333 = vmul.f32 %v1461, %v1033
      %v2334 = vmul.f32 %v1466, %v1033
      %v2336 = vsel %vm1579, %v2329, 0
      %v2339 = vsel %vm1579, %v2330, 0
      %v2342 = vsel %vm1579, %v2331, 0
      %v2345 = vsel %vm1772, %v2334, 0
      %2347 = vmatprep.subr.mxu0 0.0
      %2348 = vmatpush1.msra.mxu0 %v2332
      %2349 = vmatprep.subr.mxu0 0.0
      %2350 = vmatpush1.msra.mxu0 %v2333
      %2351 = vmatprep.subr.mxu0 0.0
      %2352 = vmatpush1.msra.mxu0 %v2345
      %2353 = vmatprep.subr.mxu0 0.0
      %2354 = vmatpush1.msra.mxu0 0.0
      %2355 = vmatprep.subr.mxu0 0.0
      %2356 = vmatpush1.msra.mxu0 0.0
      %2357 = vmatprep.subr.mxu0 0.0
      %2358 = vmatpush1.msra.mxu0 0.0
      %2359 = vmatprep.subr.mxu0 0.0
      %2360 = vmatpush1.msra.mxu0 0.0
      %2361 = vmatprep.subr.mxu0 0.0
      %2362 = vmatpush1.msra.mxu0 0.0
      %2363 = vmatprep.subr.mxu0 0.0
      %2364 = vmatpush1.msra.mxu0 0.0
      %2365 = vmatprep.subr.mxu0 0.0
      %2366 = vmatpush1.msra.mxu0 0.0
      %2367 = vmatprep.subr.mxu0 0.0
      %2368 = vmatpush1.msra.mxu0 0.0
      %2369 = vmatprep.subr.mxu0 0.0
      %2370 = vmatpush1.msra.mxu0 0.0
      %2371 = vmatprep.subr.mxu0 0.0
      %2372 = vmatpush1.msra.mxu0 0.0
      %2373 = vmatprep.subr.mxu0 0.0
      %2374 = vmatpush1.msra.mxu0 0.0
      %2375 = vmatprep.subr.mxu0 0.0
      %2376 = vmatpush1.msra.mxu0 0.0
      %2377 = vmatprep.subr.mxu0 0.0
      %2378 = vmatpush1.msra.mxu0 0.0
      %2379 = vmatprep.subr.mxu0 0.0
      %2380 = vmatpush1.msra.mxu0 0.0
      %2381 = vmatprep.subr.mxu0 0.0
      %2382 = vmatpush1.msra.mxu0 0.0
      %2383 = vmatprep.subr.mxu0 0.0
      %2384 = vmatpush1.msra.mxu0 0.0
      %2385 = vmatprep.subr.mxu0 0.0
      %2386 = vmatpush1.msra.mxu0 0.0
      %2387 = vmatprep.subr.mxu0 0.0
      %2388 = vmatpush1.msra.mxu0 0.0
      %2389 = vmatprep.subr.mxu0 0.0
      %2390 = vmatpush1.msra.mxu0 0.0
      %2391 = vmatprep.subr.mxu0 0.0
      %2392 = vmatpush1.msra.mxu0 0.0
      %2393 = vmatprep.subr.mxu0 0.0
      %2394 = vmatpush1.msra.mxu0 0.0
      %2395 = vmatprep.subr.mxu0 0.0
      %2396 = vmatpush1.msra.mxu0 0.0
      %2397 = vmatprep.subr.mxu0 0.0
      %2398 = vmatpush1.msra.mxu0 0.0
      %2399 = vmatprep.subr.mxu0 0.0
      %2400 = vmatpush1.msra.mxu0 0.0
      %2401 = vmatprep.subr.mxu0 0.0
      %2402 = vmatpush1.msra.mxu0 0.0
      %2403 = vmatprep.subr.mxu0 0.0
      %2404 = vmatpush1.msra.mxu0 0.0
      %2405 = vmatprep.subr.mxu0 0.0
      %2406 = vmatpush1.msra.mxu0 0.0
      %2407 = vmatprep.subr.mxu0 0.0
      %2408 = vmatpush1.msra.mxu0 0.0
      %2409 = vmatprep.subr.mxu0 0.0
      %2410 = vmatpush1.msra.mxu0 0.0
      %2411 = vmatprep.mubr.f32.mxu0 0.0
      %2412 = vmatmul.mubr.f32.gmra.mrb[0].mxu0 %v2336
      %v2413 = vpop.f32.mrb[0].mxu0
      %v2414 = vadd.f32 0.0, %v2413
      %v2415 = vpop.f32.mrb[0].mxu0
      %2416 = vmatprep.mubr.f32.mxu0 0.0
      %2417 = vmatmul.mubr.f32.gmra.mrb[0].mxu0 %v2339
      %v2418 = vpop.f32.mrb[0].mxu0
      %v2419 = vadd.f32 0.0, %v2418
      %v2420 = vpop.f32.mrb[0].mxu0
      %2421 = vmatprep.mubr.f32.mxu0 0.0
      %2422 = vmatmul.mubr.f32.gmra.mrb[0].mxu0 %v2342
      %v2423 = vpop.f32.mrb[0].mxu0
      %v2424 = vadd.f32 0.0, %v2423
      %v2425 = vpop.f32.mrb[0].mxu0
      %2426 = vdwg.mxu0
      %v2427 = vadd.f32 %v2186, %v2414
      %v2428 = vadd.f32 %v2187, %v2419
      %v2429 = vadd.f32 %v2188, %v2424
      %v2430 = vlaneseq
      %v2431 = vshrl.u32 %v2430, 7
      %v2432 = vsub.s32 0, %v2431
      %v2433 = vrot.slane %v1109, %v2432
      %v2435 = vsel %vm1152, %v2427, 0
      %v2438 = vsel %vm1152, %v2428, 0
      %v2441 = vsel %vm1152, %v2429, 0
      %2443 = vmatprep.subr.mxu0 0.0
      %2444 = vmatpush1.msra.mxu0 %v1101
      %2445 = vmatprep.subr.mxu0 0.0
      %2446 = vmatpush1.msra.mxu0 %v1102
      %2447 = vmatprep.subr.mxu0 0.0
      %2448 = vmatpush1.msra.mxu0 %v1103
      %2449 = vmatprep.subr.mxu0 0.0
      %2450 = vmatpush1.msra.mxu0 %v1104
      %2451 = vmatprep.subr.mxu0 0.0
      %2452 = vmatpush1.msra.mxu0 0.0
      %2453 = vmatprep.subr.mxu0 0.0
      %2454 = vmatpush1.msra.mxu0 0.0
      %2455 = vmatprep.subr.mxu0 0.0
      %2456 = vmatpush1.msra.mxu0 0.0
      %2457 = vmatprep.subr.mxu0 0.0
      %2458 = vmatpush1.msra.mxu0 0.0
      %2459 = vmatprep.subr.mxu0 0.0
      %2460 = vmatpush1.msra.mxu0 0.0
      %2461 = vmatprep.subr.mxu0 0.0
      %2462 = vmatpush1.msra.mxu0 0.0
      %2463 = vmatprep.subr.mxu0 0.0
      %2464 = vmatpush1.msra.mxu0 0.0
      %2465 = vmatprep.subr.mxu0 0.0
      %2466 = vmatpush1.msra.mxu0 0.0
      %2467 = vmatprep.subr.mxu0 0.0
      %2468 = vmatpush1.msra.mxu0 0.0
      %2469 = vmatprep.subr.mxu0 0.0
      %2470 = vmatpush1.msra.mxu0 0.0
      %2471 = vmatprep.subr.mxu0 0.0
      %2472 = vmatpush1.msra.mxu0 0.0
      %2473 = vmatprep.subr.mxu0 0.0
      %2474 = vmatpush1.msra.mxu0 0.0
      %2475 = vmatprep.subr.mxu0 0.0
      %2476 = vmatpush1.msra.mxu0 0.0
      %2477 = vmatprep.subr.mxu0 0.0
      %2478 = vmatpush1.msra.mxu0 0.0
      %2479 = vmatprep.subr.mxu0 0.0
      %2480 = vmatpush1.msra.mxu0 0.0
      %2481 = vmatprep.subr.mxu0 0.0
      %2482 = vmatpush1.msra.mxu0 0.0
      %2483 = vmatprep.subr.mxu0 0.0
      %2484 = vmatpush1.msra.mxu0 0.0
      %2485 = vmatprep.subr.mxu0 0.0
      %2486 = vmatpush1.msra.mxu0 0.0
      %2487 = vmatprep.subr.mxu0 0.0
      %2488 = vmatpush1.msra.mxu0 0.0
      %2489 = vmatprep.subr.mxu0 0.0
      %2490 = vmatpush1.msra.mxu0 0.0
      %2491 = vmatprep.subr.mxu0 0.0
      %2492 = vmatpush1.msra.mxu0 0.0
      %2493 = vmatprep.subr.mxu0 0.0
      %2494 = vmatpush1.msra.mxu0 0.0
      %2495 = vmatprep.subr.mxu0 0.0
      %2496 = vmatpush1.msra.mxu0 0.0
      %2497 = vmatprep.subr.mxu0 0.0
      %2498 = vmatpush1.msra.mxu0 0.0
      %2499 = vmatprep.subr.mxu0 0.0
      %2500 = vmatpush1.msra.mxu0 0.0
      %2501 = vmatprep.subr.mxu0 0.0
      %2502 = vmatpush1.msra.mxu0 0.0
      %2503 = vmatprep.subr.mxu0 0.0
      %2504 = vmatpush1.msra.mxu0 0.0
      %2505 = vmatprep.subr.mxu0 0.0
      %2506 = vmatpush1.msra.mxu0 0.0
      %2507 = vmatprep.mubr.f32.mxu0 0.0
      %2508 = vmatmul.mubr.f32.gmra.mrb[0].mxu0 %v2435
      %v2509 = vpop.f32.mrb[0].mxu0
      %v2510 = vadd.f32 %v2433, %v2509
      %v2511 = vpop.f32.mrb[0].mxu0
      %2512 = vmatprep.mubr.f32.mxu0 0.0
      %2513 = vmatmul.mubr.f32.gmra.mrb[0].mxu0 %v2438
      %v2514 = vpop.f32.mrb[0].mxu0
      %v2515 = vadd.f32 %v2433, %v2514
      %v2516 = vpop.f32.mrb[0].mxu0
      %2517 = vmatprep.mubr.f32.mxu0 0.0
      %2518 = vmatmul.mubr.f32.gmra.mrb[0].mxu0 %v2441
      %v2519 = vpop.f32.mrb[0].mxu0
      %v2520 = vadd.f32 %v2433, %v2519
      %v2521 = vpop.f32.mrb[0].mxu0
      %2522 = vdwg.mxu0
      %v2523 = vadd.f32 %v1009, %v2510
      %v2524 = vadd.f32 %v1010, %v2515
      %v2525 = vadd.f32 %v1011, %v2520
      %v2526 = vsel %vm1152, %v2523, 0.0
      %2527 = vadd.xlane.f32.xlu0 %v2526
      %v2528 = vpop.xlane.xlu0 %2527
      %v2529 = vsel %vm1152, %v2524, 0.0
      %2530 = vadd.xlane.f32.xlu0 %v2529
      %v2531 = vpop.xlane.xlu0 %2530
      %v2532 = vsel %vm1159, %v2525, 0.0
      %2533 = vadd.xlane.f32.xlu0 %v2532
      %v2534 = vpop.xlane.xlu0 %2533
      %v2535 = vmul.f32 %v2528, %v1163
      %v2536 = vmul.f32 %v2531, %v1163
      %v2537 = vmul.f32 %v2534, %v1163
      %v2538 = vsub.f32 %v2523, %v2535
      %v2539 = vsub.f32 %v2524, %v2536
      %v2540 = vsub.f32 %v2525, %v2537
      %v2541 = vmul.f32 %v2538, %v2538
      %v2542 = vmul.f32 %v2539, %v2539
      %v2543 = vmul.f32 %v2540, %v2540
      %v2544 = vsel %vm1152, %v2541, 0.0
      %2545 = vadd.xlane.f32.xlu0 %v2544
      %v2546 = vpop.xlane.xlu0 %2545
      %v2547 = vsel %vm1152, %v2542, 0.0
      %2548 = vadd.xlane.f32.xlu0 %v2547
      %v2549 = vpop.xlane.xlu0 %2548
      %v2550 = vsel %vm1159, %v2543, 0.0
      %2551 = vadd.xlane.f32.xlu0 %v2550
      %v2552 = vpop.xlane.xlu0 %2551
      %v2553 = vmul.f32 %v2546, %v1163
      %v2554 = vmul.f32 %v2549, %v1163
      %v2555 = vmul.f32 %v2552, %v1163
      %v2556 = vadd.f32 %v2553, 1e-05
      %v2557 = vadd.f32 %v2554, 1e-05
      %v2558 = vadd.f32 %v2555, 1e-05
      %v2559 = vrsqrt.pop %v2556
      %v2560 = vrsqrt.pop %v2557
      %v2561 = vrsqrt.pop %v2558
      %v2562 = vmul.f32 %v2538, %v2559
      %v2563 = vmul.f32 %v2539, %v2560
      %v2564 = vmul.f32 %v2540, %v2561
      %v2565 = vlaneseq
      %v2566 = vshrl.u32 %v2565, 7
      %v2567 = vsub.s32 0, %v2566
      %v2568 = vrot.slane %v1072, %v2567
      %v2569 = vmul.f32 %v2562, %v2568
      %v2570 = vmul.f32 %v2563, %v2568
      %v2571 = vmul.f32 %v2564, %v2568
      %v2572 = vlaneseq
      %v2573 = vshrl.u32 %v2572, 7
      %v2574 = vsub.s32 0, %v2573
      %v2575 = vrot.slane %v1073, %v2574
      %v2576 = vadd.f32 %v2569, %v2575
      %v2577 = vadd.f32 %v2570, %v2575
      %v2578 = vadd.f32 %v2571, %v2575
      %v2579 = vlaneseq
      %v2580 = vshrl.u32 %v2579, 7
      %v2581 = vsub.s32 0, %v2580
      %v2582 = vrot.slane %v1118, %v2581
      %v2584 = vsel %vm1152, %v2576, 0
      %v2587 = vsel %vm1152, %v2577, 0
      %v2590 = vsel %vm1152, %v2578, 0
      %2592 = vmatprep.subr.mxu0 0.0
      %2593 = vmatpush1.msra.mxu0 %v1110
      %2594 = vmatprep.subr.mxu0 0.0
      %2595 = vmatpush1.msra.mxu0 %v1111
      %2596 = vmatprep.subr.mxu0 0.0
      %2597 = vmatpush1.msra.mxu0 %v1112
      %2598 = vmatprep.subr.mxu0 0.0
      %2599 = vmatpush1.msra.mxu0 %v1113
      %2600 = vmatprep.subr.mxu0 0.0
      %2601 = vmatpush1.msra.mxu0 0.0
      %2602 = vmatprep.subr.mxu0 0.0
      %2603 = vmatpush1.msra.mxu0 0.0
      %2604 = vmatprep.subr.mxu0 0.0
      %2605 = vmatpush1.msra.mxu0 0.0
      %2606 = vmatprep.subr.mxu0 0.0
      %2607 = vmatpush1.msra.mxu0 0.0
      %2608 = vmatprep.subr.mxu0 0.0
      %2609 = vmatpush1.msra.mxu0 0.0
      %2610 = vmatprep.subr.mxu0 0.0
      %2611 = vmatpush1.msra.mxu0 0.0
      %2612 = vmatprep.subr.mxu0 0.0
      %2613 = vmatpush1.msra.mxu0 0.0
      %2614 = vmatprep.subr.mxu0 0.0
      %2615 = vmatpush1.msra.mxu0 0.0
      %2616 = vmatprep.subr.mxu0 0.0
      %2617 = vmatpush1.msra.mxu0 0.0
      %2618 = vmatprep.subr.mxu0 0.0
      %2619 = vmatpush1.msra.mxu0 0.0
      %2620 = vmatprep.subr.mxu0 0.0
      %2621 = vmatpush1.msra.mxu0 0.0
      %2622 = vmatprep.subr.mxu0 0.0
      %2623 = vmatpush1.msra.mxu0 0.0
      %2624 = vmatprep.subr.mxu0 0.0
      %2625 = vmatpush1.msra.mxu0 0.0
      %2626 = vmatprep.subr.mxu0 0.0
      %2627 = vmatpush1.msra.mxu0 0.0
      %2628 = vmatprep.subr.mxu0 0.0
      %2629 = vmatpush1.msra.mxu0 0.0
      %2630 = vmatprep.subr.mxu0 0.0
      %2631 = vmatpush1.msra.mxu0 0.0
      %2632 = vmatprep.subr.mxu0 0.0
      %2633 = vmatpush1.msra.mxu0 0.0
      %2634 = vmatprep.subr.mxu0 0.0
      %2635 = vmatpush1.msra.mxu0 0.0
      %2636 = vmatprep.subr.mxu0 0.0
      %2637 = vmatpush1.msra.mxu0 0.0
      %2638 = vmatprep.subr.mxu0 0.0
      %2639 = vmatpush1.msra.mxu0 0.0
      %2640 = vmatprep.subr.mxu0 0.0
      %2641 = vmatpush1.msra.mxu0 0.0
      %2642 = vmatprep.subr.mxu0 0.0
      %2643 = vmatpush1.msra.mxu0 0.0
      %2644 = vmatprep.subr.mxu0 0.0
      %2645 = vmatpush1.msra.mxu0 0.0
      %2646 = vmatprep.subr.mxu0 0.0
      %2647 = vmatpush1.msra.mxu0 0.0
      %2648 = vmatprep.subr.mxu0 0.0
      %2649 = vmatpush1.msra.mxu0 0.0
      %2650 = vmatprep.subr.mxu0 0.0
      %2651 = vmatpush1.msra.mxu0 0.0
      %2652 = vmatprep.subr.mxu0 0.0
      %2653 = vmatpush1.msra.mxu0 0.0
      %2654 = vmatprep.subr.mxu0 0.0
      %2655 = vmatpush1.msra.mxu0 0.0
      %2656 = vmatprep.mubr.f32.mxu0 0.0
      %2657 = vmatmul.mubr.f32.gmra.mrb[0].mxu0 %v2584
      %v2658 = vpop.f32.mrb[0].mxu0
      %v2659 = vadd.f32 %v2582, %v2658
      %v2660 = vpop.f32.mrb[0].mxu0
      %2661 = vmatprep.mubr.f32.mxu0 0.0
      %2662 = vmatmul.mubr.f32.gmra.mrb[0].mxu0 %v2587
      %v2663 = vpop.f32.mrb[0].mxu0
      %v2664 = vadd.f32 %v2582, %v2663
      %v2665 = vpop.f32.mrb[0].mxu0
      %2666 = vmatprep.mubr.f32.mxu0 0.0
      %2667 = vmatmul.mubr.f32.gmra.mrb[0].mxu0 %v2590
      %v2668 = vpop.f32.mrb[0].mxu0
      %v2669 = vadd.f32 %v2582, %v2668
      %v2670 = vpop.f32.mrb[0].mxu0
      %2671 = vdwg.mxu0
      %v2672 = vmul.f32 %v2659, %v2659
      %v2673 = vmul.f32 %v2664, %v2664
      %v2674 = vmul.f32 %v2669, %v2669
      %v2675 = vmul.f32 %v2659, %v2672
      %v2676 = vmul.f32 %v2664, %v2673
      %v2677 = vmul.f32 %v2669, %v2674
      %v2678 = vmul.f32 %v2675, 0.044715
      %v2679 = vmul.f32 %v2676, 0.044715
      %v2680 = vmul.f32 %v2677, 0.044715
      %v2681 = vadd.f32 %v2659, %v2678
      %v2682 = vadd.f32 %v2664, %v2679
      %v2683 = vadd.f32 %v2669, %v2680
      %v2684 = vmul.f32 %v2681, 0.7978846
      %v2685 = vmul.f32 %v2682, 0.7978846
      %v2686 = vmul.f32 %v2683, 0.7978846
      %v2687 = vtanh.pop %v2684
      %v2688 = vtanh.pop %v2685
      %v2689 = vtanh.pop %v2686
      %v2690 = vadd.f32 %v2687, 1.0
      %v2691 = vadd.f32 %v2688, 1.0
      %v2692 = vadd.f32 %v2689, 1.0
      %v2693 = vmul.f32 %v2690, 0.5
      %v2694 = vmul.f32 %v2691, 0.5
      %v2695 = vmul.f32 %v2692, 0.5
      %v2696 = vmul.f32 %v2659, %v2693
      %v2697 = vmul.f32 %v2664, %v2694
      %v2698 = vmul.f32 %v2669, %v2695
      %v2699 = vlaneseq
      %v2700 = vshrl.u32 %v2699, 7
      %v2701 = vsub.s32 0, %v2700
      %v2702 = vrot.slane %v1151, %v2701
      %2703 = vmatprep.subr.mxu0 0.0
      %2704 = vmatpush1.msra.mxu0 %v1119
      %2705 = vmatprep.subr.mxu0 0.0
      %2706 = vmatpush1.msra.mxu0 %v1120
      %2707 = vmatprep.subr.mxu0 0.0
      %2708 = vmatpush1.msra.mxu0 %v1121
      %2709 = vmatprep.subr.mxu0 0.0
      %2710 = vmatpush1.msra.mxu0 %v1122
      %2711 = vmatprep.subr.mxu0 0.0
      %2712 = vmatpush1.msra.mxu0 %v1123
      %2713 = vmatprep.subr.mxu0 0.0
      %2714 = vmatpush1.msra.mxu0 %v1124
      %2715 = vmatprep.subr.mxu0 0.0
      %2716 = vmatpush1.msra.mxu0 %v1125
      %2717 = vmatprep.subr.mxu0 0.0
      %2718 = vmatpush1.msra.mxu0 %v1126
      %2719 = vmatprep.subr.mxu0 0.0
      %2720 = vmatpush1.msra.mxu0 %v1127
      %2721 = vmatprep.subr.mxu0 0.0
      %2722 = vmatpush1.msra.mxu0 %v1128
      %2723 = vmatprep.subr.mxu0 0.0
      %2724 = vmatpush1.msra.mxu0 %v1129
      %2725 = vmatprep.subr.mxu0 0.0
      %2726 = vmatpush1.msra.mxu0 %v1130
      %2727 = vmatprep.subr.mxu0 0.0
      %2728 = vmatpush1.msra.mxu0 %v1131
      %2729 = vmatprep.subr.mxu0 0.0
      %2730 = vmatpush1.msra.mxu0 %v1132
      %2731 = vmatprep.subr.mxu0 0.0
      %2732 = vmatpush1.msra.mxu0 %v1133
      %2733 = vmatprep.subr.mxu0 0.0
      %2734 = vmatpush1.msra.mxu0 %v1134
      %2735 = vmatprep.subr.mxu0 0.0
      %2736 = vmatpush1.msra.mxu0 0.0
      %2737 = vmatprep.subr.mxu0 0.0
      %2738 = vmatpush1.msra.mxu0 0.0
      %2739 = vmatprep.subr.mxu0 0.0
      %2740 = vmatpush1.msra.mxu0 0.0
      %2741 = vmatprep.subr.mxu0 0.0
      %2742 = vmatpush1.msra.mxu0 0.0
      %2743 = vmatprep.subr.mxu0 0.0
      %2744 = vmatpush1.msra.mxu0 0.0
      %2745 = vmatprep.subr.mxu0 0.0
      %2746 = vmatpush1.msra.mxu0 0.0
      %2747 = vmatprep.subr.mxu0 0.0
      %2748 = vmatpush1.msra.mxu0 0.0
      %2749 = vmatprep.subr.mxu0 0.0
      %2750 = vmatpush1.msra.mxu0 0.0
      %2751 = vmatprep.subr.mxu0 0.0
      %2752 = vmatpush1.msra.mxu0 0.0
      %2753 = vmatprep.subr.mxu0 0.0
      %2754 = vmatpush1.msra.mxu0 0.0
      %2755 = vmatprep.subr.mxu0 0.0
      %2756 = vmatpush1.msra.mxu0 0.0
      %2757 = vmatprep.subr.mxu0 0.0
      %2758 = vmatpush1.msra.mxu0 0.0
      %2759 = vmatprep.subr.mxu0 0.0
      %2760 = vmatpush1.msra.mxu0 0.0
      %2761 = vmatprep.subr.mxu0 0.0
      %2762 = vmatpush1.msra.mxu0 0.0
      %2763 = vmatprep.subr.mxu0 0.0
      %2764 = vmatpush1.msra.mxu0 0.0
      %2765 = vmatprep.subr.mxu0 0.0
      %2766 = vmatpush1.msra.mxu0 0.0
      %2767 = vmatprep.mubr.f32.mxu0 0.0
      %2768 = vmatmul.mubr.f32.gmra.mrb[0].mxu0 %v2696
      %v2769 = vpop.f32.mrb[0].mxu0
      %v2770 = vadd.f32 %v2702, %v2769
      %v2771 = vpop.f32.mrb[0].mxu0
      %2772 = vmatprep.mubr.f32.mxu0 0.0
      %2773 = vmatmul.mubr.f32.gmra.mrb[0].mxu0 %v2697
      %v2774 = vpop.f32.mrb[0].mxu0
      %v2775 = vadd.f32 %v2702, %v2774
      %v2776 = vpop.f32.mrb[0].mxu0
      %2777 = vmatprep.mubr.f32.mxu0 0.0
      %2778 = vmatmul.mubr.f32.gmra.mrb[0].mxu0 %v2698
      %v2779 = vpop.f32.mrb[0].mxu0
      %v2780 = vadd.f32 %v2702, %v2779
      %v2781 = vpop.f32.mrb[0].mxu0
      %2782 = vdwg.mxu0
      %v2783 = vadd.f32 %v2523, %v2770
      %v2784 = vadd.f32 %v2524, %v2775
      %v2785 = vadd.f32 %v2525, %v2780
      %v2786 = vsel %vm1152, %v2783, 0.0
      %2787 = vadd.xlane.f32.xlu0 %v2786
      %v2788 = vpop.xlane.xlu0 %2787
      %v2789 = vsel %vm1152, %v2784, 0.0
      %2790 = vadd.xlane.f32.xlu0 %v2789
      %v2791 = vpop.xlane.xlu0 %2790
      %v2792 = vsel %vm1159, %v2785, 0.0
      %2793 = vadd.xlane.f32.xlu0 %v2792
      %v2794 = vpop.xlane.xlu0 %2793
      %v2795 = vmul.f32 %v2788, %v1163
      %v2796 = vmul.f32 %v2791, %v1163
      %v2797 = vmul.f32 %v2794, %v1163
      %v2798 = vsub.f32 %v2783, %v2795
      %v2799 = vsub.f32 %v2784, %v2796
      %v2800 = vsub.f32 %v2785, %v2797
      %v2801 = vmul.f32 %v2798, %v2798
      %v2802 = vmul.f32 %v2799, %v2799
      %v2803 = vmul.f32 %v2800, %v2800
      %v2804 = vsel %vm1152, %v2801, 0.0
      %2805 = vadd.xlane.f32.xlu0 %v2804
      %v2806 = vpop.xlane.xlu0 %2805
      %v2807 = vsel %vm1152, %v2802, 0.0
      %2808 = vadd.xlane.f32.xlu0 %v2807
      %v2809 = vpop.xlane.xlu0 %2808
      %v2810 = vsel %vm1159, %v2803, 0.0
      %2811 = vadd.xlane.f32.xlu0 %v2810
      %v2812 = vpop.xlane.xlu0 %2811
      %v2813 = vmul.f32 %v2806, %v1163
      %v2814 = vmul.f32 %v2809, %v1163
      %v2815 = vmul.f32 %v2812, %v1163
      %v2816 = vadd.f32 %v2813, 1e-05
      %v2817 = vadd.f32 %v2814, 1e-05
      %v2818 = vadd.f32 %v2815, 1e-05
      %v2819 = vrsqrt.pop %v2816
      %v2820 = vrsqrt.pop %v2817
      %v2821 = vrsqrt.pop %v2818
      %v2822 = vmul.f32 %v2798, %v2819
      %v2823 = vmul.f32 %v2799, %v2820
      %v2824 = vmul.f32 %v2800, %v2821
      %v2825 = vlaneseq
      %v2826 = vshrl.u32 %v2825, 7
      %v2827 = vsub.s32 1, %v2826
      %v2828 = vrot.slane %v1070, %v2827
      %v2829 = vmul.f32 %v2822, %v2828
      %v2830 = vmul.f32 %v2823, %v2828
      %v2831 = vmul.f32 %v2824, %v2828
      %v2832 = vlaneseq
      %v2833 = vshrl.u32 %v2832, 7
      %v2834 = vsub.s32 1, %v2833
      %v2835 = vrot.slane %v1071, %v2834
      %v2836 = vadd.f32 %v2829, %v2835
      %v2837 = vadd.f32 %v2830, %v2835
      %v2838 = vadd.f32 %v2831, %v2835
      %v2839 = vlaneseq
      %v2840 = vshrl.u32 %v2839, 7
      %v2841 = vsub.s32 1, %v2840
      %v2842 = vrot.slane %v1082, %v2841
      %v2844 = vsel %vm1152, %v2836, 0
      %v2847 = vsel %vm1152, %v2837, 0
      %v2850 = vsel %vm1152, %v2838, 0
      %2852 = vmatprep.subr.mxu0 0.0
      %2853 = vmatpush1.msra.mxu0 %v1078
      %2854 = vmatprep.subr.mxu0 0.0
      %2855 = vmatpush1.msra.mxu0 %v1079
      %2856 = vmatprep.subr.mxu0 0.0
      %2857 = vmatpush1.msra.mxu0 %v1080
      %2858 = vmatprep.subr.mxu0 0.0
      %2859 = vmatpush1.msra.mxu0 %v1081
      %2860 = vmatprep.subr.mxu0 0.0
      %2861 = vmatpush1.msra.mxu0 0.0
      %2862 = vmatprep.subr.mxu0 0.0
      %2863 = vmatpush1.msra.mxu0 0.0
      %2864 = vmatprep.subr.mxu0 0.0
      %2865 = vmatpush1.msra.mxu0 0.0
      %2866 = vmatprep.subr.mxu0 0.0
      %2867 = vmatpush1.msra.mxu0 0.0
      %2868 = vmatprep.subr.mxu0 0.0
      %2869 = vmatpush1.msra.mxu0 0.0
      %2870 = vmatprep.subr.mxu0 0.0
      %2871 = vmatpush1.msra.mxu0 0.0
      %2872 = vmatprep.subr.mxu0 0.0
      %2873 = vmatpush1.msra.mxu0 0.0
      %2874 = vmatprep.subr.mxu0 0.0
      %2875 = vmatpush1.msra.mxu0 0.0
      %2876 = vmatprep.subr.mxu0 0.0
      %2877 = vmatpush1.msra.mxu0 0.0
      %2878 = vmatprep.subr.mxu0 0.0
      %2879 = vmatpush1.msra.mxu0 0.0
      %2880 = vmatprep.subr.mxu0 0.0
      %2881 = vmatpush1.msra.mxu0 0.0
      %2882 = vmatprep.subr.mxu0 0.0
      %2883 = vmatpush1.msra.mxu0 0.0
      %2884 = vmatprep.subr.mxu0 0.0
      %2885 = vmatpush1.msra.mxu0 0.0
      %2886 = vmatprep.subr.mxu0 0.0
      %2887 = vmatpush1.msra.mxu0 0.0
      %2888 = vmatprep.subr.mxu0 0.0
      %2889 = vmatpush1.msra.mxu0 0.0
      %2890 = vmatprep.subr.mxu0 0.0
      %2891 = vmatpush1.msra.mxu0 0.0
      %2892 = vmatprep.subr.mxu0 0.0
      %2893 = vmatpush1.msra.mxu0 0.0
      %2894 = vmatprep.subr.mxu0 0.0
      %2895 = vmatpush1.msra.mxu0 0.0
      %2896 = vmatprep.subr.mxu0 0.0
      %2897 = vmatpush1.msra.mxu0 0.0
      %2898 = vmatprep.subr.mxu0 0.0
      %2899 = vmatpush1.msra.mxu0 0.0
      %2900 = vmatprep.subr.mxu0 0.0
      %2901 = vmatpush1.msra.mxu0 0.0
      %2902 = vmatprep.subr.mxu0 0.0
      %2903 = vmatpush1.msra.mxu0 0.0
      %2904 = vmatprep.subr.mxu0 0.0
      %2905 = vmatpush1.msra.mxu0 0.0
      %2906 = vmatprep.subr.mxu0 0.0
      %2907 = vmatpush1.msra.mxu0 0.0
      %2908 = vmatprep.subr.mxu0 0.0
      %2909 = vmatpush1.msra.mxu0 0.0
      %2910 = vmatprep.subr.mxu0 0.0
      %2911 = vmatpush1.msra.mxu0 0.0
      %2912 = vmatprep.subr.mxu0 0.0
      %2913 = vmatpush1.msra.mxu0 0.0
      %2914 = vmatprep.subr.mxu0 0.0
      %2915 = vmatpush1.msra.mxu0 0.0
      %2916 = vmatprep.mubr.f32.mxu0 0.0
      %2917 = vmatmul.mubr.f32.gmra.mrb[0].mxu0 %v2844
      %v2918 = vpop.f32.mrb[0].mxu0
      %v2919 = vadd.f32 %v2842, %v2918
      %v2920 = vpop.f32.mrb[0].mxu0
      %2921 = vmatprep.mubr.f32.mxu0 0.0
      %2922 = vmatmul.mubr.f32.gmra.mrb[0].mxu0 %v2847
      %v2923 = vpop.f32.mrb[0].mxu0
      %v2924 = vadd.f32 %v2842, %v2923
      %v2925 = vpop.f32.mrb[0].mxu0
      %2926 = vmatprep.mubr.f32.mxu0 0.0
      %2927 = vmatmul.mubr.f32.gmra.mrb[0].mxu0 %v2850
      %v2928 = vpop.f32.mrb[0].mxu0
      %v2929 = vadd.f32 %v2842, %v2928
      %v2930 = vpop.f32.mrb[0].mxu0
      %2931 = vdwg.mxu0
      %v2932 = vlaneseq
      %v2933 = vshrl.u32 %v2932, 7
      %v2934 = vsub.s32 1, %v2933
      %v2935 = vrot.slane %v1091, %v2934
      %2936 = vmatprep.subr.mxu0 0.0
      %2937 = vmatpush1.msra.mxu0 %v1087
      %2938 = vmatprep.subr.mxu0 0.0
      %2939 = vmatpush1.msra.mxu0 %v1088
      %2940 = vmatprep.subr.mxu0 0.0
      %2941 = vmatpush1.msra.mxu0 %v1089
      %2942 = vmatprep.subr.mxu0 0.0
      %2943 = vmatpush1.msra.mxu0 %v1090
      %2944 = vmatprep.subr.mxu0 0.0
      %2945 = vmatpush1.msra.mxu0 0.0
      %2946 = vmatprep.subr.mxu0 0.0
      %2947 = vmatpush1.msra.mxu0 0.0
      %2948 = vmatprep.subr.mxu0 0.0
      %2949 = vmatpush1.msra.mxu0 0.0
      %2950 = vmatprep.subr.mxu0 0.0
      %2951 = vmatpush1.msra.mxu0 0.0
      %2952 = vmatprep.subr.mxu0 0.0
      %2953 = vmatpush1.msra.mxu0 0.0
      %2954 = vmatprep.subr.mxu0 0.0
      %2955 = vmatpush1.msra.mxu0 0.0
      %2956 = vmatprep.subr.mxu0 0.0
      %2957 = vmatpush1.msra.mxu0 0.0
      %2958 = vmatprep.subr.mxu0 0.0
      %2959 = vmatpush1.msra.mxu0 0.0
      %2960 = vmatprep.subr.mxu0 0.0
      %2961 = vmatpush1.msra.mxu0 0.0
      %2962 = vmatprep.subr.mxu0 0.0
      %2963 = vmatpush1.msra.mxu0 0.0
      %2964 = vmatprep.subr.mxu0 0.0
      %2965 = vmatpush1.msra.mxu0 0.0
      %2966 = vmatprep.subr.mxu0 0.0
      %2967 = vmatpush1.msra.mxu0 0.0
      %2968 = vmatprep.subr.mxu0 0.0
      %2969 = vmatpush1.msra.mxu0 0.0
      %2970 = vmatprep.subr.mxu0 0.0
      %2971 = vmatpush1.msra.mxu0 0.0
      %2972 = vmatprep.subr.mxu0 0.0
      %2973 = vmatpush1.msra.mxu0 0.0
      %2974 = vmatprep.subr.mxu0 0.0
      %2975 = vmatpush1.msra.mxu0 0.0
      %2976 = vmatprep.subr.mxu0 0.0
      %2977 = vmatpush1.msra.mxu0 0.0
      %2978 = vmatprep.subr.mxu0 0.0
      %2979 = vmatpush1.msra.mxu0 0.0
      %2980 = vmatprep.subr.mxu0 0.0
      %2981 = vmatpush1.msra.mxu0 0.0
      %2982 = vmatprep.subr.mxu0 0.0
      %2983 = vmatpush1.msra.mxu0 0.0
      %2984 = vmatprep.subr.mxu0 0.0
      %2985 = vmatpush1.msra.mxu0 0.0
      %2986 = vmatprep.subr.mxu0 0.0
      %2987 = vmatpush1.msra.mxu0 0.0
      %2988 = vmatprep.subr.mxu0 0.0
      %2989 = vmatpush1.msra.mxu0 0.0
      %2990 = vmatprep.subr.mxu0 0.0
      %2991 = vmatpush1.msra.mxu0 0.0
      %2992 = vmatprep.subr.mxu0 0.0
      %2993 = vmatpush1.msra.mxu0 0.0
      %2994 = vmatprep.subr.mxu0 0.0
      %2995 = vmatpush1.msra.mxu0 0.0
      %2996 = vmatprep.subr.mxu0 0.0
      %2997 = vmatpush1.msra.mxu0 0.0
      %2998 = vmatprep.subr.mxu0 0.0
      %2999 = vmatpush1.msra.mxu0 0.0
      %3000 = vmatprep.mubr.f32.mxu0 0.0
      %3001 = vmatmul.mubr.f32.gmra.mrb[0].mxu0 %v2844
      %v3002 = vpop.f32.mrb[0].mxu0
      %v3003 = vadd.f32 %v2935, %v3002
      %v3004 = vpop.f32.mrb[0].mxu0
      %3005 = vmatprep.mubr.f32.mxu0 0.0
      %3006 = vmatmul.mubr.f32.gmra.mrb[0].mxu0 %v2847
      %v3007 = vpop.f32.mrb[0].mxu0
      %v3008 = vadd.f32 %v2935, %v3007
      %v3009 = vpop.f32.mrb[0].mxu0
      %3010 = vmatprep.mubr.f32.mxu0 0.0
      %3011 = vmatmul.mubr.f32.gmra.mrb[0].mxu0 %v2850
      %v3012 = vpop.f32.mrb[0].mxu0
      %v3013 = vadd.f32 %v2935, %v3012
      %v3014 = vpop.f32.mrb[0].mxu0
      %3015 = vdwg.mxu0
      %v3016 = vlaneseq
      %v3017 = vshrl.u32 %v3016, 7
      %v3018 = vsub.s32 1, %v3017
      %v3019 = vrot.slane %v1100, %v3018
      %3020 = vmatprep.subr.mxu0 0.0
      %3021 = vmatpush1.msra.mxu0 %v1096
      %3022 = vmatprep.subr.mxu0 0.0
      %3023 = vmatpush1.msra.mxu0 %v1097
      %3024 = vmatprep.subr.mxu0 0.0
      %3025 = vmatpush1.msra.mxu0 %v1098
      %3026 = vmatprep.subr.mxu0 0.0
      %3027 = vmatpush1.msra.mxu0 %v1099
      %3028 = vmatprep.subr.mxu0 0.0
      %3029 = vmatpush1.msra.mxu0 0.0
      %3030 = vmatprep.subr.mxu0 0.0
      %3031 = vmatpush1.msra.mxu0 0.0
      %3032 = vmatprep.subr.mxu0 0.0
      %3033 = vmatpush1.msra.mxu0 0.0
      %3034 = vmatprep.subr.mxu0 0.0
      %3035 = vmatpush1.msra.mxu0 0.0
      %3036 = vmatprep.subr.mxu0 0.0
      %3037 = vmatpush1.msra.mxu0 0.0
      %3038 = vmatprep.subr.mxu0 0.0
      %3039 = vmatpush1.msra.mxu0 0.0
      %3040 = vmatprep.subr.mxu0 0.0
      %3041 = vmatpush1.msra.mxu0 0.0
      %3042 = vmatprep.subr.mxu0 0.0
      %3043 = vmatpush1.msra.mxu0 0.0
      %3044 = vmatprep.subr.mxu0 0.0
      %3045 = vmatpush1.msra.mxu0 0.0
      %3046 = vmatprep.subr.mxu0 0.0
      %3047 = vmatpush1.msra.mxu0 0.0
      %3048 = vmatprep.subr.mxu0 0.0
      %3049 = vmatpush1.msra.mxu0 0.0
      %3050 = vmatprep.subr.mxu0 0.0
      %3051 = vmatpush1.msra.mxu0 0.0
      %3052 = vmatprep.subr.mxu0 0.0
      %3053 = vmatpush1.msra.mxu0 0.0
      %3054 = vmatprep.subr.mxu0 0.0
      %3055 = vmatpush1.msra.mxu0 0.0
      %3056 = vmatprep.subr.mxu0 0.0
      %3057 = vmatpush1.msra.mxu0 0.0
      %3058 = vmatprep.subr.mxu0 0.0
      %3059 = vmatpush1.msra.mxu0 0.0
      %3060 = vmatprep.subr.mxu0 0.0
      %3061 = vmatpush1.msra.mxu0 0.0
      %3062 = vmatprep.subr.mxu0 0.0
      %3063 = vmatpush1.msra.mxu0 0.0
      %3064 = vmatprep.subr.mxu0 0.0
      %3065 = vmatpush1.msra.mxu0 0.0
      %3066 = vmatprep.subr.mxu0 0.0
      %3067 = vmatpush1.msra.mxu0 0.0
      %3068 = vmatprep.subr.mxu0 0.0
      %3069 = vmatpush1.msra.mxu0 0.0
      %3070 = vmatprep.subr.mxu0 0.0
      %3071 = vmatpush1.msra.mxu0 0.0
      %3072 = vmatprep.subr.mxu0 0.0
      %3073 = vmatpush1.msra.mxu0 0.0
      %3074 = vmatprep.subr.mxu0 0.0
      %3075 = vmatpush1.msra.mxu0 0.0
      %3076 = vmatprep.subr.mxu0 0.0
      %3077 = vmatpush1.msra.mxu0 0.0
      %3078 = vmatprep.subr.mxu0 0.0
      %3079 = vmatpush1.msra.mxu0 0.0
      %3080 = vmatprep.subr.mxu0 0.0
      %3081 = vmatpush1.msra.mxu0 0.0
      %3082 = vmatprep.subr.mxu0 0.0
      %3083 = vmatpush1.msra.mxu0 0.0
      %3084 = vmatprep.mubr.f32.mxu0 0.0
      %3085 = vmatmul.mubr.f32.gmra.mrb[0].mxu0 %v2844
      %v3086 = vpop.f32.mrb[0].mxu0
      %v3087 = vadd.f32 %v3019, %v3086
      %v3088 = vpop.f32.mrb[0].mxu0
      %3089 = vmatprep.mubr.f32.mxu0 0.0
      %3090 = vmatmul.mubr.f32.gmra.mrb[0].mxu0 %v2847
      %v3091 = vpop.f32.mrb[0].mxu0
      %v3092 = vadd.f32 %v3019, %v3091
      %v3093 = vpop.f32.mrb[0].mxu0
      %3094 = vmatprep.mubr.f32.mxu0 0.0
      %3095 = vmatmul.mubr.f32.gmra.mrb[0].mxu0 %v2850
      %v3096 = vpop.f32.mrb[0].mxu0
      %v3097 = vadd.f32 %v3019, %v3096
      %v3098 = vpop.f32.mrb[0].mxu0
      %3099 = vdwg.mxu0
      %v3100 = vmul.f32 %v2919, %v1018
      %v3101 = vmul.f32 %v2924, %v1018
      %v3102 = vmul.f32 %v2929, %v1018
      %v3103 = vmul.f32 %v3003, %v1018
      %v3104 = vmul.f32 %v3008, %v1018
      %v3105 = vmul.f32 %v3013, %v1018
      %v3107 = vsel %vm1152, %v3100, 0
      %v3110 = vsel %vm1152, %v3101, 0
      %v3113 = vsel %vm1152, %v3102, 0
      %v3116 = vsel %vm1152, %v3103, 0
      %v3119 = vsel %vm1152, %v3104, 0
      %v3122 = vsel %vm1152, %v3105, 0
      %3124 = vmatprep.subr.mxu0 0.0
      %3125 = vmatpush1.xpose.msra.mxu0 %v3116
      %3126 = vmatprep.subr.mxu0 0.0
      %3127 = vmatpush1.xpose.msra.mxu0 %v3119
      %3128 = vmatprep.subr.mxu0 0.0
      %3129 = vmatpush1.xpose.msra.mxu0 %v3122
      %3130 = vmatprep.subr.mxu0 0.0
      %3131 = vmatpush1.xpose.msra.mxu0 0.0
      %3132 = vmatprep.subr.mxu0 0.0
      %3133 = vmatpush1.xpose.msra.mxu0 0.0
      %3134 = vmatprep.subr.mxu0 0.0
      %3135 = vmatpush1.xpose.msra.mxu0 0.0
      %3136 = vmatprep.subr.mxu0 0.0
      %3137 = vmatpush1.xpose.msra.mxu0 0.0
      %3138 = vmatprep.subr.mxu0 0.0
      %3139 = vmatpush1.xpose.msra.mxu0 0.0
      %3140 = vmatprep.subr.mxu0 0.0
      %3141 = vmatpush1.xpose.msra.mxu0 0.0
      %3142 = vmatprep.subr.mxu0 0.0
      %3143 = vmatpush1.xpose.msra.mxu0 0.0
      %3144 = vmatprep.subr.mxu0 0.0
      %3145 = vmatpush1.xpose.msra.mxu0 0.0
      %3146 = vmatprep.subr.mxu0 0.0
      %3147 = vmatpush1.xpose.msra.mxu0 0.0
      %3148 = vmatprep.subr.mxu0 0.0
      %3149 = vmatpush1.xpose.msra.mxu0 0.0
      %3150 = vmatprep.subr.mxu0 0.0
      %3151 = vmatpush1.xpose.msra.mxu0 0.0
      %3152 = vmatprep.subr.mxu0 0.0
      %3153 = vmatpush1.xpose.msra.mxu0 0.0
      %3154 = vmatprep.subr.mxu0 0.0
      %3155 = vmatpush1.xpose.msra.mxu0 0.0
      %3156 = vmatprep.subr.mxu0 0.0
      %3157 = vmatpush1.xpose.msra.mxu0 0.0
      %3158 = vmatprep.subr.mxu0 0.0
      %3159 = vmatpush1.xpose.msra.mxu0 0.0
      %3160 = vmatprep.subr.mxu0 0.0
      %3161 = vmatpush1.xpose.msra.mxu0 0.0
      %3162 = vmatprep.subr.mxu0 0.0
      %3163 = vmatpush1.xpose.msra.mxu0 0.0
      %3164 = vmatprep.subr.mxu0 0.0
      %3165 = vmatpush1.xpose.msra.mxu0 0.0
      %3166 = vmatprep.subr.mxu0 0.0
      %3167 = vmatpush1.xpose.msra.mxu0 0.0
      %3168 = vmatprep.subr.mxu0 0.0
      %3169 = vmatpush1.xpose.msra.mxu0 0.0
      %3170 = vmatprep.subr.mxu0 0.0
      %3171 = vmatpush1.xpose.msra.mxu0 0.0
      %3172 = vmatprep.subr.mxu0 0.0
      %3173 = vmatpush1.xpose.msra.mxu0 0.0
      %3174 = vmatprep.subr.mxu0 0.0
      %3175 = vmatpush1.xpose.msra.mxu0 0.0
      %3176 = vmatprep.subr.mxu0 0.0
      %3177 = vmatpush1.xpose.msra.mxu0 0.0
      %3178 = vmatprep.subr.mxu0 0.0
      %3179 = vmatpush1.xpose.msra.mxu0 0.0
      %3180 = vmatprep.subr.mxu0 0.0
      %3181 = vmatpush1.xpose.msra.mxu0 0.0
      %3182 = vmatprep.subr.mxu0 0.0
      %3183 = vmatpush1.xpose.msra.mxu0 0.0
      %3184 = vmatprep.subr.mxu0 0.0
      %3185 = vmatpush1.xpose.msra.mxu0 0.0
      %3186 = vmatprep.subr.mxu0 0.0
      %3187 = vmatpush1.xpose.msra.mxu0 0.0
      %3188 = vmatprep.mubr.f32.mxu0 0.0
      %3189 = vmatmul.mubr.f32.gmra.mrb[0].mxu0 %v3107
      %v3190 = vpop.f32.mrb[0].mxu0
      %v3191 = vadd.f32 0.0, %v3190
      %v3192 = vpop.f32.mrb[0].mxu0
      %3193 = vmatprep.mubr.f32.mxu0 0.0
      %3194 = vmatmul.mubr.f32.gmra.mrb[0].mxu0 %v3110
      %v3195 = vpop.f32.mrb[0].mxu0
      %v3196 = vadd.f32 0.0, %v3195
      %v3197 = vpop.f32.mrb[0].mxu0
      %3198 = vmatprep.mubr.f32.mxu0 0.0
      %3199 = vmatmul.mubr.f32.gmra.mrb[0].mxu0 %v3113
      %v3200 = vpop.f32.mrb[0].mxu0
      %v3201 = vadd.f32 0.0, %v3200
      %v3202 = vpop.f32.mrb[0].mxu0
      %3203 = vdwg.mxu0
      %v3204 = vmul.f32 %v3191, 0.35355338
      %v3205 = vmul.f32 %v3196, 0.35355338
      %v3206 = vmul.f32 %v3201, 0.35355338
      %v3207 = vsel %vm1067, %v3204, -1e+30
      %v3208 = vsel %vm1068, %v3205, -1e+30
      %v3209 = vsel %vm1069, %v3206, -1e+30
      %v3210 = vsel %vm1579, %v3207, -inf
      %3211 = vmax.xlane.f32.xlu0 %v3210
      %v3212 = vpop.xlane.xlu0 %3211
      %v3213 = vsel %vm1579, %v3208, -inf
      %3214 = vmax.xlane.f32.xlu0 %v3213
      %v3215 = vpop.xlane.xlu0 %3214
      %v3216 = vsel %vm1586, %v3209, -inf
      %3217 = vmax.xlane.f32.xlu0 %v3216
      %v3218 = vpop.xlane.xlu0 %3217
      %v3219 = vsub.f32 %v3207, %v3212
      %v3220 = vsub.f32 %v3208, %v3215
      %v3221 = vsub.f32 %v3209, %v3218
      %v3222 = vmul.f32 %v3219, 1.442695
      %v3223 = vpow.pop %v3222
      %v3224 = vmul.f32 %v3220, 1.442695
      %v3225 = vpow.pop %v3224
      %v3226 = vmul.f32 %v3221, 1.442695
      %v3227 = vpow.pop %v3226
      %v3228 = vsel %vm1579, %v3223, 0.0
      %3229 = vadd.xlane.f32.xlu0 %v3228
      %v3230 = vpop.xlane.xlu0 %3229
      %v3231 = vsel %vm1579, %v3225, 0.0
      %3232 = vadd.xlane.f32.xlu0 %v3231
      %v3233 = vpop.xlane.xlu0 %3232
      %v3234 = vsel %vm1586, %v3227, 0.0
      %3235 = vadd.xlane.f32.xlu0 %v3234
      %v3236 = vpop.xlane.xlu0 %3235
      %v3237 = vrcp.pop %v3230
      %v3238 = vrcp.pop %v3233
      %v3239 = vrcp.pop %v3236
      %v3240 = vmul.f32 %v3223, %v3237
      %v3241 = vmul.f32 %v3225, %v3238
      %v3242 = vmul.f32 %v3227, %v3239
      %v3243 = vmul.f32 %v3087, %v1018
      %v3244 = vmul.f32 %v3092, %v1018
      %v3245 = vmul.f32 %v3097, %v1018
      %v3246 = vmul.f32 %v2919, %v1023
      %v3247 = vmul.f32 %v2924, %v1023
      %v3248 = vmul.f32 %v2929, %v1023
      %v3249 = vmul.f32 %v3003, %v1023
      %v3250 = vmul.f32 %v3008, %v1023
      %v3251 = vmul.f32 %v3013, %v1023
      %v3253 = vsel %vm1152, %v3246, 0
      %v3256 = vsel %vm1152, %v3247, 0
      %v3259 = vsel %vm1152, %v3248, 0
      %v3262 = vsel %vm1152, %v3249, 0
      %v3265 = vsel %vm1152, %v3250, 0
      %v3268 = vsel %vm1152, %v3251, 0
      %3270 = vmatprep.subr.mxu0 0.0
      %3271 = vmatpush1.xpose.msra.mxu0 %v3262
      %3272 = vmatprep.subr.mxu0 0.0
      %3273 = vmatpush1.xpose.msra.mxu0 %v3265
      %3274 = vmatprep.subr.mxu0 0.0
      %3275 = vmatpush1.xpose.msra.mxu0 %v3268
      %3276 = vmatprep.subr.mxu0 0.0
      %3277 = vmatpush1.xpose.msra.mxu0 0.0
      %3278 = vmatprep.subr.mxu0 0.0
      %3279 = vmatpush1.xpose.msra.mxu0 0.0
      %3280 = vmatprep.subr.mxu0 0.0
      %3281 = vmatpush1.xpose.msra.mxu0 0.0
      %3282 = vmatprep.subr.mxu0 0.0
      %3283 = vmatpush1.xpose.msra.mxu0 0.0
      %3284 = vmatprep.subr.mxu0 0.0
      %3285 = vmatpush1.xpose.msra.mxu0 0.0
      %3286 = vmatprep.subr.mxu0 0.0
      %3287 = vmatpush1.xpose.msra.mxu0 0.0
      %3288 = vmatprep.subr.mxu0 0.0
      %3289 = vmatpush1.xpose.msra.mxu0 0.0
      %3290 = vmatprep.subr.mxu0 0.0
      %3291 = vmatpush1.xpose.msra.mxu0 0.0
      %3292 = vmatprep.subr.mxu0 0.0
      %3293 = vmatpush1.xpose.msra.mxu0 0.0
      %3294 = vmatprep.subr.mxu0 0.0
      %3295 = vmatpush1.xpose.msra.mxu0 0.0
      %3296 = vmatprep.subr.mxu0 0.0
      %3297 = vmatpush1.xpose.msra.mxu0 0.0
      %3298 = vmatprep.subr.mxu0 0.0
      %3299 = vmatpush1.xpose.msra.mxu0 0.0
      %3300 = vmatprep.subr.mxu0 0.0
      %3301 = vmatpush1.xpose.msra.mxu0 0.0
      %3302 = vmatprep.subr.mxu0 0.0
      %3303 = vmatpush1.xpose.msra.mxu0 0.0
      %3304 = vmatprep.subr.mxu0 0.0
      %3305 = vmatpush1.xpose.msra.mxu0 0.0
      %3306 = vmatprep.subr.mxu0 0.0
      %3307 = vmatpush1.xpose.msra.mxu0 0.0
      %3308 = vmatprep.subr.mxu0 0.0
      %3309 = vmatpush1.xpose.msra.mxu0 0.0
      %3310 = vmatprep.subr.mxu0 0.0
      %3311 = vmatpush1.xpose.msra.mxu0 0.0
      %3312 = vmatprep.subr.mxu0 0.0
      %3313 = vmatpush1.xpose.msra.mxu0 0.0
      %3314 = vmatprep.subr.mxu0 0.0
      %3315 = vmatpush1.xpose.msra.mxu0 0.0
      %3316 = vmatprep.subr.mxu0 0.0
      %3317 = vmatpush1.xpose.msra.mxu0 0.0
      %3318 = vmatprep.subr.mxu0 0.0
      %3319 = vmatpush1.xpose.msra.mxu0 0.0
      %3320 = vmatprep.subr.mxu0 0.0
      %3321 = vmatpush1.xpose.msra.mxu0 0.0
      %3322 = vmatprep.subr.mxu0 0.0
      %3323 = vmatpush1.xpose.msra.mxu0 0.0
      %3324 = vmatprep.subr.mxu0 0.0
      %3325 = vmatpush1.xpose.msra.mxu0 0.0
      %3326 = vmatprep.subr.mxu0 0.0
      %3327 = vmatpush1.xpose.msra.mxu0 0.0
      %3328 = vmatprep.subr.mxu0 0.0
      %3329 = vmatpush1.xpose.msra.mxu0 0.0
      %3330 = vmatprep.subr.mxu0 0.0
      %3331 = vmatpush1.xpose.msra.mxu0 0.0
      %3332 = vmatprep.subr.mxu0 0.0
      %3333 = vmatpush1.xpose.msra.mxu0 0.0
      %3334 = vmatprep.mubr.f32.mxu0 0.0
      %3335 = vmatmul.mubr.f32.gmra.mrb[0].mxu0 %v3253
      %v3336 = vpop.f32.mrb[0].mxu0
      %v3337 = vadd.f32 0.0, %v3336
      %v3338 = vpop.f32.mrb[0].mxu0
      %3339 = vmatprep.mubr.f32.mxu0 0.0
      %3340 = vmatmul.mubr.f32.gmra.mrb[0].mxu0 %v3256
      %v3341 = vpop.f32.mrb[0].mxu0
      %v3342 = vadd.f32 0.0, %v3341
      %v3343 = vpop.f32.mrb[0].mxu0
      %3344 = vmatprep.mubr.f32.mxu0 0.0
      %3345 = vmatmul.mubr.f32.gmra.mrb[0].mxu0 %v3259
      %v3346 = vpop.f32.mrb[0].mxu0
      %v3347 = vadd.f32 0.0, %v3346
      %v3348 = vpop.f32.mrb[0].mxu0
      %3349 = vdwg.mxu0
      %v3350 = vmul.f32 %v3337, 0.35355338
      %v3351 = vmul.f32 %v3342, 0.35355338
      %v3352 = vmul.f32 %v3347, 0.35355338
      %v3353 = vsel %vm1067, %v3350, -1e+30
      %v3354 = vsel %vm1068, %v3351, -1e+30
      %v3355 = vsel %vm1069, %v3352, -1e+30
      %v3356 = vsel %vm1579, %v3353, -inf
      %3357 = vmax.xlane.f32.xlu0 %v3356
      %v3358 = vpop.xlane.xlu0 %3357
      %v3359 = vsel %vm1579, %v3354, -inf
      %3360 = vmax.xlane.f32.xlu0 %v3359
      %v3361 = vpop.xlane.xlu0 %3360
      %v3362 = vsel %vm1586, %v3355, -inf
      %3363 = vmax.xlane.f32.xlu0 %v3362
      %v3364 = vpop.xlane.xlu0 %3363
      %v3365 = vsub.f32 %v3353, %v3358
      %v3366 = vsub.f32 %v3354, %v3361
      %v3367 = vsub.f32 %v3355, %v3364
      %v3368 = vmul.f32 %v3365, 1.442695
      %v3369 = vpow.pop %v3368
      %v3370 = vmul.f32 %v3366, 1.442695
      %v3371 = vpow.pop %v3370
      %v3372 = vmul.f32 %v3367, 1.442695
      %v3373 = vpow.pop %v3372
      %v3374 = vsel %vm1579, %v3369, 0.0
      %3375 = vadd.xlane.f32.xlu0 %v3374
      %v3376 = vpop.xlane.xlu0 %3375
      %v3377 = vsel %vm1579, %v3371, 0.0
      %3378 = vadd.xlane.f32.xlu0 %v3377
      %v3379 = vpop.xlane.xlu0 %3378
      %v3380 = vsel %vm1586, %v3373, 0.0
      %3381 = vadd.xlane.f32.xlu0 %v3380
      %v3382 = vpop.xlane.xlu0 %3381
      %v3383 = vrcp.pop %v3376
      %v3384 = vrcp.pop %v3379
      %v3385 = vrcp.pop %v3382
      %v3386 = vmul.f32 %v3369, %v3383
      %v3387 = vmul.f32 %v3371, %v3384
      %v3388 = vmul.f32 %v3373, %v3385
      %v3389 = vmul.f32 %v3087, %v1023
      %v3390 = vmul.f32 %v3092, %v1023
      %v3391 = vmul.f32 %v3097, %v1023
      %v3393 = vsel %vm1579, %v3386, 0
      %v3396 = vsel %vm1579, %v3387, 0
      %v3399 = vsel %vm1579, %v3388, 0
      %v3402 = vsel %vm1772, %v3391, 0
      %3404 = vmatprep.subr.mxu0 0.0
      %3405 = vmatpush1.msra.mxu0 %v3389
      %3406 = vmatprep.subr.mxu0 0.0
      %3407 = vmatpush1.msra.mxu0 %v3390
      %3408 = vmatprep.subr.mxu0 0.0
      %3409 = vmatpush1.msra.mxu0 %v3402
      %3410 = vmatprep.subr.mxu0 0.0
      %3411 = vmatpush1.msra.mxu0 0.0
      %3412 = vmatprep.subr.mxu0 0.0
      %3413 = vmatpush1.msra.mxu0 0.0
      %3414 = vmatprep.subr.mxu0 0.0
      %3415 = vmatpush1.msra.mxu0 0.0
      %3416 = vmatprep.subr.mxu0 0.0
      %3417 = vmatpush1.msra.mxu0 0.0
      %3418 = vmatprep.subr.mxu0 0.0
      %3419 = vmatpush1.msra.mxu0 0.0
      %3420 = vmatprep.subr.mxu0 0.0
      %3421 = vmatpush1.msra.mxu0 0.0
      %3422 = vmatprep.subr.mxu0 0.0
      %3423 = vmatpush1.msra.mxu0 0.0
      %3424 = vmatprep.subr.mxu0 0.0
      %3425 = vmatpush1.msra.mxu0 0.0
      %3426 = vmatprep.subr.mxu0 0.0
      %3427 = vmatpush1.msra.mxu0 0.0
      %3428 = vmatprep.subr.mxu0 0.0
      %3429 = vmatpush1.msra.mxu0 0.0
      %3430 = vmatprep.subr.mxu0 0.0
      %3431 = vmatpush1.msra.mxu0 0.0
      %3432 = vmatprep.subr.mxu0 0.0
      %3433 = vmatpush1.msra.mxu0 0.0
      %3434 = vmatprep.subr.mxu0 0.0
      %3435 = vmatpush1.msra.mxu0 0.0
      %3436 = vmatprep.subr.mxu0 0.0
      %3437 = vmatpush1.msra.mxu0 0.0
      %3438 = vmatprep.subr.mxu0 0.0
      %3439 = vmatpush1.msra.mxu0 0.0
      %3440 = vmatprep.subr.mxu0 0.0
      %3441 = vmatpush1.msra.mxu0 0.0
      %3442 = vmatprep.subr.mxu0 0.0
      %3443 = vmatpush1.msra.mxu0 0.0
      %3444 = vmatprep.subr.mxu0 0.0
      %3445 = vmatpush1.msra.mxu0 0.0
      %3446 = vmatprep.subr.mxu0 0.0
      %3447 = vmatpush1.msra.mxu0 0.0
      %3448 = vmatprep.subr.mxu0 0.0
      %3449 = vmatpush1.msra.mxu0 0.0
      %3450 = vmatprep.subr.mxu0 0.0
      %3451 = vmatpush1.msra.mxu0 0.0
      %3452 = vmatprep.subr.mxu0 0.0
      %3453 = vmatpush1.msra.mxu0 0.0
      %3454 = vmatprep.subr.mxu0 0.0
      %3455 = vmatpush1.msra.mxu0 0.0
      %3456 = vmatprep.subr.mxu0 0.0
      %3457 = vmatpush1.msra.mxu0 0.0
      %3458 = vmatprep.subr.mxu0 0.0
      %3459 = vmatpush1.msra.mxu0 0.0
      %3460 = vmatprep.subr.mxu0 0.0
      %3461 = vmatpush1.msra.mxu0 0.0
      %3462 = vmatprep.subr.mxu0 0.0
      %3463 = vmatpush1.msra.mxu0 0.0
      %3464 = vmatprep.subr.mxu0 0.0
      %3465 = vmatpush1.msra.mxu0 0.0
      %3466 = vmatprep.subr.mxu0 0.0
      %3467 = vmatpush1.msra.mxu0 0.0
      %3468 = vmatprep.mubr.f32.mxu0 0.0
      %3469 = vmatmul.mubr.f32.gmra.mrb[0].mxu0 %v3393
      %v3470 = vpop.f32.mrb[0].mxu0
      %v3471 = vadd.f32 0.0, %v3470
      %v3472 = vpop.f32.mrb[0].mxu0
      %3473 = vmatprep.mubr.f32.mxu0 0.0
      %3474 = vmatmul.mubr.f32.gmra.mrb[0].mxu0 %v3396
      %v3475 = vpop.f32.mrb[0].mxu0
      %v3476 = vadd.f32 0.0, %v3475
      %v3477 = vpop.f32.mrb[0].mxu0
      %3478 = vmatprep.mubr.f32.mxu0 0.0
      %3479 = vmatmul.mubr.f32.gmra.mrb[0].mxu0 %v3399
      %v3480 = vpop.f32.mrb[0].mxu0
      %v3481 = vadd.f32 0.0, %v3480
      %v3482 = vpop.f32.mrb[0].mxu0
      %3483 = vdwg.mxu0
      %v3485 = vsel %vm1579, %v3240, 0
      %v3488 = vsel %vm1579, %v3241, 0
      %v3491 = vsel %vm1579, %v3242, 0
      %v3494 = vsel %vm1772, %v3245, 0
      %3496 = vmatprep.subr.mxu0 0.0
      %3497 = vmatpush1.msra.mxu0 %v3243
      %3498 = vmatprep.subr.mxu0 0.0
      %3499 = vmatpush1.msra.mxu0 %v3244
      %3500 = vmatprep.subr.mxu0 0.0
      %3501 = vmatpush1.msra.mxu0 %v3494
      %3502 = vmatprep.subr.mxu0 0.0
      %3503 = vmatpush1.msra.mxu0 0.0
      %3504 = vmatprep.subr.mxu0 0.0
      %3505 = vmatpush1.msra.mxu0 0.0
      %3506 = vmatprep.subr.mxu0 0.0
      %3507 = vmatpush1.msra.mxu0 0.0
      %3508 = vmatprep.subr.mxu0 0.0
      %3509 = vmatpush1.msra.mxu0 0.0
      %3510 = vmatprep.subr.mxu0 0.0
      %3511 = vmatpush1.msra.mxu0 0.0
      %3512 = vmatprep.subr.mxu0 0.0
      %3513 = vmatpush1.msra.mxu0 0.0
      %3514 = vmatprep.subr.mxu0 0.0
      %3515 = vmatpush1.msra.mxu0 0.0
      %3516 = vmatprep.subr.mxu0 0.0
      %3517 = vmatpush1.msra.mxu0 0.0
      %3518 = vmatprep.subr.mxu0 0.0
      %3519 = vmatpush1.msra.mxu0 0.0
      %3520 = vmatprep.subr.mxu0 0.0
      %3521 = vmatpush1.msra.mxu0 0.0
      %3522 = vmatprep.subr.mxu0 0.0
      %3523 = vmatpush1.msra.mxu0 0.0
      %3524 = vmatprep.subr.mxu0 0.0
      %3525 = vmatpush1.msra.mxu0 0.0
      %3526 = vmatprep.subr.mxu0 0.0
      %3527 = vmatpush1.msra.mxu0 0.0
      %3528 = vmatprep.subr.mxu0 0.0
      %3529 = vmatpush1.msra.mxu0 0.0
      %3530 = vmatprep.subr.mxu0 0.0
      %3531 = vmatpush1.msra.mxu0 0.0
      %3532 = vmatprep.subr.mxu0 0.0
      %3533 = vmatpush1.msra.mxu0 0.0
      %3534 = vmatprep.subr.mxu0 0.0
      %3535 = vmatpush1.msra.mxu0 0.0
      %3536 = vmatprep.subr.mxu0 0.0
      %3537 = vmatpush1.msra.mxu0 0.0
      %3538 = vmatprep.subr.mxu0 0.0
      %3539 = vmatpush1.msra.mxu0 0.0
      %3540 = vmatprep.subr.mxu0 0.0
      %3541 = vmatpush1.msra.mxu0 0.0
      %3542 = vmatprep.subr.mxu0 0.0
      %3543 = vmatpush1.msra.mxu0 0.0
      %3544 = vmatprep.subr.mxu0 0.0
      %3545 = vmatpush1.msra.mxu0 0.0
      %3546 = vmatprep.subr.mxu0 0.0
      %3547 = vmatpush1.msra.mxu0 0.0
      %3548 = vmatprep.subr.mxu0 0.0
      %3549 = vmatpush1.msra.mxu0 0.0
      %3550 = vmatprep.subr.mxu0 0.0
      %3551 = vmatpush1.msra.mxu0 0.0
      %3552 = vmatprep.subr.mxu0 0.0
      %3553 = vmatpush1.msra.mxu0 0.0
      %3554 = vmatprep.subr.mxu0 0.0
      %3555 = vmatpush1.msra.mxu0 0.0
      %3556 = vmatprep.subr.mxu0 0.0
      %3557 = vmatpush1.msra.mxu0 0.0
      %3558 = vmatprep.subr.mxu0 0.0
      %3559 = vmatpush1.msra.mxu0 0.0
      %3560 = vmatprep.mubr.f32.mxu0 0.0
      %3561 = vmatmul.mubr.f32.gmra.mrb[0].mxu0 %v3485
      %v3562 = vpop.f32.mrb[0].mxu0
      %v3563 = vadd.f32 %v3471, %v3562
      %v3564 = vpop.f32.mrb[0].mxu0
      %3565 = vmatprep.mubr.f32.mxu0 0.0
      %3566 = vmatmul.mubr.f32.gmra.mrb[0].mxu0 %v3488
      %v3567 = vpop.f32.mrb[0].mxu0
      %v3568 = vadd.f32 %v3476, %v3567
      %v3569 = vpop.f32.mrb[0].mxu0
      %3570 = vmatprep.mubr.f32.mxu0 0.0
      %3571 = vmatmul.mubr.f32.gmra.mrb[0].mxu0 %v3491
      %v3572 = vpop.f32.mrb[0].mxu0
      %v3573 = vadd.f32 %v3481, %v3572
      %v3574 = vpop.f32.mrb[0].mxu0
      %3575 = vdwg.mxu0
      %v3576 = vmul.f32 %v2919, %v1028
      %v3577 = vmul.f32 %v2924, %v1028
      %v3578 = vmul.f32 %v2929, %v1028
      %v3579 = vmul.f32 %v3003, %v1028
      %v3580 = vmul.f32 %v3008, %v1028
      %v3581 = vmul.f32 %v3013, %v1028
      %v3583 = vsel %vm1152, %v3576, 0
      %v3586 = vsel %vm1152, %v3577, 0
      %v3589 = vsel %vm1152, %v3578, 0
      %v3592 = vsel %vm1152, %v3579, 0
      %v3595 = vsel %vm1152, %v3580, 0
      %v3598 = vsel %vm1152, %v3581, 0
      %3600 = vmatprep.subr.mxu0 0.0
      %3601 = vmatpush1.xpose.msra.mxu0 %v3592
      %3602 = vmatprep.subr.mxu0 0.0
      %3603 = vmatpush1.xpose.msra.mxu0 %v3595
      %3604 = vmatprep.subr.mxu0 0.0
      %3605 = vmatpush1.xpose.msra.mxu0 %v3598
      %3606 = vmatprep.subr.mxu0 0.0
      %3607 = vmatpush1.xpose.msra.mxu0 0.0
      %3608 = vmatprep.subr.mxu0 0.0
      %3609 = vmatpush1.xpose.msra.mxu0 0.0
      %3610 = vmatprep.subr.mxu0 0.0
      %3611 = vmatpush1.xpose.msra.mxu0 0.0
      %3612 = vmatprep.subr.mxu0 0.0
      %3613 = vmatpush1.xpose.msra.mxu0 0.0
      %3614 = vmatprep.subr.mxu0 0.0
      %3615 = vmatpush1.xpose.msra.mxu0 0.0
      %3616 = vmatprep.subr.mxu0 0.0
      %3617 = vmatpush1.xpose.msra.mxu0 0.0
      %3618 = vmatprep.subr.mxu0 0.0
      %3619 = vmatpush1.xpose.msra.mxu0 0.0
      %3620 = vmatprep.subr.mxu0 0.0
      %3621 = vmatpush1.xpose.msra.mxu0 0.0
      %3622 = vmatprep.subr.mxu0 0.0
      %3623 = vmatpush1.xpose.msra.mxu0 0.0
      %3624 = vmatprep.subr.mxu0 0.0
      %3625 = vmatpush1.xpose.msra.mxu0 0.0
      %3626 = vmatprep.subr.mxu0 0.0
      %3627 = vmatpush1.xpose.msra.mxu0 0.0
      %3628 = vmatprep.subr.mxu0 0.0
      %3629 = vmatpush1.xpose.msra.mxu0 0.0
      %3630 = vmatprep.subr.mxu0 0.0
      %3631 = vmatpush1.xpose.msra.mxu0 0.0
      %3632 = vmatprep.subr.mxu0 0.0
      %3633 = vmatpush1.xpose.msra.mxu0 0.0
      %3634 = vmatprep.subr.mxu0 0.0
      %3635 = vmatpush1.xpose.msra.mxu0 0.0
      %3636 = vmatprep.subr.mxu0 0.0
      %3637 = vmatpush1.xpose.msra.mxu0 0.0
      %3638 = vmatprep.subr.mxu0 0.0
      %3639 = vmatpush1.xpose.msra.mxu0 0.0
      %3640 = vmatprep.subr.mxu0 0.0
      %3641 = vmatpush1.xpose.msra.mxu0 0.0
      %3642 = vmatprep.subr.mxu0 0.0
      %3643 = vmatpush1.xpose.msra.mxu0 0.0
      %3644 = vmatprep.subr.mxu0 0.0
      %3645 = vmatpush1.xpose.msra.mxu0 0.0
      %3646 = vmatprep.subr.mxu0 0.0
      %3647 = vmatpush1.xpose.msra.mxu0 0.0
      %3648 = vmatprep.subr.mxu0 0.0
      %3649 = vmatpush1.xpose.msra.mxu0 0.0
      %3650 = vmatprep.subr.mxu0 0.0
      %3651 = vmatpush1.xpose.msra.mxu0 0.0
      %3652 = vmatprep.subr.mxu0 0.0
      %3653 = vmatpush1.xpose.msra.mxu0 0.0
      %3654 = vmatprep.subr.mxu0 0.0
      %3655 = vmatpush1.xpose.msra.mxu0 0.0
      %3656 = vmatprep.subr.mxu0 0.0
      %3657 = vmatpush1.xpose.msra.mxu0 0.0
      %3658 = vmatprep.subr.mxu0 0.0
      %3659 = vmatpush1.xpose.msra.mxu0 0.0
      %3660 = vmatprep.subr.mxu0 0.0
      %3661 = vmatpush1.xpose.msra.mxu0 0.0
      %3662 = vmatprep.subr.mxu0 0.0
      %3663 = vmatpush1.xpose.msra.mxu0 0.0
      %3664 = vmatprep.mubr.f32.mxu0 0.0
      %3665 = vmatmul.mubr.f32.gmra.mrb[0].mxu0 %v3583
      %v3666 = vpop.f32.mrb[0].mxu0
      %v3667 = vadd.f32 0.0, %v3666
      %v3668 = vpop.f32.mrb[0].mxu0
      %3669 = vmatprep.mubr.f32.mxu0 0.0
      %3670 = vmatmul.mubr.f32.gmra.mrb[0].mxu0 %v3586
      %v3671 = vpop.f32.mrb[0].mxu0
      %v3672 = vadd.f32 0.0, %v3671
      %v3673 = vpop.f32.mrb[0].mxu0
      %3674 = vmatprep.mubr.f32.mxu0 0.0
      %3675 = vmatmul.mubr.f32.gmra.mrb[0].mxu0 %v3589
      %v3676 = vpop.f32.mrb[0].mxu0
      %v3677 = vadd.f32 0.0, %v3676
      %v3678 = vpop.f32.mrb[0].mxu0
      %3679 = vdwg.mxu0
      %v3680 = vmul.f32 %v3667, 0.35355338
      %v3681 = vmul.f32 %v3672, 0.35355338
      %v3682 = vmul.f32 %v3677, 0.35355338
      %v3683 = vsel %vm1067, %v3680, -1e+30
      %v3684 = vsel %vm1068, %v3681, -1e+30
      %v3685 = vsel %vm1069, %v3682, -1e+30
      %v3686 = vsel %vm1579, %v3683, -inf
      %3687 = vmax.xlane.f32.xlu0 %v3686
      %v3688 = vpop.xlane.xlu0 %3687
      %v3689 = vsel %vm1579, %v3684, -inf
      %3690 = vmax.xlane.f32.xlu0 %v3689
      %v3691 = vpop.xlane.xlu0 %3690
      %v3692 = vsel %vm1586, %v3685, -inf
      %3693 = vmax.xlane.f32.xlu0 %v3692
      %v3694 = vpop.xlane.xlu0 %3693
      %v3695 = vsub.f32 %v3683, %v3688
      %v3696 = vsub.f32 %v3684, %v3691
      %v3697 = vsub.f32 %v3685, %v3694
      %v3698 = vmul.f32 %v3695, 1.442695
      %v3699 = vpow.pop %v3698
      %v3700 = vmul.f32 %v3696, 1.442695
      %v3701 = vpow.pop %v3700
      %v3702 = vmul.f32 %v3697, 1.442695
      %v3703 = vpow.pop %v3702
      %v3704 = vsel %vm1579, %v3699, 0.0
      %3705 = vadd.xlane.f32.xlu0 %v3704
      %v3706 = vpop.xlane.xlu0 %3705
      %v3707 = vsel %vm1579, %v3701, 0.0
      %3708 = vadd.xlane.f32.xlu0 %v3707
      %v3709 = vpop.xlane.xlu0 %3708
      %v3710 = vsel %vm1586, %v3703, 0.0
      %3711 = vadd.xlane.f32.xlu0 %v3710
      %v3712 = vpop.xlane.xlu0 %3711
      %v3713 = vrcp.pop %v3706
      %v3714 = vrcp.pop %v3709
      %v3715 = vrcp.pop %v3712
      %v3716 = vmul.f32 %v3699, %v3713
      %v3717 = vmul.f32 %v3701, %v3714
      %v3718 = vmul.f32 %v3703, %v3715
      %v3719 = vmul.f32 %v3087, %v1028
      %v3720 = vmul.f32 %v3092, %v1028
      %v3721 = vmul.f32 %v3097, %v1028
      %v3723 = vsel %vm1579, %v3716, 0
      %v3726 = vsel %vm1579, %v3717, 0
      %v3729 = vsel %vm1579, %v3718, 0
      %v3732 = vsel %vm1772, %v3721, 0
      %3734 = vmatprep.subr.mxu0 0.0
      %3735 = vmatpush1.msra.mxu0 %v3719
      %3736 = vmatprep.subr.mxu0 0.0
      %3737 = vmatpush1.msra.mxu0 %v3720
      %3738 = vmatprep.subr.mxu0 0.0
      %3739 = vmatpush1.msra.mxu0 %v3732
      %3740 = vmatprep.subr.mxu0 0.0
      %3741 = vmatpush1.msra.mxu0 0.0
      %3742 = vmatprep.subr.mxu0 0.0
      %3743 = vmatpush1.msra.mxu0 0.0
      %3744 = vmatprep.subr.mxu0 0.0
      %3745 = vmatpush1.msra.mxu0 0.0
      %3746 = vmatprep.subr.mxu0 0.0
      %3747 = vmatpush1.msra.mxu0 0.0
      %3748 = vmatprep.subr.mxu0 0.0
      %3749 = vmatpush1.msra.mxu0 0.0
      %3750 = vmatprep.subr.mxu0 0.0
      %3751 = vmatpush1.msra.mxu0 0.0
      %3752 = vmatprep.subr.mxu0 0.0
      %3753 = vmatpush1.msra.mxu0 0.0
      %3754 = vmatprep.subr.mxu0 0.0
      %3755 = vmatpush1.msra.mxu0 0.0
      %3756 = vmatprep.subr.mxu0 0.0
      %3757 = vmatpush1.msra.mxu0 0.0
      %3758 = vmatprep.subr.mxu0 0.0
      %3759 = vmatpush1.msra.mxu0 0.0
      %3760 = vmatprep.subr.mxu0 0.0
      %3761 = vmatpush1.msra.mxu0 0.0
      %3762 = vmatprep.subr.mxu0 0.0
      %3763 = vmatpush1.msra.mxu0 0.0
      %3764 = vmatprep.subr.mxu0 0.0
      %3765 = vmatpush1.msra.mxu0 0.0
      %3766 = vmatprep.subr.mxu0 0.0
      %3767 = vmatpush1.msra.mxu0 0.0
      %3768 = vmatprep.subr.mxu0 0.0
      %3769 = vmatpush1.msra.mxu0 0.0
      %3770 = vmatprep.subr.mxu0 0.0
      %3771 = vmatpush1.msra.mxu0 0.0
      %3772 = vmatprep.subr.mxu0 0.0
      %3773 = vmatpush1.msra.mxu0 0.0
      %3774 = vmatprep.subr.mxu0 0.0
      %3775 = vmatpush1.msra.mxu0 0.0
      %3776 = vmatprep.subr.mxu0 0.0
      %3777 = vmatpush1.msra.mxu0 0.0
      %3778 = vmatprep.subr.mxu0 0.0
      %3779 = vmatpush1.msra.mxu0 0.0
      %3780 = vmatprep.subr.mxu0 0.0
      %3781 = vmatpush1.msra.mxu0 0.0
      %3782 = vmatprep.subr.mxu0 0.0
      %3783 = vmatpush1.msra.mxu0 0.0
      %3784 = vmatprep.subr.mxu0 0.0
      %3785 = vmatpush1.msra.mxu0 0.0
      %3786 = vmatprep.subr.mxu0 0.0
      %3787 = vmatpush1.msra.mxu0 0.0
      %3788 = vmatprep.subr.mxu0 0.0
      %3789 = vmatpush1.msra.mxu0 0.0
      %3790 = vmatprep.subr.mxu0 0.0
      %3791 = vmatpush1.msra.mxu0 0.0
      %3792 = vmatprep.subr.mxu0 0.0
      %3793 = vmatpush1.msra.mxu0 0.0
      %3794 = vmatprep.subr.mxu0 0.0
      %3795 = vmatpush1.msra.mxu0 0.0
      %3796 = vmatprep.subr.mxu0 0.0
      %3797 = vmatpush1.msra.mxu0 0.0
      %3798 = vmatprep.mubr.f32.mxu0 0.0
      %3799 = vmatmul.mubr.f32.gmra.mrb[0].mxu0 %v3723
      %v3800 = vpop.f32.mrb[0].mxu0
      %v3801 = vadd.f32 0.0, %v3800
      %v3802 = vpop.f32.mrb[0].mxu0
      %3803 = vmatprep.mubr.f32.mxu0 0.0
      %3804 = vmatmul.mubr.f32.gmra.mrb[0].mxu0 %v3726
      %v3805 = vpop.f32.mrb[0].mxu0
      %v3806 = vadd.f32 0.0, %v3805
      %v3807 = vpop.f32.mrb[0].mxu0
      %3808 = vmatprep.mubr.f32.mxu0 0.0
      %3809 = vmatmul.mubr.f32.gmra.mrb[0].mxu0 %v3729
      %v3810 = vpop.f32.mrb[0].mxu0
      %v3811 = vadd.f32 0.0, %v3810
      %v3812 = vpop.f32.mrb[0].mxu0
      %3813 = vdwg.mxu0
      %v3814 = vadd.f32 %v3563, %v3801
      %v3815 = vadd.f32 %v3568, %v3806
      %v3816 = vadd.f32 %v3573, %v3811
      %v3817 = vmul.f32 %v2919, %v1033
      %v3818 = vmul.f32 %v2924, %v1033
      %v3819 = vmul.f32 %v2929, %v1033
      %v3820 = vmul.f32 %v3003, %v1033
      %v3821 = vmul.f32 %v3008, %v1033
      %v3822 = vmul.f32 %v3013, %v1033
      %v3824 = vsel %vm1152, %v3817, 0
      %v3827 = vsel %vm1152, %v3818, 0
      %v3830 = vsel %vm1152, %v3819, 0
      %v3833 = vsel %vm1152, %v3820, 0
      %v3836 = vsel %vm1152, %v3821, 0
      %v3839 = vsel %vm1152, %v3822, 0
      %3841 = vmatprep.subr.mxu0 0.0
      %3842 = vmatpush1.xpose.msra.mxu0 %v3833
      %3843 = vmatprep.subr.mxu0 0.0
      %3844 = vmatpush1.xpose.msra.mxu0 %v3836
      %3845 = vmatprep.subr.mxu0 0.0
      %3846 = vmatpush1.xpose.msra.mxu0 %v3839
      %3847 = vmatprep.subr.mxu0 0.0
      %3848 = vmatpush1.xpose.msra.mxu0 0.0
      %3849 = vmatprep.subr.mxu0 0.0
      %3850 = vmatpush1.xpose.msra.mxu0 0.0
      %3851 = vmatprep.subr.mxu0 0.0
      %3852 = vmatpush1.xpose.msra.mxu0 0.0
      %3853 = vmatprep.subr.mxu0 0.0
      %3854 = vmatpush1.xpose.msra.mxu0 0.0
      %3855 = vmatprep.subr.mxu0 0.0
      %3856 = vmatpush1.xpose.msra.mxu0 0.0
      %3857 = vmatprep.subr.mxu0 0.0
      %3858 = vmatpush1.xpose.msra.mxu0 0.0
      %3859 = vmatprep.subr.mxu0 0.0
      %3860 = vmatpush1.xpose.msra.mxu0 0.0
      %3861 = vmatprep.subr.mxu0 0.0
      %3862 = vmatpush1.xpose.msra.mxu0 0.0
      %3863 = vmatprep.subr.mxu0 0.0
      %3864 = vmatpush1.xpose.msra.mxu0 0.0
      %3865 = vmatprep.subr.mxu0 0.0
      %3866 = vmatpush1.xpose.msra.mxu0 0.0
      %3867 = vmatprep.subr.mxu0 0.0
      %3868 = vmatpush1.xpose.msra.mxu0 0.0
      %3869 = vmatprep.subr.mxu0 0.0
      %3870 = vmatpush1.xpose.msra.mxu0 0.0
      %3871 = vmatprep.subr.mxu0 0.0
      %3872 = vmatpush1.xpose.msra.mxu0 0.0
      %3873 = vmatprep.subr.mxu0 0.0
      %3874 = vmatpush1.xpose.msra.mxu0 0.0
      %3875 = vmatprep.subr.mxu0 0.0
      %3876 = vmatpush1.xpose.msra.mxu0 0.0
      %3877 = vmatprep.subr.mxu0 0.0
      %3878 = vmatpush1.xpose.msra.mxu0 0.0
      %3879 = vmatprep.subr.mxu0 0.0
      %3880 = vmatpush1.xpose.msra.mxu0 0.0
      %3881 = vmatprep.subr.mxu0 0.0
      %3882 = vmatpush1.xpose.msra.mxu0 0.0
      %3883 = vmatprep.subr.mxu0 0.0
      %3884 = vmatpush1.xpose.msra.mxu0 0.0
      %3885 = vmatprep.subr.mxu0 0.0
      %3886 = vmatpush1.xpose.msra.mxu0 0.0
      %3887 = vmatprep.subr.mxu0 0.0
      %3888 = vmatpush1.xpose.msra.mxu0 0.0
      %3889 = vmatprep.subr.mxu0 0.0
      %3890 = vmatpush1.xpose.msra.mxu0 0.0
      %3891 = vmatprep.subr.mxu0 0.0
      %3892 = vmatpush1.xpose.msra.mxu0 0.0
      %3893 = vmatprep.subr.mxu0 0.0
      %3894 = vmatpush1.xpose.msra.mxu0 0.0
      %3895 = vmatprep.subr.mxu0 0.0
      %3896 = vmatpush1.xpose.msra.mxu0 0.0
      %3897 = vmatprep.subr.mxu0 0.0
      %3898 = vmatpush1.xpose.msra.mxu0 0.0
      %3899 = vmatprep.subr.mxu0 0.0
      %3900 = vmatpush1.xpose.msra.mxu0 0.0
      %3901 = vmatprep.subr.mxu0 0.0
      %3902 = vmatpush1.xpose.msra.mxu0 0.0
      %3903 = vmatprep.subr.mxu0 0.0
      %3904 = vmatpush1.xpose.msra.mxu0 0.0
      %3905 = vmatprep.mubr.f32.mxu0 0.0
      %3906 = vmatmul.mubr.f32.gmra.mrb[0].mxu0 %v3824
      %v3907 = vpop.f32.mrb[0].mxu0
      %v3908 = vadd.f32 0.0, %v3907
      %v3909 = vpop.f32.mrb[0].mxu0
      %3910 = vmatprep.mubr.f32.mxu0 0.0
      %3911 = vmatmul.mubr.f32.gmra.mrb[0].mxu0 %v3827
      %v3912 = vpop.f32.mrb[0].mxu0
      %v3913 = vadd.f32 0.0, %v3912
      %v3914 = vpop.f32.mrb[0].mxu0
      %3915 = vmatprep.mubr.f32.mxu0 0.0
      %3916 = vmatmul.mubr.f32.gmra.mrb[0].mxu0 %v3830
      %v3917 = vpop.f32.mrb[0].mxu0
      %v3918 = vadd.f32 0.0, %v3917
      %v3919 = vpop.f32.mrb[0].mxu0
      %3920 = vdwg.mxu0
      %v3921 = vmul.f32 %v3908, 0.35355338
      %v3922 = vmul.f32 %v3913, 0.35355338
      %v3923 = vmul.f32 %v3918, 0.35355338
      %v3924 = vsel %vm1067, %v3921, -1e+30
      %v3925 = vsel %vm1068, %v3922, -1e+30
      %v3926 = vsel %vm1069, %v3923, -1e+30
      %v3927 = vsel %vm1579, %v3924, -inf
      %3928 = vmax.xlane.f32.xlu0 %v3927
      %v3929 = vpop.xlane.xlu0 %3928
      %v3930 = vsel %vm1579, %v3925, -inf
      %3931 = vmax.xlane.f32.xlu0 %v3930
      %v3932 = vpop.xlane.xlu0 %3931
      %v3933 = vsel %vm1586, %v3926, -inf
      %3934 = vmax.xlane.f32.xlu0 %v3933
      %v3935 = vpop.xlane.xlu0 %3934
      %v3936 = vsub.f32 %v3924, %v3929
      %v3937 = vsub.f32 %v3925, %v3932
      %v3938 = vsub.f32 %v3926, %v3935
      %v3939 = vmul.f32 %v3936, 1.442695
      %v3940 = vpow.pop %v3939
      %v3941 = vmul.f32 %v3937, 1.442695
      %v3942 = vpow.pop %v3941
      %v3943 = vmul.f32 %v3938, 1.442695
      %v3944 = vpow.pop %v3943
      %v3945 = vsel %vm1579, %v3940, 0.0
      %3946 = vadd.xlane.f32.xlu0 %v3945
      %v3947 = vpop.xlane.xlu0 %3946
      %v3948 = vsel %vm1579, %v3942, 0.0
      %3949 = vadd.xlane.f32.xlu0 %v3948
      %v3950 = vpop.xlane.xlu0 %3949
      %v3951 = vsel %vm1586, %v3944, 0.0
      %3952 = vadd.xlane.f32.xlu0 %v3951
      %v3953 = vpop.xlane.xlu0 %3952
      %v3954 = vrcp.pop %v3947
      %v3955 = vrcp.pop %v3950
      %v3956 = vrcp.pop %v3953
      %v3957 = vmul.f32 %v3940, %v3954
      %v3958 = vmul.f32 %v3942, %v3955
      %v3959 = vmul.f32 %v3944, %v3956
      %v3960 = vmul.f32 %v3087, %v1033
      %v3961 = vmul.f32 %v3092, %v1033
      %v3962 = vmul.f32 %v3097, %v1033
      %v3964 = vsel %vm1579, %v3957, 0
      %v3967 = vsel %vm1579, %v3958, 0
      %v3970 = vsel %vm1579, %v3959, 0
      %v3973 = vsel %vm1772, %v3962, 0
      %3975 = vmatprep.subr.mxu0 0.0
      %3976 = vmatpush1.msra.mxu0 %v3960
      %3977 = vmatprep.subr.mxu0 0.0
      %3978 = vmatpush1.msra.mxu0 %v3961
      %3979 = vmatprep.subr.mxu0 0.0
      %3980 = vmatpush1.msra.mxu0 %v3973
      %3981 = vmatprep.subr.mxu0 0.0
      %3982 = vmatpush1.msra.mxu0 0.0
      %3983 = vmatprep.subr.mxu0 0.0
      %3984 = vmatpush1.msra.mxu0 0.0
      %3985 = vmatprep.subr.mxu0 0.0
      %3986 = vmatpush1.msra.mxu0 0.0
      %3987 = vmatprep.subr.mxu0 0.0
      %3988 = vmatpush1.msra.mxu0 0.0
      %3989 = vmatprep.subr.mxu0 0.0
      %3990 = vmatpush1.msra.mxu0 0.0
      %3991 = vmatprep.subr.mxu0 0.0
      %3992 = vmatpush1.msra.mxu0 0.0
      %3993 = vmatprep.subr.mxu0 0.0
      %3994 = vmatpush1.msra.mxu0 0.0
      %3995 = vmatprep.subr.mxu0 0.0
      %3996 = vmatpush1.msra.mxu0 0.0
      %3997 = vmatprep.subr.mxu0 0.0
      %3998 = vmatpush1.msra.mxu0 0.0
      %3999 = vmatprep.subr.mxu0 0.0
      %4000 = vmatpush1.msra.mxu0 0.0
      %4001 = vmatprep.subr.mxu0 0.0
      %4002 = vmatpush1.msra.mxu0 0.0
      %4003 = vmatprep.subr.mxu0 0.0
      %4004 = vmatpush1.msra.mxu0 0.0
      %4005 = vmatprep.subr.mxu0 0.0
      %4006 = vmatpush1.msra.mxu0 0.0
      %4007 = vmatprep.subr.mxu0 0.0
      %4008 = vmatpush1.msra.mxu0 0.0
      %4009 = vmatprep.subr.mxu0 0.0
      %4010 = vmatpush1.msra.mxu0 0.0
      %4011 = vmatprep.subr.mxu0 0.0
      %4012 = vmatpush1.msra.mxu0 0.0
      %4013 = vmatprep.subr.mxu0 0.0
      %4014 = vmatpush1.msra.mxu0 0.0
      %4015 = vmatprep.subr.mxu0 0.0
      %4016 = vmatpush1.msra.mxu0 0.0
      %4017 = vmatprep.subr.mxu0 0.0
      %4018 = vmatpush1.msra.mxu0 0.0
      %4019 = vmatprep.subr.mxu0 0.0
      %4020 = vmatpush1.msra.mxu0 0.0
      %4021 = vmatprep.subr.mxu0 0.0
      %4022 = vmatpush1.msra.mxu0 0.0
      %4023 = vmatprep.subr.mxu0 0.0
      %4024 = vmatpush1.msra.mxu0 0.0
      %4025 = vmatprep.subr.mxu0 0.0
      %4026 = vmatpush1.msra.mxu0 0.0
      %4027 = vmatprep.subr.mxu0 0.0
      %4028 = vmatpush1.msra.mxu0 0.0
      %4029 = vmatprep.subr.mxu0 0.0
      %4030 = vmatpush1.msra.mxu0 0.0
      %4031 = vmatprep.subr.mxu0 0.0
      %4032 = vmatpush1.msra.mxu0 0.0
      %4033 = vmatprep.subr.mxu0 0.0
      %4034 = vmatpush1.msra.mxu0 0.0
      %4035 = vmatprep.subr.mxu0 0.0
      %4036 = vmatpush1.msra.mxu0 0.0
      %4037 = vmatprep.subr.mxu0 0.0
      %4038 = vmatpush1.msra.mxu0 0.0
      %4039 = vmatprep.mubr.f32.mxu0 0.0
      %4040 = vmatmul.mubr.f32.gmra.mrb[0].mxu0 %v3964
      %v4041 = vpop.f32.mrb[0].mxu0
      %v4042 = vadd.f32 0.0, %v4041
      %v4043 = vpop.f32.mrb[0].mxu0
      %4044 = vmatprep.mubr.f32.mxu0 0.0
      %4045 = vmatmul.mubr.f32.gmra.mrb[0].mxu0 %v3967
      %v4046 = vpop.f32.mrb[0].mxu0
      %v4047 = vadd.f32 0.0, %v4046
      %v4048 = vpop.f32.mrb[0].mxu0
      %4049 = vmatprep.mubr.f32.mxu0 0.0
      %4050 = vmatmul.mubr.f32.gmra.mrb[0].mxu0 %v3970
      %v4051 = vpop.f32.mrb[0].mxu0
      %v4052 = vadd.f32 0.0, %v4051
      %v4053 = vpop.f32.mrb[0].mxu0
      %4054 = vdwg.mxu0
      %v4055 = vadd.f32 %v3814, %v4042
      %v4056 = vadd.f32 %v3815, %v4047
      %v4057 = vadd.f32 %v3816, %v4052
      %v4058 = vlaneseq
      %v4059 = vshrl.u32 %v4058, 7
      %v4060 = vsub.s32 1, %v4059
      %v4061 = vrot.slane %v1109, %v4060
      %v4063 = vsel %vm1152, %v4055, 0
      %v4066 = vsel %vm1152, %v4056, 0
      %v4069 = vsel %vm1152, %v4057, 0
      %4071 = vmatprep.subr.mxu0 0.0
      %4072 = vmatpush1.msra.mxu0 %v1105
      %4073 = vmatprep.subr.mxu0 0.0
      %4074 = vmatpush1.msra.mxu0 %v1106
      %4075 = vmatprep.subr.mxu0 0.0
      %4076 = vmatpush1.msra.mxu0 %v1107
      %4077 = vmatprep.subr.mxu0 0.0
      %4078 = vmatpush1.msra.mxu0 %v1108
      %4079 = vmatprep.subr.mxu0 0.0
      %4080 = vmatpush1.msra.mxu0 0.0
      %4081 = vmatprep.subr.mxu0 0.0
      %4082 = vmatpush1.msra.mxu0 0.0
      %4083 = vmatprep.subr.mxu0 0.0
      %4084 = vmatpush1.msra.mxu0 0.0
      %4085 = vmatprep.subr.mxu0 0.0
      %4086 = vmatpush1.msra.mxu0 0.0
      %4087 = vmatprep.subr.mxu0 0.0
      %4088 = vmatpush1.msra.mxu0 0.0
      %4089 = vmatprep.subr.mxu0 0.0
      %4090 = vmatpush1.msra.mxu0 0.0
      %4091 = vmatprep.subr.mxu0 0.0
      %4092 = vmatpush1.msra.mxu0 0.0
      %4093 = vmatprep.subr.mxu0 0.0
      %4094 = vmatpush1.msra.mxu0 0.0
      %4095 = vmatprep.subr.mxu0 0.0
      %4096 = vmatpush1.msra.mxu0 0.0
      %4097 = vmatprep.subr.mxu0 0.0
      %4098 = vmatpush1.msra.mxu0 0.0
      %4099 = vmatprep.subr.mxu0 0.0
      %4100 = vmatpush1.msra.mxu0 0.0
      %4101 = vmatprep.subr.mxu0 0.0
      %4102 = vmatpush1.msra.mxu0 0.0
      %4103 = vmatprep.subr.mxu0 0.0
      %4104 = vmatpush1.msra.mxu0 0.0
      %4105 = vmatprep.subr.mxu0 0.0
      %4106 = vmatpush1.msra.mxu0 0.0
      %4107 = vmatprep.subr.mxu0 0.0
      %4108 = vmatpush1.msra.mxu0 0.0
      %4109 = vmatprep.subr.mxu0 0.0
      %4110 = vmatpush1.msra.mxu0 0.0
      %4111 = vmatprep.subr.mxu0 0.0
      %4112 = vmatpush1.msra.mxu0 0.0
      %4113 = vmatprep.subr.mxu0 0.0
      %4114 = vmatpush1.msra.mxu0 0.0
      %4115 = vmatprep.subr.mxu0 0.0
      %4116 = vmatpush1.msra.mxu0 0.0
      %4117 = vmatprep.subr.mxu0 0.0
      %4118 = vmatpush1.msra.mxu0 0.0
      %4119 = vmatprep.subr.mxu0 0.0
      %4120 = vmatpush1.msra.mxu0 0.0
      %4121 = vmatprep.subr.mxu0 0.0
      %4122 = vmatpush1.msra.mxu0 0.0
      %4123 = vmatprep.subr.mxu0 0.0
      %4124 = vmatpush1.msra.mxu0 0.0
      %4125 = vmatprep.subr.mxu0 0.0
      %4126 = vmatpush1.msra.mxu0 0.0
      %4127 = vmatprep.subr.mxu0 0.0
      %4128 = vmatpush1.msra.mxu0 0.0
      %4129 = vmatprep.subr.mxu0 0.0
      %4130 = vmatpush1.msra.mxu0 0.0
      %4131 = vmatprep.subr.mxu0 0.0
      %4132 = vmatpush1.msra.mxu0 0.0
      %4133 = vmatprep.subr.mxu0 0.0
      %4134 = vmatpush1.msra.mxu0 0.0
      %4135 = vmatprep.mubr.f32.mxu0 0.0
      %4136 = vmatmul.mubr.f32.gmra.mrb[0].mxu0 %v4063
      %v4137 = vpop.f32.mrb[0].mxu0
      %v4138 = vadd.f32 %v4061, %v4137
      %v4139 = vpop.f32.mrb[0].mxu0
      %4140 = vmatprep.mubr.f32.mxu0 0.0
      %4141 = vmatmul.mubr.f32.gmra.mrb[0].mxu0 %v4066
      %v4142 = vpop.f32.mrb[0].mxu0
      %v4143 = vadd.f32 %v4061, %v4142
      %v4144 = vpop.f32.mrb[0].mxu0
      %4145 = vmatprep.mubr.f32.mxu0 0.0
      %4146 = vmatmul.mubr.f32.gmra.mrb[0].mxu0 %v4069
      %v4147 = vpop.f32.mrb[0].mxu0
      %v4148 = vadd.f32 %v4061, %v4147
      %v4149 = vpop.f32.mrb[0].mxu0
      %4150 = vdwg.mxu0
      %v4151 = vadd.f32 %v2783, %v4138
      %v4152 = vadd.f32 %v2784, %v4143
      %v4153 = vadd.f32 %v2785, %v4148
      %v4154 = vsel %vm1152, %v4151, 0.0
      %4155 = vadd.xlane.f32.xlu0 %v4154
      %v4156 = vpop.xlane.xlu0 %4155
      %v4157 = vsel %vm1152, %v4152, 0.0
      %4158 = vadd.xlane.f32.xlu0 %v4157
      %v4159 = vpop.xlane.xlu0 %4158
      %v4160 = vsel %vm1159, %v4153, 0.0
      %4161 = vadd.xlane.f32.xlu0 %v4160
      %v4162 = vpop.xlane.xlu0 %4161
      %v4163 = vmul.f32 %v4156, %v1163
      %v4164 = vmul.f32 %v4159, %v1163
      %v4165 = vmul.f32 %v4162, %v1163
      %v4166 = vsub.f32 %v4151, %v4163
      %v4167 = vsub.f32 %v4152, %v4164
      %v4168 = vsub.f32 %v4153, %v4165
      %v4169 = vmul.f32 %v4166, %v4166
      %v4170 = vmul.f32 %v4167, %v4167
      %v4171 = vmul.f32 %v4168, %v4168
      %v4172 = vsel %vm1152, %v4169, 0.0
      %4173 = vadd.xlane.f32.xlu0 %v4172
      %v4174 = vpop.xlane.xlu0 %4173
      %v4175 = vsel %vm1152, %v4170, 0.0
      %4176 = vadd.xlane.f32.xlu0 %v4175
      %v4177 = vpop.xlane.xlu0 %4176
      %v4178 = vsel %vm1159, %v4171, 0.0
      %4179 = vadd.xlane.f32.xlu0 %v4178
      %v4180 = vpop.xlane.xlu0 %4179
      %v4181 = vmul.f32 %v4174, %v1163
      %v4182 = vmul.f32 %v4177, %v1163
      %v4183 = vmul.f32 %v4180, %v1163
      %v4184 = vadd.f32 %v4181, 1e-05
      %v4185 = vadd.f32 %v4182, 1e-05
      %v4186 = vadd.f32 %v4183, 1e-05
      %v4187 = vrsqrt.pop %v4184
      %v4188 = vrsqrt.pop %v4185
      %v4189 = vrsqrt.pop %v4186
      %v4190 = vmul.f32 %v4166, %v4187
      %v4191 = vmul.f32 %v4167, %v4188
      %v4192 = vmul.f32 %v4168, %v4189
      %v4193 = vlaneseq
      %v4194 = vshrl.u32 %v4193, 7
      %v4195 = vsub.s32 1, %v4194
      %v4196 = vrot.slane %v1072, %v4195
      %v4197 = vmul.f32 %v4190, %v4196
      %v4198 = vmul.f32 %v4191, %v4196
      %v4199 = vmul.f32 %v4192, %v4196
      %v4200 = vlaneseq
      %v4201 = vshrl.u32 %v4200, 7
      %v4202 = vsub.s32 1, %v4201
      %v4203 = vrot.slane %v1073, %v4202
      %v4204 = vadd.f32 %v4197, %v4203
      %v4205 = vadd.f32 %v4198, %v4203
      %v4206 = vadd.f32 %v4199, %v4203
      %v4207 = vlaneseq
      %v4208 = vshrl.u32 %v4207, 7
      %v4209 = vsub.s32 1, %v4208
      %v4210 = vrot.slane %v1118, %v4209
      %v4212 = vsel %vm1152, %v4204, 0
      %v4215 = vsel %vm1152, %v4205, 0
      %v4218 = vsel %vm1152, %v4206, 0
      %4220 = vmatprep.subr.mxu0 0.0
      %4221 = vmatpush1.msra.mxu0 %v1114
      %4222 = vmatprep.subr.mxu0 0.0
      %4223 = vmatpush1.msra.mxu0 %v1115
      %4224 = vmatprep.subr.mxu0 0.0
      %4225 = vmatpush1.msra.mxu0 %v1116
      %4226 = vmatprep.subr.mxu0 0.0
      %4227 = vmatpush1.msra.mxu0 %v1117
      %4228 = vmatprep.subr.mxu0 0.0
      %4229 = vmatpush1.msra.mxu0 0.0
      %4230 = vmatprep.subr.mxu0 0.0
      %4231 = vmatpush1.msra.mxu0 0.0
      %4232 = vmatprep.subr.mxu0 0.0
      %4233 = vmatpush1.msra.mxu0 0.0
      %4234 = vmatprep.subr.mxu0 0.0
      %4235 = vmatpush1.msra.mxu0 0.0
      %4236 = vmatprep.subr.mxu0 0.0
      %4237 = vmatpush1.msra.mxu0 0.0
      %4238 = vmatprep.subr.mxu0 0.0
      %4239 = vmatpush1.msra.mxu0 0.0
      %4240 = vmatprep.subr.mxu0 0.0
      %4241 = vmatpush1.msra.mxu0 0.0
      %4242 = vmatprep.subr.mxu0 0.0
      %4243 = vmatpush1.msra.mxu0 0.0
      %4244 = vmatprep.subr.mxu0 0.0
      %4245 = vmatpush1.msra.mxu0 0.0
      %4246 = vmatprep.subr.mxu0 0.0
      %4247 = vmatpush1.msra.mxu0 0.0
      %4248 = vmatprep.subr.mxu0 0.0
      %4249 = vmatpush1.msra.mxu0 0.0
      %4250 = vmatprep.subr.mxu0 0.0
      %4251 = vmatpush1.msra.mxu0 0.0
      %4252 = vmatprep.subr.mxu0 0.0
      %4253 = vmatpush1.msra.mxu0 0.0
      %4254 = vmatprep.subr.mxu0 0.0
      %4255 = vmatpush1.msra.mxu0 0.0
      %4256 = vmatprep.subr.mxu0 0.0
      %4257 = vmatpush1.msra.mxu0 0.0
      %4258 = vmatprep.subr.mxu0 0.0
      %4259 = vmatpush1.msra.mxu0 0.0
      %4260 = vmatprep.subr.mxu0 0.0
      %4261 = vmatpush1.msra.mxu0 0.0
      %4262 = vmatprep.subr.mxu0 0.0
      %4263 = vmatpush1.msra.mxu0 0.0
      %4264 = vmatprep.subr.mxu0 0.0
      %4265 = vmatpush1.msra.mxu0 0.0
      %4266 = vmatprep.subr.mxu0 0.0
      %4267 = vmatpush1.msra.mxu0 0.0
      %4268 = vmatprep.subr.mxu0 0.0
      %4269 = vmatpush1.msra.mxu0 0.0
      %4270 = vmatprep.subr.mxu0 0.0
      %4271 = vmatpush1.msra.mxu0 0.0
      %4272 = vmatprep.subr.mxu0 0.0
      %4273 = vmatpush1.msra.mxu0 0.0
      %4274 = vmatprep.subr.mxu0 0.0
      %4275 = vmatpush1.msra.mxu0 0.0
      %4276 = vmatprep.subr.mxu0 0.0
      %4277 = vmatpush1.msra.mxu0 0.0
      %4278 = vmatprep.subr.mxu0 0.0
      %4279 = vmatpush1.msra.mxu0 0.0
      %4280 = vmatprep.subr.mxu0 0.0
      %4281 = vmatpush1.msra.mxu0 0.0
      %4282 = vmatprep.subr.mxu0 0.0
      %4283 = vmatpush1.msra.mxu0 0.0
      %4284 = vmatprep.mubr.f32.mxu0 0.0
      %4285 = vmatmul.mubr.f32.gmra.mrb[0].mxu0 %v4212
      %v4286 = vpop.f32.mrb[0].mxu0
      %v4287 = vadd.f32 %v4210, %v4286
      %v4288 = vpop.f32.mrb[0].mxu0
      %4289 = vmatprep.mubr.f32.mxu0 0.0
      %4290 = vmatmul.mubr.f32.gmra.mrb[0].mxu0 %v4215
      %v4291 = vpop.f32.mrb[0].mxu0
      %v4292 = vadd.f32 %v4210, %v4291
      %v4293 = vpop.f32.mrb[0].mxu0
      %4294 = vmatprep.mubr.f32.mxu0 0.0
      %4295 = vmatmul.mubr.f32.gmra.mrb[0].mxu0 %v4218
      %v4296 = vpop.f32.mrb[0].mxu0
      %v4297 = vadd.f32 %v4210, %v4296
      %v4298 = vpop.f32.mrb[0].mxu0
      %4299 = vdwg.mxu0
      %v4300 = vmul.f32 %v4287, %v4287
      %v4301 = vmul.f32 %v4292, %v4292
      %v4302 = vmul.f32 %v4297, %v4297
      %v4303 = vmul.f32 %v4287, %v4300
      %v4304 = vmul.f32 %v4292, %v4301
      %v4305 = vmul.f32 %v4297, %v4302
      %v4306 = vmul.f32 %v4303, 0.044715
      %v4307 = vmul.f32 %v4304, 0.044715
      %v4308 = vmul.f32 %v4305, 0.044715
      %v4309 = vadd.f32 %v4287, %v4306
      %v4310 = vadd.f32 %v4292, %v4307
      %v4311 = vadd.f32 %v4297, %v4308
      %v4312 = vmul.f32 %v4309, 0.7978846
      %v4313 = vmul.f32 %v4310, 0.7978846
      %v4314 = vmul.f32 %v4311, 0.7978846
      %v4315 = vtanh.pop %v4312
      %v4316 = vtanh.pop %v4313
      %v4317 = vtanh.pop %v4314
      %v4318 = vadd.f32 %v4315, 1.0
      %v4319 = vadd.f32 %v4316, 1.0
      %v4320 = vadd.f32 %v4317, 1.0
      %v4321 = vmul.f32 %v4318, 0.5
      %v4322 = vmul.f32 %v4319, 0.5
      %v4323 = vmul.f32 %v4320, 0.5
      %v4324 = vmul.f32 %v4287, %v4321
      %v4325 = vmul.f32 %v4292, %v4322
      %v4326 = vmul.f32 %v4297, %v4323
      %v4327 = vlaneseq
      %v4328 = vshrl.u32 %v4327, 7
      %v4329 = vsub.s32 1, %v4328
      %v4330 = vrot.slane %v1151, %v4329
      %4331 = vmatprep.subr.mxu0 0.0
      %4332 = vmatpush1.msra.mxu0 %v1135
      %4333 = vmatprep.subr.mxu0 0.0
      %4334 = vmatpush1.msra.mxu0 %v1136
      %4335 = vmatprep.subr.mxu0 0.0
      %4336 = vmatpush1.msra.mxu0 %v1137
      %4337 = vmatprep.subr.mxu0 0.0
      %4338 = vmatpush1.msra.mxu0 %v1138
      %4339 = vmatprep.subr.mxu0 0.0
      %4340 = vmatpush1.msra.mxu0 %v1139
      %4341 = vmatprep.subr.mxu0 0.0
      %4342 = vmatpush1.msra.mxu0 %v1140
      %4343 = vmatprep.subr.mxu0 0.0
      %4344 = vmatpush1.msra.mxu0 %v1141
      %4345 = vmatprep.subr.mxu0 0.0
      %4346 = vmatpush1.msra.mxu0 %v1142
      %4347 = vmatprep.subr.mxu0 0.0
      %4348 = vmatpush1.msra.mxu0 %v1143
      %4349 = vmatprep.subr.mxu0 0.0
      %4350 = vmatpush1.msra.mxu0 %v1144
      %4351 = vmatprep.subr.mxu0 0.0
      %4352 = vmatpush1.msra.mxu0 %v1145
      %4353 = vmatprep.subr.mxu0 0.0
      %4354 = vmatpush1.msra.mxu0 %v1146
      %4355 = vmatprep.subr.mxu0 0.0
      %4356 = vmatpush1.msra.mxu0 %v1147
      %4357 = vmatprep.subr.mxu0 0.0
      %4358 = vmatpush1.msra.mxu0 %v1148
      %4359 = vmatprep.subr.mxu0 0.0
      %4360 = vmatpush1.msra.mxu0 %v1149
      %4361 = vmatprep.subr.mxu0 0.0
      %4362 = vmatpush1.msra.mxu0 %v1150
      %4363 = vmatprep.subr.mxu0 0.0
      %4364 = vmatpush1.msra.mxu0 0.0
      %4365 = vmatprep.subr.mxu0 0.0
      %4366 = vmatpush1.msra.mxu0 0.0
      %4367 = vmatprep.subr.mxu0 0.0
      %4368 = vmatpush1.msra.mxu0 0.0
      %4369 = vmatprep.subr.mxu0 0.0
      %4370 = vmatpush1.msra.mxu0 0.0
      %4371 = vmatprep.subr.mxu0 0.0
      %4372 = vmatpush1.msra.mxu0 0.0
      %4373 = vmatprep.subr.mxu0 0.0
      %4374 = vmatpush1.msra.mxu0 0.0
      %4375 = vmatprep.subr.mxu0 0.0
      %4376 = vmatpush1.msra.mxu0 0.0
      %4377 = vmatprep.subr.mxu0 0.0
      %4378 = vmatpush1.msra.mxu0 0.0
      %4379 = vmatprep.subr.mxu0 0.0
      %4380 = vmatpush1.msra.mxu0 0.0
      %4381 = vmatprep.subr.mxu0 0.0
      %4382 = vmatpush1.msra.mxu0 0.0
      %4383 = vmatprep.subr.mxu0 0.0
      %4384 = vmatpush1.msra.mxu0 0.0
      %4385 = vmatprep.subr.mxu0 0.0
      %4386 = vmatpush1.msra.mxu0 0.0
      %4387 = vmatprep.subr.mxu0 0.0
      %4388 = vmatpush1.msra.mxu0 0.0
      %4389 = vmatprep.subr.mxu0 0.0
      %4390 = vmatpush1.msra.mxu0 0.0
      %4391 = vmatprep.subr.mxu0 0.0
      %4392 = vmatpush1.msra.mxu0 0.0
      %4393 = vmatprep.subr.mxu0 0.0
      %4394 = vmatpush1.msra.mxu0 0.0
      %4395 = vmatprep.mubr.f32.mxu0 0.0
      %4396 = vmatmul.mubr.f32.gmra.mrb[0].mxu0 %v4324
      %v4397 = vpop.f32.mrb[0].mxu0
      %v4398 = vadd.f32 %v4330, %v4397
      %v4399 = vpop.f32.mrb[0].mxu0
      %4400 = vmatprep.mubr.f32.mxu0 0.0
      %4401 = vmatmul.mubr.f32.gmra.mrb[0].mxu0 %v4325
      %v4402 = vpop.f32.mrb[0].mxu0
      %v4403 = vadd.f32 %v4330, %v4402
      %v4404 = vpop.f32.mrb[0].mxu0
      %4405 = vmatprep.mubr.f32.mxu0 0.0
      %4406 = vmatmul.mubr.f32.gmra.mrb[0].mxu0 %v4326
      %v4407 = vpop.f32.mrb[0].mxu0
      %v4408 = vadd.f32 %v4330, %v4407
      %v4409 = vpop.f32.mrb[0].mxu0
      %4410 = vdwg.mxu0
      %v4411 = vadd.f32 %v4151, %v4398
      %v4412 = vadd.f32 %v4152, %v4403
      %v4413 = vadd.f32 %v4153, %v4408
      %v4414 = vld [vmem:[%s992] sm:$0x1]
      %v4415 = vld [vmem:[%s995] sm:$0x1]
      %v4416 = vsel %vm1152, %v4411, 0.0
      %4417 = vadd.xlane.f32.xlu0 %v4416
      %v4418 = vpop.xlane.xlu0 %4417
      %v4419 = vsel %vm1152, %v4412, 0.0
      %4420 = vadd.xlane.f32.xlu0 %v4419
      %v4421 = vpop.xlane.xlu0 %4420
      %v4422 = vsel %vm1159, %v4413, 0.0
      %4423 = vadd.xlane.f32.xlu0 %v4422
      %v4424 = vpop.xlane.xlu0 %4423
      %v4425 = vmul.f32 %v4418, %v1163
      %v4426 = vmul.f32 %v4421, %v1163
      %v4427 = vmul.f32 %v4424, %v1163
      %v4428 = vsub.f32 %v4411, %v4425
      %v4429 = vsub.f32 %v4412, %v4426
      %v4430 = vsub.f32 %v4413, %v4427
      %v4431 = vmul.f32 %v4428, %v4428
      %v4432 = vmul.f32 %v4429, %v4429
      %v4433 = vmul.f32 %v4430, %v4430
      %v4434 = vsel %vm1152, %v4431, 0.0
      %4435 = vadd.xlane.f32.xlu0 %v4434
      %v4436 = vpop.xlane.xlu0 %4435
      %v4437 = vsel %vm1152, %v4432, 0.0
      %4438 = vadd.xlane.f32.xlu0 %v4437
      %v4439 = vpop.xlane.xlu0 %4438
      %v4440 = vsel %vm1159, %v4433, 0.0
      %4441 = vadd.xlane.f32.xlu0 %v4440
      %v4442 = vpop.xlane.xlu0 %4441
      %v4443 = vmul.f32 %v4436, %v1163
      %v4444 = vmul.f32 %v4439, %v1163
      %v4445 = vmul.f32 %v4442, %v1163
      %v4446 = vadd.f32 %v4443, 1e-05
      %v4447 = vadd.f32 %v4444, 1e-05
      %v4448 = vadd.f32 %v4445, 1e-05
      %v4449 = vrsqrt.pop %v4446
      %v4450 = vrsqrt.pop %v4447
      %v4451 = vrsqrt.pop %v4448
      %v4452 = vmul.f32 %v4428, %v4449
      %v4453 = vmul.f32 %v4429, %v4450
      %v4454 = vmul.f32 %v4430, %v4451
      %v4456 = vlaneseq
      %v4457 = vshrl.u32 %v4456, 7
      %v4458 = vsub.s32 0, %v4457
      %v4459 = vrot.slane %v4414, %v4458
      %v4461 = vmul.f32 %v4452, %v4459
      %v4462 = vmul.f32 %v4453, %v4459
      %v4463 = vmul.f32 %v4454, %v4459
      %v4465 = vlaneseq
      %v4466 = vshrl.u32 %v4465, 7
      %v4467 = vsub.s32 0, %v4466
      %v4468 = vrot.slane %v4415, %v4467
      %v4470 = vadd.f32 %v4461, %v4468
      %v4471 = vadd.f32 %v4462, %v4468
      %v4472 = vadd.f32 %v4463, %v4468
      %v4473 = vld [vmem:[%s1000] sm:$0xff]
      %v4474 = vld [vmem:[%s1000 + $0x8] sm:$0xff]
      %v4475 = vld [vmem:[%s1000 + $0x10] sm:$0xff]
      %v4476 = vld [vmem:[%s1000 + $0x18] sm:$0xff]
      %v4477 = vld [vmem:[%s1003] sm:$0x1]
      %v4479 = vlaneseq
      %v4480 = vshrl.u32 %v4479, 7
      %v4481 = vsub.s32 0, %v4480
      %v4482 = vrot.slane %v4477, %v4481
      %v4485 = vsel %vm1152, %v4470, 0
      %v4488 = vsel %vm1152, %v4471, 0
      %v4491 = vsel %vm1152, %v4472, 0
      %4493 = vmatprep.subr.mxu0 0.0
      %4494 = vmatpush1.msra.mxu0 %v4473
      %4495 = vmatprep.subr.mxu0 0.0
      %4496 = vmatpush1.msra.mxu0 %v4474
      %4497 = vmatprep.subr.mxu0 0.0
      %4498 = vmatpush1.msra.mxu0 %v4475
      %4499 = vmatprep.subr.mxu0 0.0
      %4500 = vmatpush1.msra.mxu0 %v4476
      %4501 = vmatprep.subr.mxu0 0.0
      %4502 = vmatpush1.msra.mxu0 0.0
      %4503 = vmatprep.subr.mxu0 0.0
      %4504 = vmatpush1.msra.mxu0 0.0
      %4505 = vmatprep.subr.mxu0 0.0
      %4506 = vmatpush1.msra.mxu0 0.0
      %4507 = vmatprep.subr.mxu0 0.0
      %4508 = vmatpush1.msra.mxu0 0.0
      %4509 = vmatprep.subr.mxu0 0.0
      %4510 = vmatpush1.msra.mxu0 0.0
      %4511 = vmatprep.subr.mxu0 0.0
      %4512 = vmatpush1.msra.mxu0 0.0
      %4513 = vmatprep.subr.mxu0 0.0
      %4514 = vmatpush1.msra.mxu0 0.0
      %4515 = vmatprep.subr.mxu0 0.0
      %4516 = vmatpush1.msra.mxu0 0.0
      %4517 = vmatprep.subr.mxu0 0.0
      %4518 = vmatpush1.msra.mxu0 0.0
      %4519 = vmatprep.subr.mxu0 0.0
      %4520 = vmatpush1.msra.mxu0 0.0
      %4521 = vmatprep.subr.mxu0 0.0
      %4522 = vmatpush1.msra.mxu0 0.0
      %4523 = vmatprep.subr.mxu0 0.0
      %4524 = vmatpush1.msra.mxu0 0.0
      %4525 = vmatprep.subr.mxu0 0.0
      %4526 = vmatpush1.msra.mxu0 0.0
      %4527 = vmatprep.subr.mxu0 0.0
      %4528 = vmatpush1.msra.mxu0 0.0
      %4529 = vmatprep.subr.mxu0 0.0
      %4530 = vmatpush1.msra.mxu0 0.0
      %4531 = vmatprep.subr.mxu0 0.0
      %4532 = vmatpush1.msra.mxu0 0.0
      %4533 = vmatprep.subr.mxu0 0.0
      %4534 = vmatpush1.msra.mxu0 0.0
      %4535 = vmatprep.subr.mxu0 0.0
      %4536 = vmatpush1.msra.mxu0 0.0
      %4537 = vmatprep.subr.mxu0 0.0
      %4538 = vmatpush1.msra.mxu0 0.0
      %4539 = vmatprep.subr.mxu0 0.0
      %4540 = vmatpush1.msra.mxu0 0.0
      %4541 = vmatprep.subr.mxu0 0.0
      %4542 = vmatpush1.msra.mxu0 0.0
      %4543 = vmatprep.subr.mxu0 0.0
      %4544 = vmatpush1.msra.mxu0 0.0
      %4545 = vmatprep.subr.mxu0 0.0
      %4546 = vmatpush1.msra.mxu0 0.0
      %4547 = vmatprep.subr.mxu0 0.0
      %4548 = vmatpush1.msra.mxu0 0.0
      %4549 = vmatprep.subr.mxu0 0.0
      %4550 = vmatpush1.msra.mxu0 0.0
      %4551 = vmatprep.subr.mxu0 0.0
      %4552 = vmatpush1.msra.mxu0 0.0
      %4553 = vmatprep.subr.mxu0 0.0
      %4554 = vmatpush1.msra.mxu0 0.0
      %4555 = vmatprep.subr.mxu0 0.0
      %4556 = vmatpush1.msra.mxu0 0.0
      %4557 = vmatprep.mubr.f32.mxu0 0.0
      %4558 = vmatmul.mubr.f32.gmra.mrb[0].mxu0 %v4485
      %v4559 = vpop.f32.mrb[0].mxu0
      %v4560 = vadd.f32 %v4482, %v4559
      %v4561 = vpop.f32.mrb[0].mxu0
      %4562 = vmatprep.mubr.f32.mxu0 0.0
      %4563 = vmatmul.mubr.f32.gmra.mrb[0].mxu0 %v4488
      %v4564 = vpop.f32.mrb[0].mxu0
      %v4565 = vadd.f32 %v4482, %v4564
      %v4566 = vpop.f32.mrb[0].mxu0
      %4567 = vmatprep.mubr.f32.mxu0 0.0
      %4568 = vmatmul.mubr.f32.gmra.mrb[0].mxu0 %v4491
      %v4569 = vpop.f32.mrb[0].mxu0
      %v4570 = vadd.f32 %v4482, %v4569
      %v4571 = vpop.f32.mrb[0].mxu0
      %4572 = vdwg.mxu0
      %vm4573 = vcmask 130048
      %4574 = vst.msk [vmem:[%s1008] sm:$0xff] %vm4573, %v4560
      %4575 = vst.msk [vmem:[%s1008 + $0x8] sm:$0xff] %vm4573, %v4565
      %vm4576 = vcmask 123904
      %4577 = vst.msk [vmem:[%s1008 + $0x10] sm:$0x3] %vm4576, %v4570
      %p4578 = scmp.lt.s32.totalorder %s32, 5
      %s4579 = scalar_select %p4578, %s32, 5
      %s4580 = smul.addr %s4579, 3
      %s4581 = smul.addr %s4580, 8
      %s4582 = scalar_lea.vmem %s21, %s4581
      // Predicated region
      $region105: #{wavelet_transformer_forward.5} parent=103 // pred_check
        %p4583 = pneg %p596
      $region106: #{wavelet_transformer_forward.5} parent=103 // pred_check_branch
        %4585 = sbr.rel (%p4583) target = $region108
      $region107: #{wavelet_transformer_forward.5} parent=103 // pred_region
        _
      $region108: #{wavelet_transformer_forward.5} parent=103 // pred_fallthru
        _
    $region104: #{wavelet_transformer_forward.5} parent=5 // pred_fallthru
      _
    %p4586 = scmp.le.s32.totalorder 2, %s27
    // Predicated region
    $region109: #{wavelet_transformer_forward.5} parent=5 // pred_check
      %p4587 = pneg %p4586
    $region110: #{wavelet_transformer_forward.5} parent=5 // pred_check_branch
      %4589 = sbr.rel (%p4587) target = $region112
    $region111: #{wavelet_transformer_forward.5} parent=5 // pred_region
      %s4590 = ssub.s32 %s27, 2
      // Predicated region
      $region113: #{wavelet_transformer_forward.5} parent=111 // pred_check
        %p4591 = pneg %p602
      $region114: #{wavelet_transformer_forward.5} parent=111 // pred_check_branch
        %4593 = sbr.rel (%p4591) target = $region116
      $region115: #{wavelet_transformer_forward.5} parent=111 // pred_region
        %p4594 = scmp.lt.s32.totalorder %s33, 5
        %s4595 = scalar_select %p4594, %s33, 5
        %s4596 = smul.addr %s4595, 3
        %s4597 = smul.addr %s4596, 8
        %s4598 = scalar_lea.vmem %s21, %s4597
      $region116: #{wavelet_transformer_forward.5} parent=111 // pred_fallthru
        _
    $region112: #{wavelet_transformer_forward.5} parent=5 // pred_fallthru
      _
  $region6: #{wavelet_transformer_forward.5} parent=0 // loop_footer
    %s31 = sadd.s32 1, %s27
  $region7: #{wavelet_transformer_forward.5} parent=0 // loop_footer_branch
    %26 = sbr.rel target = $region3
  $region8: #{wavelet_transformer_forward.5} parent=0 // loop_exit
    _

// kernel: wavelet_transformer_forward.7
$region0: #{wavelet_transformer_forward.7}
  #allocation0 [shape = 'u32[]', space=smem, size = 0x4, offset = 0x4, fixed_abs, tag = 'smem constant byte address 0x4 - core index']
  #allocation1 [shape = 'u32[144,128]{1,0:T(1,128)}', space=vmem, size = 0x12000, scoped, tag = 'internal scratch']
  %s0 = inlined_call_operand.vmem [shape: f32[6,32,16], index: 0, kind: input, shape index: {}]
  %s1 = inlined_call_operand.vmem [shape: f32[32,16], index: 1, kind: input, shape index: {}]
  %s2 = inlined_call_operand.vmem [shape: f32[32,1], index: 2, kind: input, shape index: {}]
  %s3 = inlined_call_operand.hbm [shape: f32[32,16], index: 3, kind: output, shape index: {0}]
  %s4 = inlined_call_operand.hbm [shape: f32[1,1], index: 4, kind: output, shape index: {1}]
  %5 = xla_tuple %s3, %s4
  %s6 = sld [smem:[#allocation0]]
  $region30: #{wavelet_transformer_forward.7} parent=0
    _
  %s8 = ssub.s32 1, %s6
  %s9 = scalar_select 0, %s8, %s6
  $region1: #{wavelet_transformer_forward.7} parent=0
    #allocation2 [shape = 'u8[16384]{0}', space=vmem, size = 0x4000, scoped, tag = 'output window, operand 0, single buffered']
    #allocation3 [shape = 's32[1]{0}', space=sflag, size = 0x4, scoped, tag = 'scoped memory for wavelet_transformer_forward.7']
    #allocation4 [shape = 's32[1]{0}', space=sflag, size = 0x4, scoped, tag = 'scoped memory for wavelet_transformer_forward.7']
    #allocation5 [shape = 'u8[512]{0}', space=smem, size = 0x200, scoped, tag = 'output window, operand 1, single buffered']
    %10 = vsyncpa [#allocation3], 0
    %11 = vsyncpa [#allocation4], 0
    // Predicated region
    $region2: #{wavelet_transformer_forward.7} parent=1 // pred_check
      _
    $region3: #{wavelet_transformer_forward.7} parent=1 // pred_check_branch
      %13 = sbr.rel (0) target = $region5
    $region4: #{wavelet_transformer_forward.7} parent=1 // pred_region
      _
    $region5: #{wavelet_transformer_forward.7} parent=1 // pred_fallthru
      _
    // Predicated region
    $region6: #{wavelet_transformer_forward.7} parent=1 // pred_check
      _
    $region7: #{wavelet_transformer_forward.7} parent=1 // pred_check_branch
      %15 = sbr.rel (0) target = $region9
    $region8: #{wavelet_transformer_forward.7} parent=1 // pred_region
      _
    $region9: #{wavelet_transformer_forward.7} parent=1 // pred_fallthru
      _
    // Predicated region
    $region10: #{wavelet_transformer_forward.7} parent=1 // pred_check
      _
    $region11: #{wavelet_transformer_forward.7} parent=1 // pred_check_branch
      %17 = sbr.rel (0) target = $region13
    $region12: #{wavelet_transformer_forward.7} parent=1 // pred_region
      _
    $region13: #{wavelet_transformer_forward.7} parent=1 // pred_fallthru
      _
    %v18 = vld [vmem:[%s0] sm:$0xff]
    %v19 = vld [vmem:[%s0 + $0x8] sm:$0xff]
    %v20 = vld [vmem:[%s0 + $0x10] sm:$0xff]
    %v21 = vld [vmem:[%s0 + $0x18] sm:$0xff]
    %s22 = scalar_lea.vmem %s0, 32
    %v23 = vld [vmem:[%s22] sm:$0xff]
    %v24 = vld [vmem:[%s22 + $0x8] sm:$0xff]
    %v25 = vld [vmem:[%s22 + $0x10] sm:$0xff]
    %v26 = vld [vmem:[%s22 + $0x18] sm:$0xff]
    %v27 = vadd.f32 %v18, %v23
    %v28 = vadd.f32 %v19, %v24
    %v29 = vadd.f32 %v20, %v25
    %v30 = vadd.f32 %v21, %v26
    %s31 = scalar_lea.vmem %s0, 64
    %v32 = vld [vmem:[%s31] sm:$0xff]
    %v33 = vld [vmem:[%s31 + $0x8] sm:$0xff]
    %v34 = vld [vmem:[%s31 + $0x10] sm:$0xff]
    %v35 = vld [vmem:[%s31 + $0x18] sm:$0xff]
    %v36 = vadd.f32 %v27, %v32
    %v37 = vadd.f32 %v28, %v33
    %v38 = vadd.f32 %v29, %v34
    %v39 = vadd.f32 %v30, %v35
    %s40 = scalar_lea.vmem %s0, 96
    %v41 = vld [vmem:[%s40] sm:$0xff]
    %v42 = vld [vmem:[%s40 + $0x8] sm:$0xff]
    %v43 = vld [vmem:[%s40 + $0x10] sm:$0xff]
    %v44 = vld [vmem:[%s40 + $0x18] sm:$0xff]
    %v45 = vadd.f32 %v36, %v41
    %v46 = vadd.f32 %v37, %v42
    %v47 = vadd.f32 %v38, %v43
    %v48 = vadd.f32 %v39, %v44
    %s49 = scalar_lea.vmem %s0, 128
    %v50 = vld [vmem:[%s49] sm:$0xff]
    %v51 = vld [vmem:[%s49 + $0x8] sm:$0xff]
    %v52 = vld [vmem:[%s49 + $0x10] sm:$0xff]
    %v53 = vld [vmem:[%s49 + $0x18] sm:$0xff]
    %v54 = vadd.f32 %v45, %v50
    %v55 = vadd.f32 %v46, %v51
    %v56 = vadd.f32 %v47, %v52
    %v57 = vadd.f32 %v48, %v53
    %s58 = scalar_lea.vmem %s0, 160
    %v59 = vld [vmem:[%s58] sm:$0xff]
    %v60 = vld [vmem:[%s58 + $0x8] sm:$0xff]
    %v61 = vld [vmem:[%s58 + $0x10] sm:$0xff]
    %v62 = vld [vmem:[%s58 + $0x18] sm:$0xff]
    %v63 = vadd.f32 %v54, %v59
    %v64 = vadd.f32 %v55, %v60
    %v65 = vadd.f32 %v56, %v61
    %v66 = vadd.f32 %v57, %v62
    %vm67 = vcmask 130048
    %68 = vst.msk [vmem:[#allocation2] sm:$0xff] %vm67, %v63
    %69 = vst.msk [vmem:[#allocation2 + $0x8] sm:$0xff] %vm67, %v64
    %70 = vst.msk [vmem:[#allocation2 + $0x10] sm:$0xff] %vm67, %v65
    %71 = vst.msk [vmem:[#allocation2 + $0x18] sm:$0xff] %vm67, %v66
    %v72 = vld [vmem:[%s1] sm:$0xff]
    %v73 = vld [vmem:[%s1 + $0x8] sm:$0xff]
    %v74 = vld [vmem:[%s1 + $0x10] sm:$0xff]
    %v75 = vld [vmem:[%s1 + $0x18] sm:$0xff]
    %v76 = vsub.f32 %v63, %v72
    %v77 = vsub.f32 %v64, %v73
    %v78 = vsub.f32 %v65, %v74
    %v79 = vsub.f32 %v66, %v75
    %v80 = vmul.f32 %v76, %v76
    %v81 = vmul.f32 %v77, %v77
    %v82 = vmul.f32 %v78, %v78
    %v83 = vmul.f32 %v79, %v79
    %v84 = vsel %vm67, %v80, 0.0
    %85 = vadd.xlane.f32.xlu0 %v84
    %v86 = vpop.xlane.xlu0 %85
    %v87 = vsel %vm67, %v81, 0.0
    %88 = vadd.xlane.f32.xlu0 %v87
    %v89 = vpop.xlane.xlu0 %88
    %v90 = vsel %vm67, %v82, 0.0
    %91 = vadd.xlane.f32.xlu0 %v90
    %v92 = vpop.xlane.xlu0 %91
    %v93 = vsel %vm67, %v83, 0.0
    %94 = vadd.xlane.f32.xlu0 %v93
    %v95 = vpop.xlane.xlu0 %94
    %v96 = vrcp.pop 16.0
    %v97 = vmul.f32 %v86, %v96
    %v98 = vmul.f32 %v89, %v96
    %v99 = vmul.f32 %v92, %v96
    %v100 = vmul.f32 %v95, %v96
    %v101 = vld [vmem:[%s2] sm:$0xff]
    %v102 = vld [vmem:[%s2 + $0x8] sm:$0xff]
    %v103 = vld [vmem:[%s2 + $0x10] sm:$0xff]
    %v104 = vld [vmem:[%s2 + $0x18] sm:$0xff]
    %v105 = vmul.f32 %v97, %v101
    %v106 = vmul.f32 %v98, %v102
    %v107 = vmul.f32 %v99, %v103
    %v108 = vmul.f32 %v100, %v104
    %vm109 = vcmask 7168
    %v110 = vsel %vm109, %v105, 0.0
    %v111 = vsel %vm109, %v106, 0.0
    %v112 = vadd.f32 %v110, %v111
    %v113 = vsel %vm109, %v107, 0.0
    %v114 = vadd.f32 %v112, %v113
    %v115 = vsel %vm109, %v108, 0.0
    %v116 = vadd.f32 %v114, %v115
    %117 = vadd.xlane.f32.xlu0 %v116
    %v118 = vpop.xlane.xlu0 %117
    %v119 = vrot.slane %v118, 4
    %v120 = vadd.f32 %v118, %v119
    %v121 = vrot.slane %v120, 2
    %v122 = vadd.f32 %v120, %v121
    %v123 = vrot.slane %v122, 1
    %v124 = vadd.f32 %v122, %v123
    %s125 = vtos %v124
    %v126 = vsel %vm109, %v101, 0.0
    %v127 = vsel %vm109, %v102, 0.0
    %v128 = vadd.f32 %v126, %v127
    %v129 = vsel %vm109, %v103, 0.0
    %v130 = vadd.f32 %v128, %v129
    %v131 = vsel %vm109, %v104, 0.0
    %v132 = vadd.f32 %v130, %v131
    %133 = vadd.xlane.f32.xlu0 %v132
    %v134 = vpop.xlane.xlu0 %133
    %v135 = vrot.slane %v134, 4
    %v136 = vadd.f32 %v134, %v135
    %v137 = vrot.slane %v136, 2
    %v138 = vadd.f32 %v136, %v137
    %v139 = vrot.slane %v138, 1
    %v140 = vadd.f32 %v138, %v139
    %s141 = vtos %v140
    %v142 = vstv %s141
    %v143 = vrcp.pop %v142
    %s144 = vtos %v143
    %s145 = smul.f32 %s125, %s144
    %s146 = scalar_lea.smem [#allocation5], 0
    %147 = sst [smem:[%s146]] %s145
    // Predicated region
    $region14: #{wavelet_transformer_forward.7} parent=1 // pred_check
      _
    $region15: #{wavelet_transformer_forward.7} parent=1 // pred_check_branch
      %149 = sbr.rel (0) target = $region17
    $region16: #{wavelet_transformer_forward.7} parent=1 // pred_region
      %s151 = ssub.s32 512, 512
      %152 = vsyncadd [#allocation3], %s151
      %s153 = sshll.u32 [#allocation2], 4
      %s154 = int_to_ptr.vmem [resolvable:$true] %s153
      %159 = dma.vmem_to_hbm [thread:$0]  %s154, 512, %s3, [#allocation3], 128, 128, 8
    $region17: #{wavelet_transformer_forward.7} parent=1 // pred_fallthru
      _
    // Predicated region
    $region18: #{wavelet_transformer_forward.7} parent=1 // pred_check
      _
    $region19: #{wavelet_transformer_forward.7} parent=1 // pred_check_branch
      %161 = sbr.rel (0) target = $region21
    $region20: #{wavelet_transformer_forward.7} parent=1 // pred_region
      %s163 = ssub.s32 16, 16
      %164 = vsyncadd [#allocation4], %s163
      %167 = dma.smem_to_hbm [#allocation5], 16, %s4, [#allocation4]
    $region21: #{wavelet_transformer_forward.7} parent=1 // pred_fallthru
      _
    // Predicated region
    $region22: #{wavelet_transformer_forward.7} parent=1 // pred_check
      _
    $region23: #{wavelet_transformer_forward.7} parent=1 // pred_check_branch
      %169 = sbr.rel (0) target = $region25
    $region24: #{wavelet_transformer_forward.7} parent=1 // pred_region
      %170 = dma.done [#allocation3], 512
    $region25: #{wavelet_transformer_forward.7} parent=1 // pred_fallthru
      _
    // Predicated region
    $region26: #{wavelet_transformer_forward.7} parent=1 // pred_check
      _
    $region27: #{wavelet_transformer_forward.7} parent=1 // pred_check_branch
      %172 = sbr.rel (0) target = $region29
    $region28: #{wavelet_transformer_forward.7} parent=1 // pred_region
      %173 = dma.done [#allocation4], 16
    $region29: #{wavelet_transformer_forward.7} parent=1 // pred_fallthru
      _
    %174 = sfence
    %175 = vsyncpa [#allocation3], 1
    %176 = vsyncpa [#allocation4], 1

// kernel: wavelet_transformer_forward.6
$region0: #{wavelet_transformer_forward.6}
  #allocation0 [shape = 'u32[]', space=smem, size = 0x4, offset = 0x4, fixed_abs, tag = 'smem constant byte address 0x4 - core index']
  #allocation1 [shape = 'u32[144,128]{1,0:T(1,128)}', space=vmem, size = 0x12000, scoped, tag = 'internal scratch']
  %s0 = inlined_call_operand.vmem [shape: f32[6,34,16], index: 0, kind: input, shape index: {}]
  %s1 = inlined_call_operand.vmem [shape: f32[6,1,16], index: 1, kind: input, shape index: {}]
  %s2 = inlined_call_operand.vmem [shape: f32[6,1,16], index: 2, kind: input, shape index: {}]
  %s3 = inlined_call_operand.vmem [shape: f32[6,1,16,16], index: 3, kind: input, shape index: {}]
  %s4 = inlined_call_operand.vmem [shape: f32[6,1,16], index: 4, kind: input, shape index: {}]
  %s5 = inlined_call_operand.vmem [shape: f32[6,1,16,16], index: 5, kind: input, shape index: {}]
  %s6 = inlined_call_operand.vmem [shape: f32[6,1,16], index: 6, kind: input, shape index: {}]
  %s7 = inlined_call_operand.vmem [shape: f32[6,1,16,16], index: 7, kind: input, shape index: {}]
  %s8 = inlined_call_operand.vmem [shape: f32[6,1,16], index: 8, kind: input, shape index: {}]
  %s9 = inlined_call_operand.vmem [shape: f32[6,1,16,16], index: 9, kind: input, shape index: {}]
  %s10 = inlined_call_operand.vmem [shape: f32[6,1,16], index: 10, kind: input, shape index: {}]
  %s11 = inlined_call_operand.vmem [shape: f32[6,1,16], index: 11, kind: input, shape index: {}]
  %s12 = inlined_call_operand.vmem [shape: f32[6,1,16], index: 12, kind: input, shape index: {}]
  %s13 = inlined_call_operand.vmem [shape: f32[6,1,16,64], index: 13, kind: input, shape index: {}]
  %s14 = inlined_call_operand.vmem [shape: f32[6,1,64], index: 14, kind: input, shape index: {}]
  %s15 = inlined_call_operand.vmem [shape: f32[6,1,64,16], index: 15, kind: input, shape index: {}]
  %s16 = inlined_call_operand.vmem [shape: f32[6,1,16], index: 16, kind: input, shape index: {}]
  %s17 = inlined_call_operand.vmem [shape: f32[6,1,16], index: 17, kind: input, shape index: {}]
  %s18 = inlined_call_operand.vmem [shape: f32[6,1,16], index: 18, kind: input, shape index: {}]
  %s19 = inlined_call_operand.vmem [shape: f32[6,16,16], index: 19, kind: input, shape index: {}]
  %s20 = inlined_call_operand.vmem [shape: f32[6,1,16], index: 20, kind: input, shape index: {}]
  %s21 = inlined_call_operand.vmem [shape: f32[6,34,16], index: 21, kind: output, shape index: {}]
  %s22 = sld [smem:[#allocation0]]
  $region117: #{wavelet_transformer_forward.6} parent=0
    _
  %s24 = ssub.s32 1, %s22
  %s25 = scalar_select 0, %s24, %s22
  loop: start=0, step=1, limit=8
  $region2: #{wavelet_transformer_forward.6} parent=0 // loop_pre_header
    _
  $region3: #{wavelet_transformer_forward.6} parent=0 // loop_header
    %s27 = sphi 0, %s31
    %p28 = scmp.ge.s32.totalorder %s27, 8
    %s37 = sphi 0, %s39
    %s40 = sphi 0, %s37
    %s41 = sphi 0, %s40
    %s57 = sphi 0, %s41
    %s63 = sphi 0, %s65
    %s66 = sphi 0, %s63
    %s67 = sphi 0, %s66
    %s83 = sphi 0, %s67
    %s89 = sphi 0, %s91
    %s92 = sphi 0, %s89
    %s93 = sphi 0, %s92
    %s109 = sphi 0, %s93
    %s115 = sphi 0, %s117
    %s118 = sphi 0, %s115
    %s119 = sphi 0, %s118
    %s135 = sphi 0, %s119
    %s141 = sphi 0, %s143
    %s144 = sphi 0, %s141
    %s145 = sphi 0, %s144
    %s161 = sphi 0, %s145
    %s167 = sphi 0, %s169
    %s170 = sphi 0, %s167
    %s171 = sphi 0, %s170
    %s187 = sphi 0, %s171
    %s193 = sphi 0, %s195
    %s196 = sphi 0, %s193
    %s197 = sphi 0, %s196
    %s213 = sphi 0, %s197
    %s219 = sphi 0, %s221
    %s222 = sphi 0, %s219
    %s223 = sphi 0, %s222
    %s239 = sphi 0, %s223
    %s245 = sphi 0, %s247
    %s248 = sphi 0, %s245
    %s249 = sphi 0, %s248
    %s265 = sphi 0, %s249
    %s271 = sphi 0, %s273
    %s274 = sphi 0, %s271
    %s275 = sphi 0, %s274
    %s291 = sphi 0, %s275
    %s297 = sphi 0, %s299
    %s300 = sphi 0, %s297
    %s301 = sphi 0, %s300
    %s317 = sphi 0, %s301
    %s323 = sphi 0, %s325
    %s326 = sphi 0, %s323
    %s327 = sphi 0, %s326
    %s343 = sphi 0, %s327
    %s349 = sphi 0, %s351
    %s352 = sphi 0, %s349
    %s353 = sphi 0, %s352
    %s369 = sphi 0, %s353
    %s375 = sphi 0, %s377
    %s378 = sphi 0, %s375
    %s379 = sphi 0, %s378
    %s395 = sphi 0, %s379
    %s401 = sphi 0, %s403
    %s404 = sphi 0, %s401
    %s405 = sphi 0, %s404
    %s421 = sphi 0, %s405
    %s427 = sphi 0, %s429
    %s430 = sphi 0, %s427
    %s431 = sphi 0, %s430
    %s447 = sphi 0, %s431
    %s453 = sphi 0, %s455
    %s456 = sphi 0, %s453
    %s457 = sphi 0, %s456
    %s473 = sphi 0, %s457
    %s479 = sphi 0, %s481
    %s482 = sphi 0, %s479
    %s483 = sphi 0, %s482
    %s499 = sphi 0, %s483
    %s505 = sphi 0, %s507
    %s508 = sphi 0, %s505
    %s509 = sphi 0, %s508
    %s525 = sphi 0, %s509
    %s531 = sphi 0, %s533
    %s534 = sphi 0, %s531
    %s535 = sphi 0, %s534
    %s551 = sphi 0, %s535
    %s557 = sphi 0, %s559
    %s560 = sphi 0, %s557
    %s561 = sphi 0, %s560
    %s577 = sphi 0, %s561
    %s583 = sphi 0, %s585
    %s586 = sphi 0, %s583
    %s587 = sphi 0, %s586
    %s603 = sphi 0, %s587
  $region4: #{wavelet_transformer_forward.6} parent=0 // loop_header_branch
    %30 = sbr.rel (%p28) target = $region8
  $region5: #{wavelet_transformer_forward.6} parent=0 // loop_body
    %s32 = ssub.s32 %s27, 1
    %s33 = ssub.s32 %s27, 2
    %s34 = sadd.s32 %s27, 1
    %s35 = ssub.s32 %s27, %s34
    %p36 = scmp.eq.s32.totalorder %s35, 0
    %s38 = sadd.s32 %s37, 1
    %s39 = scalar_select %p36, %s37, %s38
    %p42 = pneg %p36
    %p43 = scmp.eq.s32.totalorder %s27, 5
    %p44 = por %p42, %p43
    %p45 = scmp.ne.s32.totalorder %s37, %s40
    %p46 = scmp.eq.s32.totalorder %s27, 0
    %p47 = por %p45, %p46
    %p48 = scmp.ne.s32.totalorder %s37, %s40
    %p49 = scmp.eq.s32.totalorder %s32, 5
    %p50 = por %p48, %p49
    %p51 = scmp.ne.s32.totalorder %s40, %s41
    %p52 = scmp.eq.s32.totalorder %s32, 0
    %p53 = por %p51, %p52
    %p54 = scmp.ne.s32.totalorder %s40, %s41
    %p55 = scmp.eq.s32.totalorder %s33, 5
    %p56 = por %p54, %p55
    %p58 = scmp.ne.s32.totalorder %s41, %s57
    %p59 = scmp.eq.s32.totalorder %s33, 0
    %p60 = por %p58, %p59
    %s61 = ssub.s32 %s27, %s34
    %p62 = scmp.eq.s32.totalorder %s61, 0
    %s64 = sadd.s32 %s63, 1
    %s65 = scalar_select %p62, %s63, %s64
    %p68 = pneg %p62
    %p69 = scmp.eq.s32.totalorder %s27, 5
    %p70 = por %p68, %p69
    %p71 = scmp.ne.s32.totalorder %s63, %s66
    %p72 = scmp.eq.s32.totalorder %s27, 0
    %p73 = por %p71, %p72
    %p74 = scmp.ne.s32.totalorder %s63, %s66
    %p75 = scmp.eq.s32.totalorder %s32, 5
    %p76 = por %p74, %p75
    %p77 = scmp.ne.s32.totalorder %s66, %s67
    %p78 = scmp.eq.s32.totalorder %s32, 0
    %p79 = por %p77, %p78
    %p80 = scmp.ne.s32.totalorder %s66, %s67
    %p81 = scmp.eq.s32.totalorder %s33, 5
    %p82 = por %p80, %p81
    %p84 = scmp.ne.s32.totalorder %s67, %s83
    %p85 = scmp.eq.s32.totalorder %s33, 0
    %p86 = por %p84, %p85
    %s87 = ssub.s32 %s27, %s34
    %p88 = scmp.eq.s32.totalorder %s87, 0
    %s90 = sadd.s32 %s89, 1
    %s91 = scalar_select %p88, %s89, %s90
    %p94 = pneg %p88
    %p95 = scmp.eq.s32.totalorder %s27, 5
    %p96 = por %p94, %p95
    %p97 = scmp.ne.s32.totalorder %s89, %s92
    %p98 = scmp.eq.s32.totalorder %s27, 0
    %p99 = por %p97, %p98
    %p100 = scmp.ne.s32.totalorder %s89, %s92
    %p101 = scmp.eq.s32.totalorder %s32, 5
    %p102 = por %p100, %p101
    %p103 = scmp.ne.s32.totalorder %s92, %s93
    %p104 = scmp.eq.s32.totalorder %s32, 0
    %p105 = por %p103, %p104
    %p106 = scmp.ne.s32.totalorder %s92, %s93
    %p107 = scmp.eq.s32.totalorder %s33, 5
    %p108 = por %p106, %p107
    %p110 = scmp.ne.s32.totalorder %s93, %s109
    %p111 = scmp.eq.s32.totalorder %s33, 0
    %p112 = por %p110, %p111
    %s113 = ssub.s32 %s27, %s34
    %p114 = scmp.eq.s32.totalorder %s113, 0
    %s116 = sadd.s32 %s115, 1
    %s117 = scalar_select %p114, %s115, %s116
    %p120 = pneg %p114
    %p121 = scmp.eq.s32.totalorder %s27, 5
    %p122 = por %p120, %p121
    %p123 = scmp.ne.s32.totalorder %s115, %s118
    %p124 = scmp.eq.s32.totalorder %s27, 0
    %p125 = por %p123, %p124
    %p126 = scmp.ne.s32.totalorder %s115, %s118
    %p127 = scmp.eq.s32.totalorder %s32, 5
    %p128 = por %p126, %p127
    %p129 = scmp.ne.s32.totalorder %s118, %s119
    %p130 = scmp.eq.s32.totalorder %s32, 0
    %p131 = por %p129, %p130
    %p132 = scmp.ne.s32.totalorder %s118, %s119
    %p133 = scmp.eq.s32.totalorder %s33, 5
    %p134 = por %p132, %p133
    %p136 = scmp.ne.s32.totalorder %s119, %s135
    %p137 = scmp.eq.s32.totalorder %s33, 0
    %p138 = por %p136, %p137
    %s139 = ssub.s32 %s27, %s34
    %p140 = scmp.eq.s32.totalorder %s139, 0
    %s142 = sadd.s32 %s141, 1
    %s143 = scalar_select %p140, %s141, %s142
    %p146 = pneg %p140
    %p147 = scmp.eq.s32.totalorder %s27, 5
    %p148 = por %p146, %p147
    %p149 = scmp.ne.s32.totalorder %s141, %s144
    %p150 = scmp.eq.s32.totalorder %s27, 0
    %p151 = por %p149, %p150
    %p152 = scmp.ne.s32.totalorder %s141, %s144
    %p153 = scmp.eq.s32.totalorder %s32, 5
    %p154 = por %p152, %p153
    %p155 = scmp.ne.s32.totalorder %s144, %s145
    %p156 = scmp.eq.s32.totalorder %s32, 0
    %p157 = por %p155, %p156
    %p158 = scmp.ne.s32.totalorder %s144, %s145
    %p159 = scmp.eq.s32.totalorder %s33, 5
    %p160 = por %p158, %p159
    %p162 = scmp.ne.s32.totalorder %s145, %s161
    %p163 = scmp.eq.s32.totalorder %s33, 0
    %p164 = por %p162, %p163
    %s165 = ssub.s32 %s27, %s34
    %p166 = scmp.eq.s32.totalorder %s165, 0
    %s168 = sadd.s32 %s167, 1
    %s169 = scalar_select %p166, %s167, %s168
    %p172 = pneg %p166
    %p173 = scmp.eq.s32.totalorder %s27, 5
    %p174 = por %p172, %p173
    %p175 = scmp.ne.s32.totalorder %s167, %s170
    %p176 = scmp.eq.s32.totalorder %s27, 0
    %p177 = por %p175, %p176
    %p178 = scmp.ne.s32.totalorder %s167, %s170
    %p179 = scmp.eq.s32.totalorder %s32, 5
    %p180 = por %p178, %p179
    %p181 = scmp.ne.s32.totalorder %s170, %s171
    %p182 = scmp.eq.s32.totalorder %s32, 0
    %p183 = por %p181, %p182
    %p184 = scmp.ne.s32.totalorder %s170, %s171
    %p185 = scmp.eq.s32.totalorder %s33, 5
    %p186 = por %p184, %p185
    %p188 = scmp.ne.s32.totalorder %s171, %s187
    %p189 = scmp.eq.s32.totalorder %s33, 0
    %p190 = por %p188, %p189
    %s191 = ssub.s32 %s27, %s34
    %p192 = scmp.eq.s32.totalorder %s191, 0
    %s194 = sadd.s32 %s193, 1
    %s195 = scalar_select %p192, %s193, %s194
    %p198 = pneg %p192
    %p199 = scmp.eq.s32.totalorder %s27, 5
    %p200 = por %p198, %p199
    %p201 = scmp.ne.s32.totalorder %s193, %s196
    %p202 = scmp.eq.s32.totalorder %s27, 0
    %p203 = por %p201, %p202
    %p204 = scmp.ne.s32.totalorder %s193, %s196
    %p205 = scmp.eq.s32.totalorder %s32, 5
    %p206 = por %p204, %p205
    %p207 = scmp.ne.s32.totalorder %s196, %s197
    %p208 = scmp.eq.s32.totalorder %s32, 0
    %p209 = por %p207, %p208
    %p210 = scmp.ne.s32.totalorder %s196, %s197
    %p211 = scmp.eq.s32.totalorder %s33, 5
    %p212 = por %p210, %p211
    %p214 = scmp.ne.s32.totalorder %s197, %s213
    %p215 = scmp.eq.s32.totalorder %s33, 0
    %p216 = por %p214, %p215
    %s217 = ssub.s32 %s27, %s34
    %p218 = scmp.eq.s32.totalorder %s217, 0
    %s220 = sadd.s32 %s219, 1
    %s221 = scalar_select %p218, %s219, %s220
    %p224 = pneg %p218
    %p225 = scmp.eq.s32.totalorder %s27, 5
    %p226 = por %p224, %p225
    %p227 = scmp.ne.s32.totalorder %s219, %s222
    %p228 = scmp.eq.s32.totalorder %s27, 0
    %p229 = por %p227, %p228
    %p230 = scmp.ne.s32.totalorder %s219, %s222
    %p231 = scmp.eq.s32.totalorder %s32, 5
    %p232 = por %p230, %p231
    %p233 = scmp.ne.s32.totalorder %s222, %s223
    %p234 = scmp.eq.s32.totalorder %s32, 0
    %p235 = por %p233, %p234
    %p236 = scmp.ne.s32.totalorder %s222, %s223
    %p237 = scmp.eq.s32.totalorder %s33, 5
    %p238 = por %p236, %p237
    %p240 = scmp.ne.s32.totalorder %s223, %s239
    %p241 = scmp.eq.s32.totalorder %s33, 0
    %p242 = por %p240, %p241
    %s243 = ssub.s32 %s27, %s34
    %p244 = scmp.eq.s32.totalorder %s243, 0
    %s246 = sadd.s32 %s245, 1
    %s247 = scalar_select %p244, %s245, %s246
    %p250 = pneg %p244
    %p251 = scmp.eq.s32.totalorder %s27, 5
    %p252 = por %p250, %p251
    %p253 = scmp.ne.s32.totalorder %s245, %s248
    %p254 = scmp.eq.s32.totalorder %s27, 0
    %p255 = por %p253, %p254
    %p256 = scmp.ne.s32.totalorder %s245, %s248
    %p257 = scmp.eq.s32.totalorder %s32, 5
    %p258 = por %p256, %p257
    %p259 = scmp.ne.s32.totalorder %s248, %s249
    %p260 = scmp.eq.s32.totalorder %s32, 0
    %p261 = por %p259, %p260
    %p262 = scmp.ne.s32.totalorder %s248, %s249
    %p263 = scmp.eq.s32.totalorder %s33, 5
    %p264 = por %p262, %p263
    %p266 = scmp.ne.s32.totalorder %s249, %s265
    %p267 = scmp.eq.s32.totalorder %s33, 0
    %p268 = por %p266, %p267
    %s269 = ssub.s32 %s27, %s34
    %p270 = scmp.eq.s32.totalorder %s269, 0
    %s272 = sadd.s32 %s271, 1
    %s273 = scalar_select %p270, %s271, %s272
    %p276 = pneg %p270
    %p277 = scmp.eq.s32.totalorder %s27, 5
    %p278 = por %p276, %p277
    %p279 = scmp.ne.s32.totalorder %s271, %s274
    %p280 = scmp.eq.s32.totalorder %s27, 0
    %p281 = por %p279, %p280
    %p282 = scmp.ne.s32.totalorder %s271, %s274
    %p283 = scmp.eq.s32.totalorder %s32, 5
    %p284 = por %p282, %p283
    %p285 = scmp.ne.s32.totalorder %s274, %s275
    %p286 = scmp.eq.s32.totalorder %s32, 0
    %p287 = por %p285, %p286
    %p288 = scmp.ne.s32.totalorder %s274, %s275
    %p289 = scmp.eq.s32.totalorder %s33, 5
    %p290 = por %p288, %p289
    %p292 = scmp.ne.s32.totalorder %s275, %s291
    %p293 = scmp.eq.s32.totalorder %s33, 0
    %p294 = por %p292, %p293
    %s295 = ssub.s32 %s27, %s34
    %p296 = scmp.eq.s32.totalorder %s295, 0
    %s298 = sadd.s32 %s297, 1
    %s299 = scalar_select %p296, %s297, %s298
    %p302 = pneg %p296
    %p303 = scmp.eq.s32.totalorder %s27, 5
    %p304 = por %p302, %p303
    %p305 = scmp.ne.s32.totalorder %s297, %s300
    %p306 = scmp.eq.s32.totalorder %s27, 0
    %p307 = por %p305, %p306
    %p308 = scmp.ne.s32.totalorder %s297, %s300
    %p309 = scmp.eq.s32.totalorder %s32, 5
    %p310 = por %p308, %p309
    %p311 = scmp.ne.s32.totalorder %s300, %s301
    %p312 = scmp.eq.s32.totalorder %s32, 0
    %p313 = por %p311, %p312
    %p314 = scmp.ne.s32.totalorder %s300, %s301
    %p315 = scmp.eq.s32.totalorder %s33, 5
    %p316 = por %p314, %p315
    %p318 = scmp.ne.s32.totalorder %s301, %s317
    %p319 = scmp.eq.s32.totalorder %s33, 0
    %p320 = por %p318, %p319
    %s321 = ssub.s32 %s27, %s34
    %p322 = scmp.eq.s32.totalorder %s321, 0
    %s324 = sadd.s32 %s323, 1
    %s325 = scalar_select %p322, %s323, %s324
    %p328 = pneg %p322
    %p329 = scmp.eq.s32.totalorder %s27, 5
    %p330 = por %p328, %p329
    %p331 = scmp.ne.s32.totalorder %s323, %s326
    %p332 = scmp.eq.s32.totalorder %s27, 0
    %p333 = por %p331, %p332
    %p334 = scmp.ne.s32.totalorder %s323, %s326
    %p335 = scmp.eq.s32.totalorder %s32, 5
    %p336 = por %p334, %p335
    %p337 = scmp.ne.s32.totalorder %s326, %s327
    %p338 = scmp.eq.s32.totalorder %s32, 0
    %p339 = por %p337, %p338
    %p340 = scmp.ne.s32.totalorder %s326, %s327
    %p341 = scmp.eq.s32.totalorder %s33, 5
    %p342 = por %p340, %p341
    %p344 = scmp.ne.s32.totalorder %s327, %s343
    %p345 = scmp.eq.s32.totalorder %s33, 0
    %p346 = por %p344, %p345
    %s347 = ssub.s32 %s27, %s34
    %p348 = scmp.eq.s32.totalorder %s347, 0
    %s350 = sadd.s32 %s349, 1
    %s351 = scalar_select %p348, %s349, %s350
    %p354 = pneg %p348
    %p355 = scmp.eq.s32.totalorder %s27, 5
    %p356 = por %p354, %p355
    %p357 = scmp.ne.s32.totalorder %s349, %s352
    %p358 = scmp.eq.s32.totalorder %s27, 0
    %p359 = por %p357, %p358
    %p360 = scmp.ne.s32.totalorder %s349, %s352
    %p361 = scmp.eq.s32.totalorder %s32, 5
    %p362 = por %p360, %p361
    %p363 = scmp.ne.s32.totalorder %s352, %s353
    %p364 = scmp.eq.s32.totalorder %s32, 0
    %p365 = por %p363, %p364
    %p366 = scmp.ne.s32.totalorder %s352, %s353
    %p367 = scmp.eq.s32.totalorder %s33, 5
    %p368 = por %p366, %p367
    %p370 = scmp.ne.s32.totalorder %s353, %s369
    %p371 = scmp.eq.s32.totalorder %s33, 0
    %p372 = por %p370, %p371
    %s373 = ssub.s32 %s27, %s34
    %p374 = scmp.eq.s32.totalorder %s373, 0
    %s376 = sadd.s32 %s375, 1
    %s377 = scalar_select %p374, %s375, %s376
    %p380 = pneg %p374
    %p381 = scmp.eq.s32.totalorder %s27, 5
    %p382 = por %p380, %p381
    %p383 = scmp.ne.s32.totalorder %s375, %s378
    %p384 = scmp.eq.s32.totalorder %s27, 0
    %p385 = por %p383, %p384
    %p386 = scmp.ne.s32.totalorder %s375, %s378
    %p387 = scmp.eq.s32.totalorder %s32, 5
    %p388 = por %p386, %p387
    %p389 = scmp.ne.s32.totalorder %s378, %s379
    %p390 = scmp.eq.s32.totalorder %s32, 0
    %p391 = por %p389, %p390
    %p392 = scmp.ne.s32.totalorder %s378, %s379
    %p393 = scmp.eq.s32.totalorder %s33, 5
    %p394 = por %p392, %p393
    %p396 = scmp.ne.s32.totalorder %s379, %s395
    %p397 = scmp.eq.s32.totalorder %s33, 0
    %p398 = por %p396, %p397
    %s399 = ssub.s32 %s27, %s34
    %p400 = scmp.eq.s32.totalorder %s399, 0
    %s402 = sadd.s32 %s401, 1
    %s403 = scalar_select %p400, %s401, %s402
    %p406 = pneg %p400
    %p407 = scmp.eq.s32.totalorder %s27, 5
    %p408 = por %p406, %p407
    %p409 = scmp.ne.s32.totalorder %s401, %s404
    %p410 = scmp.eq.s32.totalorder %s27, 0
    %p411 = por %p409, %p410
    %p412 = scmp.ne.s32.totalorder %s401, %s404
    %p413 = scmp.eq.s32.totalorder %s32, 5
    %p414 = por %p412, %p413
    %p415 = scmp.ne.s32.totalorder %s404, %s405
    %p416 = scmp.eq.s32.totalorder %s32, 0
    %p417 = por %p415, %p416
    %p418 = scmp.ne.s32.totalorder %s404, %s405
    %p419 = scmp.eq.s32.totalorder %s33, 5
    %p420 = por %p418, %p419
    %p422 = scmp.ne.s32.totalorder %s405, %s421
    %p423 = scmp.eq.s32.totalorder %s33, 0
    %p424 = por %p422, %p423
    %s425 = ssub.s32 %s27, %s34
    %p426 = scmp.eq.s32.totalorder %s425, 0
    %s428 = sadd.s32 %s427, 1
    %s429 = scalar_select %p426, %s427, %s428
    %p432 = pneg %p426
    %p433 = scmp.eq.s32.totalorder %s27, 5
    %p434 = por %p432, %p433
    %p435 = scmp.ne.s32.totalorder %s427, %s430
    %p436 = scmp.eq.s32.totalorder %s27, 0
    %p437 = por %p435, %p436
    %p438 = scmp.ne.s32.totalorder %s427, %s430
    %p439 = scmp.eq.s32.totalorder %s32, 5
    %p440 = por %p438, %p439
    %p441 = scmp.ne.s32.totalorder %s430, %s431
    %p442 = scmp.eq.s32.totalorder %s32, 0
    %p443 = por %p441, %p442
    %p444 = scmp.ne.s32.totalorder %s430, %s431
    %p445 = scmp.eq.s32.totalorder %s33, 5
    %p446 = por %p444, %p445
    %p448 = scmp.ne.s32.totalorder %s431, %s447
    %p449 = scmp.eq.s32.totalorder %s33, 0
    %p450 = por %p448, %p449
    %s451 = ssub.s32 %s27, %s34
    %p452 = scmp.eq.s32.totalorder %s451, 0
    %s454 = sadd.s32 %s453, 1
    %s455 = scalar_select %p452, %s453, %s454
    %p458 = pneg %p452
    %p459 = scmp.eq.s32.totalorder %s27, 5
    %p460 = por %p458, %p459
    %p461 = scmp.ne.s32.totalorder %s453, %s456
    %p462 = scmp.eq.s32.totalorder %s27, 0
    %p463 = por %p461, %p462
    %p464 = scmp.ne.s32.totalorder %s453, %s456
    %p465 = scmp.eq.s32.totalorder %s32, 5
    %p466 = por %p464, %p465
    %p467 = scmp.ne.s32.totalorder %s456, %s457
    %p468 = scmp.eq.s32.totalorder %s32, 0
    %p469 = por %p467, %p468
    %p470 = scmp.ne.s32.totalorder %s456, %s457
    %p471 = scmp.eq.s32.totalorder %s33, 5
    %p472 = por %p470, %p471
    %p474 = scmp.ne.s32.totalorder %s457, %s473
    %p475 = scmp.eq.s32.totalorder %s33, 0
    %p476 = por %p474, %p475
    %s477 = ssub.s32 %s27, %s34
    %p478 = scmp.eq.s32.totalorder %s477, 0
    %s480 = sadd.s32 %s479, 1
    %s481 = scalar_select %p478, %s479, %s480
    %p484 = pneg %p478
    %p485 = scmp.eq.s32.totalorder %s27, 5
    %p486 = por %p484, %p485
    %p487 = scmp.ne.s32.totalorder %s479, %s482
    %p488 = scmp.eq.s32.totalorder %s27, 0
    %p489 = por %p487, %p488
    %p490 = scmp.ne.s32.totalorder %s479, %s482
    %p491 = scmp.eq.s32.totalorder %s32, 5
    %p492 = por %p490, %p491
    %p493 = scmp.ne.s32.totalorder %s482, %s483
    %p494 = scmp.eq.s32.totalorder %s32, 0
    %p495 = por %p493, %p494
    %p496 = scmp.ne.s32.totalorder %s482, %s483
    %p497 = scmp.eq.s32.totalorder %s33, 5
    %p498 = por %p496, %p497
    %p500 = scmp.ne.s32.totalorder %s483, %s499
    %p501 = scmp.eq.s32.totalorder %s33, 0
    %p502 = por %p500, %p501
    %s503 = ssub.s32 %s27, %s34
    %p504 = scmp.eq.s32.totalorder %s503, 0
    %s506 = sadd.s32 %s505, 1
    %s507 = scalar_select %p504, %s505, %s506
    %p510 = pneg %p504
    %p511 = scmp.eq.s32.totalorder %s27, 5
    %p512 = por %p510, %p511
    %p513 = scmp.ne.s32.totalorder %s505, %s508
    %p514 = scmp.eq.s32.totalorder %s27, 0
    %p515 = por %p513, %p514
    %p516 = scmp.ne.s32.totalorder %s505, %s508
    %p517 = scmp.eq.s32.totalorder %s32, 5
    %p518 = por %p516, %p517
    %p519 = scmp.ne.s32.totalorder %s508, %s509
    %p520 = scmp.eq.s32.totalorder %s32, 0
    %p521 = por %p519, %p520
    %p522 = scmp.ne.s32.totalorder %s508, %s509
    %p523 = scmp.eq.s32.totalorder %s33, 5
    %p524 = por %p522, %p523
    %p526 = scmp.ne.s32.totalorder %s509, %s525
    %p527 = scmp.eq.s32.totalorder %s33, 0
    %p528 = por %p526, %p527
    %s529 = ssub.s32 %s27, %s34
    %p530 = scmp.eq.s32.totalorder %s529, 0
    %s532 = sadd.s32 %s531, 1
    %s533 = scalar_select %p530, %s531, %s532
    %p536 = pneg %p530
    %p537 = scmp.eq.s32.totalorder %s27, 5
    %p538 = por %p536, %p537
    %p539 = scmp.ne.s32.totalorder %s531, %s534
    %p540 = scmp.eq.s32.totalorder %s27, 0
    %p541 = por %p539, %p540
    %p542 = scmp.ne.s32.totalorder %s531, %s534
    %p543 = scmp.eq.s32.totalorder %s32, 5
    %p544 = por %p542, %p543
    %p545 = scmp.ne.s32.totalorder %s534, %s535
    %p546 = scmp.eq.s32.totalorder %s32, 0
    %p547 = por %p545, %p546
    %p548 = scmp.ne.s32.totalorder %s534, %s535
    %p549 = scmp.eq.s32.totalorder %s33, 5
    %p550 = por %p548, %p549
    %p552 = scmp.ne.s32.totalorder %s535, %s551
    %p553 = scmp.eq.s32.totalorder %s33, 0
    %p554 = por %p552, %p553
    %s555 = ssub.s32 %s27, %s34
    %p556 = scmp.eq.s32.totalorder %s555, 0
    %s558 = sadd.s32 %s557, 1
    %s559 = scalar_select %p556, %s557, %s558
    %p562 = pneg %p556
    %p563 = scmp.eq.s32.totalorder %s27, 5
    %p564 = por %p562, %p563
    %p565 = scmp.ne.s32.totalorder %s557, %s560
    %p566 = scmp.eq.s32.totalorder %s27, 0
    %p567 = por %p565, %p566
    %p568 = scmp.ne.s32.totalorder %s557, %s560
    %p569 = scmp.eq.s32.totalorder %s32, 5
    %p570 = por %p568, %p569
    %p571 = scmp.ne.s32.totalorder %s560, %s561
    %p572 = scmp.eq.s32.totalorder %s32, 0
    %p573 = por %p571, %p572
    %p574 = scmp.ne.s32.totalorder %s560, %s561
    %p575 = scmp.eq.s32.totalorder %s33, 5
    %p576 = por %p574, %p575
    %p578 = scmp.ne.s32.totalorder %s561, %s577
    %p579 = scmp.eq.s32.totalorder %s33, 0
    %p580 = por %p578, %p579
    %s581 = ssub.s32 %s27, %s34
    %p582 = scmp.eq.s32.totalorder %s581, 0
    %s584 = sadd.s32 %s583, 1
    %s585 = scalar_select %p582, %s583, %s584
    %p588 = pneg %p582
    %p589 = scmp.eq.s32.totalorder %s27, 5
    %p590 = por %p588, %p589
    %p591 = scmp.ne.s32.totalorder %s583, %s586
    %p592 = scmp.eq.s32.totalorder %s27, 0
    %p593 = por %p591, %p592
    %p594 = scmp.ne.s32.totalorder %s583, %s586
    %p595 = scmp.eq.s32.totalorder %s32, 5
    %p596 = por %p594, %p595
    %p597 = scmp.ne.s32.totalorder %s586, %s587
    %p598 = scmp.eq.s32.totalorder %s32, 0
    %p599 = por %p597, %p598
    %p600 = scmp.ne.s32.totalorder %s586, %s587
    %p601 = scmp.eq.s32.totalorder %s33, 5
    %p602 = por %p600, %p601
    %p604 = scmp.ne.s32.totalorder %s587, %s603
    %p605 = scmp.eq.s32.totalorder %s33, 0
    %p606 = por %p604, %p605
    %p607 = scmp.le.s32.totalorder 1, %s27
    %p608 = scmp.lt.s32.totalorder %s27, 7
    %p609 = pnand %p607, %p608
    %p610 = pneg %p609
    // Predicated region
    $region9: #{wavelet_transformer_forward.6} parent=5 // pred_check
      _
    $region10: #{wavelet_transformer_forward.6} parent=5 // pred_check_branch
      %612 = sbr.rel (%p609) target = $region12
    $region11: #{wavelet_transformer_forward.6} parent=5 // pred_region
      %s613 = ssub.s32 %s27, 1
    $region12: #{wavelet_transformer_forward.6} parent=5 // pred_fallthru
      _
    %p614 = scmp.lt.s32.totalorder %s27, 6
    // Predicated region
    $region13: #{wavelet_transformer_forward.6} parent=5 // pred_check
      %p615 = pneg %p614
    $region14: #{wavelet_transformer_forward.6} parent=5 // pred_check_branch
      %617 = sbr.rel (%p615) target = $region16
    $region15: #{wavelet_transformer_forward.6} parent=5 // pred_region
      // Predicated region
      $region17: #{wavelet_transformer_forward.6} parent=15 // pred_check
        %p618 = pneg %p47
      $region18: #{wavelet_transformer_forward.6} parent=15 // pred_check_branch
        %620 = sbr.rel (%p618) target = $region20
      $region19: #{wavelet_transformer_forward.6} parent=15 // pred_region
        %p621 = scmp.lt.s32.totalorder %s27, 5
        %s622 = scalar_select %p621, %s27, 5
        %s623 = smul.addr %s622, 5
        %s624 = smul.addr %s623, 8
        %s625 = scalar_lea.vmem %s0, %s624
      $region20: #{wavelet_transformer_forward.6} parent=15 // pred_fallthru
        _
      // Predicated region
      $region21: #{wavelet_transformer_forward.6} parent=15 // pred_check
        %p626 = pneg %p73
      $region22: #{wavelet_transformer_forward.6} parent=15 // pred_check_branch
        %628 = sbr.rel (%p626) target = $region24
      $region23: #{wavelet_transformer_forward.6} parent=15 // pred_region
        %p629 = scmp.lt.s32.totalorder %s27, 5
        %s630 = scalar_select %p629, %s27, 5
        %s631 = scalar_lea.vmem %s1, %s630
      $region24: #{wavelet_transformer_forward.6} parent=15 // pred_fallthru
        _
      // Predicated region
      $region25: #{wavelet_transformer_forward.6} parent=15 // pred_check
        %p632 = pneg %p99
      $region26: #{wavelet_transformer_forward.6} parent=15 // pred_check_branch
        %634 = sbr.rel (%p632) target = $region28
      $region27: #{wavelet_transformer_forward.6} parent=15 // pred_region
        %p635 = scmp.lt.s32.totalorder %s27, 5
        %s636 = scalar_select %p635, %s27, 5
        %s637 = scalar_lea.vmem %s2, %s636
      $region28: #{wavelet_transformer_forward.6} parent=15 // pred_fallthru
        _
      // Predicated region
      $region29: #{wavelet_transformer_forward.6} parent=15 // pred_check
        %p638 = pneg %p125
      $region30: #{wavelet_transformer_forward.6} parent=15 // pred_check_branch
        %640 = sbr.rel (%p638) target = $region32
      $region31: #{wavelet_transformer_forward.6} parent=15 // pred_region
        %p641 = scmp.lt.s32.totalorder %s27, 5
        %s642 = scalar_select %p641, %s27, 5
        %s643 = smul.addr %s642, 2
        %s644 = smul.addr %s643, 8
        %s645 = scalar_lea.vmem %s3, %s644
      $region32: #{wavelet_transformer_forward.6} parent=15 // pred_fallthru
        _
      // Predicated region
      $region33: #{wavelet_transformer_forward.6} parent=15 // pred_check
        %p646 = pneg %p151
      $region34: #{wavelet_transformer_forward.6} parent=15 // pred_check_branch
        %648 = sbr.rel (%p646) target = $region36
      $region35: #{wavelet_transformer_forward.6} parent=15 // pred_region
        %p649 = scmp.lt.s32.totalorder %s27, 5
        %s650 = scalar_select %p649, %s27, 5
        %s651 = scalar_lea.vmem %s4, %s650
      $region36: #{wavelet_transformer_forward.6} parent=15 // pred_fallthru
        _
      // Predicated region
      $region37: #{wavelet_transformer_forward.6} parent=15 // pred_check
        %p652 = pneg %p177
      $region38: #{wavelet_transformer_forward.6} parent=15 // pred_check_branch
        %654 = sbr.rel (%p652) target = $region40
      $region39: #{wavelet_transformer_forward.6} parent=15 // pred_region
        %p655 = scmp.lt.s32.totalorder %s27, 5
        %s656 = scalar_select %p655, %s27, 5
        %s657 = smul.addr %s656, 2
        %s658 = smul.addr %s657, 8
        %s659 = scalar_lea.vmem %s5, %s658
      $region40: #{wavelet_transformer_forward.6} parent=15 // pred_fallthru
        _
      // Predicated region
      $region41: #{wavelet_transformer_forward.6} parent=15 // pred_check
        %p660 = pneg %p203
      $region42: #{wavelet_transformer_forward.6} parent=15 // pred_check_branch
        %662 = sbr.rel (%p660) target = $region44
      $region43: #{wavelet_transformer_forward.6} parent=15 // pred_region
        %p663 = scmp.lt.s32.totalorder %s27, 5
        %s664 = scalar_select %p663, %s27, 5
        %s665 = scalar_lea.vmem %s6, %s664
      $region44: #{wavelet_transformer_forward.6} parent=15 // pred_fallthru
        _
      // Predicated region
      $region45: #{wavelet_transformer_forward.6} parent=15 // pred_check
        %p666 = pneg %p229
      $region46: #{wavelet_transformer_forward.6} parent=15 // pred_check_branch
        %668 = sbr.rel (%p666) target = $region48
      $region47: #{wavelet_transformer_forward.6} parent=15 // pred_region
        %p669 = scmp.lt.s32.totalorder %s27, 5
        %s670 = scalar_select %p669, %s27, 5
        %s671 = smul.addr %s670, 2
        %s672 = smul.addr %s671, 8
        %s673 = scalar_lea.vmem %s7, %s672
      $region48: #{wavelet_transformer_forward.6} parent=15 // pred_fallthru
        _
      // Predicated region
      $region49: #{wavelet_transformer_forward.6} parent=15 // pred_check
        %p674 = pneg %p255
      $region50: #{wavelet_transformer_forward.6} parent=15 // pred_check_branch
        %676 = sbr.rel (%p674) target = $region52
      $region51: #{wavelet_transformer_forward.6} parent=15 // pred_region
        %p677 = scmp.lt.s32.totalorder %s27, 5
        %s678 = scalar_select %p677, %s27, 5
        %s679 = scalar_lea.vmem %s8, %s678
      $region52: #{wavelet_transformer_forward.6} parent=15 // pred_fallthru
        _
      // Predicated region
      $region53: #{wavelet_transformer_forward.6} parent=15 // pred_check
        %p680 = pneg %p281
      $region54: #{wavelet_transformer_forward.6} parent=15 // pred_check_branch
        %682 = sbr.rel (%p680) target = $region56
      $region55: #{wavelet_transformer_forward.6} parent=15 // pred_region
        %p683 = scmp.lt.s32.totalorder %s27, 5
        %s684 = scalar_select %p683, %s27, 5
        %s685 = smul.addr %s684, 2
        %s686 = smul.addr %s685, 8
        %s687 = scalar_lea.vmem %s9, %s686
      $region56: #{wavelet_transformer_forward.6} parent=15 // pred_fallthru
        _
      // Predicated region
      $region57: #{wavelet_transformer_forward.6} parent=15 // pred_check
        %p688 = pneg %p307
      $region58: #{wavelet_transformer_forward.6} parent=15 // pred_check_branch
        %690 = sbr.rel (%p688) target = $region60
      $region59: #{wavelet_transformer_forward.6} parent=15 // pred_region
        %p691 = scmp.lt.s32.totalorder %s27, 5
        %s692 = scalar_select %p691, %s27, 5
        %s693 = scalar_lea.vmem %s10, %s692
      $region60: #{wavelet_transformer_forward.6} parent=15 // pred_fallthru
        _
      // Predicated region
      $region61: #{wavelet_transformer_forward.6} parent=15 // pred_check
        %p694 = pneg %p333
      $region62: #{wavelet_transformer_forward.6} parent=15 // pred_check_branch
        %696 = sbr.rel (%p694) target = $region64
      $region63: #{wavelet_transformer_forward.6} parent=15 // pred_region
        %p697 = scmp.lt.s32.totalorder %s27, 5
        %s698 = scalar_select %p697, %s27, 5
        %s699 = scalar_lea.vmem %s11, %s698
      $region64: #{wavelet_transformer_forward.6} parent=15 // pred_fallthru
        _
      // Predicated region
      $region65: #{wavelet_transformer_forward.6} parent=15 // pred_check
        %p700 = pneg %p359
      $region66: #{wavelet_transformer_forward.6} parent=15 // pred_check_branch
        %702 = sbr.rel (%p700) target = $region68
      $region67: #{wavelet_transformer_forward.6} parent=15 // pred_region
        %p703 = scmp.lt.s32.totalorder %s27, 5
        %s704 = scalar_select %p703, %s27, 5
        %s705 = scalar_lea.vmem %s12, %s704
      $region68: #{wavelet_transformer_forward.6} parent=15 // pred_fallthru
        _
      // Predicated region
      $region69: #{wavelet_transformer_forward.6} parent=15 // pred_check
        %p706 = pneg %p385
      $region70: #{wavelet_transformer_forward.6} parent=15 // pred_check_branch
        %708 = sbr.rel (%p706) target = $region72
      $region71: #{wavelet_transformer_forward.6} parent=15 // pred_region
        %p709 = scmp.lt.s32.totalorder %s27, 5
        %s710 = scalar_select %p709, %s27, 5
        %s711 = smul.addr %s710, 2
        %s712 = smul.addr %s711, 8
        %s713 = scalar_lea.vmem %s13, %s712
      $region72: #{wavelet_transformer_forward.6} parent=15 // pred_fallthru
        _
      // Predicated region
      $region73: #{wavelet_transformer_forward.6} parent=15 // pred_check
        %p714 = pneg %p411
      $region74: #{wavelet_transformer_forward.6} parent=15 // pred_check_branch
        %716 = sbr.rel (%p714) target = $region76
      $region75: #{wavelet_transformer_forward.6} parent=15 // pred_region
        %p717 = scmp.lt.s32.totalorder %s27, 5
        %s718 = scalar_select %p717, %s27, 5
        %s719 = scalar_lea.vmem %s14, %s718
      $region76: #{wavelet_transformer_forward.6} parent=15 // pred_fallthru
        _
      // Predicated region
      $region77: #{wavelet_transformer_forward.6} parent=15 // pred_check
        %p720 = pneg %p437
      $region78: #{wavelet_transformer_forward.6} parent=15 // pred_check_branch
        %722 = sbr.rel (%p720) target = $region80
      $region79: #{wavelet_transformer_forward.6} parent=15 // pred_region
        %p723 = scmp.lt.s32.totalorder %s27, 5
        %s724 = scalar_select %p723, %s27, 5
        %s725 = smul.addr %s724, 8
        %s726 = smul.addr %s725, 8
        %s727 = scalar_lea.vmem %s15, %s726
      $region80: #{wavelet_transformer_forward.6} parent=15 // pred_fallthru
        _
      // Predicated region
      $region81: #{wavelet_transformer_forward.6} parent=15 // pred_check
        %p728 = pneg %p463
      $region82: #{wavelet_transformer_forward.6} parent=15 // pred_check_branch
        %730 = sbr.rel (%p728) target = $region84
      $region83: #{wavelet_transformer_forward.6} parent=15 // pred_region
        %p731 = scmp.lt.s32.totalorder %s27, 5
        %s732 = scalar_select %p731, %s27, 5
        %s733 = scalar_lea.vmem %s16, %s732
      $region84: #{wavelet_transformer_forward.6} parent=15 // pred_fallthru
        _
      // Predicated region
      $region85: #{wavelet_transformer_forward.6} parent=15 // pred_check
        %p734 = pneg %p489
      $region86: #{wavelet_transformer_forward.6} parent=15 // pred_check_branch
        %736 = sbr.rel (%p734) target = $region88
      $region87: #{wavelet_transformer_forward.6} parent=15 // pred_region
        %p737 = scmp.lt.s32.totalorder %s27, 5
        %s738 = scalar_select %p737, %s27, 5
        %s739 = scalar_lea.vmem %s17, %s738
      $region88: #{wavelet_transformer_forward.6} parent=15 // pred_fallthru
        _
      // Predicated region
      $region89: #{wavelet_transformer_forward.6} parent=15 // pred_check
        %p740 = pneg %p515
      $region90: #{wavelet_transformer_forward.6} parent=15 // pred_check_branch
        %742 = sbr.rel (%p740) target = $region92
      $region91: #{wavelet_transformer_forward.6} parent=15 // pred_region
        %p743 = scmp.lt.s32.totalorder %s27, 5
        %s744 = scalar_select %p743, %s27, 5
        %s745 = scalar_lea.vmem %s18, %s744
      $region92: #{wavelet_transformer_forward.6} parent=15 // pred_fallthru
        _
      // Predicated region
      $region93: #{wavelet_transformer_forward.6} parent=15 // pred_check
        %p746 = pneg %p541
      $region94: #{wavelet_transformer_forward.6} parent=15 // pred_check_branch
        %748 = sbr.rel (%p746) target = $region96
      $region95: #{wavelet_transformer_forward.6} parent=15 // pred_region
        %p749 = scmp.lt.s32.totalorder %s27, 5
        %s750 = scalar_select %p749, %s27, 5
        %s751 = smul.addr %s750, 2
        %s752 = smul.addr %s751, 8
        %s753 = scalar_lea.vmem %s19, %s752
      $region96: #{wavelet_transformer_forward.6} parent=15 // pred_fallthru
        _
      // Predicated region
      $region97: #{wavelet_transformer_forward.6} parent=15 // pred_check
        %p754 = pneg %p567
      $region98: #{wavelet_transformer_forward.6} parent=15 // pred_check_branch
        %756 = sbr.rel (%p754) target = $region100
      $region99: #{wavelet_transformer_forward.6} parent=15 // pred_region
        %p757 = scmp.lt.s32.totalorder %s27, 5
        %s758 = scalar_select %p757, %s27, 5
        %s759 = scalar_lea.vmem %s20, %s758
      $region100: #{wavelet_transformer_forward.6} parent=15 // pred_fallthru
        _
    $region16: #{wavelet_transformer_forward.6} parent=5 // pred_fallthru
      _
    %p760 = scmp.le.s32.totalorder 1, %s27
    %p761 = scmp.lt.s32.totalorder %s27, 7
    %p762 = pnand %p760, %p761
    %p763 = pneg %p762
    // Predicated region
    $region101: #{wavelet_transformer_forward.6} parent=5 // pred_check
      _
    $region102: #{wavelet_transformer_forward.6} parent=5 // pred_check_branch
      %765 = sbr.rel (%p762) target = $region104
    $region103: #{wavelet_transformer_forward.6} parent=5 // pred_region
      %s766 = ssub.s32 %s27, 1
      %p767 = scmp.lt.s32.totalorder %s32, 5
      %s768 = scalar_select %p767, %s32, 5
      %s769 = smul.addr %s768, 5
      %s770 = smul.addr %s769, 8
      %s771 = scalar_lea.vmem %s0, %s770
      %p772 = pneg %p53
      %p773 = pneg %p50
      %p774 = scmp.lt.s32.totalorder %s32, 5
      %s775 = scalar_select %p774, %s32, 5
      %s776 = scalar_lea.vmem %s1, %s775
      %p777 = pneg %p79
      %p778 = pneg %p76
      %p779 = scmp.lt.s32.totalorder %s32, 5
      %s780 = scalar_select %p779, %s32, 5
      %s781 = scalar_lea.vmem %s2, %s780
      %p782 = pneg %p105
      %p783 = pneg %p102
      %p784 = scmp.lt.s32.totalorder %s32, 5
      %s785 = scalar_select %p784, %s32, 5
      %s786 = smul.addr %s785, 2
      %s787 = smul.addr %s786, 8
      %s788 = scalar_lea.vmem %s3, %s787
      %p789 = pneg %p131
      %p790 = pneg %p128
      %p791 = scmp.lt.s32.totalorder %s32, 5
      %s792 = scalar_select %p791, %s32, 5
      %s793 = scalar_lea.vmem %s4, %s792
      %p794 = pneg %p157
      %p795 = pneg %p154
      %p796 = scmp.lt.s32.totalorder %s32, 5
      %s797 = scalar_select %p796, %s32, 5
      %s798 = smul.addr %s797, 2
      %s799 = smul.addr %s798, 8
      %s800 = scalar_lea.vmem %s5, %s799
      %p801 = pneg %p183
      %p802 = pneg %p180
      %p803 = scmp.lt.s32.totalorder %s32, 5
      %s804 = scalar_select %p803, %s32, 5
      %s805 = scalar_lea.vmem %s6, %s804
      %p806 = pneg %p209
      %p807 = pneg %p206
      %p808 = scmp.lt.s32.totalorder %s32, 5
      %s809 = scalar_select %p808, %s32, 5
      %s810 = smul.addr %s809, 2
      %s811 = smul.addr %s810, 8
      %s812 = scalar_lea.vmem %s7, %s811
      %p813 = pneg %p235
      %p814 = pneg %p232
      %p815 = scmp.lt.s32.totalorder %s32, 5
      %s816 = scalar_select %p815, %s32, 5
      %s817 = scalar_lea.vmem %s8, %s816
      %p818 = pneg %p261
      %p819 = pneg %p258
      %p820 = scmp.lt.s32.totalorder %s32, 5
      %s821 = scalar_select %p820, %s32, 5
      %s822 = smul.addr %s821, 2
      %s823 = smul.addr %s822, 8
      %s824 = scalar_lea.vmem %s9, %s823
      %p825 = pneg %p287
      %p826 = pneg %p284
      %p827 = scmp.lt.s32.totalorder %s32, 5
      %s828 = scalar_select %p827, %s32, 5
      %s829 = scalar_lea.vmem %s10, %s828
      %p830 = pneg %p313
      %p831 = pneg %p310
      %p832 = scmp.lt.s32.totalorder %s32, 5
      %s833 = scalar_select %p832, %s32, 5
      %s834 = scalar_lea.vmem %s11, %s833
      %p835 = pneg %p339
      %p836 = pneg %p336
      %p837 = scmp.lt.s32.totalorder %s32, 5
      %s838 = scalar_select %p837, %s32, 5
      %s839 = scalar_lea.vmem %s12, %s838
      %p840 = pneg %p365
      %p841 = pneg %p362
      %p842 = scmp.lt.s32.totalorder %s32, 5
      %s843 = scalar_select %p842, %s32, 5
      %s844 = smul.addr %s843, 2
      %s845 = smul.addr %s844, 8
      %s846 = scalar_lea.vmem %s13, %s845
      %p847 = pneg %p391
      %p848 = pneg %p388
      %p849 = scmp.lt.s32.totalorder %s32, 5
      %s850 = scalar_select %p849, %s32, 5
      %s851 = scalar_lea.vmem %s14, %s850
      %p852 = pneg %p417
      %p853 = pneg %p414
      %p854 = scmp.lt.s32.totalorder %s32, 5
      %s855 = scalar_select %p854, %s32, 5
      %s856 = smul.addr %s855, 8
      %s857 = smul.addr %s856, 8
      %s858 = scalar_lea.vmem %s15, %s857
      %p859 = pneg %p443
      %p860 = pneg %p440
      %p861 = scmp.lt.s32.totalorder %s32, 5
      %s862 = scalar_select %p861, %s32, 5
      %s863 = scalar_lea.vmem %s16, %s862
      %p864 = pneg %p469
      %p865 = pneg %p466
      %p866 = scmp.lt.s32.totalorder %s32, 5
      %s867 = scalar_select %p866, %s32, 5
      %s868 = scalar_lea.vmem %s17, %s867
      %p869 = pneg %p495
      %p870 = pneg %p492
      %p871 = scmp.lt.s32.totalorder %s32, 5
      %s872 = scalar_select %p871, %s32, 5
      %s873 = scalar_lea.vmem %s18, %s872
      %p874 = pneg %p521
      %p875 = pneg %p518
      %p876 = scmp.lt.s32.totalorder %s32, 5
      %s877 = scalar_select %p876, %s32, 5
      %s878 = smul.addr %s877, 2
      %s879 = smul.addr %s878, 8
      %s880 = scalar_lea.vmem %s19, %s879
      %p881 = pneg %p547
      %p882 = pneg %p544
      %p883 = scmp.lt.s32.totalorder %s32, 5
      %s884 = scalar_select %p883, %s32, 5
      %s885 = scalar_lea.vmem %s20, %s884
      %p886 = pneg %p573
      %p887 = pneg %p570
      %p888 = pneg %p599
      %p889 = pneg %p596
      %p890 = scmp.lt.s32.totalorder %s32, 5
      %s891 = scalar_select %p890, %s32, 5
      %s892 = smul.addr %s891, 5
      %s893 = smul.addr %s892, 8
      %s894 = scalar_lea.vmem %s21, %s893
      %p895 = scmp.lt.s32.totalorder %s32, 5
      %s896 = scalar_select %p895, %s32, 5
      %s897 = smul.addr %s896, 5
      %s898 = smul.addr %s897, 8
      %s899 = scalar_lea.vmem %s0, %s898
      %p900 = scmp.lt.s32.totalorder %s32, 5
      %s901 = scalar_select %p900, %s32, 5
      %s902 = scalar_lea.vmem %s1, %s901
      %p903 = scmp.lt.s32.totalorder %s32, 5
      %s904 = scalar_select %p903, %s32, 5
      %s905 = scalar_lea.vmem %s2, %s904
      %p906 = scmp.lt.s32.totalorder %s32, 5
      %s907 = scalar_select %p906, %s32, 5
      %s908 = smul.addr %s907, 2
      %s909 = smul.addr %s908, 8
      %s910 = scalar_lea.vmem %s3, %s909
      %p911 = scmp.lt.s32.totalorder %s32, 5
      %s912 = scalar_select %p911, %s32, 5
      %s913 = scalar_lea.vmem %s4, %s912
      %p914 = scmp.lt.s32.totalorder %s32, 5
      %s915 = scalar_select %p914, %s32, 5
      %s916 = smul.addr %s915, 2
      %s917 = smul.addr %s916, 8
      %s918 = scalar_lea.vmem %s5, %s917
      %p919 = scmp.lt.s32.totalorder %s32, 5
      %s920 = scalar_select %p919, %s32, 5
      %s921 = scalar_lea.vmem %s6, %s920
      %p922 = scmp.lt.s32.totalorder %s32, 5
      %s923 = scalar_select %p922, %s32, 5
      %s924 = smul.addr %s923, 2
      %s925 = smul.addr %s924, 8
      %s926 = scalar_lea.vmem %s7, %s925
      %p927 = scmp.lt.s32.totalorder %s32, 5
      %s928 = scalar_select %p927, %s32, 5
      %s929 = scalar_lea.vmem %s8, %s928
      %p930 = scmp.lt.s32.totalorder %s32, 5
      %s931 = scalar_select %p930, %s32, 5
      %s932 = smul.addr %s931, 2
      %s933 = smul.addr %s932, 8
      %s934 = scalar_lea.vmem %s9, %s933
      %p935 = scmp.lt.s32.totalorder %s32, 5
      %s936 = scalar_select %p935, %s32, 5
      %s937 = scalar_lea.vmem %s10, %s936
      %p938 = scmp.lt.s32.totalorder %s32, 5
      %s939 = scalar_select %p938, %s32, 5
      %s940 = scalar_lea.vmem %s11, %s939
      %p941 = scmp.lt.s32.totalorder %s32, 5
      %s942 = scalar_select %p941, %s32, 5
      %s943 = scalar_lea.vmem %s12, %s942
      %p944 = scmp.lt.s32.totalorder %s32, 5
      %s945 = scalar_select %p944, %s32, 5
      %s946 = smul.addr %s945, 2
      %s947 = smul.addr %s946, 8
      %s948 = scalar_lea.vmem %s13, %s947
      %p949 = scmp.lt.s32.totalorder %s32, 5
      %s950 = scalar_select %p949, %s32, 5
      %s951 = scalar_lea.vmem %s14, %s950
      %p952 = scmp.lt.s32.totalorder %s32, 5
      %s953 = scalar_select %p952, %s32, 5
      %s954 = smul.addr %s953, 8
      %s955 = smul.addr %s954, 8
      %s956 = scalar_lea.vmem %s15, %s955
      %p957 = scmp.lt.s32.totalorder %s32, 5
      %s958 = scalar_select %p957, %s32, 5
      %s959 = scalar_lea.vmem %s16, %s958
      %p960 = scmp.lt.s32.totalorder %s32, 5
      %s961 = scalar_select %p960, %s32, 5
      %s962 = scalar_lea.vmem %s17, %s961
      %p963 = scmp.lt.s32.totalorder %s32, 5
      %s964 = scalar_select %p963, %s32, 5
      %s965 = scalar_lea.vmem %s18, %s964
      %p966 = scmp.lt.s32.totalorder %s32, 5
      %s967 = scalar_select %p966, %s32, 5
      %s968 = smul.addr %s967, 2
      %s969 = smul.addr %s968, 8
      %s970 = scalar_lea.vmem %s19, %s969
      %p971 = scmp.lt.s32.totalorder %s32, 5
      %s972 = scalar_select %p971, %s32, 5
      %s973 = scalar_lea.vmem %s20, %s972
      %p974 = scmp.lt.s32.totalorder %s32, 5
      %s975 = scalar_select %p974, %s32, 5
      %s976 = smul.addr %s975, 5
      %s977 = smul.addr %s976, 8
      %s978 = scalar_lea.vmem %s21, %s977
      %v979 = vld [vmem:[%s899] sm:$0xff]
      %v980 = vld [vmem:[%s899 + $0x8] sm:$0xff]
      %v981 = vld [vmem:[%s899 + $0x10] sm:$0xff]
      %v982 = vld [vmem:[%s899 + $0x18] sm:$0xff]
      %v983 = vld [vmem:[%s899 + $0x20] sm:$0x3]
      %v984 = vlaneseq
      %v985 = vand.u32 %v984, 127
      %vm986 = vcmp.ge.s32.totalorder %v985, 0
      %vm987 = vcmp.lt.s32.totalorder %v985, 4
      %vm988 = vmand %vm986, %vm987
      %v989 = vsel %vm988, 1, 0
      %v990 = vcvt.s32.f32 %v989
      %vm991 = vcmp.ge.s32.totalorder %v985, 4
      %vm992 = vcmp.lt.s32.totalorder %v985, 8
      %vm993 = vmand %vm991, %vm992
      %v994 = vsel %vm993, 1, 0
      %v995 = vcvt.s32.f32 %v994
      %vm996 = vcmp.ge.s32.totalorder %v985, 8
      %vm997 = vcmp.lt.s32.totalorder %v985, 12
      %vm998 = vmand %vm996, %vm997
      %v999 = vsel %vm998, 1, 0
      %v1000 = vcvt.s32.f32 %v999
      %vm1001 = vcmp.ge.s32.totalorder %v985, 12
      %vm1002 = vcmp.lt.s32.totalorder %v985, 16
      %vm1003 = vmand %vm1001, %vm1002
      %v1004 = vsel %vm1003, 1, 0
      %v1005 = vcvt.s32.f32 %v1004
      %v1006 = vlaneseq
      %v1007 = vshrl.u32 %v1006, 7
      %v1008 = vadd.s32 %v1007, 8
      %v1009 = vadd.s32 %v1007, 16
      %v1010 = vadd.s32 %v1007, 24
      %v1011 = vadd.s32 %v1007, 32
      %vm1012 = vcmp.ge.s32.totalorder %v1007, 0
      %vm1013 = vcmp.ge.s32.totalorder %v1008, 0
      %vm1014 = vcmp.ge.s32.totalorder %v1009, 0
      %vm1015 = vcmp.ge.s32.totalorder %v1010, 0
      %vm1016 = vcmp.ge.s32.totalorder %v1011, 0
      %vm1017 = vcmp.lt.s32.totalorder %v1007, 17
      %vm1018 = vcmp.lt.s32.totalorder %v1008, 17
      %vm1019 = vcmp.lt.s32.totalorder %v1009, 17
      %vm1020 = vcmp.lt.s32.totalorder %v1010, 17
      %vm1021 = vcmp.lt.s32.totalorder %v1011, 17
      %vm1022 = vmand %vm1012, %vm1017
      %vm1023 = vmand %vm1013, %vm1018
      %vm1024 = vmand %vm1014, %vm1019
      %vm1025 = vmand %vm1015, %vm1020
      %vm1026 = vmand %vm1016, %vm1021
      %vm1027 = vcmp.lt.s32.totalorder %v985, 17
      %vm1028 = vmand %vm986, %vm1027
      %vm1029 = vmand %vm1022, %vm1028
      %vm1030 = vmand %vm1023, %vm1028
      %vm1031 = vmand %vm1024, %vm1028
      %vm1032 = vmand %vm1025, %vm1028
      %vm1033 = vmand %vm1026, %vm1028
      %vm1034 = vcmp.ge.s32.totalorder %v1007, 17
      %vm1035 = vcmp.ge.s32.totalorder %v1008, 17
      %vm1036 = vcmp.ge.s32.totalorder %v1009, 17
      %vm1037 = vcmp.ge.s32.totalorder %v1010, 17
      %vm1038 = vcmp.ge.s32.totalorder %v1011, 17
      %vm1039 = vcmp.lt.s32.totalorder %v1007, 34
      %vm1040 = vcmp.lt.s32.totalorder %v1008, 34
      %vm1041 = vcmp.lt.s32.totalorder %v1009, 34
      %vm1042 = vcmp.lt.s32.totalorder %v1010, 34
      %vm1043 = vcmp.lt.s32.totalorder %v1011, 34
      %vm1044 = vmand %vm1034, %vm1039
      %vm1045 = vmand %vm1035, %vm1040
      %vm1046 = vmand %vm1036, %vm1041
      %vm1047 = vmand %vm1037, %vm1042
      %vm1048 = vmand %vm1038, %vm1043
      %vm1049 = vcmp.ge.s32.totalorder %v985, 17
      %vm1050 = vcmp.lt.s32.totalorder %v985, 34
      %vm1051 = vmand %vm1049, %vm1050
      %vm1052 = vmand %vm1044, %vm1051
      %vm1053 = vmand %vm1045, %vm1051
      %vm1054 = vmand %vm1046, %vm1051
      %vm1055 = vmand %vm1047, %vm1051
      %vm1056 = vmand %vm1048, %vm1051
      %vm1057 = vmor %vm1029, %vm1052
      %vm1058 = vmor %vm1030, %vm1053
      %vm1059 = vmor %vm1031, %vm1054
      %vm1060 = vmor %vm1032, %vm1055
      %vm1061 = vmor %vm1033, %vm1056
      %v1062 = vld [vmem:[%s902] sm:$0x1]
      %v1063 = vld [vmem:[%s905] sm:$0x1]
      %v1064 = vld [vmem:[%s940] sm:$0x1]
      %v1065 = vld [vmem:[%s943] sm:$0x1]
      %v1066 = vld [vmem:[%s910] sm:$0xff]
      %v1067 = vld [vmem:[%s910 + $0x8] sm:$0xff]
      %v1068 = vld [vmem:[%s913] sm:$0x1]
      %v1069 = vld [vmem:[%s918] sm:$0xff]
      %v1070 = vld [vmem:[%s918 + $0x8] sm:$0xff]
      %v1071 = vld [vmem:[%s921] sm:$0x1]
      %v1072 = vld [vmem:[%s926] sm:$0xff]
      %v1073 = vld [vmem:[%s926 + $0x8] sm:$0xff]
      %v1074 = vld [vmem:[%s929] sm:$0x1]
      %v1075 = vld [vmem:[%s934] sm:$0xff]
      %v1076 = vld [vmem:[%s934 + $0x8] sm:$0xff]
      %v1077 = vld [vmem:[%s937] sm:$0x1]
      %v1078 = vld [vmem:[%s948] sm:$0xff]
      %v1079 = vld [vmem:[%s948 + $0x8] sm:$0xff]
      %v1080 = vld [vmem:[%s951] sm:$0x1]
      %v1081 = vld [vmem:[%s956] sm:$0xff]
      %v1082 = vld [vmem:[%s956 + $0x8] sm:$0xff]
      %v1083 = vld [vmem:[%s956 + $0x10] sm:$0xff]
      %v1084 = vld [vmem:[%s956 + $0x18] sm:$0xff]
      %v1085 = vld [vmem:[%s956 + $0x20] sm:$0xff]
      %v1086 = vld [vmem:[%s956 + $0x28] sm:$0xff]
      %v1087 = vld [vmem:[%s956 + $0x30] sm:$0xff]
      %v1088 = vld [vmem:[%s956 + $0x38] sm:$0xff]
      %v1089 = vld [vmem:[%s959] sm:$0x1]
      %vm1090 = vcmask 130048
      %v1091 = vsel %vm1090, %v979, 0.0
      %1092 = vadd.xlane.f32.xlu0 %v1091
      %v1093 = vpop.xlane.xlu0 %1092
      %v1094 = vsel %vm1090, %v980, 0.0
      %1095 = vadd.xlane.f32.xlu0 %v1094
      %v1096 = vpop.xlane.xlu0 %1095
      %v1097 = vsel %vm1090, %v981, 0.0
      %1098 = vadd.xlane.f32.xlu0 %v1097
      %v1099 = vpop.xlane.xlu0 %1098
      %v1100 = vsel %vm1090, %v982, 0.0
      %1101 = vadd.xlane.f32.xlu0 %v1100
      %v1102 = vpop.xlane.xlu0 %1101
      %vm1103 = vcmask 123904
      %v1104 = vsel %vm1103, %v983, 0.0
      %1105 = vadd.xlane.f32.xlu0 %v1104
      %v1106 = vpop.xlane.xlu0 %1105
      %v1107 = vrcp.pop 16.0
      %v1108 = vmul.f32 %v1093, %v1107
      %v1109 = vmul.f32 %v1096, %v1107
      %v1110 = vmul.f32 %v1099, %v1107
      %v1111 = vmul.f32 %v1102, %v1107
      %v1112 = vmul.f32 %v1106, %v1107
      %v1113 = vsub.f32 %v979, %v1108
      %v1114 = vsub.f32 %v980, %v1109
      %v1115 = vsub.f32 %v981, %v1110
      %v1116 = vsub.f32 %v982, %v1111
      %v1117 = vsub.f32 %v983, %v1112
      %v1118 = vmul.f32 %v1113, %v1113
      %v1119 = vmul.f32 %v1114, %v1114
      %v1120 = vmul.f32 %v1115, %v1115
      %v1121 = vmul.f32 %v1116, %v1116
      %v1122 = vmul.f32 %v1117, %v1117
      %v1123 = vsel %vm1090, %v1118, 0.0
      %1124 = vadd.xlane.f32.xlu0 %v1123
      %v1125 = vpop.xlane.xlu0 %1124
      %v1126 = vsel %vm1090, %v1119, 0.0
      %1127 = vadd.xlane.f32.xlu0 %v1126
      %v1128 = vpop.xlane.xlu0 %1127
      %v1129 = vsel %vm1090, %v1120, 0.0
      %1130 = vadd.xlane.f32.xlu0 %v1129
      %v1131 = vpop.xlane.xlu0 %1130
      %v1132 = vsel %vm1090, %v1121, 0.0
      %1133 = vadd.xlane.f32.xlu0 %v1132
      %v1134 = vpop.xlane.xlu0 %1133
      %v1135 = vsel %vm1103, %v1122, 0.0
      %1136 = vadd.xlane.f32.xlu0 %v1135
      %v1137 = vpop.xlane.xlu0 %1136
      %v1138 = vmul.f32 %v1125, %v1107
      %v1139 = vmul.f32 %v1128, %v1107
      %v1140 = vmul.f32 %v1131, %v1107
      %v1141 = vmul.f32 %v1134, %v1107
      %v1142 = vmul.f32 %v1137, %v1107
      %v1143 = vadd.f32 %v1138, 1e-05
      %v1144 = vadd.f32 %v1139, 1e-05
      %v1145 = vadd.f32 %v1140, 1e-05
      %v1146 = vadd.f32 %v1141, 1e-05
      %v1147 = vadd.f32 %v1142, 1e-05
      %v1148 = vrsqrt.pop %v1143
      %v1149 = vrsqrt.pop %v1144
      %v1150 = vrsqrt.pop %v1145
      %v1151 = vrsqrt.pop %v1146
      %v1152 = vrsqrt.pop %v1147
      %v1153 = vmul.f32 %v1113, %v1148
      %v1154 = vmul.f32 %v1114, %v1149
      %v1155 = vmul.f32 %v1115, %v1150
      %v1156 = vmul.f32 %v1116, %v1151
      %v1157 = vmul.f32 %v1117, %v1152
      %v1159 = vlaneseq
      %v1160 = vshrl.u32 %v1159, 7
      %v1161 = vsub.s32 0, %v1160
      %v1162 = vrot.slane %v1062, %v1161
      %v1164 = vmul.f32 %v1153, %v1162
      %v1165 = vmul.f32 %v1154, %v1162
      %v1166 = vmul.f32 %v1155, %v1162
      %v1167 = vmul.f32 %v1156, %v1162
      %v1168 = vmul.f32 %v1157, %v1162
      %v1170 = vlaneseq
      %v1171 = vshrl.u32 %v1170, 7
      %v1172 = vsub.s32 0, %v1171
      %v1173 = vrot.slane %v1063, %v1172
      %v1175 = vadd.f32 %v1164, %v1173
      %v1176 = vadd.f32 %v1165, %v1173
      %v1177 = vadd.f32 %v1166, %v1173
      %v1178 = vadd.f32 %v1167, %v1173
      %v1179 = vadd.f32 %v1168, %v1173
      %v1181 = vlaneseq
      %v1182 = vshrl.u32 %v1181, 7
      %v1183 = vsub.s32 0, %v1182
      %v1184 = vrot.slane %v1068, %v1183
      %v1187 = vsel %vm1090, %v1175, 0
      %v1190 = vsel %vm1090, %v1176, 0
      %v1193 = vsel %vm1090, %v1177, 0
      %v1196 = vsel %vm1090, %v1178, 0
      %v1199 = vsel %vm1090, %v1179, 0
      %1201 = vmatprep.subr.mxu0 0.0
      %1202 = vmatpush1.msra.mxu0 %v1066
      %1203 = vmatprep.subr.mxu0 0.0
      %1204 = vmatpush1.msra.mxu0 %v1067
      %1205 = vmatprep.subr.mxu0 0.0
      %1206 = vmatpush1.msra.mxu0 0.0
      %1207 = vmatprep.subr.mxu0 0.0
      %1208 = vmatpush1.msra.mxu0 0.0
      %1209 = vmatprep.subr.mxu0 0.0
      %1210 = vmatpush1.msra.mxu0 0.0
      %1211 = vmatprep.subr.mxu0 0.0
      %1212 = vmatpush1.msra.mxu0 0.0
      %1213 = vmatprep.subr.mxu0 0.0
      %1214 = vmatpush1.msra.mxu0 0.0
      %1215 = vmatprep.subr.mxu0 0.0
      %1216 = vmatpush1.msra.mxu0 0.0
      %1217 = vmatprep.subr.mxu0 0.0
      %1218 = vmatpush1.msra.mxu0 0.0
      %1219 = vmatprep.subr.mxu0 0.0
      %1220 = vmatpush1.msra.mxu0 0.0
      %1221 = vmatprep.subr.mxu0 0.0
      %1222 = vmatpush1.msra.mxu0 0.0
      %1223 = vmatprep.subr.mxu0 0.0
      %1224 = vmatpush1.msra.mxu0 0.0
      %1225 = vmatprep.subr.mxu0 0.0
      %1226 = vmatpush1.msra.mxu0 0.0
      %1227 = vmatprep.subr.mxu0 0.0
      %1228 = vmatpush1.msra.mxu0 0.0
      %1229 = vmatprep.subr.mxu0 0.0
      %1230 = vmatpush1.msra.mxu0 0.0
      %1231 = vmatprep.subr.mxu0 0.0
      %1232 = vmatpush1.msra.mxu0 0.0
      %1233 = vmatprep.subr.mxu0 0.0
      %1234 = vmatpush1.msra.mxu0 0.0
      %1235 = vmatprep.subr.mxu0 0.0
      %1236 = vmatpush1.msra.mxu0 0.0
      %1237 = vmatprep.subr.mxu0 0.0
      %1238 = vmatpush1.msra.mxu0 0.0
      %1239 = vmatprep.subr.mxu0 0.0
      %1240 = vmatpush1.msra.mxu0 0.0
      %1241 = vmatprep.subr.mxu0 0.0
      %1242 = vmatpush1.msra.mxu0 0.0
      %1243 = vmatprep.subr.mxu0 0.0
      %1244 = vmatpush1.msra.mxu0 0.0
      %1245 = vmatprep.subr.mxu0 0.0
      %1246 = vmatpush1.msra.mxu0 0.0
      %1247 = vmatprep.subr.mxu0 0.0
      %1248 = vmatpush1.msra.mxu0 0.0
      %1249 = vmatprep.subr.mxu0 0.0
      %1250 = vmatpush1.msra.mxu0 0.0
      %1251 = vmatprep.subr.mxu0 0.0
      %1252 = vmatpush1.msra.mxu0 0.0
      %1253 = vmatprep.subr.mxu0 0.0
      %1254 = vmatpush1.msra.mxu0 0.0
      %1255 = vmatprep.subr.mxu0 0.0
      %1256 = vmatpush1.msra.mxu0 0.0
      %1257 = vmatprep.subr.mxu0 0.0
      %1258 = vmatpush1.msra.mxu0 0.0
      %1259 = vmatprep.subr.mxu0 0.0
      %1260 = vmatpush1.msra.mxu0 0.0
      %1261 = vmatprep.subr.mxu0 0.0
      %1262 = vmatpush1.msra.mxu0 0.0
      %1263 = vmatprep.subr.mxu0 0.0
      %1264 = vmatpush1.msra.mxu0 0.0
      %1265 = vmatprep.mubr.f32.mxu0 0.0
      %1266 = vmatmul.mubr.f32.gmra.mrb[0].mxu0 %v1187
      %v1267 = vpop.f32.mrb[0].mxu0
      %v1268 = vadd.f32 %v1184, %v1267
      %v1269 = vpop.f32.mrb[0].mxu0
      %1270 = vmatprep.mubr.f32.mxu0 0.0
      %1271 = vmatmul.mubr.f32.gmra.mrb[0].mxu0 %v1190
      %v1272 = vpop.f32.mrb[0].mxu0
      %v1273 = vadd.f32 %v1184, %v1272
      %v1274 = vpop.f32.mrb[0].mxu0
      %1275 = vmatprep.mubr.f32.mxu0 0.0
      %1276 = vmatmul.mubr.f32.gmra.mrb[0].mxu0 %v1193
      %v1277 = vpop.f32.mrb[0].mxu0
      %v1278 = vadd.f32 %v1184, %v1277
      %v1279 = vpop.f32.mrb[0].mxu0
      %1280 = vmatprep.mubr.f32.mxu0 0.0
      %1281 = vmatmul.mubr.f32.gmra.mrb[0].mxu0 %v1196
      %v1282 = vpop.f32.mrb[0].mxu0
      %v1283 = vadd.f32 %v1184, %v1282
      %v1284 = vpop.f32.mrb[0].mxu0
      %1285 = vmatprep.mubr.f32.mxu0 0.0
      %1286 = vmatmul.mubr.f32.gmra.mrb[0].mxu0 %v1199
      %v1287 = vpop.f32.mrb[0].mxu0
      %v1288 = vadd.f32 %v1184, %v1287
      %v1289 = vpop.f32.mrb[0].mxu0
      %1290 = vdwg.mxu0
      %v1292 = vlaneseq
      %v1293 = vshrl.u32 %v1292, 7
      %v1294 = vsub.s32 0, %v1293
      %v1295 = vrot.slane %v1071, %v1294
      %1297 = vmatprep.subr.mxu0 0.0
      %1298 = vmatpush1.msra.mxu0 %v1069
      %1299 = vmatprep.subr.mxu0 0.0
      %1300 = vmatpush1.msra.mxu0 %v1070
      %1301 = vmatprep.subr.mxu0 0.0
      %1302 = vmatpush1.msra.mxu0 0.0
      %1303 = vmatprep.subr.mxu0 0.0
      %1304 = vmatpush1.msra.mxu0 0.0
      %1305 = vmatprep.subr.mxu0 0.0
      %1306 = vmatpush1.msra.mxu0 0.0
      %1307 = vmatprep.subr.mxu0 0.0
      %1308 = vmatpush1.msra.mxu0 0.0
      %1309 = vmatprep.subr.mxu0 0.0
      %1310 = vmatpush1.msra.mxu0 0.0
      %1311 = vmatprep.subr.mxu0 0.0
      %1312 = vmatpush1.msra.mxu0 0.0
      %1313 = vmatprep.subr.mxu0 0.0
      %1314 = vmatpush1.msra.mxu0 0.0
      %1315 = vmatprep.subr.mxu0 0.0
      %1316 = vmatpush1.msra.mxu0 0.0
      %1317 = vmatprep.subr.mxu0 0.0
      %1318 = vmatpush1.msra.mxu0 0.0
      %1319 = vmatprep.subr.mxu0 0.0
      %1320 = vmatpush1.msra.mxu0 0.0
      %1321 = vmatprep.subr.mxu0 0.0
      %1322 = vmatpush1.msra.mxu0 0.0
      %1323 = vmatprep.subr.mxu0 0.0
      %1324 = vmatpush1.msra.mxu0 0.0
      %1325 = vmatprep.subr.mxu0 0.0
      %1326 = vmatpush1.msra.mxu0 0.0
      %1327 = vmatprep.subr.mxu0 0.0
      %1328 = vmatpush1.msra.mxu0 0.0
      %1329 = vmatprep.subr.mxu0 0.0
      %1330 = vmatpush1.msra.mxu0 0.0
      %1331 = vmatprep.subr.mxu0 0.0
      %1332 = vmatpush1.msra.mxu0 0.0
      %1333 = vmatprep.subr.mxu0 0.0
      %1334 = vmatpush1.msra.mxu0 0.0
      %1335 = vmatprep.subr.mxu0 0.0
      %1336 = vmatpush1.msra.mxu0 0.0
      %1337 = vmatprep.subr.mxu0 0.0
      %1338 = vmatpush1.msra.mxu0 0.0
      %1339 = vmatprep.subr.mxu0 0.0
      %1340 = vmatpush1.msra.mxu0 0.0
      %1341 = vmatprep.subr.mxu0 0.0
      %1342 = vmatpush1.msra.mxu0 0.0
      %1343 = vmatprep.subr.mxu0 0.0
      %1344 = vmatpush1.msra.mxu0 0.0
      %1345 = vmatprep.subr.mxu0 0.0
      %1346 = vmatpush1.msra.mxu0 0.0
      %1347 = vmatprep.subr.mxu0 0.0
      %1348 = vmatpush1.msra.mxu0 0.0
      %1349 = vmatprep.subr.mxu0 0.0
      %1350 = vmatpush1.msra.mxu0 0.0
      %1351 = vmatprep.subr.mxu0 0.0
      %1352 = vmatpush1.msra.mxu0 0.0
      %1353 = vmatprep.subr.mxu0 0.0
      %1354 = vmatpush1.msra.mxu0 0.0
      %1355 = vmatprep.subr.mxu0 0.0
      %1356 = vmatpush1.msra.mxu0 0.0
      %1357 = vmatprep.subr.mxu0 0.0
      %1358 = vmatpush1.msra.mxu0 0.0
      %1359 = vmatprep.subr.mxu0 0.0
      %1360 = vmatpush1.msra.mxu0 0.0
      %1361 = vmatprep.mubr.f32.mxu0 0.0
      %1362 = vmatmul.mubr.f32.gmra.mrb[0].mxu0 %v1187
      %v1363 = vpop.f32.mrb[0].mxu0
      %v1364 = vadd.f32 %v1295, %v1363
      %v1365 = vpop.f32.mrb[0].mxu0
      %1366 = vmatprep.mubr.f32.mxu0 0.0
      %1367 = vmatmul.mubr.f32.gmra.mrb[0].mxu0 %v1190
      %v1368 = vpop.f32.mrb[0].mxu0
      %v1369 = vadd.f32 %v1295, %v1368
      %v1370 = vpop.f32.mrb[0].mxu0
      %1371 = vmatprep.mubr.f32.mxu0 0.0
      %1372 = vmatmul.mubr.f32.gmra.mrb[0].mxu0 %v1193
      %v1373 = vpop.f32.mrb[0].mxu0
      %v1374 = vadd.f32 %v1295, %v1373
      %v1375 = vpop.f32.mrb[0].mxu0
      %1376 = vmatprep.mubr.f32.mxu0 0.0
      %1377 = vmatmul.mubr.f32.gmra.mrb[0].mxu0 %v1196
      %v1378 = vpop.f32.mrb[0].mxu0
      %v1379 = vadd.f32 %v1295, %v1378
      %v1380 = vpop.f32.mrb[0].mxu0
      %1381 = vmatprep.mubr.f32.mxu0 0.0
      %1382 = vmatmul.mubr.f32.gmra.mrb[0].mxu0 %v1199
      %v1383 = vpop.f32.mrb[0].mxu0
      %v1384 = vadd.f32 %v1295, %v1383
      %v1385 = vpop.f32.mrb[0].mxu0
      %1386 = vdwg.mxu0
      %v1388 = vlaneseq
      %v1389 = vshrl.u32 %v1388, 7
      %v1390 = vsub.s32 0, %v1389
      %v1391 = vrot.slane %v1074, %v1390
      %1393 = vmatprep.subr.mxu0 0.0
      %1394 = vmatpush1.msra.mxu0 %v1072
      %1395 = vmatprep.subr.mxu0 0.0
      %1396 = vmatpush1.msra.mxu0 %v1073
      %1397 = vmatprep.subr.mxu0 0.0
      %1398 = vmatpush1.msra.mxu0 0.0
      %1399 = vmatprep.subr.mxu0 0.0
      %1400 = vmatpush1.msra.mxu0 0.0
      %1401 = vmatprep.subr.mxu0 0.0
      %1402 = vmatpush1.msra.mxu0 0.0
      %1403 = vmatprep.subr.mxu0 0.0
      %1404 = vmatpush1.msra.mxu0 0.0
      %1405 = vmatprep.subr.mxu0 0.0
      %1406 = vmatpush1.msra.mxu0 0.0
      %1407 = vmatprep.subr.mxu0 0.0
      %1408 = vmatpush1.msra.mxu0 0.0
      %1409 = vmatprep.subr.mxu0 0.0
      %1410 = vmatpush1.msra.mxu0 0.0
      %1411 = vmatprep.subr.mxu0 0.0
      %1412 = vmatpush1.msra.mxu0 0.0
      %1413 = vmatprep.subr.mxu0 0.0
      %1414 = vmatpush1.msra.mxu0 0.0
      %1415 = vmatprep.subr.mxu0 0.0
      %1416 = vmatpush1.msra.mxu0 0.0
      %1417 = vmatprep.subr.mxu0 0.0
      %1418 = vmatpush1.msra.mxu0 0.0
      %1419 = vmatprep.subr.mxu0 0.0
      %1420 = vmatpush1.msra.mxu0 0.0
      %1421 = vmatprep.subr.mxu0 0.0
      %1422 = vmatpush1.msra.mxu0 0.0
      %1423 = vmatprep.subr.mxu0 0.0
      %1424 = vmatpush1.msra.mxu0 0.0
      %1425 = vmatprep.subr.mxu0 0.0
      %1426 = vmatpush1.msra.mxu0 0.0
      %1427 = vmatprep.subr.mxu0 0.0
      %1428 = vmatpush1.msra.mxu0 0.0
      %1429 = vmatprep.subr.mxu0 0.0
      %1430 = vmatpush1.msra.mxu0 0.0
      %1431 = vmatprep.subr.mxu0 0.0
      %1432 = vmatpush1.msra.mxu0 0.0
      %1433 = vmatprep.subr.mxu0 0.0
      %1434 = vmatpush1.msra.mxu0 0.0
      %1435 = vmatprep.subr.mxu0 0.0
      %1436 = vmatpush1.msra.mxu0 0.0
      %1437 = vmatprep.subr.mxu0 0.0
      %1438 = vmatpush1.msra.mxu0 0.0
      %1439 = vmatprep.subr.mxu0 0.0
      %1440 = vmatpush1.msra.mxu0 0.0
      %1441 = vmatprep.subr.mxu0 0.0
      %1442 = vmatpush1.msra.mxu0 0.0
      %1443 = vmatprep.subr.mxu0 0.0
      %1444 = vmatpush1.msra.mxu0 0.0
      %1445 = vmatprep.subr.mxu0 0.0
      %1446 = vmatpush1.msra.mxu0 0.0
      %1447 = vmatprep.subr.mxu0 0.0
      %1448 = vmatpush1.msra.mxu0 0.0
      %1449 = vmatprep.subr.mxu0 0.0
      %1450 = vmatpush1.msra.mxu0 0.0
      %1451 = vmatprep.subr.mxu0 0.0
      %1452 = vmatpush1.msra.mxu0 0.0
      %1453 = vmatprep.subr.mxu0 0.0
      %1454 = vmatpush1.msra.mxu0 0.0
      %1455 = vmatprep.subr.mxu0 0.0
      %1456 = vmatpush1.msra.mxu0 0.0
      %1457 = vmatprep.mubr.f32.mxu0 0.0
      %1458 = vmatmul.mubr.f32.gmra.mrb[0].mxu0 %v1187
      %v1459 = vpop.f32.mrb[0].mxu0
      %v1460 = vadd.f32 %v1391, %v1459
      %v1461 = vpop.f32.mrb[0].mxu0
      %1462 = vmatprep.mubr.f32.mxu0 0.0
      %1463 = vmatmul.mubr.f32.gmra.mrb[0].mxu0 %v1190
      %v1464 = vpop.f32.mrb[0].mxu0
      %v1465 = vadd.f32 %v1391, %v1464
      %v1466 = vpop.f32.mrb[0].mxu0
      %1467 = vmatprep.mubr.f32.mxu0 0.0
      %1468 = vmatmul.mubr.f32.gmra.mrb[0].mxu0 %v1193
      %v1469 = vpop.f32.mrb[0].mxu0
      %v1470 = vadd.f32 %v1391, %v1469
      %v1471 = vpop.f32.mrb[0].mxu0
      %1472 = vmatprep.mubr.f32.mxu0 0.0
      %1473 = vmatmul.mubr.f32.gmra.mrb[0].mxu0 %v1196
      %v1474 = vpop.f32.mrb[0].mxu0
      %v1475 = vadd.f32 %v1391, %v1474
      %v1476 = vpop.f32.mrb[0].mxu0
      %1477 = vmatprep.mubr.f32.mxu0 0.0
      %1478 = vmatmul.mubr.f32.gmra.mrb[0].mxu0 %v1199
      %v1479 = vpop.f32.mrb[0].mxu0
      %v1480 = vadd.f32 %v1391, %v1479
      %v1481 = vpop.f32.mrb[0].mxu0
      %1482 = vdwg.mxu0
      %v1483 = vmul.f32 %v1268, %v990
      %v1484 = vmul.f32 %v1273, %v990
      %v1485 = vmul.f32 %v1278, %v990
      %v1486 = vmul.f32 %v1283, %v990
      %v1487 = vmul.f32 %v1288, %v990
      %v1488 = vmul.f32 %v1364, %v990
      %v1489 = vmul.f32 %v1369, %v990
      %v1490 = vmul.f32 %v1374, %v990
      %v1491 = vmul.f32 %v1379, %v990
      %v1492 = vmul.f32 %v1384, %v990
      %v1494 = vsel %vm1090, %v1483, 0
      %v1497 = vsel %vm1090, %v1484, 0
      %v1500 = vsel %vm1090, %v1485, 0
      %v1503 = vsel %vm1090, %v1486, 0
      %v1506 = vsel %vm1090, %v1487, 0
      %v1509 = vsel %vm1090, %v1488, 0
      %v1512 = vsel %vm1090, %v1489, 0
      %v1515 = vsel %vm1090, %v1490, 0
      %v1518 = vsel %vm1090, %v1491, 0
      %v1521 = vsel %vm1090, %v1492, 0
      %1523 = vmatprep.subr.mxu0 0.0
      %1524 = vmatpush1.xpose.msra.mxu0 %v1509
      %1525 = vmatprep.subr.mxu0 0.0
      %1526 = vmatpush1.xpose.msra.mxu0 %v1512
      %1527 = vmatprep.subr.mxu0 0.0
      %1528 = vmatpush1.xpose.msra.mxu0 %v1515
      %1529 = vmatprep.subr.mxu0 0.0
      %1530 = vmatpush1.xpose.msra.mxu0 %v1518
      %1531 = vmatprep.subr.mxu0 0.0
      %1532 = vmatpush1.xpose.msra.mxu0 %v1521
      %1533 = vmatprep.subr.mxu0 0.0
      %1534 = vmatpush1.xpose.msra.mxu0 0.0
      %1535 = vmatprep.subr.mxu0 0.0
      %1536 = vmatpush1.xpose.msra.mxu0 0.0
      %1537 = vmatprep.subr.mxu0 0.0
      %1538 = vmatpush1.xpose.msra.mxu0 0.0
      %1539 = vmatprep.subr.mxu0 0.0
      %1540 = vmatpush1.xpose.msra.mxu0 0.0
      %1541 = vmatprep.subr.mxu0 0.0
      %1542 = vmatpush1.xpose.msra.mxu0 0.0
      %1543 = vmatprep.subr.mxu0 0.0
      %1544 = vmatpush1.xpose.msra.mxu0 0.0
      %1545 = vmatprep.subr.mxu0 0.0
      %1546 = vmatpush1.xpose.msra.mxu0 0.0
      %1547 = vmatprep.subr.mxu0 0.0
      %1548 = vmatpush1.xpose.msra.mxu0 0.0
      %1549 = vmatprep.subr.mxu0 0.0
      %1550 = vmatpush1.xpose.msra.mxu0 0.0
      %1551 = vmatprep.subr.mxu0 0.0
      %1552 = vmatpush1.xpose.msra.mxu0 0.0
      %1553 = vmatprep.subr.mxu0 0.0
      %1554 = vmatpush1.xpose.msra.mxu0 0.0
      %1555 = vmatprep.subr.mxu0 0.0
      %1556 = vmatpush1.xpose.msra.mxu0 0.0
      %1557 = vmatprep.subr.mxu0 0.0
      %1558 = vmatpush1.xpose.msra.mxu0 0.0
      %1559 = vmatprep.subr.mxu0 0.0
      %1560 = vmatpush1.xpose.msra.mxu0 0.0
      %1561 = vmatprep.subr.mxu0 0.0
      %1562 = vmatpush1.xpose.msra.mxu0 0.0
      %1563 = vmatprep.subr.mxu0 0.0
      %1564 = vmatpush1.xpose.msra.mxu0 0.0
      %1565 = vmatprep.subr.mxu0 0.0
      %1566 = vmatpush1.xpose.msra.mxu0 0.0
      %1567 = vmatprep.subr.mxu0 0.0
      %1568 = vmatpush1.xpose.msra.mxu0 0.0
      %1569 = vmatprep.subr.mxu0 0.0
      %1570 = vmatpush1.xpose.msra.mxu0 0.0
      %1571 = vmatprep.subr.mxu0 0.0
      %1572 = vmatpush1.xpose.msra.mxu0 0.0
      %1573 = vmatprep.subr.mxu0 0.0
      %1574 = vmatpush1.xpose.msra.mxu0 0.0
      %1575 = vmatprep.subr.mxu0 0.0
      %1576 = vmatpush1.xpose.msra.mxu0 0.0
      %1577 = vmatprep.subr.mxu0 0.0
      %1578 = vmatpush1.xpose.msra.mxu0 0.0
      %1579 = vmatprep.subr.mxu0 0.0
      %1580 = vmatpush1.xpose.msra.mxu0 0.0
      %1581 = vmatprep.subr.mxu0 0.0
      %1582 = vmatpush1.xpose.msra.mxu0 0.0
      %1583 = vmatprep.subr.mxu0 0.0
      %1584 = vmatpush1.xpose.msra.mxu0 0.0
      %1585 = vmatprep.subr.mxu0 0.0
      %1586 = vmatpush1.xpose.msra.mxu0 0.0
      %1587 = vmatprep.mubr.f32.mxu0 0.0
      %1588 = vmatmul.mubr.f32.gmra.mrb[0].mxu0 %v1494
      %v1589 = vpop.f32.mrb[0].mxu0
      %v1590 = vadd.f32 0.0, %v1589
      %v1591 = vpop.f32.mrb[0].mxu0
      %1592 = vmatprep.mubr.f32.mxu0 0.0
      %1593 = vmatmul.mubr.f32.gmra.mrb[0].mxu0 %v1497
      %v1594 = vpop.f32.mrb[0].mxu0
      %v1595 = vadd.f32 0.0, %v1594
      %v1596 = vpop.f32.mrb[0].mxu0
      %1597 = vmatprep.mubr.f32.mxu0 0.0
      %1598 = vmatmul.mubr.f32.gmra.mrb[0].mxu0 %v1500
      %v1599 = vpop.f32.mrb[0].mxu0
      %v1600 = vadd.f32 0.0, %v1599
      %v1601 = vpop.f32.mrb[0].mxu0
      %1602 = vmatprep.mubr.f32.mxu0 0.0
      %1603 = vmatmul.mubr.f32.gmra.mrb[0].mxu0 %v1503
      %v1604 = vpop.f32.mrb[0].mxu0
      %v1605 = vadd.f32 0.0, %v1604
      %v1606 = vpop.f32.mrb[0].mxu0
      %1607 = vmatprep.mubr.f32.mxu0 0.0
      %1608 = vmatmul.mubr.f32.gmra.mrb[0].mxu0 %v1506
      %v1609 = vpop.f32.mrb[0].mxu0
      %v1610 = vadd.f32 0.0, %v1609
      %v1611 = vpop.f32.mrb[0].mxu0
      %1612 = vdwg.mxu0
      %v1613 = vmul.f32 %v1590, 0.5
      %v1614 = vmul.f32 %v1595, 0.5
      %v1615 = vmul.f32 %v1600, 0.5
      %v1616 = vmul.f32 %v1605, 0.5
      %v1617 = vmul.f32 %v1610, 0.5
      %v1618 = vsel %vm1057, %v1613, -1e+30
      %v1619 = vsel %vm1058, %v1614, -1e+30
      %v1620 = vsel %vm1059, %v1615, -1e+30
      %v1621 = vsel %vm1060, %v1616, -1e+30
      %v1622 = vsel %vm1061, %v1617, -1e+30
      %vm1623 = vcmask 277504
      %v1624 = vsel %vm1623, %v1618, -inf
      %1625 = vmax.xlane.f32.xlu0 %v1624
      %v1626 = vpop.xlane.xlu0 %1625
      %v1627 = vsel %vm1623, %v1619, -inf
      %1628 = vmax.xlane.f32.xlu0 %v1627
      %v1629 = vpop.xlane.xlu0 %1628
      %v1630 = vsel %vm1623, %v1620, -inf
      %1631 = vmax.xlane.f32.xlu0 %v1630
      %v1632 = vpop.xlane.xlu0 %1631
      %v1633 = vsel %vm1623, %v1621, -inf
      %1634 = vmax.xlane.f32.xlu0 %v1633
      %v1635 = vpop.xlane.xlu0 %1634
      %vm1636 = vcmask 271360
      %v1637 = vsel %vm1636, %v1622, -inf
      %1638 = vmax.xlane.f32.xlu0 %v1637
      %v1639 = vpop.xlane.xlu0 %1638
      %v1640 = vsub.f32 %v1618, %v1626
      %v1641 = vsub.f32 %v1619, %v1629
      %v1642 = vsub.f32 %v1620, %v1632
      %v1643 = vsub.f32 %v1621, %v1635
      %v1644 = vsub.f32 %v1622, %v1639
      %v1645 = vmul.f32 %v1640, 1.442695
      %v1646 = vpow.pop %v1645
      %v1647 = vmul.f32 %v1641, 1.442695
      %v1648 = vpow.pop %v1647
      %v1649 = vmul.f32 %v1642, 1.442695
      %v1650 = vpow.pop %v1649
      %v1651 = vmul.f32 %v1643, 1.442695
      %v1652 = vpow.pop %v1651
      %v1653 = vmul.f32 %v1644, 1.442695
      %v1654 = vpow.pop %v1653
      %v1655 = vsel %vm1623, %v1646, 0.0
      %1656 = vadd.xlane.f32.xlu0 %v1655
      %v1657 = vpop.xlane.xlu0 %1656
      %v1658 = vsel %vm1623, %v1648, 0.0
      %1659 = vadd.xlane.f32.xlu0 %v1658
      %v1660 = vpop.xlane.xlu0 %1659
      %v1661 = vsel %vm1623, %v1650, 0.0
      %1662 = vadd.xlane.f32.xlu0 %v1661
      %v1663 = vpop.xlane.xlu0 %1662
      %v1664 = vsel %vm1623, %v1652, 0.0
      %1665 = vadd.xlane.f32.xlu0 %v1664
      %v1666 = vpop.xlane.xlu0 %1665
      %v1667 = vsel %vm1636, %v1654, 0.0
      %1668 = vadd.xlane.f32.xlu0 %v1667
      %v1669 = vpop.xlane.xlu0 %1668
      %v1670 = vrcp.pop %v1657
      %v1671 = vrcp.pop %v1660
      %v1672 = vrcp.pop %v1663
      %v1673 = vrcp.pop %v1666
      %v1674 = vrcp.pop %v1669
      %v1675 = vmul.f32 %v1646, %v1670
      %v1676 = vmul.f32 %v1648, %v1671
      %v1677 = vmul.f32 %v1650, %v1672
      %v1678 = vmul.f32 %v1652, %v1673
      %v1679 = vmul.f32 %v1654, %v1674
      %v1680 = vmul.f32 %v1460, %v990
      %v1681 = vmul.f32 %v1465, %v990
      %v1682 = vmul.f32 %v1470, %v990
      %v1683 = vmul.f32 %v1475, %v990
      %v1684 = vmul.f32 %v1480, %v990
      %v1685 = vmul.f32 %v1268, %v995
      %v1686 = vmul.f32 %v1273, %v995
      %v1687 = vmul.f32 %v1278, %v995
      %v1688 = vmul.f32 %v1283, %v995
      %v1689 = vmul.f32 %v1288, %v995
      %v1690 = vmul.f32 %v1364, %v995
      %v1691 = vmul.f32 %v1369, %v995
      %v1692 = vmul.f32 %v1374, %v995
      %v1693 = vmul.f32 %v1379, %v995
      %v1694 = vmul.f32 %v1384, %v995
      %v1696 = vsel %vm1090, %v1685, 0
      %v1699 = vsel %vm1090, %v1686, 0
      %v1702 = vsel %vm1090, %v1687, 0
      %v1705 = vsel %vm1090, %v1688, 0
      %v1708 = vsel %vm1090, %v1689, 0
      %v1711 = vsel %vm1090, %v1690, 0
      %v1714 = vsel %vm1090, %v1691, 0
      %v1717 = vsel %vm1090, %v1692, 0
      %v1720 = vsel %vm1090, %v1693, 0
      %v1723 = vsel %vm1090, %v1694, 0
      %1725 = vmatprep.subr.mxu0 0.0
      %1726 = vmatpush1.xpose.msra.mxu0 %v1711
      %1727 = vmatprep.subr.mxu0 0.0
      %1728 = vmatpush1.xpose.msra.mxu0 %v1714
      %1729 = vmatprep.subr.mxu0 0.0
      %1730 = vmatpush1.xpose.msra.mxu0 %v1717
      %1731 = vmatprep.subr.mxu0 0.0
      %1732 = vmatpush1.xpose.msra.mxu0 %v1720
      %1733 = vmatprep.subr.mxu0 0.0
      %1734 = vmatpush1.xpose.msra.mxu0 %v1723
      %1735 = vmatprep.subr.mxu0 0.0
      %1736 = vmatpush1.xpose.msra.mxu0 0.0
      %1737 = vmatprep.subr.mxu0 0.0
      %1738 = vmatpush1.xpose.msra.mxu0 0.0
      %1739 = vmatprep.subr.mxu0 0.0
      %1740 = vmatpush1.xpose.msra.mxu0 0.0
      %1741 = vmatprep.subr.mxu0 0.0
      %1742 = vmatpush1.xpose.msra.mxu0 0.0
      %1743 = vmatprep.subr.mxu0 0.0
      %1744 = vmatpush1.xpose.msra.mxu0 0.0
      %1745 = vmatprep.subr.mxu0 0.0
      %1746 = vmatpush1.xpose.msra.mxu0 0.0
      %1747 = vmatprep.subr.mxu0 0.0
      %1748 = vmatpush1.xpose.msra.mxu0 0.0
      %1749 = vmatprep.subr.mxu0 0.0
      %1750 = vmatpush1.xpose.msra.mxu0 0.0
      %1751 = vmatprep.subr.mxu0 0.0
      %1752 = vmatpush1.xpose.msra.mxu0 0.0
      %1753 = vmatprep.subr.mxu0 0.0
      %1754 = vmatpush1.xpose.msra.mxu0 0.0
      %1755 = vmatprep.subr.mxu0 0.0
      %1756 = vmatpush1.xpose.msra.mxu0 0.0
      %1757 = vmatprep.subr.mxu0 0.0
      %1758 = vmatpush1.xpose.msra.mxu0 0.0
      %1759 = vmatprep.subr.mxu0 0.0
      %1760 = vmatpush1.xpose.msra.mxu0 0.0
      %1761 = vmatprep.subr.mxu0 0.0
      %1762 = vmatpush1.xpose.msra.mxu0 0.0
      %1763 = vmatprep.subr.mxu0 0.0
      %1764 = vmatpush1.xpose.msra.mxu0 0.0
      %1765 = vmatprep.subr.mxu0 0.0
      %1766 = vmatpush1.xpose.msra.mxu0 0.0
      %1767 = vmatprep.subr.mxu0 0.0
      %1768 = vmatpush1.xpose.msra.mxu0 0.0
      %1769 = vmatprep.subr.mxu0 0.0
      %1770 = vmatpush1.xpose.msra.mxu0 0.0
      %1771 = vmatprep.subr.mxu0 0.0
      %1772 = vmatpush1.xpose.msra.mxu0 0.0
      %1773 = vmatprep.subr.mxu0 0.0
      %1774 = vmatpush1.xpose.msra.mxu0 0.0
      %1775 = vmatprep.subr.mxu0 0.0
      %1776 = vmatpush1.xpose.msra.mxu0 0.0
      %1777 = vmatprep.subr.mxu0 0.0
      %1778 = vmatpush1.xpose.msra.mxu0 0.0
      %1779 = vmatprep.subr.mxu0 0.0
      %1780 = vmatpush1.xpose.msra.mxu0 0.0
      %1781 = vmatprep.subr.mxu0 0.0
      %1782 = vmatpush1.xpose.msra.mxu0 0.0
      %1783 = vmatprep.subr.mxu0 0.0
      %1784 = vmatpush1.xpose.msra.mxu0 0.0
      %1785 = vmatprep.subr.mxu0 0.0
      %1786 = vmatpush1.xpose.msra.mxu0 0.0
      %1787 = vmatprep.subr.mxu0 0.0
      %1788 = vmatpush1.xpose.msra.mxu0 0.0
      %1789 = vmatprep.mubr.f32.mxu0 0.0
      %1790 = vmatmul.mubr.f32.gmra.mrb[0].mxu0 %v1696
      %v1791 = vpop.f32.mrb[0].mxu0
      %v1792 = vadd.f32 0.0, %v1791
      %v1793 = vpop.f32.mrb[0].mxu0
      %1794 = vmatprep.mubr.f32.mxu0 0.0
      %1795 = vmatmul.mubr.f32.gmra.mrb[0].mxu0 %v1699
      %v1796 = vpop.f32.mrb[0].mxu0
      %v1797 = vadd.f32 0.0, %v1796
      %v1798 = vpop.f32.mrb[0].mxu0
      %1799 = vmatprep.mubr.f32.mxu0 0.0
      %1800 = vmatmul.mubr.f32.gmra.mrb[0].mxu0 %v1702
      %v1801 = vpop.f32.mrb[0].mxu0
      %v1802 = vadd.f32 0.0, %v1801
      %v1803 = vpop.f32.mrb[0].mxu0
      %1804 = vmatprep.mubr.f32.mxu0 0.0
      %1805 = vmatmul.mubr.f32.gmra.mrb[0].mxu0 %v1705
      %v1806 = vpop.f32.mrb[0].mxu0
      %v1807 = vadd.f32 0.0, %v1806
      %v1808 = vpop.f32.mrb[0].mxu0
      %1809 = vmatprep.mubr.f32.mxu0 0.0
      %1810 = vmatmul.mubr.f32.gmra.mrb[0].mxu0 %v1708
      %v1811 = vpop.f32.mrb[0].mxu0
      %v1812 = vadd.f32 0.0, %v1811
      %v1813 = vpop.f32.mrb[0].mxu0
      %1814 = vdwg.mxu0
      %v1815 = vmul.f32 %v1792, 0.5
      %v1816 = vmul.f32 %v1797, 0.5
      %v1817 = vmul.f32 %v1802, 0.5
      %v1818 = vmul.f32 %v1807, 0.5
      %v1819 = vmul.f32 %v1812, 0.5
      %v1820 = vsel %vm1057, %v1815, -1e+30
      %v1821 = vsel %vm1058, %v1816, -1e+30
      %v1822 = vsel %vm1059, %v1817, -1e+30
      %v1823 = vsel %vm1060, %v1818, -1e+30
      %v1824 = vsel %vm1061, %v1819, -1e+30
      %v1825 = vsel %vm1623, %v1820, -inf
      %1826 = vmax.xlane.f32.xlu0 %v1825
      %v1827 = vpop.xlane.xlu0 %1826
      %v1828 = vsel %vm1623, %v1821, -inf
      %1829 = vmax.xlane.f32.xlu0 %v1828
      %v1830 = vpop.xlane.xlu0 %1829
      %v1831 = vsel %vm1623, %v1822, -inf
      %1832 = vmax.xlane.f32.xlu0 %v1831
      %v1833 = vpop.xlane.xlu0 %1832
      %v1834 = vsel %vm1623, %v1823, -inf
      %1835 = vmax.xlane.f32.xlu0 %v1834
      %v1836 = vpop.xlane.xlu0 %1835
      %v1837 = vsel %vm1636, %v1824, -inf
      %1838 = vmax.xlane.f32.xlu0 %v1837
      %v1839 = vpop.xlane.xlu0 %1838
      %v1840 = vsub.f32 %v1820, %v1827
      %v1841 = vsub.f32 %v1821, %v1830
      %v1842 = vsub.f32 %v1822, %v1833
      %v1843 = vsub.f32 %v1823, %v1836
      %v1844 = vsub.f32 %v1824, %v1839
      %v1845 = vmul.f32 %v1840, 1.442695
      %v1846 = vpow.pop %v1845
      %v1847 = vmul.f32 %v1841, 1.442695
      %v1848 = vpow.pop %v1847
      %v1849 = vmul.f32 %v1842, 1.442695
      %v1850 = vpow.pop %v1849
      %v1851 = vmul.f32 %v1843, 1.442695
      %v1852 = vpow.pop %v1851
      %v1853 = vmul.f32 %v1844, 1.442695
      %v1854 = vpow.pop %v1853
      %v1855 = vsel %vm1623, %v1846, 0.0
      %1856 = vadd.xlane.f32.xlu0 %v1855
      %v1857 = vpop.xlane.xlu0 %1856
      %v1858 = vsel %vm1623, %v1848, 0.0
      %1859 = vadd.xlane.f32.xlu0 %v1858
      %v1860 = vpop.xlane.xlu0 %1859
      %v1861 = vsel %vm1623, %v1850, 0.0
      %1862 = vadd.xlane.f32.xlu0 %v1861
      %v1863 = vpop.xlane.xlu0 %1862
      %v1864 = vsel %vm1623, %v1852, 0.0
      %1865 = vadd.xlane.f32.xlu0 %v1864
      %v1866 = vpop.xlane.xlu0 %1865
      %v1867 = vsel %vm1636, %v1854, 0.0
      %1868 = vadd.xlane.f32.xlu0 %v1867
      %v1869 = vpop.xlane.xlu0 %1868
      %v1870 = vrcp.pop %v1857
      %v1871 = vrcp.pop %v1860
      %v1872 = vrcp.pop %v1863
      %v1873 = vrcp.pop %v1866
      %v1874 = vrcp.pop %v1869
      %v1875 = vmul.f32 %v1846, %v1870
      %v1876 = vmul.f32 %v1848, %v1871
      %v1877 = vmul.f32 %v1850, %v1872
      %v1878 = vmul.f32 %v1852, %v1873
      %v1879 = vmul.f32 %v1854, %v1874
      %v1880 = vmul.f32 %v1460, %v995
      %v1881 = vmul.f32 %v1465, %v995
      %v1882 = vmul.f32 %v1470, %v995
      %v1883 = vmul.f32 %v1475, %v995
      %v1884 = vmul.f32 %v1480, %v995
      %v1886 = vsel %vm1623, %v1875, 0
      %v1889 = vsel %vm1623, %v1876, 0
      %v1892 = vsel %vm1623, %v1877, 0
      %v1895 = vsel %vm1623, %v1878, 0
      %v1898 = vsel %vm1623, %v1879, 0
      %vm1900 = vcmask 1041408
      %v1902 = vsel %vm1900, %v1884, 0
      %1904 = vmatprep.subr.mxu0 0.0
      %1905 = vmatpush1.msra.mxu0 %v1880
      %1906 = vmatprep.subr.mxu0 0.0
      %1907 = vmatpush1.msra.mxu0 %v1881
      %1908 = vmatprep.subr.mxu0 0.0
      %1909 = vmatpush1.msra.mxu0 %v1882
      %1910 = vmatprep.subr.mxu0 0.0
      %1911 = vmatpush1.msra.mxu0 %v1883
      %1912 = vmatprep.subr.mxu0 0.0
      %1913 = vmatpush1.msra.mxu0 %v1902
      %1914 = vmatprep.subr.mxu0 0.0
      %1915 = vmatpush1.msra.mxu0 0.0
      %1916 = vmatprep.subr.mxu0 0.0
      %1917 = vmatpush1.msra.mxu0 0.0
      %1918 = vmatprep.subr.mxu0 0.0
      %1919 = vmatpush1.msra.mxu0 0.0
      %1920 = vmatprep.subr.mxu0 0.0
      %1921 = vmatpush1.msra.mxu0 0.0
      %1922 = vmatprep.subr.mxu0 0.0
      %1923 = vmatpush1.msra.mxu0 0.0
      %1924 = vmatprep.subr.mxu0 0.0
      %1925 = vmatpush1.msra.mxu0 0.0
      %1926 = vmatprep.subr.mxu0 0.0
      %1927 = vmatpush1.msra.mxu0 0.0
      %1928 = vmatprep.subr.mxu0 0.0
      %1929 = vmatpush1.msra.mxu0 0.0
      %1930 = vmatprep.subr.mxu0 0.0
      %1931 = vmatpush1.msra.mxu0 0.0
      %1932 = vmatprep.subr.mxu0 0.0
      %1933 = vmatpush1.msra.mxu0 0.0
      %1934 = vmatprep.subr.mxu0 0.0
      %1935 = vmatpush1.msra.mxu0 0.0
      %1936 = vmatprep.subr.mxu0 0.0
      %1937 = vmatpush1.msra.mxu0 0.0
      %1938 = vmatprep.subr.mxu0 0.0
      %1939 = vmatpush1.msra.mxu0 0.0
      %1940 = vmatprep.subr.mxu0 0.0
      %1941 = vmatpush1.msra.mxu0 0.0
      %1942 = vmatprep.subr.mxu0 0.0
      %1943 = vmatpush1.msra.mxu0 0.0
      %1944 = vmatprep.subr.mxu0 0.0
      %1945 = vmatpush1.msra.mxu0 0.0
      %1946 = vmatprep.subr.mxu0 0.0
      %1947 = vmatpush1.msra.mxu0 0.0
      %1948 = vmatprep.subr.mxu0 0.0
      %1949 = vmatpush1.msra.mxu0 0.0
      %1950 = vmatprep.subr.mxu0 0.0
      %1951 = vmatpush1.msra.mxu0 0.0
      %1952 = vmatprep.subr.mxu0 0.0
      %1953 = vmatpush1.msra.mxu0 0.0
      %1954 = vmatprep.subr.mxu0 0.0
      %1955 = vmatpush1.msra.mxu0 0.0
      %1956 = vmatprep.subr.mxu0 0.0
      %1957 = vmatpush1.msra.mxu0 0.0
      %1958 = vmatprep.subr.mxu0 0.0
      %1959 = vmatpush1.msra.mxu0 0.0
      %1960 = vmatprep.subr.mxu0 0.0
      %1961 = vmatpush1.msra.mxu0 0.0
      %1962 = vmatprep.subr.mxu0 0.0
      %1963 = vmatpush1.msra.mxu0 0.0
      %1964 = vmatprep.subr.mxu0 0.0
      %1965 = vmatpush1.msra.mxu0 0.0
      %1966 = vmatprep.subr.mxu0 0.0
      %1967 = vmatpush1.msra.mxu0 0.0
      %1968 = vmatprep.mubr.f32.mxu0 0.0
      %1969 = vmatmul.mubr.f32.gmra.mrb[0].mxu0 %v1886
      %v1970 = vpop.f32.mrb[0].mxu0
      %v1971 = vadd.f32 0.0, %v1970
      %v1972 = vpop.f32.mrb[0].mxu0
      %1973 = vmatprep.mubr.f32.mxu0 0.0
      %1974 = vmatmul.mubr.f32.gmra.mrb[0].mxu0 %v1889
      %v1975 = vpop.f32.mrb[0].mxu0
      %v1976 = vadd.f32 0.0, %v1975
      %v1977 = vpop.f32.mrb[0].mxu0
      %1978 = vmatprep.mubr.f32.mxu0 0.0
      %1979 = vmatmul.mubr.f32.gmra.mrb[0].mxu0 %v1892
      %v1980 = vpop.f32.mrb[0].mxu0
      %v1981 = vadd.f32 0.0, %v1980
      %v1982 = vpop.f32.mrb[0].mxu0
      %1983 = vmatprep.mubr.f32.mxu0 0.0
      %1984 = vmatmul.mubr.f32.gmra.mrb[0].mxu0 %v1895
      %v1985 = vpop.f32.mrb[0].mxu0
      %v1986 = vadd.f32 0.0, %v1985
      %v1987 = vpop.f32.mrb[0].mxu0
      %1988 = vmatprep.mubr.f32.mxu0 0.0
      %1989 = vmatmul.mubr.f32.gmra.mrb[0].mxu0 %v1898
      %v1990 = vpop.f32.mrb[0].mxu0
      %v1991 = vadd.f32 0.0, %v1990
      %v1992 = vpop.f32.mrb[0].mxu0
      %1993 = vdwg.mxu0
      %v1995 = vsel %vm1623, %v1675, 0
      %v1998 = vsel %vm1623, %v1676, 0
      %v2001 = vsel %vm1623, %v1677, 0
      %v2004 = vsel %vm1623, %v1678, 0
      %v2007 = vsel %vm1623, %v1679, 0
      %v2010 = vsel %vm1900, %v1684, 0
      %2012 = vmatprep.subr.mxu0 0.0
      %2013 = vmatpush1.msra.mxu0 %v1680
      %2014 = vmatprep.subr.mxu0 0.0
      %2015 = vmatpush1.msra.mxu0 %v1681
      %2016 = vmatprep.subr.mxu0 0.0
      %2017 = vmatpush1.msra.mxu0 %v1682
      %2018 = vmatprep.subr.mxu0 0.0
      %2019 = vmatpush1.msra.mxu0 %v1683
      %2020 = vmatprep.subr.mxu0 0.0
      %2021 = vmatpush1.msra.mxu0 %v2010
      %2022 = vmatprep.subr.mxu0 0.0
      %2023 = vmatpush1.msra.mxu0 0.0
      %2024 = vmatprep.subr.mxu0 0.0
      %2025 = vmatpush1.msra.mxu0 0.0
      %2026 = vmatprep.subr.mxu0 0.0
      %2027 = vmatpush1.msra.mxu0 0.0
      %2028 = vmatprep.subr.mxu0 0.0
      %2029 = vmatpush1.msra.mxu0 0.0
      %2030 = vmatprep.subr.mxu0 0.0
      %2031 = vmatpush1.msra.mxu0 0.0
      %2032 = vmatprep.subr.mxu0 0.0
      %2033 = vmatpush1.msra.mxu0 0.0
      %2034 = vmatprep.subr.mxu0 0.0
      %2035 = vmatpush1.msra.mxu0 0.0
      %2036 = vmatprep.subr.mxu0 0.0
      %2037 = vmatpush1.msra.mxu0 0.0
      %2038 = vmatprep.subr.mxu0 0.0
      %2039 = vmatpush1.msra.mxu0 0.0
      %2040 = vmatprep.subr.mxu0 0.0
      %2041 = vmatpush1.msra.mxu0 0.0
      %2042 = vmatprep.subr.mxu0 0.0
      %2043 = vmatpush1.msra.mxu0 0.0
      %2044 = vmatprep.subr.mxu0 0.0
      %2045 = vmatpush1.msra.mxu0 0.0
      %2046 = vmatprep.subr.mxu0 0.0
      %2047 = vmatpush1.msra.mxu0 0.0
      %2048 = vmatprep.subr.mxu0 0.0
      %2049 = vmatpush1.msra.mxu0 0.0
      %2050 = vmatprep.subr.mxu0 0.0
      %2051 = vmatpush1.msra.mxu0 0.0
      %2052 = vmatprep.subr.mxu0 0.0
      %2053 = vmatpush1.msra.mxu0 0.0
      %2054 = vmatprep.subr.mxu0 0.0
      %2055 = vmatpush1.msra.mxu0 0.0
      %2056 = vmatprep.subr.mxu0 0.0
      %2057 = vmatpush1.msra.mxu0 0.0
      %2058 = vmatprep.subr.mxu0 0.0
      %2059 = vmatpush1.msra.mxu0 0.0
      %2060 = vmatprep.subr.mxu0 0.0
      %2061 = vmatpush1.msra.mxu0 0.0
      %2062 = vmatprep.subr.mxu0 0.0
      %2063 = vmatpush1.msra.mxu0 0.0
      %2064 = vmatprep.subr.mxu0 0.0
      %2065 = vmatpush1.msra.mxu0 0.0
      %2066 = vmatprep.subr.mxu0 0.0
      %2067 = vmatpush1.msra.mxu0 0.0
      %2068 = vmatprep.subr.mxu0 0.0
      %2069 = vmatpush1.msra.mxu0 0.0
      %2070 = vmatprep.subr.mxu0 0.0
      %2071 = vmatpush1.msra.mxu0 0.0
      %2072 = vmatprep.subr.mxu0 0.0
      %2073 = vmatpush1.msra.mxu0 0.0
      %2074 = vmatprep.subr.mxu0 0.0
      %2075 = vmatpush1.msra.mxu0 0.0
      %2076 = vmatprep.mubr.f32.mxu0 0.0
      %2077 = vmatmul.mubr.f32.gmra.mrb[0].mxu0 %v1995
      %v2078 = vpop.f32.mrb[0].mxu0
      %v2079 = vadd.f32 %v1971, %v2078
      %v2080 = vpop.f32.mrb[0].mxu0
      %2081 = vmatprep.mubr.f32.mxu0 0.0
      %2082 = vmatmul.mubr.f32.gmra.mrb[0].mxu0 %v1998
      %v2083 = vpop.f32.mrb[0].mxu0
      %v2084 = vadd.f32 %v1976, %v2083
      %v2085 = vpop.f32.mrb[0].mxu0
      %2086 = vmatprep.mubr.f32.mxu0 0.0
      %2087 = vmatmul.mubr.f32.gmra.mrb[0].mxu0 %v2001
      %v2088 = vpop.f32.mrb[0].mxu0
      %v2089 = vadd.f32 %v1981, %v2088
      %v2090 = vpop.f32.mrb[0].mxu0
      %2091 = vmatprep.mubr.f32.mxu0 0.0
      %2092 = vmatmul.mubr.f32.gmra.mrb[0].mxu0 %v2004
      %v2093 = vpop.f32.mrb[0].mxu0
      %v2094 = vadd.f32 %v1986, %v2093
      %v2095 = vpop.f32.mrb[0].mxu0
      %2096 = vmatprep.mubr.f32.mxu0 0.0
      %2097 = vmatmul.mubr.f32.gmra.mrb[0].mxu0 %v2007
      %v2098 = vpop.f32.mrb[0].mxu0
      %v2099 = vadd.f32 %v1991, %v2098
      %v2100 = vpop.f32.mrb[0].mxu0
      %2101 = vdwg.mxu0
      %v2102 = vmul.f32 %v1268, %v1000
      %v2103 = vmul.f32 %v1273, %v1000
      %v2104 = vmul.f32 %v1278, %v1000
      %v2105 = vmul.f32 %v1283, %v1000
      %v2106 = vmul.f32 %v1288, %v1000
      %v2107 = vmul.f32 %v1364, %v1000
      %v2108 = vmul.f32 %v1369, %v1000
      %v2109 = vmul.f32 %v1374, %v1000
      %v2110 = vmul.f32 %v1379, %v1000
      %v2111 = vmul.f32 %v1384, %v1000
      %v2113 = vsel %vm1090, %v2102, 0
      %v2116 = vsel %vm1090, %v2103, 0
      %v2119 = vsel %vm1090, %v2104, 0
      %v2122 = vsel %vm1090, %v2105, 0
      %v2125 = vsel %vm1090, %v2106, 0
      %v2128 = vsel %vm1090, %v2107, 0
      %v2131 = vsel %vm1090, %v2108, 0
      %v2134 = vsel %vm1090, %v2109, 0
      %v2137 = vsel %vm1090, %v2110, 0
      %v2140 = vsel %vm1090, %v2111, 0
      %2142 = vmatprep.subr.mxu0 0.0
      %2143 = vmatpush1.xpose.msra.mxu0 %v2128
      %2144 = vmatprep.subr.mxu0 0.0
      %2145 = vmatpush1.xpose.msra.mxu0 %v2131
      %2146 = vmatprep.subr.mxu0 0.0
      %2147 = vmatpush1.xpose.msra.mxu0 %v2134
      %2148 = vmatprep.subr.mxu0 0.0
      %2149 = vmatpush1.xpose.msra.mxu0 %v2137
      %2150 = vmatprep.subr.mxu0 0.0
      %2151 = vmatpush1.xpose.msra.mxu0 %v2140
      %2152 = vmatprep.subr.mxu0 0.0
      %2153 = vmatpush1.xpose.msra.mxu0 0.0
      %2154 = vmatprep.subr.mxu0 0.0
      %2155 = vmatpush1.xpose.msra.mxu0 0.0
      %2156 = vmatprep.subr.mxu0 0.0
      %2157 = vmatpush1.xpose.msra.mxu0 0.0
      %2158 = vmatprep.subr.mxu0 0.0
      %2159 = vmatpush1.xpose.msra.mxu0 0.0
      %2160 = vmatprep.subr.mxu0 0.0
      %2161 = vmatpush1.xpose.msra.mxu0 0.0
      %2162 = vmatprep.subr.mxu0 0.0
      %2163 = vmatpush1.xpose.msra.mxu0 0.0
      %2164 = vmatprep.subr.mxu0 0.0
      %2165 = vmatpush1.xpose.msra.mxu0 0.0
      %2166 = vmatprep.subr.mxu0 0.0
      %2167 = vmatpush1.xpose.msra.mxu0 0.0
      %2168 = vmatprep.subr.mxu0 0.0
      %2169 = vmatpush1.xpose.msra.mxu0 0.0
      %2170 = vmatprep.subr.mxu0 0.0
      %2171 = vmatpush1.xpose.msra.mxu0 0.0
      %2172 = vmatprep.subr.mxu0 0.0
      %2173 = vmatpush1.xpose.msra.mxu0 0.0
      %2174 = vmatprep.subr.mxu0 0.0
      %2175 = vmatpush1.xpose.msra.mxu0 0.0
      %2176 = vmatprep.subr.mxu0 0.0
      %2177 = vmatpush1.xpose.msra.mxu0 0.0
      %2178 = vmatprep.subr.mxu0 0.0
      %2179 = vmatpush1.xpose.msra.mxu0 0.0
      %2180 = vmatprep.subr.mxu0 0.0
      %2181 = vmatpush1.xpose.msra.mxu0 0.0
      %2182 = vmatprep.subr.mxu0 0.0
      %2183 = vmatpush1.xpose.msra.mxu0 0.0
      %2184 = vmatprep.subr.mxu0 0.0
      %2185 = vmatpush1.xpose.msra.mxu0 0.0
      %2186 = vmatprep.subr.mxu0 0.0
      %2187 = vmatpush1.xpose.msra.mxu0 0.0
      %2188 = vmatprep.subr.mxu0 0.0
      %2189 = vmatpush1.xpose.msra.mxu0 0.0
      %2190 = vmatprep.subr.mxu0 0.0
      %2191 = vmatpush1.xpose.msra.mxu0 0.0
      %2192 = vmatprep.subr.mxu0 0.0
      %2193 = vmatpush1.xpose.msra.mxu0 0.0
      %2194 = vmatprep.subr.mxu0 0.0
      %2195 = vmatpush1.xpose.msra.mxu0 0.0
      %2196 = vmatprep.subr.mxu0 0.0
      %2197 = vmatpush1.xpose.msra.mxu0 0.0
      %2198 = vmatprep.subr.mxu0 0.0
      %2199 = vmatpush1.xpose.msra.mxu0 0.0
      %2200 = vmatprep.subr.mxu0 0.0
      %2201 = vmatpush1.xpose.msra.mxu0 0.0
      %2202 = vmatprep.subr.mxu0 0.0
      %2203 = vmatpush1.xpose.msra.mxu0 0.0
      %2204 = vmatprep.subr.mxu0 0.0
      %2205 = vmatpush1.xpose.msra.mxu0 0.0
      %2206 = vmatprep.mubr.f32.mxu0 0.0
      %2207 = vmatmul.mubr.f32.gmra.mrb[0].mxu0 %v2113
      %v2208 = vpop.f32.mrb[0].mxu0
      %v2209 = vadd.f32 0.0, %v2208
      %v2210 = vpop.f32.mrb[0].mxu0
      %2211 = vmatprep.mubr.f32.mxu0 0.0
      %2212 = vmatmul.mubr.f32.gmra.mrb[0].mxu0 %v2116
      %v2213 = vpop.f32.mrb[0].mxu0
      %v2214 = vadd.f32 0.0, %v2213
      %v2215 = vpop.f32.mrb[0].mxu0
      %2216 = vmatprep.mubr.f32.mxu0 0.0
      %2217 = vmatmul.mubr.f32.gmra.mrb[0].mxu0 %v2119
      %v2218 = vpop.f32.mrb[0].mxu0
      %v2219 = vadd.f32 0.0, %v2218
      %v2220 = vpop.f32.mrb[0].mxu0
      %2221 = vmatprep.mubr.f32.mxu0 0.0
      %2222 = vmatmul.mubr.f32.gmra.mrb[0].mxu0 %v2122
      %v2223 = vpop.f32.mrb[0].mxu0
      %v2224 = vadd.f32 0.0, %v2223
      %v2225 = vpop.f32.mrb[0].mxu0
      %2226 = vmatprep.mubr.f32.mxu0 0.0
      %2227 = vmatmul.mubr.f32.gmra.mrb[0].mxu0 %v2125
      %v2228 = vpop.f32.mrb[0].mxu0
      %v2229 = vadd.f32 0.0, %v2228
      %v2230 = vpop.f32.mrb[0].mxu0
      %2231 = vdwg.mxu0
      %v2232 = vmul.f32 %v2209, 0.5
      %v2233 = vmul.f32 %v2214, 0.5
      %v2234 = vmul.f32 %v2219, 0.5
      %v2235 = vmul.f32 %v2224, 0.5
      %v2236 = vmul.f32 %v2229, 0.5
      %v2237 = vsel %vm1057, %v2232, -1e+30
      %v2238 = vsel %vm1058, %v2233, -1e+30
      %v2239 = vsel %vm1059, %v2234, -1e+30
      %v2240 = vsel %vm1060, %v2235, -1e+30
      %v2241 = vsel %vm1061, %v2236, -1e+30
      %v2242 = vsel %vm1623, %v2237, -inf
      %2243 = vmax.xlane.f32.xlu0 %v2242
      %v2244 = vpop.xlane.xlu0 %2243
      %v2245 = vsel %vm1623, %v2238, -inf
      %2246 = vmax.xlane.f32.xlu0 %v2245
      %v2247 = vpop.xlane.xlu0 %2246
      %v2248 = vsel %vm1623, %v2239, -inf
      %2249 = vmax.xlane.f32.xlu0 %v2248
      %v2250 = vpop.xlane.xlu0 %2249
      %v2251 = vsel %vm1623, %v2240, -inf
      %2252 = vmax.xlane.f32.xlu0 %v2251
      %v2253 = vpop.xlane.xlu0 %2252
      %v2254 = vsel %vm1636, %v2241, -inf
      %2255 = vmax.xlane.f32.xlu0 %v2254
      %v2256 = vpop.xlane.xlu0 %2255
      %v2257 = vsub.f32 %v2237, %v2244
      %v2258 = vsub.f32 %v2238, %v2247
      %v2259 = vsub.f32 %v2239, %v2250
      %v2260 = vsub.f32 %v2240, %v2253
      %v2261 = vsub.f32 %v2241, %v2256
      %v2262 = vmul.f32 %v2257, 1.442695
      %v2263 = vpow.pop %v2262
      %v2264 = vmul.f32 %v2258, 1.442695
      %v2265 = vpow.pop %v2264
      %v2266 = vmul.f32 %v2259, 1.442695
      %v2267 = vpow.pop %v2266
      %v2268 = vmul.f32 %v2260, 1.442695
      %v2269 = vpow.pop %v2268
      %v2270 = vmul.f32 %v2261, 1.442695
      %v2271 = vpow.pop %v2270
      %v2272 = vsel %vm1623, %v2263, 0.0
      %2273 = vadd.xlane.f32.xlu0 %v2272
      %v2274 = vpop.xlane.xlu0 %2273
      %v2275 = vsel %vm1623, %v2265, 0.0
      %2276 = vadd.xlane.f32.xlu0 %v2275
      %v2277 = vpop.xlane.xlu0 %2276
      %v2278 = vsel %vm1623, %v2267, 0.0
      %2279 = vadd.xlane.f32.xlu0 %v2278
      %v2280 = vpop.xlane.xlu0 %2279
      %v2281 = vsel %vm1623, %v2269, 0.0
      %2282 = vadd.xlane.f32.xlu0 %v2281
      %v2283 = vpop.xlane.xlu0 %2282
      %v2284 = vsel %vm1636, %v2271, 0.0
      %2285 = vadd.xlane.f32.xlu0 %v2284
      %v2286 = vpop.xlane.xlu0 %2285
      %v2287 = vrcp.pop %v2274
      %v2288 = vrcp.pop %v2277
      %v2289 = vrcp.pop %v2280
      %v2290 = vrcp.pop %v2283
      %v2291 = vrcp.pop %v2286
      %v2292 = vmul.f32 %v2263, %v2287
      %v2293 = vmul.f32 %v2265, %v2288
      %v2294 = vmul.f32 %v2267, %v2289
      %v2295 = vmul.f32 %v2269, %v2290
      %v2296 = vmul.f32 %v2271, %v2291
      %v2297 = vmul.f32 %v1460, %v1000
      %v2298 = vmul.f32 %v1465, %v1000
      %v2299 = vmul.f32 %v1470, %v1000
      %v2300 = vmul.f32 %v1475, %v1000
      %v2301 = vmul.f32 %v1480, %v1000
      %v2303 = vsel %vm1623, %v2292, 0
      %v2306 = vsel %vm1623, %v2293, 0
      %v2309 = vsel %vm1623, %v2294, 0
      %v2312 = vsel %vm1623, %v2295, 0
      %v2315 = vsel %vm1623, %v2296, 0
      %v2318 = vsel %vm1900, %v2301, 0
      %2320 = vmatprep.subr.mxu0 0.0
      %2321 = vmatpush1.msra.mxu0 %v2297
      %2322 = vmatprep.subr.mxu0 0.0
      %2323 = vmatpush1.msra.mxu0 %v2298
      %2324 = vmatprep.subr.mxu0 0.0
      %2325 = vmatpush1.msra.mxu0 %v2299
      %2326 = vmatprep.subr.mxu0 0.0
      %2327 = vmatpush1.msra.mxu0 %v2300
      %2328 = vmatprep.subr.mxu0 0.0
      %2329 = vmatpush1.msra.mxu0 %v2318
      %2330 = vmatprep.subr.mxu0 0.0
      %2331 = vmatpush1.msra.mxu0 0.0
      %2332 = vmatprep.subr.mxu0 0.0
      %2333 = vmatpush1.msra.mxu0 0.0
      %2334 = vmatprep.subr.mxu0 0.0
      %2335 = vmatpush1.msra.mxu0 0.0
      %2336 = vmatprep.subr.mxu0 0.0
      %2337 = vmatpush1.msra.mxu0 0.0
      %2338 = vmatprep.subr.mxu0 0.0
      %2339 = vmatpush1.msra.mxu0 0.0
      %2340 = vmatprep.subr.mxu0 0.0
      %2341 = vmatpush1.msra.mxu0 0.0
      %2342 = vmatprep.subr.mxu0 0.0
      %2343 = vmatpush1.msra.mxu0 0.0
      %2344 = vmatprep.subr.mxu0 0.0
      %2345 = vmatpush1.msra.mxu0 0.0
      %2346 = vmatprep.subr.mxu0 0.0
      %2347 = vmatpush1.msra.mxu0 0.0
      %2348 = vmatprep.subr.mxu0 0.0
      %2349 = vmatpush1.msra.mxu0 0.0
      %2350 = vmatprep.subr.mxu0 0.0
      %2351 = vmatpush1.msra.mxu0 0.0
      %2352 = vmatprep.subr.mxu0 0.0
      %2353 = vmatpush1.msra.mxu0 0.0
      %2354 = vmatprep.subr.mxu0 0.0
      %2355 = vmatpush1.msra.mxu0 0.0
      %2356 = vmatprep.subr.mxu0 0.0
      %2357 = vmatpush1.msra.mxu0 0.0
      %2358 = vmatprep.subr.mxu0 0.0
      %2359 = vmatpush1.msra.mxu0 0.0
      %2360 = vmatprep.subr.mxu0 0.0
      %2361 = vmatpush1.msra.mxu0 0.0
      %2362 = vmatprep.subr.mxu0 0.0
      %2363 = vmatpush1.msra.mxu0 0.0
      %2364 = vmatprep.subr.mxu0 0.0
      %2365 = vmatpush1.msra.mxu0 0.0
      %2366 = vmatprep.subr.mxu0 0.0
      %2367 = vmatpush1.msra.mxu0 0.0
      %2368 = vmatprep.subr.mxu0 0.0
      %2369 = vmatpush1.msra.mxu0 0.0
      %2370 = vmatprep.subr.mxu0 0.0
      %2371 = vmatpush1.msra.mxu0 0.0
      %2372 = vmatprep.subr.mxu0 0.0
      %2373 = vmatpush1.msra.mxu0 0.0
      %2374 = vmatprep.subr.mxu0 0.0
      %2375 = vmatpush1.msra.mxu0 0.0
      %2376 = vmatprep.subr.mxu0 0.0
      %2377 = vmatpush1.msra.mxu0 0.0
      %2378 = vmatprep.subr.mxu0 0.0
      %2379 = vmatpush1.msra.mxu0 0.0
      %2380 = vmatprep.subr.mxu0 0.0
      %2381 = vmatpush1.msra.mxu0 0.0
      %2382 = vmatprep.subr.mxu0 0.0
      %2383 = vmatpush1.msra.mxu0 0.0
      %2384 = vmatprep.mubr.f32.mxu0 0.0
      %2385 = vmatmul.mubr.f32.gmra.mrb[0].mxu0 %v2303
      %v2386 = vpop.f32.mrb[0].mxu0
      %v2387 = vadd.f32 0.0, %v2386
      %v2388 = vpop.f32.mrb[0].mxu0
      %2389 = vmatprep.mubr.f32.mxu0 0.0
      %2390 = vmatmul.mubr.f32.gmra.mrb[0].mxu0 %v2306
      %v2391 = vpop.f32.mrb[0].mxu0
      %v2392 = vadd.f32 0.0, %v2391
      %v2393 = vpop.f32.mrb[0].mxu0
      %2394 = vmatprep.mubr.f32.mxu0 0.0
      %2395 = vmatmul.mubr.f32.gmra.mrb[0].mxu0 %v2309
      %v2396 = vpop.f32.mrb[0].mxu0
      %v2397 = vadd.f32 0.0, %v2396
      %v2398 = vpop.f32.mrb[0].mxu0
      %2399 = vmatprep.mubr.f32.mxu0 0.0
      %2400 = vmatmul.mubr.f32.gmra.mrb[0].mxu0 %v2312
      %v2401 = vpop.f32.mrb[0].mxu0
      %v2402 = vadd.f32 0.0, %v2401
      %v2403 = vpop.f32.mrb[0].mxu0
      %2404 = vmatprep.mubr.f32.mxu0 0.0
      %2405 = vmatmul.mubr.f32.gmra.mrb[0].mxu0 %v2315
      %v2406 = vpop.f32.mrb[0].mxu0
      %v2407 = vadd.f32 0.0, %v2406
      %v2408 = vpop.f32.mrb[0].mxu0
      %2409 = vdwg.mxu0
      %v2410 = vadd.f32 %v2079, %v2387
      %v2411 = vadd.f32 %v2084, %v2392
      %v2412 = vadd.f32 %v2089, %v2397
      %v2413 = vadd.f32 %v2094, %v2402
      %v2414 = vadd.f32 %v2099, %v2407
      %v2415 = vmul.f32 %v1268, %v1005
      %v2416 = vmul.f32 %v1273, %v1005
      %v2417 = vmul.f32 %v1278, %v1005
      %v2418 = vmul.f32 %v1283, %v1005
      %v2419 = vmul.f32 %v1288, %v1005
      %v2420 = vmul.f32 %v1364, %v1005
      %v2421 = vmul.f32 %v1369, %v1005
      %v2422 = vmul.f32 %v1374, %v1005
      %v2423 = vmul.f32 %v1379, %v1005
      %v2424 = vmul.f32 %v1384, %v1005
      %v2426 = vsel %vm1090, %v2415, 0
      %v2429 = vsel %vm1090, %v2416, 0
      %v2432 = vsel %vm1090, %v2417, 0
      %v2435 = vsel %vm1090, %v2418, 0
      %v2438 = vsel %vm1090, %v2419, 0
      %v2441 = vsel %vm1090, %v2420, 0
      %v2444 = vsel %vm1090, %v2421, 0
      %v2447 = vsel %vm1090, %v2422, 0
      %v2450 = vsel %vm1090, %v2423, 0
      %v2453 = vsel %vm1090, %v2424, 0
      %2455 = vmatprep.subr.mxu0 0.0
      %2456 = vmatpush1.xpose.msra.mxu0 %v2441
      %2457 = vmatprep.subr.mxu0 0.0
      %2458 = vmatpush1.xpose.msra.mxu0 %v2444
      %2459 = vmatprep.subr.mxu0 0.0
      %2460 = vmatpush1.xpose.msra.mxu0 %v2447
      %2461 = vmatprep.subr.mxu0 0.0
      %2462 = vmatpush1.xpose.msra.mxu0 %v2450
      %2463 = vmatprep.subr.mxu0 0.0
      %2464 = vmatpush1.xpose.msra.mxu0 %v2453
      %2465 = vmatprep.subr.mxu0 0.0
      %2466 = vmatpush1.xpose.msra.mxu0 0.0
      %2467 = vmatprep.subr.mxu0 0.0
      %2468 = vmatpush1.xpose.msra.mxu0 0.0
      %2469 = vmatprep.subr.mxu0 0.0
      %2470 = vmatpush1.xpose.msra.mxu0 0.0
      %2471 = vmatprep.subr.mxu0 0.0
      %2472 = vmatpush1.xpose.msra.mxu0 0.0
      %2473 = vmatprep.subr.mxu0 0.0
      %2474 = vmatpush1.xpose.msra.mxu0 0.0
      %2475 = vmatprep.subr.mxu0 0.0
      %2476 = vmatpush1.xpose.msra.mxu0 0.0
      %2477 = vmatprep.subr.mxu0 0.0
      %2478 = vmatpush1.xpose.msra.mxu0 0.0
      %2479 = vmatprep.subr.mxu0 0.0
      %2480 = vmatpush1.xpose.msra.mxu0 0.0
      %2481 = vmatprep.subr.mxu0 0.0
      %2482 = vmatpush1.xpose.msra.mxu0 0.0
      %2483 = vmatprep.subr.mxu0 0.0
      %2484 = vmatpush1.xpose.msra.mxu0 0.0
      %2485 = vmatprep.subr.mxu0 0.0
      %2486 = vmatpush1.xpose.msra.mxu0 0.0
      %2487 = vmatprep.subr.mxu0 0.0
      %2488 = vmatpush1.xpose.msra.mxu0 0.0
      %2489 = vmatprep.subr.mxu0 0.0
      %2490 = vmatpush1.xpose.msra.mxu0 0.0
      %2491 = vmatprep.subr.mxu0 0.0
      %2492 = vmatpush1.xpose.msra.mxu0 0.0
      %2493 = vmatprep.subr.mxu0 0.0
      %2494 = vmatpush1.xpose.msra.mxu0 0.0
      %2495 = vmatprep.subr.mxu0 0.0
      %2496 = vmatpush1.xpose.msra.mxu0 0.0
      %2497 = vmatprep.subr.mxu0 0.0
      %2498 = vmatpush1.xpose.msra.mxu0 0.0
      %2499 = vmatprep.subr.mxu0 0.0
      %2500 = vmatpush1.xpose.msra.mxu0 0.0
      %2501 = vmatprep.subr.mxu0 0.0
      %2502 = vmatpush1.xpose.msra.mxu0 0.0
      %2503 = vmatprep.subr.mxu0 0.0
      %2504 = vmatpush1.xpose.msra.mxu0 0.0
      %2505 = vmatprep.subr.mxu0 0.0
      %2506 = vmatpush1.xpose.msra.mxu0 0.0
      %2507 = vmatprep.subr.mxu0 0.0
      %2508 = vmatpush1.xpose.msra.mxu0 0.0
      %2509 = vmatprep.subr.mxu0 0.0
      %2510 = vmatpush1.xpose.msra.mxu0 0.0
      %2511 = vmatprep.subr.mxu0 0.0
      %2512 = vmatpush1.xpose.msra.mxu0 0.0
      %2513 = vmatprep.subr.mxu0 0.0
      %2514 = vmatpush1.xpose.msra.mxu0 0.0
      %2515 = vmatprep.subr.mxu0 0.0
      %2516 = vmatpush1.xpose.msra.mxu0 0.0
      %2517 = vmatprep.subr.mxu0 0.0
      %2518 = vmatpush1.xpose.msra.mxu0 0.0
      %2519 = vmatprep.mubr.f32.mxu0 0.0
      %2520 = vmatmul.mubr.f32.gmra.mrb[0].mxu0 %v2426
      %v2521 = vpop.f32.mrb[0].mxu0
      %v2522 = vadd.f32 0.0, %v2521
      %v2523 = vpop.f32.mrb[0].mxu0
      %2524 = vmatprep.mubr.f32.mxu0 0.0
      %2525 = vmatmul.mubr.f32.gmra.mrb[0].mxu0 %v2429
      %v2526 = vpop.f32.mrb[0].mxu0
      %v2527 = vadd.f32 0.0, %v2526
      %v2528 = vpop.f32.mrb[0].mxu0
      %2529 = vmatprep.mubr.f32.mxu0 0.0
      %2530 = vmatmul.mubr.f32.gmra.mrb[0].mxu0 %v2432
      %v2531 = vpop.f32.mrb[0].mxu0
      %v2532 = vadd.f32 0.0, %v2531
      %v2533 = vpop.f32.mrb[0].mxu0
      %2534 = vmatprep.mubr.f32.mxu0 0.0
      %2535 = vmatmul.mubr.f32.gmra.mrb[0].mxu0 %v2435
      %v2536 = vpop.f32.mrb[0].mxu0
      %v2537 = vadd.f32 0.0, %v2536
      %v2538 = vpop.f32.mrb[0].mxu0
      %2539 = vmatprep.mubr.f32.mxu0 0.0
      %2540 = vmatmul.mubr.f32.gmra.mrb[0].mxu0 %v2438
      %v2541 = vpop.f32.mrb[0].mxu0
      %v2542 = vadd.f32 0.0, %v2541
      %v2543 = vpop.f32.mrb[0].mxu0
      %2544 = vdwg.mxu0
      %v2545 = vmul.f32 %v2522, 0.5
      %v2546 = vmul.f32 %v2527, 0.5
      %v2547 = vmul.f32 %v2532, 0.5
      %v2548 = vmul.f32 %v2537, 0.5
      %v2549 = vmul.f32 %v2542, 0.5
      %v2550 = vsel %vm1057, %v2545, -1e+30
      %v2551 = vsel %vm1058, %v2546, -1e+30
      %v2552 = vsel %vm1059, %v2547, -1e+30
      %v2553 = vsel %vm1060, %v2548, -1e+30
      %v2554 = vsel %vm1061, %v2549, -1e+30
      %v2555 = vsel %vm1623, %v2550, -inf
      %2556 = vmax.xlane.f32.xlu0 %v2555
      %v2557 = vpop.xlane.xlu0 %2556
      %v2558 = vsel %vm1623, %v2551, -inf
      %2559 = vmax.xlane.f32.xlu0 %v2558
      %v2560 = vpop.xlane.xlu0 %2559
      %v2561 = vsel %vm1623, %v2552, -inf
      %2562 = vmax.xlane.f32.xlu0 %v2561
      %v2563 = vpop.xlane.xlu0 %2562
      %v2564 = vsel %vm1623, %v2553, -inf
      %2565 = vmax.xlane.f32.xlu0 %v2564
      %v2566 = vpop.xlane.xlu0 %2565
      %v2567 = vsel %vm1636, %v2554, -inf
      %2568 = vmax.xlane.f32.xlu0 %v2567
      %v2569 = vpop.xlane.xlu0 %2568
      %v2570 = vsub.f32 %v2550, %v2557
      %v2571 = vsub.f32 %v2551, %v2560
      %v2572 = vsub.f32 %v2552, %v2563
      %v2573 = vsub.f32 %v2553, %v2566
      %v2574 = vsub.f32 %v2554, %v2569
      %v2575 = vmul.f32 %v2570, 1.442695
      %v2576 = vpow.pop %v2575
      %v2577 = vmul.f32 %v2571, 1.442695
      %v2578 = vpow.pop %v2577
      %v2579 = vmul.f32 %v2572, 1.442695
      %v2580 = vpow.pop %v2579
      %v2581 = vmul.f32 %v2573, 1.442695
      %v2582 = vpow.pop %v2581
      %v2583 = vmul.f32 %v2574, 1.442695
      %v2584 = vpow.pop %v2583
      %v2585 = vsel %vm1623, %v2576, 0.0
      %2586 = vadd.xlane.f32.xlu0 %v2585
      %v2587 = vpop.xlane.xlu0 %2586
      %v2588 = vsel %vm1623, %v2578, 0.0
      %2589 = vadd.xlane.f32.xlu0 %v2588
      %v2590 = vpop.xlane.xlu0 %2589
      %v2591 = vsel %vm1623, %v2580, 0.0
      %2592 = vadd.xlane.f32.xlu0 %v2591
      %v2593 = vpop.xlane.xlu0 %2592
      %v2594 = vsel %vm1623, %v2582, 0.0
      %2595 = vadd.xlane.f32.xlu0 %v2594
      %v2596 = vpop.xlane.xlu0 %2595
      %v2597 = vsel %vm1636, %v2584, 0.0
      %2598 = vadd.xlane.f32.xlu0 %v2597
      %v2599 = vpop.xlane.xlu0 %2598
      %v2600 = vrcp.pop %v2587
      %v2601 = vrcp.pop %v2590
      %v2602 = vrcp.pop %v2593
      %v2603 = vrcp.pop %v2596
      %v2604 = vrcp.pop %v2599
      %v2605 = vmul.f32 %v2576, %v2600
      %v2606 = vmul.f32 %v2578, %v2601
      %v2607 = vmul.f32 %v2580, %v2602
      %v2608 = vmul.f32 %v2582, %v2603
      %v2609 = vmul.f32 %v2584, %v2604
      %v2610 = vmul.f32 %v1460, %v1005
      %v2611 = vmul.f32 %v1465, %v1005
      %v2612 = vmul.f32 %v1470, %v1005
      %v2613 = vmul.f32 %v1475, %v1005
      %v2614 = vmul.f32 %v1480, %v1005
      %v2616 = vsel %vm1623, %v2605, 0
      %v2619 = vsel %vm1623, %v2606, 0
      %v2622 = vsel %vm1623, %v2607, 0
      %v2625 = vsel %vm1623, %v2608, 0
      %v2628 = vsel %vm1623, %v2609, 0
      %v2631 = vsel %vm1900, %v2614, 0
      %2633 = vmatprep.subr.mxu0 0.0
      %2634 = vmatpush1.msra.mxu0 %v2610
      %2635 = vmatprep.subr.mxu0 0.0
      %2636 = vmatpush1.msra.mxu0 %v2611
      %2637 = vmatprep.subr.mxu0 0.0
      %2638 = vmatpush1.msra.mxu0 %v2612
      %2639 = vmatprep.subr.mxu0 0.0
      %2640 = vmatpush1.msra.mxu0 %v2613
      %2641 = vmatprep.subr.mxu0 0.0
      %2642 = vmatpush1.msra.mxu0 %v2631
      %2643 = vmatprep.subr.mxu0 0.0
      %2644 = vmatpush1.msra.mxu0 0.0
      %2645 = vmatprep.subr.mxu0 0.0
      %2646 = vmatpush1.msra.mxu0 0.0
      %2647 = vmatprep.subr.mxu0 0.0
      %2648 = vmatpush1.msra.mxu0 0.0
      %2649 = vmatprep.subr.mxu0 0.0
      %2650 = vmatpush1.msra.mxu0 0.0
      %2651 = vmatprep.subr.mxu0 0.0
      %2652 = vmatpush1.msra.mxu0 0.0
      %2653 = vmatprep.subr.mxu0 0.0
      %2654 = vmatpush1.msra.mxu0 0.0
      %2655 = vmatprep.subr.mxu0 0.0
      %2656 = vmatpush1.msra.mxu0 0.0
      %2657 = vmatprep.subr.mxu0 0.0
      %2658 = vmatpush1.msra.mxu0 0.0
      %2659 = vmatprep.subr.mxu0 0.0
      %2660 = vmatpush1.msra.mxu0 0.0
      %2661 = vmatprep.subr.mxu0 0.0
      %2662 = vmatpush1.msra.mxu0 0.0
      %2663 = vmatprep.subr.mxu0 0.0
      %2664 = vmatpush1.msra.mxu0 0.0
      %2665 = vmatprep.subr.mxu0 0.0
      %2666 = vmatpush1.msra.mxu0 0.0
      %2667 = vmatprep.subr.mxu0 0.0
      %2668 = vmatpush1.msra.mxu0 0.0
      %2669 = vmatprep.subr.mxu0 0.0
      %2670 = vmatpush1.msra.mxu0 0.0
      %2671 = vmatprep.subr.mxu0 0.0
      %2672 = vmatpush1.msra.mxu0 0.0
      %2673 = vmatprep.subr.mxu0 0.0
      %2674 = vmatpush1.msra.mxu0 0.0
      %2675 = vmatprep.subr.mxu0 0.0
      %2676 = vmatpush1.msra.mxu0 0.0
      %2677 = vmatprep.subr.mxu0 0.0
      %2678 = vmatpush1.msra.mxu0 0.0
      %2679 = vmatprep.subr.mxu0 0.0
      %2680 = vmatpush1.msra.mxu0 0.0
      %2681 = vmatprep.subr.mxu0 0.0
      %2682 = vmatpush1.msra.mxu0 0.0
      %2683 = vmatprep.subr.mxu0 0.0
      %2684 = vmatpush1.msra.mxu0 0.0
      %2685 = vmatprep.subr.mxu0 0.0
      %2686 = vmatpush1.msra.mxu0 0.0
      %2687 = vmatprep.subr.mxu0 0.0
      %2688 = vmatpush1.msra.mxu0 0.0
      %2689 = vmatprep.subr.mxu0 0.0
      %2690 = vmatpush1.msra.mxu0 0.0
      %2691 = vmatprep.subr.mxu0 0.0
      %2692 = vmatpush1.msra.mxu0 0.0
      %2693 = vmatprep.subr.mxu0 0.0
      %2694 = vmatpush1.msra.mxu0 0.0
      %2695 = vmatprep.subr.mxu0 0.0
      %2696 = vmatpush1.msra.mxu0 0.0
      %2697 = vmatprep.mubr.f32.mxu0 0.0
      %2698 = vmatmul.mubr.f32.gmra.mrb[0].mxu0 %v2616
      %v2699 = vpop.f32.mrb[0].mxu0
      %v2700 = vadd.f32 0.0, %v2699
      %v2701 = vpop.f32.mrb[0].mxu0
      %2702 = vmatprep.mubr.f32.mxu0 0.0
      %2703 = vmatmul.mubr.f32.gmra.mrb[0].mxu0 %v2619
      %v2704 = vpop.f32.mrb[0].mxu0
      %v2705 = vadd.f32 0.0, %v2704
      %v2706 = vpop.f32.mrb[0].mxu0
      %2707 = vmatprep.mubr.f32.mxu0 0.0
      %2708 = vmatmul.mubr.f32.gmra.mrb[0].mxu0 %v2622
      %v2709 = vpop.f32.mrb[0].mxu0
      %v2710 = vadd.f32 0.0, %v2709
      %v2711 = vpop.f32.mrb[0].mxu0
      %2712 = vmatprep.mubr.f32.mxu0 0.0
      %2713 = vmatmul.mubr.f32.gmra.mrb[0].mxu0 %v2625
      %v2714 = vpop.f32.mrb[0].mxu0
      %v2715 = vadd.f32 0.0, %v2714
      %v2716 = vpop.f32.mrb[0].mxu0
      %2717 = vmatprep.mubr.f32.mxu0 0.0
      %2718 = vmatmul.mubr.f32.gmra.mrb[0].mxu0 %v2628
      %v2719 = vpop.f32.mrb[0].mxu0
      %v2720 = vadd.f32 0.0, %v2719
      %v2721 = vpop.f32.mrb[0].mxu0
      %2722 = vdwg.mxu0
      %v2723 = vadd.f32 %v2410, %v2700
      %v2724 = vadd.f32 %v2411, %v2705
      %v2725 = vadd.f32 %v2412, %v2710
      %v2726 = vadd.f32 %v2413, %v2715
      %v2727 = vadd.f32 %v2414, %v2720
      %v2729 = vlaneseq
      %v2730 = vshrl.u32 %v2729, 7
      %v2731 = vsub.s32 0, %v2730
      %v2732 = vrot.slane %v1077, %v2731
      %v2735 = vsel %vm1090, %v2723, 0
      %v2738 = vsel %vm1090, %v2724, 0
      %v2741 = vsel %vm1090, %v2725, 0
      %v2744 = vsel %vm1090, %v2726, 0
      %v2747 = vsel %vm1090, %v2727, 0
      %2749 = vmatprep.subr.mxu0 0.0
      %2750 = vmatpush1.msra.mxu0 %v1075
      %2751 = vmatprep.subr.mxu0 0.0
      %2752 = vmatpush1.msra.mxu0 %v1076
      %2753 = vmatprep.subr.mxu0 0.0
      %2754 = vmatpush1.msra.mxu0 0.0
      %2755 = vmatprep.subr.mxu0 0.0
      %2756 = vmatpush1.msra.mxu0 0.0
      %2757 = vmatprep.subr.mxu0 0.0
      %2758 = vmatpush1.msra.mxu0 0.0
      %2759 = vmatprep.subr.mxu0 0.0
      %2760 = vmatpush1.msra.mxu0 0.0
      %2761 = vmatprep.subr.mxu0 0.0
      %2762 = vmatpush1.msra.mxu0 0.0
      %2763 = vmatprep.subr.mxu0 0.0
      %2764 = vmatpush1.msra.mxu0 0.0
      %2765 = vmatprep.subr.mxu0 0.0
      %2766 = vmatpush1.msra.mxu0 0.0
      %2767 = vmatprep.subr.mxu0 0.0
      %2768 = vmatpush1.msra.mxu0 0.0
      %2769 = vmatprep.subr.mxu0 0.0
      %2770 = vmatpush1.msra.mxu0 0.0
      %2771 = vmatprep.subr.mxu0 0.0
      %2772 = vmatpush1.msra.mxu0 0.0
      %2773 = vmatprep.subr.mxu0 0.0
      %2774 = vmatpush1.msra.mxu0 0.0
      %2775 = vmatprep.subr.mxu0 0.0
      %2776 = vmatpush1.msra.mxu0 0.0
      %2777 = vmatprep.subr.mxu0 0.0
      %2778 = vmatpush1.msra.mxu0 0.0
      %2779 = vmatprep.subr.mxu0 0.0
      %2780 = vmatpush1.msra.mxu0 0.0
      %2781 = vmatprep.subr.mxu0 0.0
      %2782 = vmatpush1.msra.mxu0 0.0
      %2783 = vmatprep.subr.mxu0 0.0
      %2784 = vmatpush1.msra.mxu0 0.0
      %2785 = vmatprep.subr.mxu0 0.0
      %2786 = vmatpush1.msra.mxu0 0.0
      %2787 = vmatprep.subr.mxu0 0.0
      %2788 = vmatpush1.msra.mxu0 0.0
      %2789 = vmatprep.subr.mxu0 0.0
      %2790 = vmatpush1.msra.mxu0 0.0
      %2791 = vmatprep.subr.mxu0 0.0
      %2792 = vmatpush1.msra.mxu0 0.0
      %2793 = vmatprep.subr.mxu0 0.0
      %2794 = vmatpush1.msra.mxu0 0.0
      %2795 = vmatprep.subr.mxu0 0.0
      %2796 = vmatpush1.msra.mxu0 0.0
      %2797 = vmatprep.subr.mxu0 0.0
      %2798 = vmatpush1.msra.mxu0 0.0
      %2799 = vmatprep.subr.mxu0 0.0
      %2800 = vmatpush1.msra.mxu0 0.0
      %2801 = vmatprep.subr.mxu0 0.0
      %2802 = vmatpush1.msra.mxu0 0.0
      %2803 = vmatprep.subr.mxu0 0.0
      %2804 = vmatpush1.msra.mxu0 0.0
      %2805 = vmatprep.subr.mxu0 0.0
      %2806 = vmatpush1.msra.mxu0 0.0
      %2807 = vmatprep.subr.mxu0 0.0
      %2808 = vmatpush1.msra.mxu0 0.0
      %2809 = vmatprep.subr.mxu0 0.0
      %2810 = vmatpush1.msra.mxu0 0.0
      %2811 = vmatprep.subr.mxu0 0.0
      %2812 = vmatpush1.msra.mxu0 0.0
      %2813 = vmatprep.mubr.f32.mxu0 0.0
      %2814 = vmatmul.mubr.f32.gmra.mrb[0].mxu0 %v2735
      %v2815 = vpop.f32.mrb[0].mxu0
      %v2816 = vadd.f32 %v2732, %v2815
      %v2817 = vpop.f32.mrb[0].mxu0
      %2818 = vmatprep.mubr.f32.mxu0 0.0
      %2819 = vmatmul.mubr.f32.gmra.mrb[0].mxu0 %v2738
      %v2820 = vpop.f32.mrb[0].mxu0
      %v2821 = vadd.f32 %v2732, %v2820
      %v2822 = vpop.f32.mrb[0].mxu0
      %2823 = vmatprep.mubr.f32.mxu0 0.0
      %2824 = vmatmul.mubr.f32.gmra.mrb[0].mxu0 %v2741
      %v2825 = vpop.f32.mrb[0].mxu0
      %v2826 = vadd.f32 %v2732, %v2825
      %v2827 = vpop.f32.mrb[0].mxu0
      %2828 = vmatprep.mubr.f32.mxu0 0.0
      %2829 = vmatmul.mubr.f32.gmra.mrb[0].mxu0 %v2744
      %v2830 = vpop.f32.mrb[0].mxu0
      %v2831 = vadd.f32 %v2732, %v2830
      %v2832 = vpop.f32.mrb[0].mxu0
      %2833 = vmatprep.mubr.f32.mxu0 0.0
      %2834 = vmatmul.mubr.f32.gmra.mrb[0].mxu0 %v2747
      %v2835 = vpop.f32.mrb[0].mxu0
      %v2836 = vadd.f32 %v2732, %v2835
      %v2837 = vpop.f32.mrb[0].mxu0
      %2838 = vdwg.mxu0
      %v2839 = vadd.f32 %v979, %v2816
      %v2840 = vadd.f32 %v980, %v2821
      %v2841 = vadd.f32 %v981, %v2826
      %v2842 = vadd.f32 %v982, %v2831
      %v2843 = vadd.f32 %v983, %v2836
      %v2844 = vsel %vm1090, %v2839, 0.0
      %2845 = vadd.xlane.f32.xlu0 %v2844
      %v2846 = vpop.xlane.xlu0 %2845
      %v2847 = vsel %vm1090, %v2840, 0.0
      %2848 = vadd.xlane.f32.xlu0 %v2847
      %v2849 = vpop.xlane.xlu0 %2848
      %v2850 = vsel %vm1090, %v2841, 0.0
      %2851 = vadd.xlane.f32.xlu0 %v2850
      %v2852 = vpop.xlane.xlu0 %2851
      %v2853 = vsel %vm1090, %v2842, 0.0
      %2854 = vadd.xlane.f32.xlu0 %v2853
      %v2855 = vpop.xlane.xlu0 %2854
      %v2856 = vsel %vm1103, %v2843, 0.0
      %2857 = vadd.xlane.f32.xlu0 %v2856
      %v2858 = vpop.xlane.xlu0 %2857
      %v2859 = vmul.f32 %v2846, %v1107
      %v2860 = vmul.f32 %v2849, %v1107
      %v2861 = vmul.f32 %v2852, %v1107
      %v2862 = vmul.f32 %v2855, %v1107
      %v2863 = vmul.f32 %v2858, %v1107
      %v2864 = vsub.f32 %v2839, %v2859
      %v2865 = vsub.f32 %v2840, %v2860
      %v2866 = vsub.f32 %v2841, %v2861
      %v2867 = vsub.f32 %v2842, %v2862
      %v2868 = vsub.f32 %v2843, %v2863
      %v2869 = vmul.f32 %v2864, %v2864
      %v2870 = vmul.f32 %v2865, %v2865
      %v2871 = vmul.f32 %v2866, %v2866
      %v2872 = vmul.f32 %v2867, %v2867
      %v2873 = vmul.f32 %v2868, %v2868
      %v2874 = vsel %vm1090, %v2869, 0.0
      %2875 = vadd.xlane.f32.xlu0 %v2874
      %v2876 = vpop.xlane.xlu0 %2875
      %v2877 = vsel %vm1090, %v2870, 0.0
      %2878 = vadd.xlane.f32.xlu0 %v2877
      %v2879 = vpop.xlane.xlu0 %2878
      %v2880 = vsel %vm1090, %v2871, 0.0
      %2881 = vadd.xlane.f32.xlu0 %v2880
      %v2882 = vpop.xlane.xlu0 %2881
      %v2883 = vsel %vm1090, %v2872, 0.0
      %2884 = vadd.xlane.f32.xlu0 %v2883
      %v2885 = vpop.xlane.xlu0 %2884
      %v2886 = vsel %vm1103, %v2873, 0.0
      %2887 = vadd.xlane.f32.xlu0 %v2886
      %v2888 = vpop.xlane.xlu0 %2887
      %v2889 = vmul.f32 %v2876, %v1107
      %v2890 = vmul.f32 %v2879, %v1107
      %v2891 = vmul.f32 %v2882, %v1107
      %v2892 = vmul.f32 %v2885, %v1107
      %v2893 = vmul.f32 %v2888, %v1107
      %v2894 = vadd.f32 %v2889, 1e-05
      %v2895 = vadd.f32 %v2890, 1e-05
      %v2896 = vadd.f32 %v2891, 1e-05
      %v2897 = vadd.f32 %v2892, 1e-05
      %v2898 = vadd.f32 %v2893, 1e-05
      %v2899 = vrsqrt.pop %v2894
      %v2900 = vrsqrt.pop %v2895
      %v2901 = vrsqrt.pop %v2896
      %v2902 = vrsqrt.pop %v2897
      %v2903 = vrsqrt.pop %v2898
      %v2904 = vmul.f32 %v2864, %v2899
      %v2905 = vmul.f32 %v2865, %v2900
      %v2906 = vmul.f32 %v2866, %v2901
      %v2907 = vmul.f32 %v2867, %v2902
      %v2908 = vmul.f32 %v2868, %v2903
      %v2910 = vlaneseq
      %v2911 = vshrl.u32 %v2910, 7
      %v2912 = vsub.s32 0, %v2911
      %v2913 = vrot.slane %v1064, %v2912
      %v2915 = vmul.f32 %v2904, %v2913
      %v2916 = vmul.f32 %v2905, %v2913
      %v2917 = vmul.f32 %v2906, %v2913
      %v2918 = vmul.f32 %v2907, %v2913
      %v2919 = vmul.f32 %v2908, %v2913
      %v2921 = vlaneseq
      %v2922 = vshrl.u32 %v2921, 7
      %v2923 = vsub.s32 0, %v2922
      %v2924 = vrot.slane %v1065, %v2923
      %v2926 = vadd.f32 %v2915, %v2924
      %v2927 = vadd.f32 %v2916, %v2924
      %v2928 = vadd.f32 %v2917, %v2924
      %v2929 = vadd.f32 %v2918, %v2924
      %v2930 = vadd.f32 %v2919, %v2924
      %v2932 = vlaneseq
      %v2933 = vshrl.u32 %v2932, 7
      %v2934 = vsub.s32 0, %v2933
      %v2935 = vrot.slane %v1080, %v2934
      %v2938 = vsel %vm1090, %v2926, 0
      %v2941 = vsel %vm1090, %v2927, 0
      %v2944 = vsel %vm1090, %v2928, 0
      %v2947 = vsel %vm1090, %v2929, 0
      %v2950 = vsel %vm1090, %v2930, 0
      %2952 = vmatprep.subr.mxu0 0.0
      %2953 = vmatpush1.msra.mxu0 %v1078
      %2954 = vmatprep.subr.mxu0 0.0
      %2955 = vmatpush1.msra.mxu0 %v1079
      %2956 = vmatprep.subr.mxu0 0.0
      %2957 = vmatpush1.msra.mxu0 0.0
      %2958 = vmatprep.subr.mxu0 0.0
      %2959 = vmatpush1.msra.mxu0 0.0
      %2960 = vmatprep.subr.mxu0 0.0
      %2961 = vmatpush1.msra.mxu0 0.0
      %2962 = vmatprep.subr.mxu0 0.0
      %2963 = vmatpush1.msra.mxu0 0.0
      %2964 = vmatprep.subr.mxu0 0.0
      %2965 = vmatpush1.msra.mxu0 0.0
      %2966 = vmatprep.subr.mxu0 0.0
      %2967 = vmatpush1.msra.mxu0 0.0
      %2968 = vmatprep.subr.mxu0 0.0
      %2969 = vmatpush1.msra.mxu0 0.0
      %2970 = vmatprep.subr.mxu0 0.0
      %2971 = vmatpush1.msra.mxu0 0.0
      %2972 = vmatprep.subr.mxu0 0.0
      %2973 = vmatpush1.msra.mxu0 0.0
      %2974 = vmatprep.subr.mxu0 0.0
      %2975 = vmatpush1.msra.mxu0 0.0
      %2976 = vmatprep.subr.mxu0 0.0
      %2977 = vmatpush1.msra.mxu0 0.0
      %2978 = vmatprep.subr.mxu0 0.0
      %2979 = vmatpush1.msra.mxu0 0.0
      %2980 = vmatprep.subr.mxu0 0.0
      %2981 = vmatpush1.msra.mxu0 0.0
      %2982 = vmatprep.subr.mxu0 0.0
      %2983 = vmatpush1.msra.mxu0 0.0
      %2984 = vmatprep.subr.mxu0 0.0
      %2985 = vmatpush1.msra.mxu0 0.0
      %2986 = vmatprep.subr.mxu0 0.0
      %2987 = vmatpush1.msra.mxu0 0.0
      %2988 = vmatprep.subr.mxu0 0.0
      %2989 = vmatpush1.msra.mxu0 0.0
      %2990 = vmatprep.subr.mxu0 0.0
      %2991 = vmatpush1.msra.mxu0 0.0
      %2992 = vmatprep.subr.mxu0 0.0
      %2993 = vmatpush1.msra.mxu0 0.0
      %2994 = vmatprep.subr.mxu0 0.0
      %2995 = vmatpush1.msra.mxu0 0.0
      %2996 = vmatprep.subr.mxu0 0.0
      %2997 = vmatpush1.msra.mxu0 0.0
      %2998 = vmatprep.subr.mxu0 0.0
      %2999 = vmatpush1.msra.mxu0 0.0
      %3000 = vmatprep.subr.mxu0 0.0
      %3001 = vmatpush1.msra.mxu0 0.0
      %3002 = vmatprep.subr.mxu0 0.0
      %3003 = vmatpush1.msra.mxu0 0.0
      %3004 = vmatprep.subr.mxu0 0.0
      %3005 = vmatpush1.msra.mxu0 0.0
      %3006 = vmatprep.subr.mxu0 0.0
      %3007 = vmatpush1.msra.mxu0 0.0
      %3008 = vmatprep.subr.mxu0 0.0
      %3009 = vmatpush1.msra.mxu0 0.0
      %3010 = vmatprep.subr.mxu0 0.0
      %3011 = vmatpush1.msra.mxu0 0.0
      %3012 = vmatprep.subr.mxu0 0.0
      %3013 = vmatpush1.msra.mxu0 0.0
      %3014 = vmatprep.subr.mxu0 0.0
      %3015 = vmatpush1.msra.mxu0 0.0
      %3016 = vmatprep.mubr.f32.mxu0 0.0
      %3017 = vmatmul.mubr.f32.gmra.mrb[0].mxu0 %v2938
      %v3018 = vpop.f32.mrb[0].mxu0
      %v3019 = vadd.f32 %v2935, %v3018
      %v3020 = vpop.f32.mrb[0].mxu0
      %3021 = vmatprep.mubr.f32.mxu0 0.0
      %3022 = vmatmul.mubr.f32.gmra.mrb[0].mxu0 %v2941
      %v3023 = vpop.f32.mrb[0].mxu0
      %v3024 = vadd.f32 %v2935, %v3023
      %v3025 = vpop.f32.mrb[0].mxu0
      %3026 = vmatprep.mubr.f32.mxu0 0.0
      %3027 = vmatmul.mubr.f32.gmra.mrb[0].mxu0 %v2944
      %v3028 = vpop.f32.mrb[0].mxu0
      %v3029 = vadd.f32 %v2935, %v3028
      %v3030 = vpop.f32.mrb[0].mxu0
      %3031 = vmatprep.mubr.f32.mxu0 0.0
      %3032 = vmatmul.mubr.f32.gmra.mrb[0].mxu0 %v2947
      %v3033 = vpop.f32.mrb[0].mxu0
      %v3034 = vadd.f32 %v2935, %v3033
      %v3035 = vpop.f32.mrb[0].mxu0
      %3036 = vmatprep.mubr.f32.mxu0 0.0
      %3037 = vmatmul.mubr.f32.gmra.mrb[0].mxu0 %v2950
      %v3038 = vpop.f32.mrb[0].mxu0
      %v3039 = vadd.f32 %v2935, %v3038
      %v3040 = vpop.f32.mrb[0].mxu0
      %3041 = vdwg.mxu0
      %v3042 = vmul.f32 %v3019, %v3019
      %v3043 = vmul.f32 %v3024, %v3024
      %v3044 = vmul.f32 %v3029, %v3029
      %v3045 = vmul.f32 %v3034, %v3034
      %v3046 = vmul.f32 %v3039, %v3039
      %v3047 = vmul.f32 %v3019, %v3042
      %v3048 = vmul.f32 %v3024, %v3043
      %v3049 = vmul.f32 %v3029, %v3044
      %v3050 = vmul.f32 %v3034, %v3045
      %v3051 = vmul.f32 %v3039, %v3046
      %v3052 = vmul.f32 %v3047, 0.044715
      %v3053 = vmul.f32 %v3048, 0.044715
      %v3054 = vmul.f32 %v3049, 0.044715
      %v3055 = vmul.f32 %v3050, 0.044715
      %v3056 = vmul.f32 %v3051, 0.044715
      %v3057 = vadd.f32 %v3019, %v3052
      %v3058 = vadd.f32 %v3024, %v3053
      %v3059 = vadd.f32 %v3029, %v3054
      %v3060 = vadd.f32 %v3034, %v3055
      %v3061 = vadd.f32 %v3039, %v3056
      %v3062 = vmul.f32 %v3057, 0.7978846
      %v3063 = vmul.f32 %v3058, 0.7978846
      %v3064 = vmul.f32 %v3059, 0.7978846
      %v3065 = vmul.f32 %v3060, 0.7978846
      %v3066 = vmul.f32 %v3061, 0.7978846
      %v3067 = vtanh.pop %v3062
      %v3068 = vtanh.pop %v3063
      %v3069 = vtanh.pop %v3064
      %v3070 = vtanh.pop %v3065
      %v3071 = vtanh.pop %v3066
      %v3072 = vadd.f32 %v3067, 1.0
      %v3073 = vadd.f32 %v3068, 1.0
      %v3074 = vadd.f32 %v3069, 1.0
      %v3075 = vadd.f32 %v3070, 1.0
      %v3076 = vadd.f32 %v3071, 1.0
      %v3077 = vmul.f32 %v3072, 0.5
      %v3078 = vmul.f32 %v3073, 0.5
      %v3079 = vmul.f32 %v3074, 0.5
      %v3080 = vmul.f32 %v3075, 0.5
      %v3081 = vmul.f32 %v3076, 0.5
      %v3082 = vmul.f32 %v3019, %v3077
      %v3083 = vmul.f32 %v3024, %v3078
      %v3084 = vmul.f32 %v3029, %v3079
      %v3085 = vmul.f32 %v3034, %v3080
      %v3086 = vmul.f32 %v3039, %v3081
      %v3088 = vlaneseq
      %v3089 = vshrl.u32 %v3088, 7
      %v3090 = vsub.s32 0, %v3089
      %v3091 = vrot.slane %v1089, %v3090
      %vm3093 = vcmask 523264
      %v3095 = vsel %vm3093, %v3082, 0
      %v3098 = vsel %vm3093, %v3083, 0
      %v3101 = vsel %vm3093, %v3084, 0
      %v3104 = vsel %vm3093, %v3085, 0
      %v3107 = vsel %vm3093, %v3086, 0
      %3109 = vmatprep.subr.mxu0 0.0
      %3110 = vmatpush1.msra.mxu0 %v1081
      %3111 = vmatprep.subr.mxu0 0.0
      %3112 = vmatpush1.msra.mxu0 %v1082
      %3113 = vmatprep.subr.mxu0 0.0
      %3114 = vmatpush1.msra.mxu0 %v1083
      %3115 = vmatprep.subr.mxu0 0.0
      %3116 = vmatpush1.msra.mxu0 %v1084
      %3117 = vmatprep.subr.mxu0 0.0
      %3118 = vmatpush1.msra.mxu0 %v1085
      %3119 = vmatprep.subr.mxu0 0.0
      %3120 = vmatpush1.msra.mxu0 %v1086
      %3121 = vmatprep.subr.mxu0 0.0
      %3122 = vmatpush1.msra.mxu0 %v1087
      %3123 = vmatprep.subr.mxu0 0.0
      %3124 = vmatpush1.msra.mxu0 %v1088
      %3125 = vmatprep.subr.mxu0 0.0
      %3126 = vmatpush1.msra.mxu0 0.0
      %3127 = vmatprep.subr.mxu0 0.0
      %3128 = vmatpush1.msra.mxu0 0.0
      %3129 = vmatprep.subr.mxu0 0.0
      %3130 = vmatpush1.msra.mxu0 0.0
      %3131 = vmatprep.subr.mxu0 0.0
      %3132 = vmatpush1.msra.mxu0 0.0
      %3133 = vmatprep.subr.mxu0 0.0
      %3134 = vmatpush1.msra.mxu0 0.0
      %3135 = vmatprep.subr.mxu0 0.0
      %3136 = vmatpush1.msra.mxu0 0.0
      %3137 = vmatprep.subr.mxu0 0.0
      %3138 = vmatpush1.msra.mxu0 0.0
      %3139 = vmatprep.subr.mxu0 0.0
      %3140 = vmatpush1.msra.mxu0 0.0
      %3141 = vmatprep.subr.mxu0 0.0
      %3142 = vmatpush1.msra.mxu0 0.0
      %3143 = vmatprep.subr.mxu0 0.0
      %3144 = vmatpush1.msra.mxu0 0.0
      %3145 = vmatprep.subr.mxu0 0.0
      %3146 = vmatpush1.msra.mxu0 0.0
      %3147 = vmatprep.subr.mxu0 0.0
      %3148 = vmatpush1.msra.mxu0 0.0
      %3149 = vmatprep.subr.mxu0 0.0
      %3150 = vmatpush1.msra.mxu0 0.0
      %3151 = vmatprep.subr.mxu0 0.0
      %3152 = vmatpush1.msra.mxu0 0.0
      %3153 = vmatprep.subr.mxu0 0.0
      %3154 = vmatpush1.msra.mxu0 0.0
      %3155 = vmatprep.subr.mxu0 0.0
      %3156 = vmatpush1.msra.mxu0 0.0
      %3157 = vmatprep.subr.mxu0 0.0
      %3158 = vmatpush1.msra.mxu0 0.0
      %3159 = vmatprep.subr.mxu0 0.0
      %3160 = vmatpush1.msra.mxu0 0.0
      %3161 = vmatprep.subr.mxu0 0.0
      %3162 = vmatpush1.msra.mxu0 0.0
      %3163 = vmatprep.subr.mxu0 0.0
      %3164 = vmatpush1.msra.mxu0 0.0
      %3165 = vmatprep.subr.mxu0 0.0
      %3166 = vmatpush1.msra.mxu0 0.0
      %3167 = vmatprep.subr.mxu0 0.0
      %3168 = vmatpush1.msra.mxu0 0.0
      %3169 = vmatprep.subr.mxu0 0.0
      %3170 = vmatpush1.msra.mxu0 0.0
      %3171 = vmatprep.subr.mxu0 0.0
      %3172 = vmatpush1.msra.mxu0 0.0
      %3173 = vmatprep.mubr.f32.mxu0 0.0
      %3174 = vmatmul.mubr.f32.gmra.mrb[0].mxu0 %v3095
      %v3175 = vpop.f32.mrb[0].mxu0
      %v3176 = vadd.f32 %v3091, %v3175
      %v3177 = vpop.f32.mrb[0].mxu0
      %3178 = vmatprep.mubr.f32.mxu0 0.0
      %3179 = vmatmul.mubr.f32.gmra.mrb[0].mxu0 %v3098
      %v3180 = vpop.f32.mrb[0].mxu0
      %v3181 = vadd.f32 %v3091, %v3180
      %v3182 = vpop.f32.mrb[0].mxu0
      %3183 = vmatprep.mubr.f32.mxu0 0.0
      %3184 = vmatmul.mubr.f32.gmra.mrb[0].mxu0 %v3101
      %v3185 = vpop.f32.mrb[0].mxu0
      %v3186 = vadd.f32 %v3091, %v3185
      %v3187 = vpop.f32.mrb[0].mxu0
      %3188 = vmatprep.mubr.f32.mxu0 0.0
      %3189 = vmatmul.mubr.f32.gmra.mrb[0].mxu0 %v3104
      %v3190 = vpop.f32.mrb[0].mxu0
      %v3191 = vadd.f32 %v3091, %v3190
      %v3192 = vpop.f32.mrb[0].mxu0
      %3193 = vmatprep.mubr.f32.mxu0 0.0
      %3194 = vmatmul.mubr.f32.gmra.mrb[0].mxu0 %v3107
      %v3195 = vpop.f32.mrb[0].mxu0
      %v3196 = vadd.f32 %v3091, %v3195
      %v3197 = vpop.f32.mrb[0].mxu0
      %3198 = vdwg.mxu0
      %v3199 = vadd.f32 %v2839, %v3176
      %v3200 = vadd.f32 %v2840, %v3181
      %v3201 = vadd.f32 %v2841, %v3186
      %v3202 = vadd.f32 %v2842, %v3191
      %v3203 = vadd.f32 %v2843, %v3196
      %v3204 = vld [vmem:[%s962] sm:$0x1]
      %v3205 = vld [vmem:[%s965] sm:$0x1]
      %v3206 = vsel %vm1090, %v3199, 0.0
      %3207 = vadd.xlane.f32.xlu0 %v3206
      %v3208 = vpop.xlane.xlu0 %3207
      %v3209 = vsel %vm1090, %v3200, 0.0
      %3210 = vadd.xlane.f32.xlu0 %v3209
      %v3211 = vpop.xlane.xlu0 %3210
      %v3212 = vsel %vm1090, %v3201, 0.0
      %3213 = vadd.xlane.f32.xlu0 %v3212
      %v3214 = vpop.xlane.xlu0 %3213
      %v3215 = vsel %vm1090, %v3202, 0.0
      %3216 = vadd.xlane.f32.xlu0 %v3215
      %v3217 = vpop.xlane.xlu0 %3216
      %v3218 = vsel %vm1103, %v3203, 0.0
      %3219 = vadd.xlane.f32.xlu0 %v3218
      %v3220 = vpop.xlane.xlu0 %3219
      %v3221 = vmul.f32 %v3208, %v1107
      %v3222 = vmul.f32 %v3211, %v1107
      %v3223 = vmul.f32 %v3214, %v1107
      %v3224 = vmul.f32 %v3217, %v1107
      %v3225 = vmul.f32 %v3220, %v1107
      %v3226 = vsub.f32 %v3199, %v3221
      %v3227 = vsub.f32 %v3200, %v3222
      %v3228 = vsub.f32 %v3201, %v3223
      %v3229 = vsub.f32 %v3202, %v3224
      %v3230 = vsub.f32 %v3203, %v3225
      %v3231 = vmul.f32 %v3226, %v3226
      %v3232 = vmul.f32 %v3227, %v3227
      %v3233 = vmul.f32 %v3228, %v3228
      %v3234 = vmul.f32 %v3229, %v3229
      %v3235 = vmul.f32 %v3230, %v3230
      %v3236 = vsel %vm1090, %v3231, 0.0
      %3237 = vadd.xlane.f32.xlu0 %v3236
      %v3238 = vpop.xlane.xlu0 %3237
      %v3239 = vsel %vm1090, %v3232, 0.0
      %3240 = vadd.xlane.f32.xlu0 %v3239
      %v3241 = vpop.xlane.xlu0 %3240
      %v3242 = vsel %vm1090, %v3233, 0.0
      %3243 = vadd.xlane.f32.xlu0 %v3242
      %v3244 = vpop.xlane.xlu0 %3243
      %v3245 = vsel %vm1090, %v3234, 0.0
      %3246 = vadd.xlane.f32.xlu0 %v3245
      %v3247 = vpop.xlane.xlu0 %3246
      %v3248 = vsel %vm1103, %v3235, 0.0
      %3249 = vadd.xlane.f32.xlu0 %v3248
      %v3250 = vpop.xlane.xlu0 %3249
      %v3251 = vmul.f32 %v3238, %v1107
      %v3252 = vmul.f32 %v3241, %v1107
      %v3253 = vmul.f32 %v3244, %v1107
      %v3254 = vmul.f32 %v3247, %v1107
      %v3255 = vmul.f32 %v3250, %v1107
      %v3256 = vadd.f32 %v3251, 1e-05
      %v3257 = vadd.f32 %v3252, 1e-05
      %v3258 = vadd.f32 %v3253, 1e-05
      %v3259 = vadd.f32 %v3254, 1e-05
      %v3260 = vadd.f32 %v3255, 1e-05
      %v3261 = vrsqrt.pop %v3256
      %v3262 = vrsqrt.pop %v3257
      %v3263 = vrsqrt.pop %v3258
      %v3264 = vrsqrt.pop %v3259
      %v3265 = vrsqrt.pop %v3260
      %v3266 = vmul.f32 %v3226, %v3261
      %v3267 = vmul.f32 %v3227, %v3262
      %v3268 = vmul.f32 %v3228, %v3263
      %v3269 = vmul.f32 %v3229, %v3264
      %v3270 = vmul.f32 %v3230, %v3265
      %v3272 = vlaneseq
      %v3273 = vshrl.u32 %v3272, 7
      %v3274 = vsub.s32 0, %v3273
      %v3275 = vrot.slane %v3204, %v3274
      %v3277 = vmul.f32 %v3266, %v3275
      %v3278 = vmul.f32 %v3267, %v3275
      %v3279 = vmul.f32 %v3268, %v3275
      %v3280 = vmul.f32 %v3269, %v3275
      %v3281 = vmul.f32 %v3270, %v3275
      %v3283 = vlaneseq
      %v3284 = vshrl.u32 %v3283, 7
      %v3285 = vsub.s32 0, %v3284
      %v3286 = vrot.slane %v3205, %v3285
      %v3288 = vadd.f32 %v3277, %v3286
      %v3289 = vadd.f32 %v3278, %v3286
      %v3290 = vadd.f32 %v3279, %v3286
      %v3291 = vadd.f32 %v3280, %v3286
      %v3292 = vadd.f32 %v3281, %v3286
      %v3293 = vld [vmem:[%s970] sm:$0xff]
      %v3294 = vld [vmem:[%s970 + $0x8] sm:$0xff]
      %v3295 = vld [vmem:[%s973] sm:$0x1]
      %v3297 = vlaneseq
      %v3298 = vshrl.u32 %v3297, 7
      %v3299 = vsub.s32 0, %v3298
      %v3300 = vrot.slane %v3295, %v3299
      %v3303 = vsel %vm1090, %v3288, 0
      %v3306 = vsel %vm1090, %v3289, 0
      %v3309 = vsel %vm1090, %v3290, 0
      %v3312 = vsel %vm1090, %v3291, 0
      %v3315 = vsel %vm1090, %v3292, 0
      %3317 = vmatprep.subr.mxu0 0.0
      %3318 = vmatpush1.msra.mxu0 %v3293
      %3319 = vmatprep.subr.mxu0 0.0
      %3320 = vmatpush1.msra.mxu0 %v3294
      %3321 = vmatprep.subr.mxu0 0.0
      %3322 = vmatpush1.msra.mxu0 0.0
      %3323 = vmatprep.subr.mxu0 0.0
      %3324 = vmatpush1.msra.mxu0 0.0
      %3325 = vmatprep.subr.mxu0 0.0
      %3326 = vmatpush1.msra.mxu0 0.0
      %3327 = vmatprep.subr.mxu0 0.0
      %3328 = vmatpush1.msra.mxu0 0.0
      %3329 = vmatprep.subr.mxu0 0.0
      %3330 = vmatpush1.msra.mxu0 0.0
      %3331 = vmatprep.subr.mxu0 0.0
      %3332 = vmatpush1.msra.mxu0 0.0
      %3333 = vmatprep.subr.mxu0 0.0
      %3334 = vmatpush1.msra.mxu0 0.0
      %3335 = vmatprep.subr.mxu0 0.0
      %3336 = vmatpush1.msra.mxu0 0.0
      %3337 = vmatprep.subr.mxu0 0.0
      %3338 = vmatpush1.msra.mxu0 0.0
      %3339 = vmatprep.subr.mxu0 0.0
      %3340 = vmatpush1.msra.mxu0 0.0
      %3341 = vmatprep.subr.mxu0 0.0
      %3342 = vmatpush1.msra.mxu0 0.0
      %3343 = vmatprep.subr.mxu0 0.0
      %3344 = vmatpush1.msra.mxu0 0.0
      %3345 = vmatprep.subr.mxu0 0.0
      %3346 = vmatpush1.msra.mxu0 0.0
      %3347 = vmatprep.subr.mxu0 0.0
      %3348 = vmatpush1.msra.mxu0 0.0
      %3349 = vmatprep.subr.mxu0 0.0
      %3350 = vmatpush1.msra.mxu0 0.0
      %3351 = vmatprep.subr.mxu0 0.0
      %3352 = vmatpush1.msra.mxu0 0.0
      %3353 = vmatprep.subr.mxu0 0.0
      %3354 = vmatpush1.msra.mxu0 0.0
      %3355 = vmatprep.subr.mxu0 0.0
      %3356 = vmatpush1.msra.mxu0 0.0
      %3357 = vmatprep.subr.mxu0 0.0
      %3358 = vmatpush1.msra.mxu0 0.0
      %3359 = vmatprep.subr.mxu0 0.0
      %3360 = vmatpush1.msra.mxu0 0.0
      %3361 = vmatprep.subr.mxu0 0.0
      %3362 = vmatpush1.msra.mxu0 0.0
      %3363 = vmatprep.subr.mxu0 0.0
      %3364 = vmatpush1.msra.mxu0 0.0
      %3365 = vmatprep.subr.mxu0 0.0
      %3366 = vmatpush1.msra.mxu0 0.0
      %3367 = vmatprep.subr.mxu0 0.0
      %3368 = vmatpush1.msra.mxu0 0.0
      %3369 = vmatprep.subr.mxu0 0.0
      %3370 = vmatpush1.msra.mxu0 0.0
      %3371 = vmatprep.subr.mxu0 0.0
      %3372 = vmatpush1.msra.mxu0 0.0
      %3373 = vmatprep.subr.mxu0 0.0
      %3374 = vmatpush1.msra.mxu0 0.0
      %3375 = vmatprep.subr.mxu0 0.0
      %3376 = vmatpush1.msra.mxu0 0.0
      %3377 = vmatprep.subr.mxu0 0.0
      %3378 = vmatpush1.msra.mxu0 0.0
      %3379 = vmatprep.subr.mxu0 0.0
      %3380 = vmatpush1.msra.mxu0 0.0
      %3381 = vmatprep.mubr.f32.mxu0 0.0
      %3382 = vmatmul.mubr.f32.gmra.mrb[0].mxu0 %v3303
      %v3383 = vpop.f32.mrb[0].mxu0
      %v3384 = vadd.f32 %v3300, %v3383
      %v3385 = vpop.f32.mrb[0].mxu0
      %3386 = vmatprep.mubr.f32.mxu0 0.0
      %3387 = vmatmul.mubr.f32.gmra.mrb[0].mxu0 %v3306
      %v3388 = vpop.f32.mrb[0].mxu0
      %v3389 = vadd.f32 %v3300, %v3388
      %v3390 = vpop.f32.mrb[0].mxu0
      %3391 = vmatprep.mubr.f32.mxu0 0.0
      %3392 = vmatmul.mubr.f32.gmra.mrb[0].mxu0 %v3309
      %v3393 = vpop.f32.mrb[0].mxu0
      %v3394 = vadd.f32 %v3300, %v3393
      %v3395 = vpop.f32.mrb[0].mxu0
      %3396 = vmatprep.mubr.f32.mxu0 0.0
      %3397 = vmatmul.mubr.f32.gmra.mrb[0].mxu0 %v3312
      %v3398 = vpop.f32.mrb[0].mxu0
      %v3399 = vadd.f32 %v3300, %v3398
      %v3400 = vpop.f32.mrb[0].mxu0
      %3401 = vmatprep.mubr.f32.mxu0 0.0
      %3402 = vmatmul.mubr.f32.gmra.mrb[0].mxu0 %v3315
      %v3403 = vpop.f32.mrb[0].mxu0
      %v3404 = vadd.f32 %v3300, %v3403
      %v3405 = vpop.f32.mrb[0].mxu0
      %3406 = vdwg.mxu0
      %3407 = vst.msk [vmem:[%s978] sm:$0xff] %vm1090, %v3384
      %3408 = vst.msk [vmem:[%s978 + $0x8] sm:$0xff] %vm1090, %v3389
      %3409 = vst.msk [vmem:[%s978 + $0x10] sm:$0xff] %vm1090, %v3394
      %3410 = vst.msk [vmem:[%s978 + $0x18] sm:$0xff] %vm1090, %v3399
      %3411 = vst.msk [vmem:[%s978 + $0x20] sm:$0x3] %vm1103, %v3404
      %p3412 = scmp.lt.s32.totalorder %s32, 5
      %s3413 = scalar_select %p3412, %s32, 5
      %s3414 = smul.addr %s3413, 5
      %s3415 = smul.addr %s3414, 8
      %s3416 = scalar_lea.vmem %s21, %s3415
      // Predicated region
      $region105: #{wavelet_transformer_forward.6} parent=103 // pred_check
        %p3417 = pneg %p596
      $region106: #{wavelet_transformer_forward.6} parent=103 // pred_check_branch
        %3419 = sbr.rel (%p3417) target = $region108
      $region107: #{wavelet_transformer_forward.6} parent=103 // pred_region
        _
      $region108: #{wavelet_transformer_forward.6} parent=103 // pred_fallthru
        _
    $region104: #{wavelet_transformer_forward.6} parent=5 // pred_fallthru
      _
    %p3420 = scmp.le.s32.totalorder 2, %s27
    // Predicated region
    $region109: #{wavelet_transformer_forward.6} parent=5 // pred_check
      %p3421 = pneg %p3420
    $region110: #{wavelet_transformer_forward.6} parent=5 // pred_check_branch
      %3423 = sbr.rel (%p3421) target = $region112
    $region111: #{wavelet_transformer_forward.6} parent=5 // pred_region
      %s3424 = ssub.s32 %s27, 2
      // Predicated region
      $region113: #{wavelet_transformer_forward.6} parent=111 // pred_check
        %p3425 = pneg %p602
      $region114: #{wavelet_transformer_forward.6} parent=111 // pred_check_branch
        %3427 = sbr.rel (%p3425) target = $region116
      $region115: #{wavelet_transformer_forward.6} parent=111 // pred_region
        %p3428 = scmp.lt.s32.totalorder %s33, 5
        %s3429 = scalar_select %p3428, %s33, 5
        %s3430 = smul.addr %s3429, 5
        %s3431 = smul.addr %s3430, 8
        %s3432 = scalar_lea.vmem %s21, %s3431
      $region116: #{wavelet_transformer_forward.6} parent=111 // pred_fallthru
        _
    $region112: #{wavelet_transformer_forward.6} parent=5 // pred_fallthru
      _
  $region6: #{wavelet_transformer_forward.6} parent=0 // loop_footer
    %s31 = sadd.s32 1, %s27
  $region7: #{wavelet_transformer_forward.6} parent=0 // loop_footer_branch
    %26 = sbr.rel target = $region3
  $region8: #{wavelet_transformer_forward.6} parent=0 // loop_exit
    _

</llo_original>
